<compile_context>
chip_gen: v7x
topology: tpu7x:2x2x1
jax: 0.10.0
libtpu: 0.0.40
codegen_flags: <defaults>
</compile_context>

<pallas_src>
import math

import numpy as np
import jax
import jax.numpy as jnp
from jax.experimental import pallas as pl
from jax.experimental.pallas import tpu as pltpu

IMG = 24      # input spatial size (the only size consistent with the 128*3*3 bottleneck)
LANE = 128    # TPU lane width; first/last/latent tensors are zero-padded to this
EPS = 1e-5    # PyTorch BatchNorm default eps


def _round8(n):
    return ((n + 7) // 8) * 8


def _factorize(n):
    fs, d = [], 2
    while n > 1:
        while n % d == 0:
            fs.append(d)
            n //= d
        d += 1
    return fs


# ----------------------------------------------------------------------------
# Host-side (one-time) weight preprocessing.
# Every layer is rewritten as:
#     Y = epilogue( concat_t( S_t @ X )_lanes @ M_stack + bias )
# on a 2-D activation X with rows (b, h) and lanes (w, c), channels fastest.
# S_t is a 0/1 row-selection matrix (vertical kernel tap / stride / zero pad),
# M_stack folds horizontal taps + channel mixing.  All S_t are stacked
# vertically into one gather matrix, all M_t into one long-K matrix.
# ----------------------------------------------------------------------------
def _conv_stacked(w_oihw, bias, B, H, stride, pad, rows_in_pad, lanes_in_pad):
    """Conv2d, PyTorch weight [Co, Ci, KH, KW]."""
    w = np.asarray(w_oihw, np.float32)
    Co, Ci, KH, KW = w.shape
    W = H
    OH = (H + 2 * pad - KH) // stride + 1
    OW = OH
    rows_out = B * OH
    rows_pad = _round8(rows_out)
    lanes_out = OW * Co
    S = np.zeros((KH * rows_pad, rows_in_pad), np.float32)
    for t in range(KH):
        for b in range(B):
            for oh in range(OH):
                ih = oh * stride + t - pad
                if 0 <= ih < H:
                    S[t * rows_pad + b * OH + oh, b * H + ih] = 1.0
    M = np.zeros((KH * lanes_in_pad, lanes_out), np.float32)
    for t in range(KH):
        for ow in range(OW):
            for j in range(KW):
                iw = ow * stride + j - pad
                if 0 <= iw < W:
                    M[t * lanes_in_pad + iw * Ci: t * lanes_in_pad + (iw + 1) * Ci,
                      ow * Co:(ow + 1) * Co] = w[:, :, t, j].T
    bcols = np.tile(np.asarray(bias, np.float32), OW)[None, :]
    return S, M, bcols, OH, Co, OW, rows_out, rows_pad, lanes_out


def _deconv_stacked(w_iohw, bias, B, H, stride, pad, out_pad,
                    rows_in_pad, lanes_in_pad, lanes_out_pad=None):
    """ConvTranspose2d, PyTorch weight [Ci, Co, KH, KW]."""
    w = np.asarray(w_iohw, np.float32)
    Ci, Co, KH, KW = w.shape
    W = H
    OH = (H - 1) * stride - 2 * pad + KH + out_pad
    OW = OH
    rows_out = B * OH
    rows_pad = _round8(rows_out)
    lanes_out = OW * Co
    if lanes_out_pad is None:
        lanes_out_pad = lanes_out
    S = np.zeros((KH * rows_pad, rows_in_pad), np.float32)
    for t in range(KH):
        for b in range(B):
            for oh in range(OH):
                num = oh + pad - t
                if num % stride == 0:
                    ih = num // stride
                    if 0 <= ih < H:
                        S[t * rows_pad + b * OH + oh, b * H + ih] = 1.0
    M = np.zeros((KH * lanes_in_pad, lanes_out_pad), np.float32)
    for t in range(KH):
        for iw in range(W):
            for ow in range(OW):
                j = ow + pad - iw * stride
                if 0 <= j < KW:
                    M[t * lanes_in_pad + iw * Ci: t * lanes_in_pad + (iw + 1) * Ci,
                      ow * Co:(ow + 1) * Co] = w[:, :, t, j]
    bcols = np.zeros((1, lanes_out_pad), np.float32)
    bcols[0, :lanes_out] = np.tile(np.asarray(bias, np.float32), OW)
    return S, M, bcols, OH, rows_out, rows_pad, lanes_out_pad


def _fc_latent_stacked(w_oi, bias, B, H, C, rows_in_pad, lanes_in_pad, lanes_out_pad):
    """fc_latent on the NCHW-flattened bottleneck (flat idx = c*H*W + h*W + w), taps over h."""
    w = np.asarray(w_oi, np.float32)          # [L, C*H*W]
    L = w.shape[0]
    W = H
    rows_out = B
    rows_pad = _round8(rows_out)
    S = np.zeros((H * rows_pad, rows_in_pad), np.float32)
    for t in range(H):
        for b in range(B):
            S[t * rows_pad + b, b * H + t] = 1.0
    M = np.zeros((H * lanes_in_pad, lanes_out_pad), np.float32)
    for t in range(H):
        for wp in range(W):
            for c in range(C):
                M[t * lanes_in_pad + wp * C + c, :L] = w[:, c * H * W + t * W + wp]
    bcols = np.zeros((1, lanes_out_pad), np.float32)
    bcols[0, :L] = np.asarray(bias, np.float32)
    return S, M, bcols, rows_out, rows_pad


def _fc_dec_stacked(w_oi, bias, B, H, C, rows_in_pad, lanes_in_pad):
    """fc_dec whose output is produced directly in rows (b,h) x lanes (w,c) layout."""
    w = np.asarray(w_oi, np.float32)          # [C*H*W, L]
    L = w.shape[1]
    W = H
    rows_out = B * H
    rows_pad = _round8(rows_out)
    lanes_out = W * C
    S = np.zeros((H * rows_pad, rows_in_pad), np.float32)
    for t in range(H):
        for b in range(B):
            S[t * rows_pad + b * H + t, b] = 1.0
    M = np.zeros((H * lanes_in_pad, lanes_out), np.float32)
    for t in range(H):
        for wp in range(W):
            for c in range(C):
                M[t * lanes_in_pad: t * lanes_in_pad + L, wp * C + c] = w[c * H * W + t * W + wp, :]
    bv = np.asarray(bias, np.float32)
    bfull = np.zeros((rows_pad, lanes_out), np.float32)
    for b in range(B):
        for h in range(H):
            for wp in range(W):
                bfull[b * H + h, wp * C:(wp + 1) * C] = bv[np.arange(C) * H * W + h * W + wp]
    return S, M, bfull, rows_out, rows_pad, lanes_out


def prepare_inputs(params, batch):
    """Precompute all kernel operands (done once, outside jit)."""
    B = batch
    inputs, schema = [], []

    def add(S, M, bias, rows_valid, rows_pad, act, bn=None):
        taps = S.shape[0] // rows_pad
        inputs.append(jnp.asarray(S, jnp.bfloat16))      # 0/1 gather -> exact in bf16
        inputs.append(jnp.asarray(M, jnp.bfloat16))
        inputs.append(jnp.asarray(bias, jnp.float32))
        entry = dict(taps=taps, rows_valid=rows_valid, rows_pad=rows_pad, act=act, bn=None)
        if bn is not None:
            gamma, beta, C, OW, count = bn
            inputs.append(jnp.asarray(np.tile(np.asarray(gamma, np.float32), OW)[None, :], jnp.float32))
            inputs.append(jnp.asarray(np.tile(np.asarray(beta, np.float32), OW)[None, :], jnp.float32))
            entry["bn"] = dict(C=int(C), OW=int(OW), count=float(count))
        schema.append(entry)

    # ----- encoder: Conv -> ReLU -> BatchNorm (batch statistics), 3x -----
    rows_in, lanes_in = B * IMG, LANE
    S, M, b, OH, Co, OW, rv, rp, lo = _conv_stacked(params["c1_w"], params["c1_b"], B, IMG, 2, 2, rows_in, lanes_in)
    add(S, M, b, rv, rp, "relu", bn=(params["bn1_g"], params["bn1_b"], Co, OW, B * OH * OW))
    H, rows_in, lanes_in = OH, rp, lo

    S, M, b, OH, Co, OW, rv, rp, lo = _conv_stacked(params["c2_w"], params["c2_b"], B, H, 2, 1, rows_in, lanes_in)
    add(S, M, b, rv, rp, "relu", bn=(params["bn2_g"], params["bn2_b"], Co, OW, B * OH * OW))
    H, rows_in, lanes_in = OH, rp, lo

    S, M, b, OH, Co, OW, rv, rp, lo = _conv_stacked(params["c3_w"], params["c3_b"], B, H, 2, 1, rows_in, lanes_in)
    add(S, M, b, rv, rp, "relu", bn=(params["bn3_g"], params["bn3_b"], Co, OW, B * OH * OW))
    H, C, rows_in, lanes_in = OH, Co, rp, lo          # H=3, C=128, lanes_in=384

    # ----- bottleneck linears (latent lanes padded to 128 for dense stores) -----
    S, M, b, rv, rp = _fc_latent_stacked(params["fc_lat_w"], params["fc_lat_b"], B, H, C, rows_in, lanes_in, LANE)
    add(S, M, b, rv, rp, "none")
    rows_in, lanes_in = rp, LANE

    S, M, b, rv, rp, lo = _fc_dec_stacked(params["fc_dec_w"], params["fc_dec_b"], B, H, C, rows_in, lanes_in)
    add(S, M, b, rv, rp, "none")
    rows_in, lanes_in = rp, lo

    # ----- decoder: ConvT+ReLU, ConvT+ReLU, ConvT+Sigmoid -----
    S, M, b, OH, rv, rp, lo = _deconv_stacked(params["d1_w"], params["d1_b"], B, H, 2, 1, 1, rows_in, lanes_in)
    add(S, M, b, rv, rp, "relu")
    H, rows_in, lanes_in = OH, rp, lo

    S, M, b, OH, rv, rp, lo = _deconv_stacked(params["d2_w"], params["d2_b"], B, H, 2, 1, 1, rows_in, lanes_in)
    add(S, M, b, rv, rp, "relu")
    H, rows_in, lanes_in = OH, rp, lo

    S, M, b, OH, rv, rp, lo = _deconv_stacked(params["d3_w"], params["d3_b"], B, H, 2, 1, 1,
                                              rows_in, lanes_in, lanes_out_pad=LANE)
    add(S, M, b, rv, rp, "sigmoid")
    assert OH == IMG and rv == B * IMG and rp == B * IMG
    return tuple(inputs), tuple(schema), (rp, LANE)


# ----------------------------------------------------------------------------
# In-kernel helpers + the single fused Pallas kernel.
# ----------------------------------------------------------------------------
def _ring_group_sum(x, group_stride, ngroups):
    """x lanes laid out as (group, channel), channel fastest (stride = group_stride).
    Returns the per-channel sum over all `ngroups` groups, replicated into every
    group slot — reduce AND broadcast in one pass, entirely on XLU/VPU (no MXU)."""
    acc = x
    done = 1
    for f in _factorize(ngroups):
        nxt = acc
        for j in range(1, f):
            nxt = nxt + pltpu.roll(acc, shift=j * done * group_stride, axis=1)
        acc = nxt
        done *= f
    return acc


def _make_kernel(schema):
    def kernel(*refs):
        out_ref = refs[-1]
        act = refs[0][...].astype(jnp.bfloat16)          # rows (b, h), lanes (w, c)
        idx = 1
        y = None
        for layer in schema:
            s_ref, m_ref, b_ref = refs[idx], refs[idx + 1], refs[idx + 2]
            idx += 3
            T, rp = layer["taps"], layer["rows_pad"]
            # (1) one stacked gather matmul: S is 0/1, an exact bf16 row gather.
            p = jnp.dot(s_ref[...], act, preferred_element_type=jnp.float32)
            # (2) lay the per-tap slabs side by side along lanes (slab widths are
            #     multiples of 128 and row offsets multiples of 8 -> pure relayout).
            p_wide = jnp.concatenate([p[t * rp:(t + 1) * rp, :] for t in range(T)], axis=1)
            # (3) one long-K matmul folding horizontal taps + channel mixing.
            y = jnp.dot(p_wide.astype(jnp.bfloat16), m_ref[...],
                        preferred_element_type=jnp.float32) + b_ref[...]
            if layer["act"] == "relu":
                y = jnp.maximum(y, 0.0)
            elif layer["act"] == "sigmoid":
                # numerically stable sigmoid on the EUP (tanh), no VPU divide
                y = 0.5 * (jnp.tanh(0.5 * y) + 1.0)
            bn = layer["bn"]
            if bn is not None:
                g_ref, be_ref = refs[idx], refs[idx + 1]
                idx += 2
                C, OW, inv_cnt = bn["C"], bn["OW"], 1.0 / bn["count"]
                rv = layer["rows_valid"]
                if rv != rp:     # padded rows must not pollute the batch statistics
                    rmask = (jax.lax.broadcasted_iota(jnp.int32, (rp, 1), 0) < rv
                             ).astype(jnp.float32)
                else:
                    rmask = None
                ym = y if rmask is None else y * rmask
                # per-channel mean/var, reduce+broadcast via lane rolls (no MXU pooling)
                mean = _ring_group_sum(jnp.sum(ym, axis=0, keepdims=True), C, OW) * inv_cnt
                d = y - mean
                dm = d if rmask is None else d * rmask
                var = _ring_group_sum(jnp.sum(dm * dm, axis=0, keepdims=True), C, OW) * inv_cnt
                y = d * (g_ref[...] * jax.lax.rsqrt(var + EPS)) + be_ref[...]
            act = y.astype(jnp.bfloat16)
        out_ref[...] = y                                   # (B*24, 128) f32, lane-dense
    return kernel


def build_ae_forward(params, batch):
    operands, schema, out_dims = prepare_inputs(params, batch)
    kernel = _make_kernel(schema)
    n_in = 1 + len(operands)
    vmem = pl.BlockSpec(memory_space=pltpu.MemorySpace.VMEM)
    call = pl.pallas_call(
        kernel,
        out_shape=jax.ShapeDtypeStruct(out_dims, jnp.float32),
        in_specs=[vmem] * n_in,
        out_specs=vmem,
    )

    @jax.jit
    def forward(x_nchw, ops):
        x2d = x_nchw.astype(jnp.float32).reshape(batch * IMG, IMG)   # C_in == 1
        x2d = jnp.pad(x2d, ((0, 0), (0, LANE - IMG)))                # lane-dense input
        y = call(x2d, *ops)
        return y[:, :IMG].reshape(batch, 1, IMG, IMG)

    return forward, operands


# ----------------------------------------------------------------------------
# Parameters (deterministic synthetic init; shapes match the PyTorch module)
# ----------------------------------------------------------------------------
def init_params(key, latent_dim=32):
    keys = jax.random.split(key, 16)

    def w(k, shape, fan_in):
        return jax.random.normal(k, shape, jnp.float32) * (1.0 / math.sqrt(fan_in))

    p = {}
    p["c1_w"] = w(keys[0], (32, 1, 5, 5), 1 * 5 * 5)
    p["c1_b"] = jnp.zeros((32,), jnp.float32)
    p["c2_w"] = w(keys[1], (64, 32, 3, 3), 32 * 3 * 3)
    p["c2_b"] = jnp.zeros((64,), jnp.float32)
    p["c3_w"] = w(keys[2], (128, 64, 3, 3), 64 * 3 * 3)
    p["c3_b"] = jnp.zeros((128,), jnp.float32)
    p["bn1_g"], p["bn1_b"] = jnp.ones((32,), jnp.float32), jnp.zeros((32,), jnp.float32)
    p["bn2_g"], p["bn2_b"] = jnp.ones((64,), jnp.float32), jnp.zeros((64,), jnp.float32)
    p["bn3_g"], p["bn3_b"] = jnp.ones((128,), jnp.float32), jnp.zeros((128,), jnp.float32)
    p["fc_lat_w"] = w(keys[3], (latent_dim, 128 * 3 * 3), 128 * 3 * 3)
    p["fc_lat_b"] = jnp.zeros((latent_dim,), jnp.float32)
    p["fc_dec_w"] = w(keys[4], (128 * 3 * 3, latent_dim), latent_dim)
    p["fc_dec_b"] = jnp.zeros((128 * 3 * 3,), jnp.float32)
    p["d1_w"] = w(keys[5], (128, 64, 3, 3), 128 * 3 * 3)
    p["d1_b"] = jnp.zeros((64,), jnp.float32)
    p["d2_w"] = w(keys[6], (64, 32, 3, 3), 64 * 3 * 3)
    p["d2_b"] = jnp.zeros((32,), jnp.float32)
    p["d3_w"] = w(keys[7], (32, 1, 3, 3), 32 * 3 * 3)
    p["d3_b"] = jnp.zeros((1,), jnp.float32)
    return p


# ----------------------------------------------------------------------------
# Pure-JAX f32 reference (training-mode BN, PyTorch ConvTranspose semantics)
# ----------------------------------------------------------------------------
def _conv_ref(x, w, b, s, p):
    y = jax.lax.conv_general_dilated(
        x, w, window_strides=(s, s), padding=((p, p), (p, p)),
        dimension_numbers=("NCHW", "OIHW", "NCHW"))
    return y + b.reshape(1, -1, 1, 1)


def _deconv_ref(x, w, b, s, p, op):
    Ci, Co, K, _ = w.shape
    w_flip = jnp.transpose(w, (1, 0, 2, 3))[:, :, ::-1, ::-1]
    y = jax.lax.conv_general_dilated(
        x, w_flip, window_strides=(1, 1),
        padding=((K - 1 - p, K - 1 - p + op),) * 2,
        lhs_dilation=(s, s),
        dimension_numbers=("NCHW", "OIHW", "NCHW"))
    return y + b.reshape(1, -1, 1, 1)


def _bn_ref(x, g, b):
    mean = jnp.mean(x, axis=(0, 2, 3), keepdims=True)
    var = jnp.mean((x - mean) ** 2, axis=(0, 2, 3), keepdims=True)
    return (x - mean) * jax.lax.rsqrt(var + EPS) * g.reshape(1, -1, 1, 1) + b.reshape(1, -1, 1, 1)


def ae_reference(params, x):
    h = _bn_ref(jax.nn.relu(_conv_ref(x, params["c1_w"], params["c1_b"], 2, 2)), params["bn1_g"], params["bn1_b"])
    h = _bn_ref(jax.nn.relu(_conv_ref(h, params["c2_w"], params["c2_b"], 2, 1)), params["bn2_g"], params["bn2_b"])
    h = _bn_ref(jax.nn.relu(_conv_ref(h, params["c3_w"], params["c3_b"], 2, 1)), params["bn3_g"], params["bn3_b"])
    z = h.reshape(x.shape[0], -1) @ params["fc_lat_w"].T + params["fc_lat_b"]
    d = (z @ params["fc_dec_w"].T + params["fc_dec_b"]).reshape(x.shape[0], 128, 3, 3)
    d = jax.nn.relu(_deconv_ref(d, params["d1_w"], params["d1_b"], 2, 1, 1))
    d = jax.nn.relu(_deconv_ref(d, params["d2_w"], params["d2_b"], 2, 1, 1))
    d = jax.nn.sigmoid(_deconv_ref(d, params["d3_w"], params["d3_b"], 2, 1, 1))
    return d


if __name__ == "__main__":
    key = jax.random.PRNGKey(0)
    pkey, xkey = jax.random.split(key)
    params = init_params(pkey, latent_dim=32)

    B = 2
    x = jax.random.uniform(xkey, (B, 1, IMG, IMG), dtype=jnp.float32)

    forward, operands = build_ae_forward(params, B)
    out = jax.block_until_ready(forward(x, operands))

    assert out.shape == (B, 1, IMG, IMG), out.shape
    assert out.dtype == jnp.float32
    assert bool(jnp.all(jnp.isfinite(out)))
    assert bool(jnp.all(out >= 0.0)) and bool(jnp.all(out <= 1.0))

    # Cross-check against an f32 pure-JAX reference (kernel uses bf16 weights /
    # activations internally, so compare with a loose absolute tolerance).
    ref = jax.block_until_ready(ae_reference(params, x))
    max_err = float(jnp.max(jnp.abs(out - ref)))
    assert max_err < 5e-2, f"kernel vs reference mismatch: max abs err {max_err}"

    print("KERNEL_OK")
</pallas_src>

<mosaic_0001>
module attributes {stable_mosaic.version = 11 : i64} {
  func.func @kernel(%arg0: memref<48x128xf32, #tpu.memory_space<vmem>>, %arg1: memref<120x48xbf16, #tpu.memory_space<vmem>>, %arg2: memref<640x384xbf16, #tpu.memory_space<vmem>>, %arg3: memref<1x384xf32, #tpu.memory_space<vmem>>, %arg4: memref<1x384xf32, #tpu.memory_space<vmem>>, %arg5: memref<1x384xf32, #tpu.memory_space<vmem>>, %arg6: memref<48x24xbf16, #tpu.memory_space<vmem>>, %arg7: memref<1152x384xbf16, #tpu.memory_space<vmem>>, %arg8: memref<1x384xf32, #tpu.memory_space<vmem>>, %arg9: memref<1x384xf32, #tpu.memory_space<vmem>>, %arg10: memref<1x384xf32, #tpu.memory_space<vmem>>, %arg11: memref<24x16xbf16, #tpu.memory_space<vmem>>, %arg12: memref<1152x384xbf16, #tpu.memory_space<vmem>>, %arg13: memref<1x384xf32, #tpu.memory_space<vmem>>, %arg14: memref<1x384xf32, #tpu.memory_space<vmem>>, %arg15: memref<1x384xf32, #tpu.memory_space<vmem>>, %arg16: memref<24x8xbf16, #tpu.memory_space<vmem>>, %arg17: memref<1152x128xbf16, #tpu.memory_space<vmem>>, %arg18: memref<1x128xf32, #tpu.memory_space<vmem>>, %arg19: memref<24x8xbf16, #tpu.memory_space<vmem>>, %arg20: memref<384x384xbf16, #tpu.memory_space<vmem>>, %arg21: memref<8x384xf32, #tpu.memory_space<vmem>>, %arg22: memref<48x8xbf16, #tpu.memory_space<vmem>>, %arg23: memref<1152x384xbf16, #tpu.memory_space<vmem>>, %arg24: memref<1x384xf32, #tpu.memory_space<vmem>>, %arg25: memref<72x16xbf16, #tpu.memory_space<vmem>>, %arg26: memref<1152x384xbf16, #tpu.memory_space<vmem>>, %arg27: memref<1x384xf32, #tpu.memory_space<vmem>>, %arg28: memref<144x24xbf16, #tpu.memory_space<vmem>>, %arg29: memref<1152x128xbf16, #tpu.memory_space<vmem>>, %arg30: memref<1x128xf32, #tpu.memory_space<vmem>>, %arg31: memref<48x128xf32, #tpu.memory_space<vmem>>) attributes {dimension_semantics = [], scalar_prefetch = 0 : i64, scratch_operands = 0 : i64, tpu.core_type = #tpu.core_type<tc>} {
    %c0 = arith.constant 0 : index
    %c0_0 = arith.constant 0 : index
    %0 = vector.load %arg0[%c0, %c0_0] : memref<48x128xf32, #tpu.memory_space<vmem>>, vector<48x128xf32>
    %1 = arith.truncf %0 : vector<48x128xf32> to vector<48x128xbf16>
    %c0_1 = arith.constant 0 : index
    %c0_2 = arith.constant 0 : index
    %2 = vector.load %arg1[%c0_1, %c0_2] : memref<120x48xbf16, #tpu.memory_space<vmem>>, vector<120x48xbf16>
    %cst = arith.constant dense<0.000000e+00> : vector<120x128xf32>
    %3 = tpu.matmul %2, %1, %cst {dimension_numbers = #tpu.dot_dimension_numbers<[1], [0], [0], [1], [0, 0, 1, 1], [], []>} : vector<120x48xbf16>, vector<48x128xbf16>, vector<120x128xf32> -> vector<120x128xf32>
    %4 = vector.extract_strided_slice %3 {offsets = [0, 0], sizes = [24, 128], strides = [1, 1]} : vector<120x128xf32> to vector<24x128xf32>
    %5 = vector.extract_strided_slice %3 {offsets = [24, 0], sizes = [24, 128], strides = [1, 1]} : vector<120x128xf32> to vector<24x128xf32>
    %6 = vector.extract_strided_slice %3 {offsets = [48, 0], sizes = [24, 128], strides = [1, 1]} : vector<120x128xf32> to vector<24x128xf32>
    %7 = vector.extract_strided_slice %3 {offsets = [72, 0], sizes = [24, 128], strides = [1, 1]} : vector<120x128xf32> to vector<24x128xf32>
    %8 = vector.extract_strided_slice %3 {offsets = [96, 0], sizes = [24, 128], strides = [1, 1]} : vector<120x128xf32> to vector<24x128xf32>
    %9 = tpu.concatenate %4, %5, %6, %7, %8 in 1 : vector<24x128xf32>, vector<24x128xf32>, vector<24x128xf32>, vector<24x128xf32>, vector<24x128xf32> -> vector<24x640xf32>
    %10 = arith.truncf %9 : vector<24x640xf32> to vector<24x640xbf16>
    %c0_3 = arith.constant 0 : index
    %c0_4 = arith.constant 0 : index
    %11 = vector.load %arg2[%c0_3, %c0_4] : memref<640x384xbf16, #tpu.memory_space<vmem>>, vector<640x384xbf16>
    %cst_5 = arith.constant dense<0.000000e+00> : vector<24x384xf32>
    %12 = tpu.matmul %10, %11, %cst_5 {dimension_numbers = #tpu.dot_dimension_numbers<[1], [0], [0], [1], [0, 0, 1, 1], [], []>} : vector<24x640xbf16>, vector<640x384xbf16>, vector<24x384xf32> -> vector<24x384xf32>
    %c0_6 = arith.constant 0 : index
    %c0_7 = arith.constant 0 : index
    %13 = vector.load %arg3[%c0_6, %c0_7] : memref<1x384xf32, #tpu.memory_space<vmem>>, vector<1x384xf32>
    %14 = vector.broadcast %13 : vector<1x384xf32> to vector<24x384xf32>
    %15 = arith.addf %12, %14 : vector<24x384xf32>
    %cst_8 = arith.constant 0.000000e+00 : f32
    %16 = vector.broadcast %cst_8 : f32 to vector<24x384xf32>
    %17 = arith.maximumf %15, %16 : vector<24x384xf32>
    %cst_9 = arith.constant dense<0.000000e+00> : vector<384xf32>
    %18 = vector.multi_reduction <add>, %17, %cst_9 [0] : vector<24x384xf32> to vector<384xf32>
    %19 = vector.shape_cast %18 : vector<384xf32> to vector<1x384xf32>
    %c32_i32 = arith.constant 32 : i32
    %20 = tpu.dynamic_rotate %19 by %c32_i32 dim 1 : vector<1x384xf32>, i32 -> vector<1x384xf32>
    %21 = arith.addf %19, %20 : vector<1x384xf32>
    %c64_i32 = arith.constant 64 : i32
    %22 = tpu.dynamic_rotate %21 by %c64_i32 dim 1 : vector<1x384xf32>, i32 -> vector<1x384xf32>
    %23 = arith.addf %21, %22 : vector<1x384xf32>
    %c128_i32 = arith.constant 128 : i32
    %24 = tpu.dynamic_rotate %23 by %c128_i32 dim 1 : vector<1x384xf32>, i32 -> vector<1x384xf32>
    %25 = arith.addf %23, %24 : vector<1x384xf32>
    %c256_i32 = arith.constant 256 : i32
    %26 = tpu.dynamic_rotate %23 by %c256_i32 dim 1 : vector<1x384xf32>, i32 -> vector<1x384xf32>
    %27 = arith.addf %25, %26 : vector<1x384xf32>
    %cst_10 = arith.constant 0.00347222225 : f32
    %28 = vector.broadcast %cst_10 : f32 to vector<1x384xf32>
    %29 = arith.mulf %27, %28 : vector<1x384xf32>
    %30 = vector.broadcast %29 : vector<1x384xf32> to vector<24x384xf32>
    %31 = arith.subf %17, %30 : vector<24x384xf32>
    %32 = arith.mulf %31, %31 : vector<24x384xf32>
    %cst_11 = arith.constant dense<0.000000e+00> : vector<384xf32>
    %33 = vector.multi_reduction <add>, %32, %cst_11 [0] : vector<24x384xf32> to vector<384xf32>
    %34 = vector.shape_cast %33 : vector<384xf32> to vector<1x384xf32>
    %c32_i32_12 = arith.constant 32 : i32
    %35 = tpu.dynamic_rotate %34 by %c32_i32_12 dim 1 : vector<1x384xf32>, i32 -> vector<1x384xf32>
    %36 = arith.addf %34, %35 : vector<1x384xf32>
    %c64_i32_13 = arith.constant 64 : i32
    %37 = tpu.dynamic_rotate %36 by %c64_i32_13 dim 1 : vector<1x384xf32>, i32 -> vector<1x384xf32>
    %38 = arith.addf %36, %37 : vector<1x384xf32>
    %c128_i32_14 = arith.constant 128 : i32
    %39 = tpu.dynamic_rotate %38 by %c128_i32_14 dim 1 : vector<1x384xf32>, i32 -> vector<1x384xf32>
    %40 = arith.addf %38, %39 : vector<1x384xf32>
    %c256_i32_15 = arith.constant 256 : i32
    %41 = tpu.dynamic_rotate %38 by %c256_i32_15 dim 1 : vector<1x384xf32>, i32 -> vector<1x384xf32>
    %42 = arith.addf %40, %41 : vector<1x384xf32>
    %cst_16 = arith.constant 0.00347222225 : f32
    %43 = vector.broadcast %cst_16 : f32 to vector<1x384xf32>
    %44 = arith.mulf %42, %43 : vector<1x384xf32>
    %c0_17 = arith.constant 0 : index
    %c0_18 = arith.constant 0 : index
    %45 = vector.load %arg4[%c0_17, %c0_18] : memref<1x384xf32, #tpu.memory_space<vmem>>, vector<1x384xf32>
    %cst_19 = arith.constant 9.99999974E-6 : f32
    %46 = vector.broadcast %cst_19 : f32 to vector<1x384xf32>
    %47 = arith.addf %44, %46 : vector<1x384xf32>
    %48 = math.rsqrt %47 : vector<1x384xf32>
    %49 = arith.mulf %45, %48 : vector<1x384xf32>
    %50 = vector.broadcast %49 : vector<1x384xf32> to vector<24x384xf32>
    %51 = arith.mulf %31, %50 : vector<24x384xf32>
    %c0_20 = arith.constant 0 : index
    %c0_21 = arith.constant 0 : index
    %52 = vector.load %arg5[%c0_20, %c0_21] : memref<1x384xf32, #tpu.memory_space<vmem>>, vector<1x384xf32>
    %53 = vector.broadcast %52 : vector<1x384xf32> to vector<24x384xf32>
    %54 = arith.addf %51, %53 : vector<24x384xf32>
    %55 = arith.truncf %54 : vector<24x384xf32> to vector<24x384xbf16>
    %c0_22 = arith.constant 0 : index
    %c0_23 = arith.constant 0 : index
    %56 = vector.load %arg6[%c0_22, %c0_23] : memref<48x24xbf16, #tpu.memory_space<vmem>>, vector<48x24xbf16>
    %cst_24 = arith.constant dense<0.000000e+00> : vector<48x384xf32>
    %57 = tpu.matmul %56, %55, %cst_24 {dimension_numbers = #tpu.dot_dimension_numbers<[1], [0], [0], [1], [0, 0, 1, 1], [], []>} : vector<48x24xbf16>, vector<24x384xbf16>, vector<48x384xf32> -> vector<48x384xf32>
    %58 = vector.extract_strided_slice %57 {offsets = [0, 0], sizes = [16, 384], strides = [1, 1]} : vector<48x384xf32> to vector<16x384xf32>
    %59 = vector.extract_strided_slice %57 {offsets = [16, 0], sizes = [16, 384], strides = [1, 1]} : vector<48x384xf32> to vector<16x384xf32>
    %60 = vector.extract_strided_slice %57 {offsets = [32, 0], sizes = [16, 384], strides = [1, 1]} : vector<48x384xf32> to vector<16x384xf32>
    %61 = tpu.concatenate %58, %59, %60 in 1 : vector<16x384xf32>, vector<16x384xf32>, vector<16x384xf32> -> vector<16x1152xf32>
    %62 = arith.truncf %61 : vector<16x1152xf32> to vector<16x1152xbf16>
    %c0_25 = arith.constant 0 : index
    %c0_26 = arith.constant 0 : index
    %63 = vector.load %arg7[%c0_25, %c0_26] : memref<1152x384xbf16, #tpu.memory_space<vmem>>, vector<1152x384xbf16>
    %cst_27 = arith.constant dense<0.000000e+00> : vector<16x384xf32>
    %64 = tpu.matmul %62, %63, %cst_27 {dimension_numbers = #tpu.dot_dimension_numbers<[1], [0], [0], [1], [0, 0, 1, 1], [], []>} : vector<16x1152xbf16>, vector<1152x384xbf16>, vector<16x384xf32> -> vector<16x384xf32>
    %c0_28 = arith.constant 0 : index
    %c0_29 = arith.constant 0 : index
    %65 = vector.load %arg8[%c0_28, %c0_29] : memref<1x384xf32, #tpu.memory_space<vmem>>, vector<1x384xf32>
    %66 = vector.broadcast %65 : vector<1x384xf32> to vector<16x384xf32>
    %67 = arith.addf %64, %66 : vector<16x384xf32>
    %cst_30 = arith.constant 0.000000e+00 : f32
    %68 = vector.broadcast %cst_30 : f32 to vector<16x384xf32>
    %69 = arith.maximumf %67, %68 : vector<16x384xf32>
    %70 = tpu.iota {dimensions = array<i32: 0>} : vector<16x1xi32>
    %c12_i32 = arith.constant 12 : i32
    %71 = vector.broadcast %c12_i32 : i32 to vector<16x1xi32>
    %72 = arith.cmpi slt, %70, %71 : vector<16x1xi32>
    %73 = arith.extui %72 : vector<16x1xi1> to vector<16x1xi32>
    %74 = arith.sitofp %73 : vector<16x1xi32> to vector<16x1xf32>
    %75 = vector.broadcast %74 : vector<16x1xf32> to vector<16x384xf32>
    %76 = arith.mulf %69, %75 : vector<16x384xf32>
    %cst_31 = arith.constant dense<0.000000e+00> : vector<384xf32>
    %77 = vector.multi_reduction <add>, %76, %cst_31 [0] : vector<16x384xf32> to vector<384xf32>
    %78 = vector.shape_cast %77 : vector<384xf32> to vector<1x384xf32>
    %c64_i32_32 = arith.constant 64 : i32
    %79 = tpu.dynamic_rotate %78 by %c64_i32_32 dim 1 : vector<1x384xf32>, i32 -> vector<1x384xf32>
    %80 = arith.addf %78, %79 : vector<1x384xf32>
    %c128_i32_33 = arith.constant 128 : i32
    %81 = tpu.dynamic_rotate %80 by %c128_i32_33 dim 1 : vector<1x384xf32>, i32 -> vector<1x384xf32>
    %82 = arith.addf %80, %81 : vector<1x384xf32>
    %c256_i32_34 = arith.constant 256 : i32
    %83 = tpu.dynamic_rotate %80 by %c256_i32_34 dim 1 : vector<1x384xf32>, i32 -> vector<1x384xf32>
    %84 = arith.addf %82, %83 : vector<1x384xf32>
    %cst_35 = arith.constant 0.013888889 : f32
    %85 = vector.broadcast %cst_35 : f32 to vector<1x384xf32>
    %86 = arith.mulf %84, %85 : vector<1x384xf32>
    %87 = vector.broadcast %86 : vector<1x384xf32> to vector<16x384xf32>
    %88 = arith.subf %69, %87 : vector<16x384xf32>
    %89 = vector.broadcast %74 : vector<16x1xf32> to vector<16x384xf32>
    %90 = arith.mulf %88, %89 : vector<16x384xf32>
    %91 = arith.mulf %90, %90 : vector<16x384xf32>
    %cst_36 = arith.constant dense<0.000000e+00> : vector<384xf32>
    %92 = vector.multi_reduction <add>, %91, %cst_36 [0] : vector<16x384xf32> to vector<384xf32>
    %93 = vector.shape_cast %92 : vector<384xf32> to vector<1x384xf32>
    %c64_i32_37 = arith.constant 64 : i32
    %94 = tpu.dynamic_rotate %93 by %c64_i32_37 dim 1 : vector<1x384xf32>, i32 -> vector<1x384xf32>
    %95 = arith.addf %93, %94 : vector<1x384xf32>
    %c128_i32_38 = arith.constant 128 : i32
    %96 = tpu.dynamic_rotate %95 by %c128_i32_38 dim 1 : vector<1x384xf32>, i32 -> vector<1x384xf32>
    %97 = arith.addf %95, %96 : vector<1x384xf32>
    %c256_i32_39 = arith.constant 256 : i32
    %98 = tpu.dynamic_rotate %95 by %c256_i32_39 dim 1 : vector<1x384xf32>, i32 -> vector<1x384xf32>
    %99 = arith.addf %97, %98 : vector<1x384xf32>
    %cst_40 = arith.constant 0.013888889 : f32
    %100 = vector.broadcast %cst_40 : f32 to vector<1x384xf32>
    %101 = arith.mulf %99, %100 : vector<1x384xf32>
    %c0_41 = arith.constant 0 : index
    %c0_42 = arith.constant 0 : index
    %102 = vector.load %arg9[%c0_41, %c0_42] : memref<1x384xf32, #tpu.memory_space<vmem>>, vector<1x384xf32>
    %cst_43 = arith.constant 9.99999974E-6 : f32
    %103 = vector.broadcast %cst_43 : f32 to vector<1x384xf32>
    %104 = arith.addf %101, %103 : vector<1x384xf32>
    %105 = math.rsqrt %104 : vector<1x384xf32>
    %106 = arith.mulf %102, %105 : vector<1x384xf32>
    %107 = vector.broadcast %106 : vector<1x384xf32> to vector<16x384xf32>
    %108 = arith.mulf %88, %107 : vector<16x384xf32>
    %c0_44 = arith.constant 0 : index
    %c0_45 = arith.constant 0 : index
    %109 = vector.load %arg10[%c0_44, %c0_45] : memref<1x384xf32, #tpu.memory_space<vmem>>, vector<1x384xf32>
    %110 = vector.broadcast %109 : vector<1x384xf32> to vector<16x384xf32>
    %111 = arith.addf %108, %110 : vector<16x384xf32>
    %112 = arith.truncf %111 : vector<16x384xf32> to vector<16x384xbf16>
    %c0_46 = arith.constant 0 : index
    %c0_47 = arith.constant 0 : index
    %113 = vector.load %arg11[%c0_46, %c0_47] : memref<24x16xbf16, #tpu.memory_space<vmem>>, vector<24x16xbf16>
    %cst_48 = arith.constant dense<0.000000e+00> : vector<24x384xf32>
    %114 = tpu.matmul %113, %112, %cst_48 {dimension_numbers = #tpu.dot_dimension_numbers<[1], [0], [0], [1], [0, 0, 1, 1], [], []>} : vector<24x16xbf16>, vector<16x384xbf16>, vector<24x384xf32> -> vector<24x384xf32>
    %115 = vector.extract_strided_slice %114 {offsets = [0, 0], sizes = [8, 384], strides = [1, 1]} : vector<24x384xf32> to vector<8x384xf32>
    %116 = vector.extract_strided_slice %114 {offsets = [8, 0], sizes = [8, 384], strides = [1, 1]} : vector<24x384xf32> to vector<8x384xf32>
    %117 = vector.extract_strided_slice %114 {offsets = [16, 0], sizes = [8, 384], strides = [1, 1]} : vector<24x384xf32> to vector<8x384xf32>
    %118 = tpu.concatenate %115, %116, %117 in 1 : vector<8x384xf32>, vector<8x384xf32>, vector<8x384xf32> -> vector<8x1152xf32>
    %119 = arith.truncf %118 : vector<8x1152xf32> to vector<8x1152xbf16>
    %c0_49 = arith.constant 0 : index
    %c0_50 = arith.constant 0 : index
    %120 = vector.load %arg12[%c0_49, %c0_50] : memref<1152x384xbf16, #tpu.memory_space<vmem>>, vector<1152x384xbf16>
    %cst_51 = arith.constant dense<0.000000e+00> : vector<8x384xf32>
    %121 = tpu.matmul %119, %120, %cst_51 {dimension_numbers = #tpu.dot_dimension_numbers<[1], [0], [0], [1], [0, 0, 1, 1], [], []>} : vector<8x1152xbf16>, vector<1152x384xbf16>, vector<8x384xf32> -> vector<8x384xf32>
    %c0_52 = arith.constant 0 : index
    %c0_53 = arith.constant 0 : index
    %122 = vector.load %arg13[%c0_52, %c0_53] : memref<1x384xf32, #tpu.memory_space<vmem>>, vector<1x384xf32>
    %123 = vector.broadcast %122 : vector<1x384xf32> to vector<8x384xf32>
    %124 = arith.addf %121, %123 : vector<8x384xf32>
    %cst_54 = arith.constant 0.000000e+00 : f32
    %125 = vector.broadcast %cst_54 : f32 to vector<8x384xf32>
    %126 = arith.maximumf %124, %125 : vector<8x384xf32>
    %127 = tpu.iota {dimensions = array<i32: 0>} : vector<8x1xi32>
    %c6_i32 = arith.constant 6 : i32
    %128 = vector.broadcast %c6_i32 : i32 to vector<8x1xi32>
    %129 = arith.cmpi slt, %127, %128 : vector<8x1xi32>
    %130 = arith.extui %129 : vector<8x1xi1> to vector<8x1xi32>
    %131 = arith.sitofp %130 : vector<8x1xi32> to vector<8x1xf32>
    %132 = vector.broadcast %131 : vector<8x1xf32> to vector<8x384xf32>
    %133 = arith.mulf %126, %132 : vector<8x384xf32>
    %cst_55 = arith.constant dense<0.000000e+00> : vector<384xf32>
    %134 = vector.multi_reduction <add>, %133, %cst_55 [0] : vector<8x384xf32> to vector<384xf32>
    %135 = vector.shape_cast %134 : vector<384xf32> to vector<1x384xf32>
    %c128_i32_56 = arith.constant 128 : i32
    %136 = tpu.dynamic_rotate %135 by %c128_i32_56 dim 1 : vector<1x384xf32>, i32 -> vector<1x384xf32>
    %137 = arith.addf %135, %136 : vector<1x384xf32>
    %c256_i32_57 = arith.constant 256 : i32
    %138 = tpu.dynamic_rotate %135 by %c256_i32_57 dim 1 : vector<1x384xf32>, i32 -> vector<1x384xf32>
    %139 = arith.addf %137, %138 : vector<1x384xf32>
    %cst_58 = arith.constant 0.055555556 : f32
    %140 = vector.broadcast %cst_58 : f32 to vector<1x384xf32>
    %141 = arith.mulf %139, %140 : vector<1x384xf32>
    %142 = vector.broadcast %141 : vector<1x384xf32> to vector<8x384xf32>
    %143 = arith.subf %126, %142 : vector<8x384xf32>
    %144 = vector.broadcast %131 : vector<8x1xf32> to vector<8x384xf32>
    %145 = arith.mulf %143, %144 : vector<8x384xf32>
    %146 = arith.mulf %145, %145 : vector<8x384xf32>
    %cst_59 = arith.constant dense<0.000000e+00> : vector<384xf32>
    %147 = vector.multi_reduction <add>, %146, %cst_59 [0] : vector<8x384xf32> to vector<384xf32>
    %148 = vector.shape_cast %147 : vector<384xf32> to vector<1x384xf32>
    %c128_i32_60 = arith.constant 128 : i32
    %149 = tpu.dynamic_rotate %148 by %c128_i32_60 dim 1 : vector<1x384xf32>, i32 -> vector<1x384xf32>
    %150 = arith.addf %148, %149 : vector<1x384xf32>
    %c256_i32_61 = arith.constant 256 : i32
    %151 = tpu.dynamic_rotate %148 by %c256_i32_61 dim 1 : vector<1x384xf32>, i32 -> vector<1x384xf32>
    %152 = arith.addf %150, %151 : vector<1x384xf32>
    %cst_62 = arith.constant 0.055555556 : f32
    %153 = vector.broadcast %cst_62 : f32 to vector<1x384xf32>
    %154 = arith.mulf %152, %153 : vector<1x384xf32>
    %c0_63 = arith.constant 0 : index
    %c0_64 = arith.constant 0 : index
    %155 = vector.load %arg14[%c0_63, %c0_64] : memref<1x384xf32, #tpu.memory_space<vmem>>, vector<1x384xf32>
    %cst_65 = arith.constant 9.99999974E-6 : f32
    %156 = vector.broadcast %cst_65 : f32 to vector<1x384xf32>
    %157 = arith.addf %154, %156 : vector<1x384xf32>
    %158 = math.rsqrt %157 : vector<1x384xf32>
    %159 = arith.mulf %155, %158 : vector<1x384xf32>
    %160 = vector.broadcast %159 : vector<1x384xf32> to vector<8x384xf32>
    %161 = arith.mulf %143, %160 : vector<8x384xf32>
    %c0_66 = arith.constant 0 : index
    %c0_67 = arith.constant 0 : index
    %162 = vector.load %arg15[%c0_66, %c0_67] : memref<1x384xf32, #tpu.memory_space<vmem>>, vector<1x384xf32>
    %163 = vector.broadcast %162 : vector<1x384xf32> to vector<8x384xf32>
    %164 = arith.addf %161, %163 : vector<8x384xf32>
    %165 = arith.truncf %164 : vector<8x384xf32> to vector<8x384xbf16>
    %c0_68 = arith.constant 0 : index
    %c0_69 = arith.constant 0 : index
    %166 = vector.load %arg16[%c0_68, %c0_69] : memref<24x8xbf16, #tpu.memory_space<vmem>>, vector<24x8xbf16>
    %cst_70 = arith.constant dense<0.000000e+00> : vector<24x384xf32>
    %167 = tpu.matmul %166, %165, %cst_70 {dimension_numbers = #tpu.dot_dimension_numbers<[1], [0], [0], [1], [0, 0, 1, 1], [], []>} : vector<24x8xbf16>, vector<8x384xbf16>, vector<24x384xf32> -> vector<24x384xf32>
    %168 = vector.extract_strided_slice %167 {offsets = [0, 0], sizes = [8, 384], strides = [1, 1]} : vector<24x384xf32> to vector<8x384xf32>
    %169 = vector.extract_strided_slice %167 {offsets = [8, 0], sizes = [8, 384], strides = [1, 1]} : vector<24x384xf32> to vector<8x384xf32>
    %170 = vector.extract_strided_slice %167 {offsets = [16, 0], sizes = [8, 384], strides = [1, 1]} : vector<24x384xf32> to vector<8x384xf32>
    %171 = tpu.concatenate %168, %169, %170 in 1 : vector<8x384xf32>, vector<8x384xf32>, vector<8x384xf32> -> vector<8x1152xf32>
    %172 = arith.truncf %171 : vector<8x1152xf32> to vector<8x1152xbf16>
    %c0_71 = arith.constant 0 : index
    %c0_72 = arith.constant 0 : index
    %173 = vector.load %arg17[%c0_71, %c0_72] : memref<1152x128xbf16, #tpu.memory_space<vmem>>, vector<1152x128xbf16>
    %cst_73 = arith.constant dense<0.000000e+00> : vector<8x128xf32>
    %174 = tpu.matmul %172, %173, %cst_73 {dimension_numbers = #tpu.dot_dimension_numbers<[1], [0], [0], [1], [0, 0, 1, 1], [], []>} : vector<8x1152xbf16>, vector<1152x128xbf16>, vector<8x128xf32> -> vector<8x128xf32>
    %c0_74 = arith.constant 0 : index
    %c0_75 = arith.constant 0 : index
    %175 = vector.load %arg18[%c0_74, %c0_75] : memref<1x128xf32, #tpu.memory_space<vmem>>, vector<1x128xf32>
    %176 = vector.broadcast %175 : vector<1x128xf32> to vector<8x128xf32>
    %177 = arith.addf %174, %176 : vector<8x128xf32>
    %178 = arith.truncf %177 : vector<8x128xf32> to vector<8x128xbf16>
    %c0_76 = arith.constant 0 : index
    %c0_77 = arith.constant 0 : index
    %179 = vector.load %arg19[%c0_76, %c0_77] : memref<24x8xbf16, #tpu.memory_space<vmem>>, vector<24x8xbf16>
    %cst_78 = arith.constant dense<0.000000e+00> : vector<24x128xf32>
    %180 = tpu.matmul %179, %178, %cst_78 {dimension_numbers = #tpu.dot_dimension_numbers<[1], [0], [0], [1], [0, 0, 1, 1], [], []>} : vector<24x8xbf16>, vector<8x128xbf16>, vector<24x128xf32> -> vector<24x128xf32>
    %181 = vector.extract_strided_slice %180 {offsets = [0, 0], sizes = [8, 128], strides = [1, 1]} : vector<24x128xf32> to vector<8x128xf32>
    %182 = vector.extract_strided_slice %180 {offsets = [8, 0], sizes = [8, 128], strides = [1, 1]} : vector<24x128xf32> to vector<8x128xf32>
    %183 = vector.extract_strided_slice %180 {offsets = [16, 0], sizes = [8, 128], strides = [1, 1]} : vector<24x128xf32> to vector<8x128xf32>
    %184 = tpu.concatenate %181, %182, %183 in 1 : vector<8x128xf32>, vector<8x128xf32>, vector<8x128xf32> -> vector<8x384xf32>
    %185 = arith.truncf %184 : vector<8x384xf32> to vector<8x384xbf16>
    %c0_79 = arith.constant 0 : index
    %c0_80 = arith.constant 0 : index
    %186 = vector.load %arg20[%c0_79, %c0_80] : memref<384x384xbf16, #tpu.memory_space<vmem>>, vector<384x384xbf16>
    %cst_81 = arith.constant dense<0.000000e+00> : vector<8x384xf32>
    %187 = tpu.matmul %185, %186, %cst_81 {dimension_numbers = #tpu.dot_dimension_numbers<[1], [0], [0], [1], [0, 0, 1, 1], [], []>} : vector<8x384xbf16>, vector<384x384xbf16>, vector<8x384xf32> -> vector<8x384xf32>
    %c0_82 = arith.constant 0 : index
    %c0_83 = arith.constant 0 : index
    %188 = vector.load %arg21[%c0_82, %c0_83] : memref<8x384xf32, #tpu.memory_space<vmem>>, vector<8x384xf32>
    %189 = arith.addf %187, %188 : vector<8x384xf32>
    %190 = arith.truncf %189 : vector<8x384xf32> to vector<8x384xbf16>
    %c0_84 = arith.constant 0 : index
    %c0_85 = arith.constant 0 : index
    %191 = vector.load %arg22[%c0_84, %c0_85] : memref<48x8xbf16, #tpu.memory_space<vmem>>, vector<48x8xbf16>
    %cst_86 = arith.constant dense<0.000000e+00> : vector<48x384xf32>
    %192 = tpu.matmul %191, %190, %cst_86 {dimension_numbers = #tpu.dot_dimension_numbers<[1], [0], [0], [1], [0, 0, 1, 1], [], []>} : vector<48x8xbf16>, vector<8x384xbf16>, vector<48x384xf32> -> vector<48x384xf32>
    %193 = vector.extract_strided_slice %192 {offsets = [0, 0], sizes = [16, 384], strides = [1, 1]} : vector<48x384xf32> to vector<16x384xf32>
    %194 = vector.extract_strided_slice %192 {offsets = [16, 0], sizes = [16, 384], strides = [1, 1]} : vector<48x384xf32> to vector<16x384xf32>
    %195 = vector.extract_strided_slice %192 {offsets = [32, 0], sizes = [16, 384], strides = [1, 1]} : vector<48x384xf32> to vector<16x384xf32>
    %196 = tpu.concatenate %193, %194, %195 in 1 : vector<16x384xf32>, vector<16x384xf32>, vector<16x384xf32> -> vector<16x1152xf32>
    %197 = arith.truncf %196 : vector<16x1152xf32> to vector<16x1152xbf16>
    %c0_87 = arith.constant 0 : index
    %c0_88 = arith.constant 0 : index
    %198 = vector.load %arg23[%c0_87, %c0_88] : memref<1152x384xbf16, #tpu.memory_space<vmem>>, vector<1152x384xbf16>
    %cst_89 = arith.constant dense<0.000000e+00> : vector<16x384xf32>
    %199 = tpu.matmul %197, %198, %cst_89 {dimension_numbers = #tpu.dot_dimension_numbers<[1], [0], [0], [1], [0, 0, 1, 1], [], []>} : vector<16x1152xbf16>, vector<1152x384xbf16>, vector<16x384xf32> -> vector<16x384xf32>
    %c0_90 = arith.constant 0 : index
    %c0_91 = arith.constant 0 : index
    %200 = vector.load %arg24[%c0_90, %c0_91] : memref<1x384xf32, #tpu.memory_space<vmem>>, vector<1x384xf32>
    %201 = vector.broadcast %200 : vector<1x384xf32> to vector<16x384xf32>
    %202 = arith.addf %199, %201 : vector<16x384xf32>
    %cst_92 = arith.constant 0.000000e+00 : f32
    %203 = vector.broadcast %cst_92 : f32 to vector<16x384xf32>
    %204 = arith.maximumf %202, %203 : vector<16x384xf32>
    %205 = arith.truncf %204 : vector<16x384xf32> to vector<16x384xbf16>
    %c0_93 = arith.constant 0 : index
    %c0_94 = arith.constant 0 : index
    %206 = vector.load %arg25[%c0_93, %c0_94] : memref<72x16xbf16, #tpu.memory_space<vmem>>, vector<72x16xbf16>
    %cst_95 = arith.constant dense<0.000000e+00> : vector<72x384xf32>
    %207 = tpu.matmul %206, %205, %cst_95 {dimension_numbers = #tpu.dot_dimension_numbers<[1], [0], [0], [1], [0, 0, 1, 1], [], []>} : vector<72x16xbf16>, vector<16x384xbf16>, vector<72x384xf32> -> vector<72x384xf32>
    %208 = vector.extract_strided_slice %207 {offsets = [0, 0], sizes = [24, 384], strides = [1, 1]} : vector<72x384xf32> to vector<24x384xf32>
    %209 = vector.extract_strided_slice %207 {offsets = [24, 0], sizes = [24, 384], strides = [1, 1]} : vector<72x384xf32> to vector<24x384xf32>
    %210 = vector.extract_strided_slice %207 {offsets = [48, 0], sizes = [24, 384], strides = [1, 1]} : vector<72x384xf32> to vector<24x384xf32>
    %211 = tpu.concatenate %208, %209, %210 in 1 : vector<24x384xf32>, vector<24x384xf32>, vector<24x384xf32> -> vector<24x1152xf32>
    %212 = arith.truncf %211 : vector<24x1152xf32> to vector<24x1152xbf16>
    %c0_96 = arith.constant 0 : index
    %c0_97 = arith.constant 0 : index
    %213 = vector.load %arg26[%c0_96, %c0_97] : memref<1152x384xbf16, #tpu.memory_space<vmem>>, vector<1152x384xbf16>
    %cst_98 = arith.constant dense<0.000000e+00> : vector<24x384xf32>
    %214 = tpu.matmul %212, %213, %cst_98 {dimension_numbers = #tpu.dot_dimension_numbers<[1], [0], [0], [1], [0, 0, 1, 1], [], []>} : vector<24x1152xbf16>, vector<1152x384xbf16>, vector<24x384xf32> -> vector<24x384xf32>
    %c0_99 = arith.constant 0 : index
    %c0_100 = arith.constant 0 : index
    %215 = vector.load %arg27[%c0_99, %c0_100] : memref<1x384xf32, #tpu.memory_space<vmem>>, vector<1x384xf32>
    %216 = vector.broadcast %215 : vector<1x384xf32> to vector<24x384xf32>
    %217 = arith.addf %214, %216 : vector<24x384xf32>
    %cst_101 = arith.constant 0.000000e+00 : f32
    %218 = vector.broadcast %cst_101 : f32 to vector<24x384xf32>
    %219 = arith.maximumf %217, %218 : vector<24x384xf32>
    %220 = arith.truncf %219 : vector<24x384xf32> to vector<24x384xbf16>
    %c0_102 = arith.constant 0 : index
    %c0_103 = arith.constant 0 : index
    %221 = vector.load %arg28[%c0_102, %c0_103] : memref<144x24xbf16, #tpu.memory_space<vmem>>, vector<144x24xbf16>
    %cst_104 = arith.constant dense<0.000000e+00> : vector<144x384xf32>
    %222 = tpu.matmul %221, %220, %cst_104 {dimension_numbers = #tpu.dot_dimension_numbers<[1], [0], [0], [1], [0, 0, 1, 1], [], []>} : vector<144x24xbf16>, vector<24x384xbf16>, vector<144x384xf32> -> vector<144x384xf32>
    %223 = vector.extract_strided_slice %222 {offsets = [0, 0], sizes = [48, 384], strides = [1, 1]} : vector<144x384xf32> to vector<48x384xf32>
    %224 = vector.extract_strided_slice %222 {offsets = [48, 0], sizes = [48, 384], strides = [1, 1]} : vector<144x384xf32> to vector<48x384xf32>
    %225 = vector.extract_strided_slice %222 {offsets = [96, 0], sizes = [48, 384], strides = [1, 1]} : vector<144x384xf32> to vector<48x384xf32>
    %226 = tpu.concatenate %223, %224, %225 in 1 : vector<48x384xf32>, vector<48x384xf32>, vector<48x384xf32> -> vector<48x1152xf32>
    %227 = arith.truncf %226 : vector<48x1152xf32> to vector<48x1152xbf16>
    %c0_105 = arith.constant 0 : index
    %c0_106 = arith.constant 0 : index
    %228 = vector.load %arg29[%c0_105, %c0_106] : memref<1152x128xbf16, #tpu.memory_space<vmem>>, vector<1152x128xbf16>
    %cst_107 = arith.constant dense<0.000000e+00> : vector<48x128xf32>
    %229 = tpu.matmul %227, %228, %cst_107 {dimension_numbers = #tpu.dot_dimension_numbers<[1], [0], [0], [1], [0, 0, 1, 1], [], []>} : vector<48x1152xbf16>, vector<1152x128xbf16>, vector<48x128xf32> -> vector<48x128xf32>
    %c0_108 = arith.constant 0 : index
    %c0_109 = arith.constant 0 : index
    %230 = vector.load %arg30[%c0_108, %c0_109] : memref<1x128xf32, #tpu.memory_space<vmem>>, vector<1x128xf32>
    %231 = vector.broadcast %230 : vector<1x128xf32> to vector<48x128xf32>
    %232 = arith.addf %229, %231 : vector<48x128xf32>
    %cst_110 = arith.constant 5.000000e-01 : f32
    %233 = vector.broadcast %cst_110 : f32 to vector<48x128xf32>
    %234 = arith.mulf %233, %232 : vector<48x128xf32>
    %235 = math.tanh %234 : vector<48x128xf32>
    %cst_111 = arith.constant 1.000000e+00 : f32
    %236 = vector.broadcast %cst_111 : f32 to vector<48x128xf32>
    %237 = arith.addf %235, %236 : vector<48x128xf32>
    %cst_112 = arith.constant 5.000000e-01 : f32
    %238 = vector.broadcast %cst_112 : f32 to vector<48x128xf32>
    %239 = arith.mulf %238, %237 : vector<48x128xf32>
    %c0_113 = arith.constant 0 : index
    %c0_114 = arith.constant 0 : index
    %240 = vector.load %arg31[%c0_113, %c0_114] : memref<48x128xf32, #tpu.memory_space<vmem>>, vector<48x128xf32>
    tpu.vector_store %arg31[%c0_113, %c0_114], %239 {strides = array<i32>} : memref<48x128xf32, #tpu.memory_space<vmem>>, vector<48x128xf32>,
    return
  }
}

</mosaic_0001>

<llo_original>
// kernel: forward.1
$region0: #{forward.1}
  #allocation0 [shape = 'u32[]', space=smem, size = 0x4, offset = 0x4, fixed_abs, tag = 'smem constant byte address 0x4 - core index']
  #allocation1 [shape = 'u32[144,128]{1,0:T(1,128)}', space=vmem, size = 0x12000, scoped, tag = 'internal scratch']
  %s0 = inlined_call_operand.smem [shape: u32[32], index: -1, kind: input, shape index: {}]
  %s1 = sld [smem:[%s0]]
  %s2 = scalar_lea.smem %s0, 1
  %s3 = sld [smem:[%s2]]
  %s4 = scalar_lea.smem %s0, 2
  %s5 = sld [smem:[%s4]]
  %s6 = scalar_lea.smem %s0, 3
  %s7 = sld [smem:[%s6]]
  %s8 = scalar_lea.smem %s0, 4
  %s9 = sld [smem:[%s8]]
  %s10 = scalar_lea.smem %s0, 5
  %s11 = sld [smem:[%s10]]
  %s12 = scalar_lea.smem %s0, 6
  %s13 = sld [smem:[%s12]]
  %s14 = scalar_lea.smem %s0, 7
  %s15 = sld [smem:[%s14]]
  %s16 = scalar_lea.smem %s0, 8
  %s17 = sld [smem:[%s16]]
  %s18 = scalar_lea.smem %s0, 9
  %s19 = sld [smem:[%s18]]
  %s20 = scalar_lea.smem %s0, 10
  %s21 = sld [smem:[%s20]]
  %s22 = scalar_lea.smem %s0, 11
  %s23 = sld [smem:[%s22]]
  %s24 = scalar_lea.smem %s0, 12
  %s25 = sld [smem:[%s24]]
  %s26 = scalar_lea.smem %s0, 13
  %s27 = sld [smem:[%s26]]
  %s28 = scalar_lea.smem %s0, 14
  %s29 = sld [smem:[%s28]]
  %s30 = scalar_lea.smem %s0, 15
  %s31 = sld [smem:[%s30]]
  %s32 = scalar_lea.smem %s0, 16
  %s33 = sld [smem:[%s32]]
  %s34 = scalar_lea.smem %s0, 17
  %s35 = sld [smem:[%s34]]
  %s36 = scalar_lea.smem %s0, 18
  %s37 = sld [smem:[%s36]]
  %s38 = scalar_lea.smem %s0, 19
  %s39 = sld [smem:[%s38]]
  %s40 = scalar_lea.smem %s0, 20
  %s41 = sld [smem:[%s40]]
  %s42 = scalar_lea.smem %s0, 21
  %s43 = sld [smem:[%s42]]
  %s44 = scalar_lea.smem %s0, 22
  %s45 = sld [smem:[%s44]]
  %s46 = scalar_lea.smem %s0, 23
  %s47 = sld [smem:[%s46]]
  %s48 = scalar_lea.smem %s0, 24
  %s49 = sld [smem:[%s48]]
  %s50 = scalar_lea.smem %s0, 25
  %s51 = sld [smem:[%s50]]
  %s52 = scalar_lea.smem %s0, 26
  %s53 = sld [smem:[%s52]]
  %s54 = scalar_lea.smem %s0, 27
  %s55 = sld [smem:[%s54]]
  %s56 = scalar_lea.smem %s0, 28
  %s57 = sld [smem:[%s56]]
  %s58 = scalar_lea.smem %s0, 29
  %s59 = sld [smem:[%s58]]
  %s60 = scalar_lea.smem %s0, 30
  %s61 = sld [smem:[%s60]]
  %s62 = scalar_lea.smem %s0, 31
  %s63 = sld [smem:[%s62]]
  %s64 = sld [smem:[#allocation0]]
  $region166: #{forward.1} parent=0
    _
  %s66 = ssub.s32 1, %s64
  %s67 = scalar_select 0, %s66, %s64
  $region1: #{forward.1} parent=0
    #allocation2 [shape = 'u8[491520]{0}', space=vmem, size = 0x78000, scoped, tag = 'input window, operand 2, single buffered']
    #allocation3 [shape = 's32[1]{0}', space=sflag, size = 0x4, scoped, tag = 'scoped memory for forward.1']
    #allocation4 [shape = 's32[1]{0}', space=sflag, size = 0x4, scoped, tag = 'scoped memory for forward.1']
    #allocation5 [shape = 'u8[884736]{0}', space=vmem, size = 0xd8000, scoped, tag = 'input window, operand 7, single buffered']
    #allocation6 [shape = 's32[1]{0}', space=sflag, size = 0x4, scoped, tag = 'scoped memory for forward.1']
    #allocation7 [shape = 'u8[884736]{0}', space=vmem, size = 0xd8000, scoped, tag = 'input window, operand 12, single buffered']
    #allocation8 [shape = 'u8[294912]{0}', space=vmem, size = 0x48000, scoped, tag = 'input window, operand 17, single buffered']
    #allocation9 [shape = 's32[1]{0}', space=sflag, size = 0x4, scoped, tag = 'scoped memory for forward.1']
    #allocation10 [shape = 'u8[294912]{0}', space=vmem, size = 0x48000, scoped, tag = 'input window, operand 20, single buffered']
    #allocation11 [shape = 'u8[884736]{0}', space=vmem, size = 0xd8000, scoped, tag = 'input window, operand 23, single buffered']
    #allocation12 [shape = 's32[1]{0}', space=sflag, size = 0x4, scoped, tag = 'scoped memory for forward.1']
    #allocation13 [shape = 'u8[884736]{0}', space=vmem, size = 0xd8000, scoped, tag = 'input window, operand 26, single buffered']
    #allocation14 [shape = 'u8[294912]{0}', space=vmem, size = 0x48000, scoped, tag = 'input window, operand 29, single buffered']
    #allocation15 [shape = 's32[1]{0}', space=sflag, size = 0x4, scoped, tag = 'scoped memory for forward.1']
    #allocation16 [shape = 'u8[24576]{0}', space=vmem, size = 0x6000, scoped, tag = 'output window, operand 0, single buffered']
    %68 = vsyncpa [#allocation3], 0
    %69 = vsyncpa [#allocation6], 0
    %70 = vsyncpa [#allocation9], 0
    %71 = vsyncpa [#allocation12], 0
    %72 = vsyncpa [#allocation15], 0
    %73 = vsyncpa [#allocation4], 0
    // Predicated region
    $region2: #{forward.1} parent=1 // pred_check
      _
    $region3: #{forward.1} parent=1 // pred_check_branch
      %75 = sbr.rel (0) target = $region5
    $region4: #{forward.1} parent=1 // pred_region
      _
    $region5: #{forward.1} parent=1 // pred_fallthru
      _
    // Predicated region
    $region6: #{forward.1} parent=1 // pred_check
      _
    $region7: #{forward.1} parent=1 // pred_check_branch
      %77 = sbr.rel (0) target = $region9
    $region8: #{forward.1} parent=1 // pred_region
      _
    $region9: #{forward.1} parent=1 // pred_fallthru
      _
    // Predicated region
    $region10: #{forward.1} parent=1 // pred_check
      _
    $region11: #{forward.1} parent=1 // pred_check_branch
      %79 = sbr.rel (0) target = $region13
    $region12: #{forward.1} parent=1 // pred_region
      %s81 = ssub.s32 15360, 15360
      %82 = vsyncadd [#allocation3], %s81
      %s83 = sshll.u32 [#allocation2], 4
      %s84 = int_to_ptr.vmem [resolvable:$true] %s83
      %89 = dma.hbm_to_vmem [thread:$0]  %s5, 15360, %s84, [#allocation3], 192, 192, 12
    $region13: #{forward.1} parent=1 // pred_fallthru
      _
    // Predicated region
    $region14: #{forward.1} parent=1 // pred_check
      _
    $region15: #{forward.1} parent=1 // pred_check_branch
      %91 = sbr.rel (0) target = $region17
    $region16: #{forward.1} parent=1 // pred_region
      _
    $region17: #{forward.1} parent=1 // pred_fallthru
      _
    // Predicated region
    $region18: #{forward.1} parent=1 // pred_check
      _
    $region19: #{forward.1} parent=1 // pred_check_branch
      %93 = sbr.rel (0) target = $region21
    $region20: #{forward.1} parent=1 // pred_region
      _
    $region21: #{forward.1} parent=1 // pred_fallthru
      _
    // Predicated region
    $region22: #{forward.1} parent=1 // pred_check
      _
    $region23: #{forward.1} parent=1 // pred_check_branch
      %95 = sbr.rel (0) target = $region25
    $region24: #{forward.1} parent=1 // pred_region
      _
    $region25: #{forward.1} parent=1 // pred_fallthru
      _
    // Predicated region
    $region26: #{forward.1} parent=1 // pred_check
      _
    $region27: #{forward.1} parent=1 // pred_check_branch
      %97 = sbr.rel (0) target = $region29
    $region28: #{forward.1} parent=1 // pred_region
      _
    $region29: #{forward.1} parent=1 // pred_fallthru
      _
    // Predicated region
    $region30: #{forward.1} parent=1 // pred_check
      _
    $region31: #{forward.1} parent=1 // pred_check_branch
      %99 = sbr.rel (0) target = $region33
    $region32: #{forward.1} parent=1 // pred_region
      %s101 = ssub.s32 27648, 27648
      %102 = vsyncadd [#allocation6], %s101
      %s103 = sshll.u32 [#allocation5], 4
      %s104 = int_to_ptr.vmem [resolvable:$true] %s103
      %109 = dma.hbm_to_vmem [thread:$0]  %s15, 27648, %s104, [#allocation6], 192, 192, 12
    $region33: #{forward.1} parent=1 // pred_fallthru
      _
    // Predicated region
    $region34: #{forward.1} parent=1 // pred_check
      _
    $region35: #{forward.1} parent=1 // pred_check_branch
      %111 = sbr.rel (0) target = $region37
    $region36: #{forward.1} parent=1 // pred_region
      _
    $region37: #{forward.1} parent=1 // pred_fallthru
      _
    // Predicated region
    $region38: #{forward.1} parent=1 // pred_check
      _
    $region39: #{forward.1} parent=1 // pred_check_branch
      %113 = sbr.rel (0) target = $region41
    $region40: #{forward.1} parent=1 // pred_region
      _
    $region41: #{forward.1} parent=1 // pred_fallthru
      _
    // Predicated region
    $region42: #{forward.1} parent=1 // pred_check
      _
    $region43: #{forward.1} parent=1 // pred_check_branch
      %115 = sbr.rel (0) target = $region45
    $region44: #{forward.1} parent=1 // pred_region
      _
    $region45: #{forward.1} parent=1 // pred_fallthru
      _
    // Predicated region
    $region46: #{forward.1} parent=1 // pred_check
      _
    $region47: #{forward.1} parent=1 // pred_check_branch
      %117 = sbr.rel (0) target = $region49
    $region48: #{forward.1} parent=1 // pred_region
      _
    $region49: #{forward.1} parent=1 // pred_fallthru
      _
    // Predicated region
    $region50: #{forward.1} parent=1 // pred_check
      _
    $region51: #{forward.1} parent=1 // pred_check_branch
      %119 = sbr.rel (0) target = $region53
    $region52: #{forward.1} parent=1 // pred_region
      %s121 = ssub.s32 27648, 27648
      %122 = vsyncadd [#allocation6], %s121
      %s123 = sshll.u32 [#allocation7], 4
      %s124 = int_to_ptr.vmem [resolvable:$true] %s123
      %129 = dma.hbm_to_vmem [thread:$0]  %s25, 27648, %s124, [#allocation6], 192, 192, 12
    $region53: #{forward.1} parent=1 // pred_fallthru
      _
    // Predicated region
    $region54: #{forward.1} parent=1 // pred_check
      _
    $region55: #{forward.1} parent=1 // pred_check_branch
      %131 = sbr.rel (0) target = $region57
    $region56: #{forward.1} parent=1 // pred_region
      _
    $region57: #{forward.1} parent=1 // pred_fallthru
      _
    // Predicated region
    $region58: #{forward.1} parent=1 // pred_check
      _
    $region59: #{forward.1} parent=1 // pred_check_branch
      %133 = sbr.rel (0) target = $region61
    $region60: #{forward.1} parent=1 // pred_region
      _
    $region61: #{forward.1} parent=1 // pred_fallthru
      _
    // Predicated region
    $region62: #{forward.1} parent=1 // pred_check
      _
    $region63: #{forward.1} parent=1 // pred_check_branch
      %135 = sbr.rel (0) target = $region65
    $region64: #{forward.1} parent=1 // pred_region
      _
    $region65: #{forward.1} parent=1 // pred_fallthru
      _
    // Predicated region
    $region66: #{forward.1} parent=1 // pred_check
      _
    $region67: #{forward.1} parent=1 // pred_check_branch
      %137 = sbr.rel (0) target = $region69
    $region68: #{forward.1} parent=1 // pred_region
      _
    $region69: #{forward.1} parent=1 // pred_fallthru
      _
    // Predicated region
    $region70: #{forward.1} parent=1 // pred_check
      _
    $region71: #{forward.1} parent=1 // pred_check_branch
      %139 = sbr.rel (0) target = $region73
    $region72: #{forward.1} parent=1 // pred_region
      %s141 = ssub.s32 9216, 9216
      %142 = vsyncadd [#allocation9], %s141
      %s143 = sshll.u32 [#allocation8], 4
      %s144 = int_to_ptr.vmem [resolvable:$true] %s143
      %149 = dma.hbm_to_vmem [thread:$0]  %s35, 9216, %s144, [#allocation9], 64, 64, 4
    $region73: #{forward.1} parent=1 // pred_fallthru
      _
    // Predicated region
    $region74: #{forward.1} parent=1 // pred_check
      _
    $region75: #{forward.1} parent=1 // pred_check_branch
      %151 = sbr.rel (0) target = $region77
    $region76: #{forward.1} parent=1 // pred_region
      _
    $region77: #{forward.1} parent=1 // pred_fallthru
      _
    // Predicated region
    $region78: #{forward.1} parent=1 // pred_check
      _
    $region79: #{forward.1} parent=1 // pred_check_branch
      %153 = sbr.rel (0) target = $region81
    $region80: #{forward.1} parent=1 // pred_region
      _
    $region81: #{forward.1} parent=1 // pred_fallthru
      _
    // Predicated region
    $region82: #{forward.1} parent=1 // pred_check
      _
    $region83: #{forward.1} parent=1 // pred_check_branch
      %155 = sbr.rel (0) target = $region85
    $region84: #{forward.1} parent=1 // pred_region
      %s157 = ssub.s32 9216, 9216
      %158 = vsyncadd [#allocation9], %s157
      %s159 = sshll.u32 [#allocation10], 4
      %s160 = int_to_ptr.vmem [resolvable:$true] %s159
      %165 = dma.hbm_to_vmem [thread:$0]  %s41, 9216, %s160, [#allocation9], 192, 192, 12
    $region85: #{forward.1} parent=1 // pred_fallthru
      _
    // Predicated region
    $region86: #{forward.1} parent=1 // pred_check
      _
    $region87: #{forward.1} parent=1 // pred_check_branch
      %167 = sbr.rel (0) target = $region89
    $region88: #{forward.1} parent=1 // pred_region
      _
    $region89: #{forward.1} parent=1 // pred_fallthru
      _
    // Predicated region
    $region90: #{forward.1} parent=1 // pred_check
      _
    $region91: #{forward.1} parent=1 // pred_check_branch
      %169 = sbr.rel (0) target = $region93
    $region92: #{forward.1} parent=1 // pred_region
      _
    $region93: #{forward.1} parent=1 // pred_fallthru
      _
    // Predicated region
    $region94: #{forward.1} parent=1 // pred_check
      _
    $region95: #{forward.1} parent=1 // pred_check_branch
      %171 = sbr.rel (0) target = $region97
    $region96: #{forward.1} parent=1 // pred_region
      %s173 = ssub.s32 27648, 27648
      %174 = vsyncadd [#allocation12], %s173
      %s175 = sshll.u32 [#allocation11], 4
      %s176 = int_to_ptr.vmem [resolvable:$true] %s175
      %181 = dma.hbm_to_vmem [thread:$0]  %s47, 27648, %s176, [#allocation12], 192, 192, 12
    $region97: #{forward.1} parent=1 // pred_fallthru
      _
    // Predicated region
    $region98: #{forward.1} parent=1 // pred_check
      _
    $region99: #{forward.1} parent=1 // pred_check_branch
      %183 = sbr.rel (0) target = $region101
    $region100: #{forward.1} parent=1 // pred_region
      _
    $region101: #{forward.1} parent=1 // pred_fallthru
      _
    // Predicated region
    $region102: #{forward.1} parent=1 // pred_check
      _
    $region103: #{forward.1} parent=1 // pred_check_branch
      %185 = sbr.rel (0) target = $region105
    $region104: #{forward.1} parent=1 // pred_region
      _
    $region105: #{forward.1} parent=1 // pred_fallthru
      _
    // Predicated region
    $region106: #{forward.1} parent=1 // pred_check
      _
    $region107: #{forward.1} parent=1 // pred_check_branch
      %187 = sbr.rel (0) target = $region109
    $region108: #{forward.1} parent=1 // pred_region
      %s189 = ssub.s32 27648, 27648
      %190 = vsyncadd [#allocation12], %s189
      %s191 = sshll.u32 [#allocation13], 4
      %s192 = int_to_ptr.vmem [resolvable:$true] %s191
      %197 = dma.hbm_to_vmem [thread:$0]  %s53, 27648, %s192, [#allocation12], 192, 192, 12
    $region109: #{forward.1} parent=1 // pred_fallthru
      _
    // Predicated region
    $region110: #{forward.1} parent=1 // pred_check
      _
    $region111: #{forward.1} parent=1 // pred_check_branch
      %199 = sbr.rel (0) target = $region113
    $region112: #{forward.1} parent=1 // pred_region
      _
    $region113: #{forward.1} parent=1 // pred_fallthru
      _
    // Predicated region
    $region114: #{forward.1} parent=1 // pred_check
      _
    $region115: #{forward.1} parent=1 // pred_check_branch
      %201 = sbr.rel (0) target = $region117
    $region116: #{forward.1} parent=1 // pred_region
      _
    $region117: #{forward.1} parent=1 // pred_fallthru
      _
    // Predicated region
    $region118: #{forward.1} parent=1 // pred_check
      _
    $region119: #{forward.1} parent=1 // pred_check_branch
      %203 = sbr.rel (0) target = $region121
    $region120: #{forward.1} parent=1 // pred_region
      %s205 = ssub.s32 9216, 9216
      %206 = vsyncadd [#allocation15], %s205
      %s207 = sshll.u32 [#allocation14], 4
      %s208 = int_to_ptr.vmem [resolvable:$true] %s207
      %213 = dma.hbm_to_vmem [thread:$0]  %s59, 9216, %s208, [#allocation15], 64, 64, 4
    $region121: #{forward.1} parent=1 // pred_fallthru
      _
    // Predicated region
    $region122: #{forward.1} parent=1 // pred_check
      _
    $region123: #{forward.1} parent=1 // pred_check_branch
      %215 = sbr.rel (0) target = $region125
    $region124: #{forward.1} parent=1 // pred_region
      _
    $region125: #{forward.1} parent=1 // pred_fallthru
      _
    // Predicated region
    $region126: #{forward.1} parent=1 // pred_check
      _
    $region127: #{forward.1} parent=1 // pred_check_branch
      %217 = sbr.rel (0) target = $region129
    $region128: #{forward.1} parent=1 // pred_region
      %218 = dma.done [#allocation3], 15360
    $region129: #{forward.1} parent=1 // pred_fallthru
      _
    // Predicated region
    $region130: #{forward.1} parent=1 // pred_check
      _
    $region131: #{forward.1} parent=1 // pred_check_branch
      %220 = sbr.rel (0) target = $region133
    $region132: #{forward.1} parent=1 // pred_region
      %221 = dma.done [#allocation6], 27648
    $region133: #{forward.1} parent=1 // pred_fallthru
      _
    // Predicated region
    $region134: #{forward.1} parent=1 // pred_check
      _
    $region135: #{forward.1} parent=1 // pred_check_branch
      %223 = sbr.rel (0) target = $region137
    $region136: #{forward.1} parent=1 // pred_region
      %224 = dma.done [#allocation6], 27648
    $region137: #{forward.1} parent=1 // pred_fallthru
      _
    // Predicated region
    $region138: #{forward.1} parent=1 // pred_check
      _
    $region139: #{forward.1} parent=1 // pred_check_branch
      %226 = sbr.rel (0) target = $region141
    $region140: #{forward.1} parent=1 // pred_region
      %227 = dma.done [#allocation9], 9216
    $region141: #{forward.1} parent=1 // pred_fallthru
      _
    // Predicated region
    $region142: #{forward.1} parent=1 // pred_check
      _
    $region143: #{forward.1} parent=1 // pred_check_branch
      %229 = sbr.rel (0) target = $region145
    $region144: #{forward.1} parent=1 // pred_region
      %230 = dma.done [#allocation9], 9216
    $region145: #{forward.1} parent=1 // pred_fallthru
      _
    // Predicated region
    $region146: #{forward.1} parent=1 // pred_check
      _
    $region147: #{forward.1} parent=1 // pred_check_branch
      %232 = sbr.rel (0) target = $region149
    $region148: #{forward.1} parent=1 // pred_region
      %233 = dma.done [#allocation12], 27648
    $region149: #{forward.1} parent=1 // pred_fallthru
      _
    // Predicated region
    $region150: #{forward.1} parent=1 // pred_check
      _
    $region151: #{forward.1} parent=1 // pred_check_branch
      %235 = sbr.rel (0) target = $region153
    $region152: #{forward.1} parent=1 // pred_region
      %236 = dma.done [#allocation12], 27648
    $region153: #{forward.1} parent=1 // pred_fallthru
      _
    // Predicated region
    $region154: #{forward.1} parent=1 // pred_check
      _
    $region155: #{forward.1} parent=1 // pred_check_branch
      %238 = sbr.rel (0) target = $region157
    $region156: #{forward.1} parent=1 // pred_region
      %239 = dma.done [#allocation15], 9216
    $region157: #{forward.1} parent=1 // pred_fallthru
      _
    %v241 = vld [vmem:[%s1] sm:$0xff]
    %v242 = vld [vmem:[%s1 + $0x8] sm:$0xff]
    %v243 = vld [vmem:[%s1 + $0x10] sm:$0xff]
    %v244 = vld [vmem:[%s1 + $0x18] sm:$0xff]
    %v245 = vld [vmem:[%s1 + $0x20] sm:$0xff]
    %v246 = vld [vmem:[%s1 + $0x28] sm:$0xff]
    %v247 = vpack.c.bf16 %v242, %v241
    %v248 = vpack.c.bf16 %v244, %v243
    %v249 = vpack.c.bf16 %v246, %v245
    %v250 = vld [vmem:[%s3] sm:$0xf]
    %v251 = vld [vmem:[%s3 + $0x4] sm:$0xf]
    %v252 = vld [vmem:[%s3 + $0x8] sm:$0xf]
    %v253 = vld [vmem:[%s3 + $0xc] sm:$0xf]
    %v254 = vld [vmem:[%s3 + $0x10] sm:$0xf]
    %v255 = vld [vmem:[%s3 + $0x14] sm:$0xf]
    %v256 = vld [vmem:[%s3 + $0x18] sm:$0xf]
    %v257 = vld [vmem:[%s3 + $0x1c] sm:$0xf]
    %v258 = vld [vmem:[%s3 + $0x20] sm:$0xf]
    %v259 = vld [vmem:[%s3 + $0x24] sm:$0xf]
    %v260 = vld [vmem:[%s3 + $0x28] sm:$0xf]
    %v261 = vld [vmem:[%s3 + $0x2c] sm:$0xf]
    %v262 = vld [vmem:[%s3 + $0x30] sm:$0xf]
    %v263 = vld [vmem:[%s3 + $0x34] sm:$0xf]
    %v264 = vld [vmem:[%s3 + $0x38] sm:$0xf]
    %v280 = vunpack.c.l.b16 %v250
    %v281 = vunpack.c.l.b16 %v251
    %v282 = vunpack.c.l.b16 %v252
    %v283 = vunpack.c.l.b16 %v253
    %v284 = vunpack.c.l.b16 %v254
    %v285 = vunpack.c.l.b16 %v255
    %v286 = vunpack.c.l.b16 %v256
    %v287 = vunpack.c.l.b16 %v257
    %v288 = vunpack.c.l.b16 %v258
    %v289 = vunpack.c.l.b16 %v259
    %v290 = vunpack.c.l.b16 %v260
    %v291 = vunpack.c.l.b16 %v261
    %v292 = vunpack.c.l.b16 %v262
    %v293 = vunpack.c.l.b16 %v263
    %v294 = vunpack.c.l.b16 %v264
    %v295 = vpack.c.b16 %v281, %v280
    %v296 = vpack.c.b16 %v283, %v282
    %v297 = vpack.c.b16 %v285, %v284
    %v298 = vpack.c.b16 %v287, %v286
    %v299 = vpack.c.b16 %v289, %v288
    %v300 = vpack.c.b16 %v291, %v290
    %v301 = vpack.c.b16 %v293, %v292
    %v302 = vpack.c.b16 %v294, %v294
    %vm303 = vcmask 392192
    %v305 = vsel %vm303, %v295, 0
    %v308 = vsel %vm303, %v296, 0
    %v311 = vsel %vm303, %v297, 0
    %v314 = vsel %vm303, %v298, 0
    %v317 = vsel %vm303, %v299, 0
    %v320 = vsel %vm303, %v300, 0
    %v323 = vsel %vm303, %v301, 0
    %v326 = vsel %vm303, %v302, 0
    %328 = vmatprep.subr.bf16.mxu0 0
    %329 = vmatpush1.bf16.msra.mxu0 %v247
    %330 = vmatprep.subr.bf16.mxu0 0
    %331 = vmatpush1.bf16.msra.mxu0 %v248
    %332 = vmatprep.subr.bf16.mxu0 0
    %333 = vmatpush1.bf16.msra.mxu0 %v249
    %334 = vmatprep.subr.bf16.mxu0 0
    %335 = vmatpush1.bf16.msra.mxu0 0
    %336 = vmatprep.subr.bf16.mxu0 0
    %337 = vmatpush1.bf16.msra.mxu0 0
    %338 = vmatprep.subr.bf16.mxu0 0
    %339 = vmatpush1.bf16.msra.mxu0 0
    %340 = vmatprep.subr.bf16.mxu0 0
    %341 = vmatpush1.bf16.msra.mxu0 0
    %342 = vmatprep.subr.bf16.mxu0 0
    %343 = vmatpush1.bf16.msra.mxu0 0
    %344 = vmatprep.subr.bf16.mxu0 0
    %345 = vmatpush1.bf16.msra.mxu0 0
    %346 = vmatprep.subr.bf16.mxu0 0
    %347 = vmatpush1.bf16.msra.mxu0 0
    %348 = vmatprep.subr.bf16.mxu0 0
    %349 = vmatpush1.bf16.msra.mxu0 0
    %350 = vmatprep.subr.bf16.mxu0 0
    %351 = vmatpush1.bf16.msra.mxu0 0
    %352 = vmatprep.subr.bf16.mxu0 0
    %353 = vmatpush1.bf16.msra.mxu0 0
    %354 = vmatprep.subr.bf16.mxu0 0
    %355 = vmatpush1.bf16.msra.mxu0 0
    %356 = vmatprep.subr.bf16.mxu0 0
    %357 = vmatpush1.bf16.msra.mxu0 0
    %358 = vmatprep.subr.bf16.mxu0 0
    %359 = vmatpush1.bf16.msra.mxu0 0
    %360 = vmatprep.mubr.bf16.mxu0 0
    %361 = vmatmul.mubr.bf16.gmra.mrb[0].mxu0 %v305
    %v362 = vpop.f32.mrb[0].mxu0
    %v363 = vadd.f32 0.0, %v362
    %v364 = vpop.f32.mrb[0].mxu0
    %v365 = vpop.f32.mrb[0].mxu0
    %v366 = vadd.f32 0.0, %v365
    %v367 = vpop.f32.mrb[0].mxu0
    %368 = vmatprep.mubr.bf16.mxu0 0
    %369 = vmatmul.mubr.bf16.gmra.mrb[0].mxu0 %v308
    %v370 = vpop.f32.mrb[0].mxu0
    %v371 = vadd.f32 0.0, %v370
    %v372 = vpop.f32.mrb[0].mxu0
    %v373 = vpop.f32.mrb[0].mxu0
    %v374 = vadd.f32 0.0, %v373
    %v375 = vpop.f32.mrb[0].mxu0
    %376 = vmatprep.mubr.bf16.mxu0 0
    %377 = vmatmul.mubr.bf16.gmra.mrb[0].mxu0 %v311
    %v378 = vpop.f32.mrb[0].mxu0
    %v379 = vadd.f32 0.0, %v378
    %v380 = vpop.f32.mrb[0].mxu0
    %v381 = vpop.f32.mrb[0].mxu0
    %v382 = vadd.f32 0.0, %v381
    %v383 = vpop.f32.mrb[0].mxu0
    %384 = vmatprep.mubr.bf16.mxu0 0
    %385 = vmatmul.mubr.bf16.gmra.mrb[0].mxu0 %v314
    %v386 = vpop.f32.mrb[0].mxu0
    %v387 = vadd.f32 0.0, %v386
    %v388 = vpop.f32.mrb[0].mxu0
    %v389 = vpop.f32.mrb[0].mxu0
    %v390 = vadd.f32 0.0, %v389
    %v391 = vpop.f32.mrb[0].mxu0
    %392 = vmatprep.mubr.bf16.mxu0 0
    %393 = vmatmul.mubr.bf16.gmra.mrb[0].mxu0 %v317
    %v394 = vpop.f32.mrb[0].mxu0
    %v395 = vadd.f32 0.0, %v394
    %v396 = vpop.f32.mrb[0].mxu0
    %v397 = vpop.f32.mrb[0].mxu0
    %v398 = vadd.f32 0.0, %v397
    %v399 = vpop.f32.mrb[0].mxu0
    %400 = vmatprep.mubr.bf16.mxu0 0
    %401 = vmatmul.mubr.bf16.gmra.mrb[0].mxu0 %v320
    %v402 = vpop.f32.mrb[0].mxu0
    %v403 = vadd.f32 0.0, %v402
    %v404 = vpop.f32.mrb[0].mxu0
    %v405 = vpop.f32.mrb[0].mxu0
    %v406 = vadd.f32 0.0, %v405
    %v407 = vpop.f32.mrb[0].mxu0
    %408 = vmatprep.mubr.bf16.mxu0 0
    %409 = vmatmul.mubr.bf16.gmra.mrb[0].mxu0 %v323
    %v410 = vpop.f32.mrb[0].mxu0
    %v411 = vadd.f32 0.0, %v410
    %v412 = vpop.f32.mrb[0].mxu0
    %v413 = vpop.f32.mrb[0].mxu0
    %v414 = vadd.f32 0.0, %v413
    %v415 = vpop.f32.mrb[0].mxu0
    %416 = vmatprep.mubr.bf16.mxu0 0
    %417 = vmatmul.mubr.bf16.gmra.mrb[0].mxu0 %v326
    %v418 = vpop.f32.mrb[0].mxu0
    %v419 = vadd.f32 0.0, %v418
    %v420 = vpop.f32.mrb[0].mxu0
    %v421 = vpop.f32.mrb[0].mxu0
    %v422 = vpop.f32.mrb[0].mxu0
    %423 = vdwg.mxu0
    %v424 = vpack.c.bf16 %v366, %v363
    %v425 = vpack.c.bf16 %v379, %v374
    %v426 = vpack.c.bf16 %v390, %v387
    %v427 = vpack.c.bf16 %v403, %v398
    %v428 = vpack.c.bf16 %v414, %v411
    %v429 = vpack.c.bf16 %v371, %v371
    %v430 = vpack.c.bf16 %v382, %v382
    %v431 = vpack.c.bf16 %v395, %v395
    %v432 = vpack.c.bf16 %v406, %v406
    %v433 = vpack.c.bf16 %v419, %v419
    %v434 = vld [vmem:[#allocation2] sm:$0xff]
    %v435 = vld [vmem:[#allocation2 + $0x8] sm:$0xf]
    %v436 = vld [vmem:[#allocation2 + $0xc] sm:$0xff]
    %v437 = vld [vmem:[#allocation2 + $0x14] sm:$0xf]
    %v438 = vld [vmem:[#allocation2 + $0x18] sm:$0xff]
    %v439 = vld [vmem:[#allocation2 + $0x20] sm:$0xf]
    %v440 = vld [vmem:[#allocation2 + $0x24] sm:$0xff]
    %v441 = vld [vmem:[#allocation2 + $0x2c] sm:$0xf]
    %v442 = vld [vmem:[#allocation2 + $0x30] sm:$0xff]
    %v443 = vld [vmem:[#allocation2 + $0x38] sm:$0xf]
    %v444 = vld [vmem:[#allocation2 + $0x3c] sm:$0xff]
    %v445 = vld [vmem:[#allocation2 + $0x44] sm:$0xf]
    %v446 = vld [vmem:[#allocation2 + $0x48] sm:$0xff]
    %v447 = vld [vmem:[#allocation2 + $0x50] sm:$0xf]
    %v448 = vld [vmem:[#allocation2 + $0x54] sm:$0xff]
    %v449 = vld [vmem:[#allocation2 + $0x5c] sm:$0xf]
    %v450 = vld [vmem:[#allocation2 + $0x60] sm:$0xff]
    %v451 = vld [vmem:[#allocation2 + $0x68] sm:$0xf]
    %v452 = vld [vmem:[#allocation2 + $0x6c] sm:$0xff]
    %v453 = vld [vmem:[#allocation2 + $0x74] sm:$0xf]
    %v454 = vld [vmem:[#allocation2 + $0x78] sm:$0xff]
    %v455 = vld [vmem:[#allocation2 + $0x80] sm:$0xf]
    %v456 = vld [vmem:[#allocation2 + $0x84] sm:$0xff]
    %v457 = vld [vmem:[#allocation2 + $0x8c] sm:$0xf]
    %v458 = vld [vmem:[#allocation2 + $0x90] sm:$0xff]
    %v459 = vld [vmem:[#allocation2 + $0x98] sm:$0xf]
    %v460 = vld [vmem:[#allocation2 + $0x9c] sm:$0xff]
    %v461 = vld [vmem:[#allocation2 + $0xa4] sm:$0xf]
    %v462 = vld [vmem:[#allocation2 + $0xa8] sm:$0xff]
    %v463 = vld [vmem:[#allocation2 + $0xb0] sm:$0xf]
    %v464 = vld [vmem:[#allocation2 + $0xb4] sm:$0xff]
    %v465 = vld [vmem:[#allocation2 + $0xbc] sm:$0xf]
    %v466 = vld [vmem:[#allocation2 + $0xc0] sm:$0xff]
    %v467 = vld [vmem:[#allocation2 + $0xc8] sm:$0xf]
    %v468 = vld [vmem:[#allocation2 + $0xcc] sm:$0xff]
    %v469 = vld [vmem:[#allocation2 + $0xd4] sm:$0xf]
    %v470 = vld [vmem:[#allocation2 + $0xd8] sm:$0xff]
    %v471 = vld [vmem:[#allocation2 + $0xe0] sm:$0xf]
    %v472 = vld [vmem:[#allocation2 + $0xe4] sm:$0xff]
    %v473 = vld [vmem:[#allocation2 + $0xec] sm:$0xf]
    %v474 = vld [vmem:[#allocation2 + $0xf0] sm:$0xff]
    %v475 = vld [vmem:[#allocation2 + $0xf8] sm:$0xf]
    %v476 = vld [vmem:[#allocation2 + $0xfc] sm:$0xff]
    %v477 = vld [vmem:[#allocation2 + $0x104] sm:$0xf]
    %v478 = vld [vmem:[#allocation2 + $0x108] sm:$0xff]
    %v479 = vld [vmem:[#allocation2 + $0x110] sm:$0xf]
    %v480 = vld [vmem:[#allocation2 + $0x114] sm:$0xff]
    %v481 = vld [vmem:[#allocation2 + $0x11c] sm:$0xf]
    %v482 = vld [vmem:[#allocation2 + $0x120] sm:$0xff]
    %v483 = vld [vmem:[#allocation2 + $0x128] sm:$0xf]
    %v484 = vld [vmem:[#allocation2 + $0x12c] sm:$0xff]
    %v485 = vld [vmem:[#allocation2 + $0x134] sm:$0xf]
    %v486 = vld [vmem:[#allocation2 + $0x138] sm:$0xff]
    %v487 = vld [vmem:[#allocation2 + $0x140] sm:$0xf]
    %v488 = vld [vmem:[#allocation2 + $0x144] sm:$0xff]
    %v489 = vld [vmem:[#allocation2 + $0x14c] sm:$0xf]
    %v490 = vld [vmem:[#allocation2 + $0x150] sm:$0xff]
    %v491 = vld [vmem:[#allocation2 + $0x158] sm:$0xf]
    %v492 = vld [vmem:[#allocation2 + $0x15c] sm:$0xff]
    %v493 = vld [vmem:[#allocation2 + $0x164] sm:$0xf]
    %v494 = vld [vmem:[#allocation2 + $0x168] sm:$0xff]
    %v495 = vld [vmem:[#allocation2 + $0x170] sm:$0xf]
    %v496 = vld [vmem:[#allocation2 + $0x174] sm:$0xff]
    %v497 = vld [vmem:[#allocation2 + $0x17c] sm:$0xf]
    %v498 = vld [vmem:[#allocation2 + $0x180] sm:$0xff]
    %v499 = vld [vmem:[#allocation2 + $0x188] sm:$0xf]
    %v500 = vld [vmem:[#allocation2 + $0x18c] sm:$0xff]
    %v501 = vld [vmem:[#allocation2 + $0x194] sm:$0xf]
    %v502 = vld [vmem:[#allocation2 + $0x198] sm:$0xff]
    %v503 = vld [vmem:[#allocation2 + $0x1a0] sm:$0xf]
    %v504 = vld [vmem:[#allocation2 + $0x1a4] sm:$0xff]
    %v505 = vld [vmem:[#allocation2 + $0x1ac] sm:$0xf]
    %v506 = vld [vmem:[#allocation2 + $0x1b0] sm:$0xff]
    %v507 = vld [vmem:[#allocation2 + $0x1b8] sm:$0xf]
    %v508 = vld [vmem:[#allocation2 + $0x1bc] sm:$0xff]
    %v509 = vld [vmem:[#allocation2 + $0x1c4] sm:$0xf]
    %v510 = vld [vmem:[#allocation2 + $0x1c8] sm:$0xff]
    %v511 = vld [vmem:[#allocation2 + $0x1d0] sm:$0xf]
    %v512 = vld [vmem:[#allocation2 + $0x1d4] sm:$0xff]
    %v513 = vld [vmem:[#allocation2 + $0x1dc] sm:$0xf]
    %v514 = vld [vmem:[#allocation2 + $0x1e0] sm:$0xff]
    %v515 = vld [vmem:[#allocation2 + $0x1e8] sm:$0xf]
    %v516 = vld [vmem:[#allocation2 + $0x1ec] sm:$0xff]
    %v517 = vld [vmem:[#allocation2 + $0x1f4] sm:$0xf]
    %v518 = vld [vmem:[#allocation2 + $0x1f8] sm:$0xff]
    %v519 = vld [vmem:[#allocation2 + $0x200] sm:$0xf]
    %v520 = vld [vmem:[#allocation2 + $0x204] sm:$0xff]
    %v521 = vld [vmem:[#allocation2 + $0x20c] sm:$0xf]
    %v522 = vld [vmem:[#allocation2 + $0x210] sm:$0xff]
    %v523 = vld [vmem:[#allocation2 + $0x218] sm:$0xf]
    %v524 = vld [vmem:[#allocation2 + $0x21c] sm:$0xff]
    %v525 = vld [vmem:[#allocation2 + $0x224] sm:$0xf]
    %v526 = vld [vmem:[#allocation2 + $0x228] sm:$0xff]
    %v527 = vld [vmem:[#allocation2 + $0x230] sm:$0xf]
    %v528 = vld [vmem:[#allocation2 + $0x234] sm:$0xff]
    %v529 = vld [vmem:[#allocation2 + $0x23c] sm:$0xf]
    %v530 = vld [vmem:[#allocation2 + $0x240] sm:$0xff]
    %v531 = vld [vmem:[#allocation2 + $0x248] sm:$0xf]
    %v532 = vld [vmem:[#allocation2 + $0x24c] sm:$0xff]
    %v533 = vld [vmem:[#allocation2 + $0x254] sm:$0xf]
    %v534 = vld [vmem:[#allocation2 + $0x258] sm:$0xff]
    %v535 = vld [vmem:[#allocation2 + $0x260] sm:$0xf]
    %v536 = vld [vmem:[#allocation2 + $0x264] sm:$0xff]
    %v537 = vld [vmem:[#allocation2 + $0x26c] sm:$0xf]
    %v538 = vld [vmem:[#allocation2 + $0x270] sm:$0xff]
    %v539 = vld [vmem:[#allocation2 + $0x278] sm:$0xf]
    %v540 = vld [vmem:[#allocation2 + $0x27c] sm:$0xff]
    %v541 = vld [vmem:[#allocation2 + $0x284] sm:$0xf]
    %v542 = vld [vmem:[#allocation2 + $0x288] sm:$0xff]
    %v543 = vld [vmem:[#allocation2 + $0x290] sm:$0xf]
    %v544 = vld [vmem:[#allocation2 + $0x294] sm:$0xff]
    %v545 = vld [vmem:[#allocation2 + $0x29c] sm:$0xf]
    %v546 = vld [vmem:[#allocation2 + $0x2a0] sm:$0xff]
    %v547 = vld [vmem:[#allocation2 + $0x2a8] sm:$0xf]
    %v548 = vld [vmem:[#allocation2 + $0x2ac] sm:$0xff]
    %v549 = vld [vmem:[#allocation2 + $0x2b4] sm:$0xf]
    %v550 = vld [vmem:[#allocation2 + $0x2b8] sm:$0xff]
    %v551 = vld [vmem:[#allocation2 + $0x2c0] sm:$0xf]
    %v552 = vld [vmem:[#allocation2 + $0x2c4] sm:$0xff]
    %v553 = vld [vmem:[#allocation2 + $0x2cc] sm:$0xf]
    %v554 = vld [vmem:[#allocation2 + $0x2d0] sm:$0xff]
    %v555 = vld [vmem:[#allocation2 + $0x2d8] sm:$0xf]
    %v556 = vld [vmem:[#allocation2 + $0x2dc] sm:$0xff]
    %v557 = vld [vmem:[#allocation2 + $0x2e4] sm:$0xf]
    %v558 = vld [vmem:[#allocation2 + $0x2e8] sm:$0xff]
    %v559 = vld [vmem:[#allocation2 + $0x2f0] sm:$0xf]
    %v560 = vld [vmem:[#allocation2 + $0x2f4] sm:$0xff]
    %v561 = vld [vmem:[#allocation2 + $0x2fc] sm:$0xf]
    %v562 = vld [vmem:[#allocation2 + $0x300] sm:$0xff]
    %v563 = vld [vmem:[#allocation2 + $0x308] sm:$0xf]
    %v564 = vld [vmem:[#allocation2 + $0x30c] sm:$0xff]
    %v565 = vld [vmem:[#allocation2 + $0x314] sm:$0xf]
    %v566 = vld [vmem:[#allocation2 + $0x318] sm:$0xff]
    %v567 = vld [vmem:[#allocation2 + $0x320] sm:$0xf]
    %v568 = vld [vmem:[#allocation2 + $0x324] sm:$0xff]
    %v569 = vld [vmem:[#allocation2 + $0x32c] sm:$0xf]
    %v570 = vld [vmem:[#allocation2 + $0x330] sm:$0xff]
    %v571 = vld [vmem:[#allocation2 + $0x338] sm:$0xf]
    %v572 = vld [vmem:[#allocation2 + $0x33c] sm:$0xff]
    %v573 = vld [vmem:[#allocation2 + $0x344] sm:$0xf]
    %v574 = vld [vmem:[#allocation2 + $0x348] sm:$0xff]
    %v575 = vld [vmem:[#allocation2 + $0x350] sm:$0xf]
    %v576 = vld [vmem:[#allocation2 + $0x354] sm:$0xff]
    %v577 = vld [vmem:[#allocation2 + $0x35c] sm:$0xf]
    %v578 = vld [vmem:[#allocation2 + $0x360] sm:$0xff]
    %v579 = vld [vmem:[#allocation2 + $0x368] sm:$0xf]
    %v580 = vld [vmem:[#allocation2 + $0x36c] sm:$0xff]
    %v581 = vld [vmem:[#allocation2 + $0x374] sm:$0xf]
    %v582 = vld [vmem:[#allocation2 + $0x378] sm:$0xff]
    %v583 = vld [vmem:[#allocation2 + $0x380] sm:$0xf]
    %v584 = vld [vmem:[#allocation2 + $0x384] sm:$0xff]
    %v585 = vld [vmem:[#allocation2 + $0x38c] sm:$0xf]
    %v586 = vld [vmem:[#allocation2 + $0x390] sm:$0xff]
    %v587 = vld [vmem:[#allocation2 + $0x398] sm:$0xf]
    %v588 = vld [vmem:[#allocation2 + $0x39c] sm:$0xff]
    %v589 = vld [vmem:[#allocation2 + $0x3a4] sm:$0xf]
    %v590 = vld [vmem:[#allocation2 + $0x3a8] sm:$0xff]
    %v591 = vld [vmem:[#allocation2 + $0x3b0] sm:$0xf]
    %v592 = vld [vmem:[#allocation2 + $0x3b4] sm:$0xff]
    %v593 = vld [vmem:[#allocation2 + $0x3bc] sm:$0xf]
    %v594 = vld [vmem:[%s7] sm:$0x7]
    %v596 = vlaneseq
    %v597 = vshrl.u32 %v596, 7
    %v598 = vsub.s32 0, %v597
    %v599 = vrot.slane %v594, %v598
    %v600 = vlaneseq
    %v601 = vshrl.u32 %v600, 7
    %v602 = vsub.s32 1, %v601
    %v603 = vrot.slane %v594, %v602
    %v604 = vlaneseq
    %v605 = vshrl.u32 %v604, 7
    %v606 = vsub.s32 2, %v605
    %v607 = vrot.slane %v594, %v606
    %v771 = vunpack.c.l.b16 %v434
    %v772 = vunpack.c.h.b16 %v434
    %v773 = vunpack.c.l.b16 %v435
    %v774 = vunpack.c.l.b16 %v436
    %v775 = vunpack.c.h.b16 %v436
    %v776 = vunpack.c.l.b16 %v437
    %v777 = vunpack.c.l.b16 %v438
    %v778 = vunpack.c.h.b16 %v438
    %v779 = vunpack.c.l.b16 %v439
    %v780 = vunpack.c.l.b16 %v440
    %v781 = vunpack.c.h.b16 %v440
    %v782 = vunpack.c.l.b16 %v441
    %v783 = vunpack.c.l.b16 %v442
    %v784 = vunpack.c.h.b16 %v442
    %v785 = vunpack.c.l.b16 %v443
    %v786 = vunpack.c.l.b16 %v444
    %v787 = vunpack.c.h.b16 %v444
    %v788 = vunpack.c.l.b16 %v445
    %v789 = vunpack.c.l.b16 %v446
    %v790 = vunpack.c.h.b16 %v446
    %v791 = vunpack.c.l.b16 %v447
    %v792 = vunpack.c.l.b16 %v448
    %v793 = vunpack.c.h.b16 %v448
    %v794 = vunpack.c.l.b16 %v449
    %v795 = vunpack.c.l.b16 %v450
    %v796 = vunpack.c.h.b16 %v450
    %v797 = vunpack.c.l.b16 %v451
    %v798 = vunpack.c.l.b16 %v452
    %v799 = vunpack.c.h.b16 %v452
    %v800 = vunpack.c.l.b16 %v453
    %v801 = vunpack.c.l.b16 %v454
    %v802 = vunpack.c.h.b16 %v454
    %v803 = vunpack.c.l.b16 %v455
    %v804 = vunpack.c.l.b16 %v456
    %v805 = vunpack.c.h.b16 %v456
    %v806 = vunpack.c.l.b16 %v457
    %v807 = vunpack.c.l.b16 %v458
    %v808 = vunpack.c.h.b16 %v458
    %v809 = vunpack.c.l.b16 %v459
    %v810 = vunpack.c.l.b16 %v460
    %v811 = vunpack.c.h.b16 %v460
    %v812 = vunpack.c.l.b16 %v461
    %v813 = vunpack.c.l.b16 %v462
    %v814 = vunpack.c.h.b16 %v462
    %v815 = vunpack.c.l.b16 %v463
    %v816 = vunpack.c.l.b16 %v464
    %v817 = vunpack.c.h.b16 %v464
    %v818 = vunpack.c.l.b16 %v465
    %v819 = vunpack.c.l.b16 %v466
    %v820 = vunpack.c.h.b16 %v466
    %v821 = vunpack.c.l.b16 %v467
    %v822 = vunpack.c.l.b16 %v468
    %v823 = vunpack.c.h.b16 %v468
    %v824 = vunpack.c.l.b16 %v469
    %v825 = vunpack.c.l.b16 %v470
    %v826 = vunpack.c.h.b16 %v470
    %v827 = vunpack.c.l.b16 %v471
    %v828 = vunpack.c.l.b16 %v472
    %v829 = vunpack.c.h.b16 %v472
    %v830 = vunpack.c.l.b16 %v473
    %v831 = vunpack.c.l.b16 %v474
    %v832 = vunpack.c.h.b16 %v474
    %v833 = vunpack.c.l.b16 %v475
    %v834 = vunpack.c.l.b16 %v476
    %v835 = vunpack.c.h.b16 %v476
    %v836 = vunpack.c.l.b16 %v477
    %v837 = vunpack.c.l.b16 %v478
    %v838 = vunpack.c.h.b16 %v478
    %v839 = vunpack.c.l.b16 %v479
    %v840 = vunpack.c.l.b16 %v480
    %v841 = vunpack.c.h.b16 %v480
    %v842 = vunpack.c.l.b16 %v481
    %v843 = vunpack.c.l.b16 %v482
    %v844 = vunpack.c.h.b16 %v482
    %v845 = vunpack.c.l.b16 %v483
    %v846 = vunpack.c.l.b16 %v484
    %v847 = vunpack.c.h.b16 %v484
    %v848 = vunpack.c.l.b16 %v485
    %v849 = vunpack.c.l.b16 %v486
    %v850 = vunpack.c.h.b16 %v486
    %v851 = vunpack.c.l.b16 %v487
    %v852 = vunpack.c.l.b16 %v488
    %v853 = vunpack.c.h.b16 %v488
    %v854 = vunpack.c.l.b16 %v489
    %v855 = vunpack.c.l.b16 %v490
    %v856 = vunpack.c.h.b16 %v490
    %v857 = vunpack.c.l.b16 %v491
    %v858 = vunpack.c.l.b16 %v492
    %v859 = vunpack.c.h.b16 %v492
    %v860 = vunpack.c.l.b16 %v493
    %v861 = vunpack.c.l.b16 %v494
    %v862 = vunpack.c.h.b16 %v494
    %v863 = vunpack.c.l.b16 %v495
    %v864 = vunpack.c.l.b16 %v496
    %v865 = vunpack.c.h.b16 %v496
    %v866 = vunpack.c.l.b16 %v497
    %v867 = vunpack.c.l.b16 %v498
    %v868 = vunpack.c.h.b16 %v498
    %v869 = vunpack.c.l.b16 %v499
    %v870 = vunpack.c.l.b16 %v500
    %v871 = vunpack.c.h.b16 %v500
    %v872 = vunpack.c.l.b16 %v501
    %v873 = vunpack.c.l.b16 %v502
    %v874 = vunpack.c.h.b16 %v502
    %v875 = vunpack.c.l.b16 %v503
    %v876 = vunpack.c.l.b16 %v504
    %v877 = vunpack.c.h.b16 %v504
    %v878 = vunpack.c.l.b16 %v505
    %v879 = vunpack.c.l.b16 %v506
    %v880 = vunpack.c.h.b16 %v506
    %v881 = vunpack.c.l.b16 %v507
    %v882 = vunpack.c.l.b16 %v508
    %v883 = vunpack.c.h.b16 %v508
    %v884 = vunpack.c.l.b16 %v509
    %v885 = vunpack.c.l.b16 %v510
    %v886 = vunpack.c.h.b16 %v510
    %v887 = vunpack.c.l.b16 %v511
    %v888 = vunpack.c.l.b16 %v512
    %v889 = vunpack.c.h.b16 %v512
    %v890 = vunpack.c.l.b16 %v513
    %v891 = vunpack.c.l.b16 %v514
    %v892 = vunpack.c.h.b16 %v514
    %v893 = vunpack.c.l.b16 %v515
    %v894 = vunpack.c.l.b16 %v516
    %v895 = vunpack.c.h.b16 %v516
    %v896 = vunpack.c.l.b16 %v517
    %v897 = vunpack.c.l.b16 %v518
    %v898 = vunpack.c.h.b16 %v518
    %v899 = vunpack.c.l.b16 %v519
    %v900 = vunpack.c.l.b16 %v520
    %v901 = vunpack.c.h.b16 %v520
    %v902 = vunpack.c.l.b16 %v521
    %v903 = vunpack.c.l.b16 %v522
    %v904 = vunpack.c.h.b16 %v522
    %v905 = vunpack.c.l.b16 %v523
    %v906 = vunpack.c.l.b16 %v524
    %v907 = vunpack.c.h.b16 %v524
    %v908 = vunpack.c.l.b16 %v525
    %v909 = vunpack.c.l.b16 %v526
    %v910 = vunpack.c.h.b16 %v526
    %v911 = vunpack.c.l.b16 %v527
    %v912 = vunpack.c.l.b16 %v528
    %v913 = vunpack.c.h.b16 %v528
    %v914 = vunpack.c.l.b16 %v529
    %v915 = vunpack.c.l.b16 %v530
    %v916 = vunpack.c.h.b16 %v530
    %v917 = vunpack.c.l.b16 %v531
    %v918 = vunpack.c.l.b16 %v532
    %v919 = vunpack.c.h.b16 %v532
    %v920 = vunpack.c.l.b16 %v533
    %v921 = vunpack.c.l.b16 %v534
    %v922 = vunpack.c.h.b16 %v534
    %v923 = vunpack.c.l.b16 %v535
    %v924 = vunpack.c.l.b16 %v536
    %v925 = vunpack.c.h.b16 %v536
    %v926 = vunpack.c.l.b16 %v537
    %v927 = vunpack.c.l.b16 %v538
    %v928 = vunpack.c.h.b16 %v538
    %v929 = vunpack.c.l.b16 %v539
    %v930 = vunpack.c.l.b16 %v540
    %v931 = vunpack.c.h.b16 %v540
    %v932 = vunpack.c.l.b16 %v541
    %v933 = vunpack.c.l.b16 %v542
    %v934 = vunpack.c.h.b16 %v542
    %v935 = vunpack.c.l.b16 %v543
    %v936 = vunpack.c.l.b16 %v544
    %v937 = vunpack.c.h.b16 %v544
    %v938 = vunpack.c.l.b16 %v545
    %v939 = vunpack.c.l.b16 %v546
    %v940 = vunpack.c.h.b16 %v546
    %v941 = vunpack.c.l.b16 %v547
    %v942 = vunpack.c.l.b16 %v548
    %v943 = vunpack.c.h.b16 %v548
    %v944 = vunpack.c.l.b16 %v549
    %v945 = vunpack.c.l.b16 %v550
    %v946 = vunpack.c.h.b16 %v550
    %v947 = vunpack.c.l.b16 %v551
    %v948 = vunpack.c.l.b16 %v552
    %v949 = vunpack.c.h.b16 %v552
    %v950 = vunpack.c.l.b16 %v553
    %v951 = vunpack.c.l.b16 %v554
    %v952 = vunpack.c.h.b16 %v554
    %v953 = vunpack.c.l.b16 %v555
    %v954 = vunpack.c.l.b16 %v556
    %v955 = vunpack.c.h.b16 %v556
    %v956 = vunpack.c.l.b16 %v557
    %v957 = vunpack.c.l.b16 %v558
    %v958 = vunpack.c.h.b16 %v558
    %v959 = vunpack.c.l.b16 %v559
    %v960 = vunpack.c.l.b16 %v560
    %v961 = vunpack.c.h.b16 %v560
    %v962 = vunpack.c.l.b16 %v561
    %v963 = vunpack.c.l.b16 %v562
    %v964 = vunpack.c.h.b16 %v562
    %v965 = vunpack.c.l.b16 %v563
    %v966 = vunpack.c.l.b16 %v564
    %v967 = vunpack.c.h.b16 %v564
    %v968 = vunpack.c.l.b16 %v565
    %v969 = vunpack.c.l.b16 %v566
    %v970 = vunpack.c.h.b16 %v566
    %v971 = vunpack.c.l.b16 %v567
    %v972 = vunpack.c.l.b16 %v568
    %v973 = vunpack.c.h.b16 %v568
    %v974 = vunpack.c.l.b16 %v569
    %v975 = vunpack.c.l.b16 %v570
    %v976 = vunpack.c.h.b16 %v570
    %v977 = vunpack.c.l.b16 %v571
    %v978 = vunpack.c.l.b16 %v572
    %v979 = vunpack.c.h.b16 %v572
    %v980 = vunpack.c.l.b16 %v573
    %v981 = vunpack.c.l.b16 %v574
    %v982 = vunpack.c.h.b16 %v574
    %v983 = vunpack.c.l.b16 %v575
    %v984 = vunpack.c.l.b16 %v576
    %v985 = vunpack.c.h.b16 %v576
    %v986 = vunpack.c.l.b16 %v577
    %v987 = vunpack.c.l.b16 %v578
    %v988 = vunpack.c.h.b16 %v578
    %v989 = vunpack.c.l.b16 %v579
    %v990 = vunpack.c.l.b16 %v580
    %v991 = vunpack.c.h.b16 %v580
    %v992 = vunpack.c.l.b16 %v581
    %v993 = vunpack.c.l.b16 %v582
    %v994 = vunpack.c.h.b16 %v582
    %v995 = vunpack.c.l.b16 %v583
    %v996 = vunpack.c.l.b16 %v584
    %v997 = vunpack.c.h.b16 %v584
    %v998 = vunpack.c.l.b16 %v585
    %v999 = vunpack.c.l.b16 %v586
    %v1000 = vunpack.c.h.b16 %v586
    %v1001 = vunpack.c.l.b16 %v587
    %v1002 = vunpack.c.l.b16 %v588
    %v1003 = vunpack.c.h.b16 %v588
    %v1004 = vunpack.c.l.b16 %v589
    %v1005 = vunpack.c.l.b16 %v590
    %v1006 = vunpack.c.h.b16 %v590
    %v1007 = vunpack.c.l.b16 %v591
    %v1008 = vunpack.c.l.b16 %v592
    %v1009 = vunpack.c.h.b16 %v592
    %v1010 = vunpack.c.l.b16 %v593
    %v1011 = vpack.c.b16 %v774, %v771
    %v1012 = vpack.c.b16 %v775, %v772
    %v1013 = vpack.c.b16 %v776, %v773
    %v1014 = vpack.c.b16 %v780, %v777
    %v1015 = vpack.c.b16 %v781, %v778
    %v1016 = vpack.c.b16 %v782, %v779
    %v1017 = vpack.c.b16 %v786, %v783
    %v1018 = vpack.c.b16 %v787, %v784
    %v1019 = vpack.c.b16 %v788, %v785
    %v1020 = vpack.c.b16 %v792, %v789
    %v1021 = vpack.c.b16 %v793, %v790
    %v1022 = vpack.c.b16 %v794, %v791
    %v1023 = vpack.c.b16 %v798, %v795
    %v1024 = vpack.c.b16 %v799, %v796
    %v1025 = vpack.c.b16 %v800, %v797
    %v1026 = vpack.c.b16 %v804, %v801
    %v1027 = vpack.c.b16 %v805, %v802
    %v1028 = vpack.c.b16 %v806, %v803
    %v1029 = vpack.c.b16 %v810, %v807
    %v1030 = vpack.c.b16 %v811, %v808
    %v1031 = vpack.c.b16 %v812, %v809
    %v1032 = vpack.c.b16 %v816, %v813
    %v1033 = vpack.c.b16 %v817, %v814
    %v1034 = vpack.c.b16 %v818, %v815
    %v1035 = vpack.c.b16 %v822, %v819
    %v1036 = vpack.c.b16 %v823, %v820
    %v1037 = vpack.c.b16 %v824, %v821
    %v1038 = vpack.c.b16 %v828, %v825
    %v1039 = vpack.c.b16 %v829, %v826
    %v1040 = vpack.c.b16 %v830, %v827
    %v1041 = vpack.c.b16 %v834, %v831
    %v1042 = vpack.c.b16 %v835, %v832
    %v1043 = vpack.c.b16 %v836, %v833
    %v1044 = vpack.c.b16 %v840, %v837
    %v1045 = vpack.c.b16 %v841, %v838
    %v1046 = vpack.c.b16 %v842, %v839
    %v1047 = vpack.c.b16 %v846, %v843
    %v1048 = vpack.c.b16 %v847, %v844
    %v1049 = vpack.c.b16 %v848, %v845
    %v1050 = vpack.c.b16 %v852, %v849
    %v1051 = vpack.c.b16 %v853, %v850
    %v1052 = vpack.c.b16 %v854, %v851
    %v1053 = vpack.c.b16 %v858, %v855
    %v1054 = vpack.c.b16 %v859, %v856
    %v1055 = vpack.c.b16 %v860, %v857
    %v1056 = vpack.c.b16 %v864, %v861
    %v1057 = vpack.c.b16 %v865, %v862
    %v1058 = vpack.c.b16 %v866, %v863
    %v1059 = vpack.c.b16 %v870, %v867
    %v1060 = vpack.c.b16 %v871, %v868
    %v1061 = vpack.c.b16 %v872, %v869
    %v1062 = vpack.c.b16 %v876, %v873
    %v1063 = vpack.c.b16 %v877, %v874
    %v1064 = vpack.c.b16 %v878, %v875
    %v1065 = vpack.c.b16 %v882, %v879
    %v1066 = vpack.c.b16 %v883, %v880
    %v1067 = vpack.c.b16 %v884, %v881
    %v1068 = vpack.c.b16 %v888, %v885
    %v1069 = vpack.c.b16 %v889, %v886
    %v1070 = vpack.c.b16 %v890, %v887
    %v1071 = vpack.c.b16 %v894, %v891
    %v1072 = vpack.c.b16 %v895, %v892
    %v1073 = vpack.c.b16 %v896, %v893
    %v1074 = vpack.c.b16 %v900, %v897
    %v1075 = vpack.c.b16 %v901, %v898
    %v1076 = vpack.c.b16 %v902, %v899
    %v1077 = vpack.c.b16 %v906, %v903
    %v1078 = vpack.c.b16 %v907, %v904
    %v1079 = vpack.c.b16 %v908, %v905
    %v1080 = vpack.c.b16 %v912, %v909
    %v1081 = vpack.c.b16 %v913, %v910
    %v1082 = vpack.c.b16 %v914, %v911
    %v1083 = vpack.c.b16 %v918, %v915
    %v1084 = vpack.c.b16 %v919, %v916
    %v1085 = vpack.c.b16 %v920, %v917
    %v1086 = vpack.c.b16 %v924, %v921
    %v1087 = vpack.c.b16 %v925, %v922
    %v1088 = vpack.c.b16 %v926, %v923
    %v1089 = vpack.c.b16 %v930, %v927
    %v1090 = vpack.c.b16 %v931, %v928
    %v1091 = vpack.c.b16 %v932, %v929
    %v1092 = vpack.c.b16 %v936, %v933
    %v1093 = vpack.c.b16 %v937, %v934
    %v1094 = vpack.c.b16 %v938, %v935
    %v1095 = vpack.c.b16 %v942, %v939
    %v1096 = vpack.c.b16 %v943, %v940
    %v1097 = vpack.c.b16 %v944, %v941
    %v1098 = vpack.c.b16 %v948, %v945
    %v1099 = vpack.c.b16 %v949, %v946
    %v1100 = vpack.c.b16 %v950, %v947
    %v1101 = vpack.c.b16 %v954, %v951
    %v1102 = vpack.c.b16 %v955, %v952
    %v1103 = vpack.c.b16 %v956, %v953
    %v1104 = vpack.c.b16 %v960, %v957
    %v1105 = vpack.c.b16 %v961, %v958
    %v1106 = vpack.c.b16 %v962, %v959
    %v1107 = vpack.c.b16 %v966, %v963
    %v1108 = vpack.c.b16 %v967, %v964
    %v1109 = vpack.c.b16 %v968, %v965
    %v1110 = vpack.c.b16 %v972, %v969
    %v1111 = vpack.c.b16 %v973, %v970
    %v1112 = vpack.c.b16 %v974, %v971
    %v1113 = vpack.c.b16 %v978, %v975
    %v1114 = vpack.c.b16 %v979, %v976
    %v1115 = vpack.c.b16 %v980, %v977
    %v1116 = vpack.c.b16 %v984, %v981
    %v1117 = vpack.c.b16 %v985, %v982
    %v1118 = vpack.c.b16 %v986, %v983
    %v1119 = vpack.c.b16 %v990, %v987
    %v1120 = vpack.c.b16 %v991, %v988
    %v1121 = vpack.c.b16 %v992, %v989
    %v1122 = vpack.c.b16 %v996, %v993
    %v1123 = vpack.c.b16 %v997, %v994
    %v1124 = vpack.c.b16 %v998, %v995
    %v1125 = vpack.c.b16 %v1002, %v999
    %v1126 = vpack.c.b16 %v1003, %v1000
    %v1127 = vpack.c.b16 %v1004, %v1001
    %v1128 = vpack.c.b16 %v1008, %v1005
    %v1129 = vpack.c.b16 %v1009, %v1006
    %v1130 = vpack.c.b16 %v1010, %v1007
    %1251 = vmatprep.subr.bf16.mxu0 %v1012
    %1252 = vmatpush1.bf16.msra.mxu0 %v1011
    %1253 = vmatprep.subr.bf16.mxu0 %v1015
    %1254 = vmatpush1.bf16.msra.mxu0 %v1014
    %1255 = vmatprep.subr.bf16.mxu0 %v1018
    %1256 = vmatpush1.bf16.msra.mxu0 %v1017
    %1257 = vmatprep.subr.bf16.mxu0 %v1021
    %1258 = vmatpush1.bf16.msra.mxu0 %v1020
    %1259 = vmatprep.subr.bf16.mxu0 %v1024
    %1260 = vmatpush1.bf16.msra.mxu0 %v1023
    %1261 = vmatprep.subr.bf16.mxu0 %v1027
    %1262 = vmatpush1.bf16.msra.mxu0 %v1026
    %1263 = vmatprep.subr.bf16.mxu0 %v1030
    %1264 = vmatpush1.bf16.msra.mxu0 %v1029
    %1265 = vmatprep.subr.bf16.mxu0 %v1033
    %1266 = vmatpush1.bf16.msra.mxu0 %v1032
    %1267 = vmatprep.subr.bf16.mxu0 %v1036
    %1268 = vmatpush1.bf16.msra.mxu0 %v1035
    %1269 = vmatprep.subr.bf16.mxu0 %v1039
    %1270 = vmatpush1.bf16.msra.mxu0 %v1038
    %1271 = vmatprep.subr.bf16.mxu0 %v1042
    %1272 = vmatpush1.bf16.msra.mxu0 %v1041
    %1273 = vmatprep.subr.bf16.mxu0 %v1045
    %1274 = vmatpush1.bf16.msra.mxu0 %v1044
    %1275 = vmatprep.subr.bf16.mxu0 %v1048
    %1276 = vmatpush1.bf16.msra.mxu0 %v1047
    %1277 = vmatprep.subr.bf16.mxu0 %v1051
    %1278 = vmatpush1.bf16.msra.mxu0 %v1050
    %1279 = vmatprep.subr.bf16.mxu0 %v1054
    %1280 = vmatpush1.bf16.msra.mxu0 %v1053
    %1281 = vmatprep.subr.bf16.mxu0 %v1057
    %1282 = vmatpush1.bf16.msra.mxu0 %v1056
    %1283 = vmatprep.mubr.bf16.mxu0 %v425
    %1284 = vmatmul.mubr.bf16.gmra.mrb[0].mxu0 %v424
    %v1285 = vpop.f32.mrb[0].mxu0
    %v1286 = vadd.f32 %v599, %v1285
    %v1287 = vpop.f32.mrb[0].mxu0
    %v1288 = vadd.f32 %v603, %v1287
    %v1289 = vpop.f32.mrb[0].mxu0
    %v1290 = vadd.f32 %v599, %v1289
    %v1291 = vpop.f32.mrb[0].mxu0
    %v1292 = vadd.f32 %v603, %v1291
    %1293 = vmatprep.mubr.bf16.mxu0 %v430
    %1294 = vmatmul.mubr.bf16.gmra.mrb[0].mxu0 %v429
    %v1295 = vpop.f32.mrb[0].mxu0
    %v1296 = vadd.f32 %v599, %v1295
    %v1297 = vpop.f32.mrb[0].mxu0
    %v1298 = vadd.f32 %v603, %v1297
    %v1299 = vpop.f32.mrb[0].mxu0
    %v1300 = vpop.f32.mrb[0].mxu0
    %1301 = vdwg.mxu0
    %1302 = vmatprep.subr.bf16.mxu0 %v1060
    %1303 = vmatpush1.bf16.msra.mxu0 %v1059
    %1304 = vmatprep.subr.bf16.mxu0 %v1063
    %1305 = vmatpush1.bf16.msra.mxu0 %v1062
    %1306 = vmatprep.subr.bf16.mxu0 %v1066
    %1307 = vmatpush1.bf16.msra.mxu0 %v1065
    %1308 = vmatprep.subr.bf16.mxu0 %v1069
    %1309 = vmatpush1.bf16.msra.mxu0 %v1068
    %1310 = vmatprep.subr.bf16.mxu0 %v1072
    %1311 = vmatpush1.bf16.msra.mxu0 %v1071
    %1312 = vmatprep.subr.bf16.mxu0 %v1075
    %1313 = vmatpush1.bf16.msra.mxu0 %v1074
    %1314 = vmatprep.subr.bf16.mxu0 %v1078
    %1315 = vmatpush1.bf16.msra.mxu0 %v1077
    %1316 = vmatprep.subr.bf16.mxu0 %v1081
    %1317 = vmatpush1.bf16.msra.mxu0 %v1080
    %1318 = vmatprep.subr.bf16.mxu0 %v1084
    %1319 = vmatpush1.bf16.msra.mxu0 %v1083
    %1320 = vmatprep.subr.bf16.mxu0 %v1087
    %1321 = vmatpush1.bf16.msra.mxu0 %v1086
    %1322 = vmatprep.subr.bf16.mxu0 %v1090
    %1323 = vmatpush1.bf16.msra.mxu0 %v1089
    %1324 = vmatprep.subr.bf16.mxu0 %v1093
    %1325 = vmatpush1.bf16.msra.mxu0 %v1092
    %1326 = vmatprep.subr.bf16.mxu0 %v1096
    %1327 = vmatpush1.bf16.msra.mxu0 %v1095
    %1328 = vmatprep.subr.bf16.mxu0 %v1099
    %1329 = vmatpush1.bf16.msra.mxu0 %v1098
    %1330 = vmatprep.subr.bf16.mxu0 %v1102
    %1331 = vmatpush1.bf16.msra.mxu0 %v1101
    %1332 = vmatprep.subr.bf16.mxu0 %v1105
    %1333 = vmatpush1.bf16.msra.mxu0 %v1104
    %1334 = vmatprep.mubr.bf16.mxu0 %v427
    %1335 = vmatmul.mubr.bf16.gmra.mrb[0].mxu0 %v426
    %v1336 = vpop.f32.mrb[0].mxu0
    %v1337 = vadd.f32 %v1286, %v1336
    %v1338 = vpop.f32.mrb[0].mxu0
    %v1339 = vadd.f32 %v1288, %v1338
    %v1340 = vpop.f32.mrb[0].mxu0
    %v1341 = vadd.f32 %v1290, %v1340
    %v1342 = vpop.f32.mrb[0].mxu0
    %v1343 = vadd.f32 %v1292, %v1342
    %1344 = vmatprep.mubr.bf16.mxu0 %v432
    %1345 = vmatmul.mubr.bf16.gmra.mrb[0].mxu0 %v431
    %v1346 = vpop.f32.mrb[0].mxu0
    %v1347 = vadd.f32 %v1296, %v1346
    %v1348 = vpop.f32.mrb[0].mxu0
    %v1349 = vadd.f32 %v1298, %v1348
    %v1350 = vpop.f32.mrb[0].mxu0
    %v1351 = vpop.f32.mrb[0].mxu0
    %1352 = vdwg.mxu0
    %1353 = vmatprep.subr.bf16.mxu0 %v1108
    %1354 = vmatpush1.bf16.msra.mxu0 %v1107
    %1355 = vmatprep.subr.bf16.mxu0 %v1111
    %1356 = vmatpush1.bf16.msra.mxu0 %v1110
    %1357 = vmatprep.subr.bf16.mxu0 %v1114
    %1358 = vmatpush1.bf16.msra.mxu0 %v1113
    %1359 = vmatprep.subr.bf16.mxu0 %v1117
    %1360 = vmatpush1.bf16.msra.mxu0 %v1116
    %1361 = vmatprep.subr.bf16.mxu0 %v1120
    %1362 = vmatpush1.bf16.msra.mxu0 %v1119
    %1363 = vmatprep.subr.bf16.mxu0 %v1123
    %1364 = vmatpush1.bf16.msra.mxu0 %v1122
    %1365 = vmatprep.subr.bf16.mxu0 %v1126
    %1366 = vmatpush1.bf16.msra.mxu0 %v1125
    %1367 = vmatprep.subr.bf16.mxu0 %v1129
    %1368 = vmatpush1.bf16.msra.mxu0 %v1128
    %1369 = vmatprep.subr.bf16.mxu0 0
    %1370 = vmatpush1.bf16.msra.mxu0 0
    %1371 = vmatprep.subr.bf16.mxu0 0
    %1372 = vmatpush1.bf16.msra.mxu0 0
    %1373 = vmatprep.subr.bf16.mxu0 0
    %1374 = vmatpush1.bf16.msra.mxu0 0
    %1375 = vmatprep.subr.bf16.mxu0 0
    %1376 = vmatpush1.bf16.msra.mxu0 0
    %1377 = vmatprep.subr.bf16.mxu0 0
    %1378 = vmatpush1.bf16.msra.mxu0 0
    %1379 = vmatprep.subr.bf16.mxu0 0
    %1380 = vmatpush1.bf16.msra.mxu0 0
    %1381 = vmatprep.subr.bf16.mxu0 0
    %1382 = vmatpush1.bf16.msra.mxu0 0
    %1383 = vmatprep.subr.bf16.mxu0 0
    %1384 = vmatpush1.bf16.msra.mxu0 0
    %1385 = vmatprep.mubr.bf16.mxu0 0
    %1386 = vmatmul.mubr.bf16.gmra.mrb[0].mxu0 %v428
    %v1387 = vpop.f32.mrb[0].mxu0
    %v1388 = vadd.f32 %v1337, %v1387
    %v1389 = vpop.f32.mrb[0].mxu0
    %v1390 = vadd.f32 %v1339, %v1389
    %v1391 = vpop.f32.mrb[0].mxu0
    %v1392 = vadd.f32 %v1341, %v1391
    %v1393 = vpop.f32.mrb[0].mxu0
    %v1394 = vadd.f32 %v1343, %v1393
    %1395 = vmatprep.mubr.bf16.mxu0 0
    %1396 = vmatmul.mubr.bf16.gmra.mrb[0].mxu0 %v433
    %v1397 = vpop.f32.mrb[0].mxu0
    %v1398 = vadd.f32 %v1347, %v1397
    %v1399 = vpop.f32.mrb[0].mxu0
    %v1400 = vadd.f32 %v1349, %v1399
    %v1401 = vpop.f32.mrb[0].mxu0
    %v1402 = vpop.f32.mrb[0].mxu0
    %1403 = vdwg.mxu0
    %1404 = vmatprep.subr.bf16.mxu0 0
    %1405 = vmatpush1.bf16.msra.mxu0 %v1013
    %1406 = vmatprep.subr.bf16.mxu0 0
    %1407 = vmatpush1.bf16.msra.mxu0 %v1016
    %1408 = vmatprep.subr.bf16.mxu0 0
    %1409 = vmatpush1.bf16.msra.mxu0 %v1019
    %1410 = vmatprep.subr.bf16.mxu0 0
    %1411 = vmatpush1.bf16.msra.mxu0 %v1022
    %1412 = vmatprep.subr.bf16.mxu0 0
    %1413 = vmatpush1.bf16.msra.mxu0 %v1025
    %1414 = vmatprep.subr.bf16.mxu0 0
    %1415 = vmatpush1.bf16.msra.mxu0 %v1028
    %1416 = vmatprep.subr.bf16.mxu0 0
    %1417 = vmatpush1.bf16.msra.mxu0 %v1031
    %1418 = vmatprep.subr.bf16.mxu0 0
    %1419 = vmatpush1.bf16.msra.mxu0 %v1034
    %1420 = vmatprep.subr.bf16.mxu0 0
    %1421 = vmatpush1.bf16.msra.mxu0 %v1037
    %1422 = vmatprep.subr.bf16.mxu0 0
    %1423 = vmatpush1.bf16.msra.mxu0 %v1040
    %1424 = vmatprep.subr.bf16.mxu0 0
    %1425 = vmatpush1.bf16.msra.mxu0 %v1043
    %1426 = vmatprep.subr.bf16.mxu0 0
    %1427 = vmatpush1.bf16.msra.mxu0 %v1046
    %1428 = vmatprep.subr.bf16.mxu0 0
    %1429 = vmatpush1.bf16.msra.mxu0 %v1049
    %1430 = vmatprep.subr.bf16.mxu0 0
    %1431 = vmatpush1.bf16.msra.mxu0 %v1052
    %1432 = vmatprep.subr.bf16.mxu0 0
    %1433 = vmatpush1.bf16.msra.mxu0 %v1055
    %1434 = vmatprep.subr.bf16.mxu0 0
    %1435 = vmatpush1.bf16.msra.mxu0 %v1058
    %1436 = vmatprep.mubr.bf16.mxu0 %v425
    %1437 = vmatmul.mubr.bf16.gmra.mrb[0].mxu0 %v424
    %v1438 = vpop.f32.mrb[0].mxu0
    %v1439 = vadd.f32 %v607, %v1438
    %v1440 = vpop.f32.mrb[0].mxu0
    %v1441 = vpop.f32.mrb[0].mxu0
    %v1442 = vadd.f32 %v607, %v1441
    %v1443 = vpop.f32.mrb[0].mxu0
    %1444 = vmatprep.mubr.bf16.mxu0 %v430
    %1445 = vmatmul.mubr.bf16.gmra.mrb[0].mxu0 %v429
    %v1446 = vpop.f32.mrb[0].mxu0
    %v1447 = vadd.f32 %v607, %v1446
    %v1448 = vpop.f32.mrb[0].mxu0
    %v1449 = vpop.f32.mrb[0].mxu0
    %v1450 = vpop.f32.mrb[0].mxu0
    %1451 = vdwg.mxu0
    %1452 = vmatprep.subr.bf16.mxu0 0
    %1453 = vmatpush1.bf16.msra.mxu0 %v1061
    %1454 = vmatprep.subr.bf16.mxu0 0
    %1455 = vmatpush1.bf16.msra.mxu0 %v1064
    %1456 = vmatprep.subr.bf16.mxu0 0
    %1457 = vmatpush1.bf16.msra.mxu0 %v1067
    %1458 = vmatprep.subr.bf16.mxu0 0
    %1459 = vmatpush1.bf16.msra.mxu0 %v1070
    %1460 = vmatprep.subr.bf16.mxu0 0
    %1461 = vmatpush1.bf16.msra.mxu0 %v1073
    %1462 = vmatprep.subr.bf16.mxu0 0
    %1463 = vmatpush1.bf16.msra.mxu0 %v1076
    %1464 = vmatprep.subr.bf16.mxu0 0
    %1465 = vmatpush1.bf16.msra.mxu0 %v1079
    %1466 = vmatprep.subr.bf16.mxu0 0
    %1467 = vmatpush1.bf16.msra.mxu0 %v1082
    %1468 = vmatprep.subr.bf16.mxu0 0
    %1469 = vmatpush1.bf16.msra.mxu0 %v1085
    %1470 = vmatprep.subr.bf16.mxu0 0
    %1471 = vmatpush1.bf16.msra.mxu0 %v1088
    %1472 = vmatprep.subr.bf16.mxu0 0
    %1473 = vmatpush1.bf16.msra.mxu0 %v1091
    %1474 = vmatprep.subr.bf16.mxu0 0
    %1475 = vmatpush1.bf16.msra.mxu0 %v1094
    %1476 = vmatprep.subr.bf16.mxu0 0
    %1477 = vmatpush1.bf16.msra.mxu0 %v1097
    %1478 = vmatprep.subr.bf16.mxu0 0
    %1479 = vmatpush1.bf16.msra.mxu0 %v1100
    %1480 = vmatprep.subr.bf16.mxu0 0
    %1481 = vmatpush1.bf16.msra.mxu0 %v1103
    %1482 = vmatprep.subr.bf16.mxu0 0
    %1483 = vmatpush1.bf16.msra.mxu0 %v1106
    %1484 = vmatprep.mubr.bf16.mxu0 %v427
    %1485 = vmatmul.mubr.bf16.gmra.mrb[0].mxu0 %v426
    %v1486 = vpop.f32.mrb[0].mxu0
    %v1487 = vadd.f32 %v1439, %v1486
    %v1488 = vpop.f32.mrb[0].mxu0
    %v1489 = vpop.f32.mrb[0].mxu0
    %v1490 = vadd.f32 %v1442, %v1489
    %v1491 = vpop.f32.mrb[0].mxu0
    %1492 = vmatprep.mubr.bf16.mxu0 %v432
    %1493 = vmatmul.mubr.bf16.gmra.mrb[0].mxu0 %v431
    %v1494 = vpop.f32.mrb[0].mxu0
    %v1495 = vadd.f32 %v1447, %v1494
    %v1496 = vpop.f32.mrb[0].mxu0
    %v1497 = vpop.f32.mrb[0].mxu0
    %v1498 = vpop.f32.mrb[0].mxu0
    %1499 = vdwg.mxu0
    %1500 = vmatprep.subr.bf16.mxu0 0
    %1501 = vmatpush1.bf16.msra.mxu0 %v1109
    %1502 = vmatprep.subr.bf16.mxu0 0
    %1503 = vmatpush1.bf16.msra.mxu0 %v1112
    %1504 = vmatprep.subr.bf16.mxu0 0
    %1505 = vmatpush1.bf16.msra.mxu0 %v1115
    %1506 = vmatprep.subr.bf16.mxu0 0
    %1507 = vmatpush1.bf16.msra.mxu0 %v1118
    %1508 = vmatprep.subr.bf16.mxu0 0
    %1509 = vmatpush1.bf16.msra.mxu0 %v1121
    %1510 = vmatprep.subr.bf16.mxu0 0
    %1511 = vmatpush1.bf16.msra.mxu0 %v1124
    %1512 = vmatprep.subr.bf16.mxu0 0
    %1513 = vmatpush1.bf16.msra.mxu0 %v1127
    %1514 = vmatprep.subr.bf16.mxu0 0
    %1515 = vmatpush1.bf16.msra.mxu0 %v1130
    %1516 = vmatprep.subr.bf16.mxu0 0
    %1517 = vmatpush1.bf16.msra.mxu0 0
    %1518 = vmatprep.subr.bf16.mxu0 0
    %1519 = vmatpush1.bf16.msra.mxu0 0
    %1520 = vmatprep.subr.bf16.mxu0 0
    %1521 = vmatpush1.bf16.msra.mxu0 0
    %1522 = vmatprep.subr.bf16.mxu0 0
    %1523 = vmatpush1.bf16.msra.mxu0 0
    %1524 = vmatprep.subr.bf16.mxu0 0
    %1525 = vmatpush1.bf16.msra.mxu0 0
    %1526 = vmatprep.subr.bf16.mxu0 0
    %1527 = vmatpush1.bf16.msra.mxu0 0
    %1528 = vmatprep.subr.bf16.mxu0 0
    %1529 = vmatpush1.bf16.msra.mxu0 0
    %1530 = vmatprep.subr.bf16.mxu0 0
    %1531 = vmatpush1.bf16.msra.mxu0 0
    %1532 = vmatprep.mubr.bf16.mxu0 0
    %1533 = vmatmul.mubr.bf16.gmra.mrb[0].mxu0 %v428
    %v1534 = vpop.f32.mrb[0].mxu0
    %v1535 = vadd.f32 %v1487, %v1534
    %v1536 = vpop.f32.mrb[0].mxu0
    %v1537 = vpop.f32.mrb[0].mxu0
    %v1538 = vadd.f32 %v1490, %v1537
    %v1539 = vpop.f32.mrb[0].mxu0
    %1540 = vmatprep.mubr.bf16.mxu0 0
    %1541 = vmatmul.mubr.bf16.gmra.mrb[0].mxu0 %v433
    %v1542 = vpop.f32.mrb[0].mxu0
    %v1543 = vadd.f32 %v1495, %v1542
    %v1544 = vpop.f32.mrb[0].mxu0
    %v1545 = vpop.f32.mrb[0].mxu0
    %v1546 = vpop.f32.mrb[0].mxu0
    %1547 = vdwg.mxu0
    %v1548 = vmax.f32 %v1388, 0.0
    %v1549 = vmax.f32 %v1390, 0.0
    %v1550 = vmax.f32 %v1535, 0.0
    %v1551 = vmax.f32 %v1392, 0.0
    %v1552 = vmax.f32 %v1394, 0.0
    %v1553 = vmax.f32 %v1538, 0.0
    %v1554 = vmax.f32 %v1398, 0.0
    %v1555 = vmax.f32 %v1400, 0.0
    %v1556 = vmax.f32 %v1543, 0.0
    %v1557 = vadd.f32 %v1548, %v1551
    %v1558 = vadd.f32 %v1557, %v1554
    %v1559 = vrot.slane %v1558, 4
    %v1560 = vadd.f32 %v1558, %v1559
    %v1561 = vrot.slane %v1560, 2
    %v1562 = vadd.f32 %v1560, %v1561
    %v1563 = vrot.slane %v1562, 1
    %v1564 = vadd.f32 %v1562, %v1563
    %v1565 = vadd.f32 %v1549, %v1552
    %v1566 = vadd.f32 %v1565, %v1555
    %v1567 = vrot.slane %v1566, 4
    %v1568 = vadd.f32 %v1566, %v1567
    %v1569 = vrot.slane %v1568, 2
    %v1570 = vadd.f32 %v1568, %v1569
    %v1571 = vrot.slane %v1570, 1
    %v1572 = vadd.f32 %v1570, %v1571
    %v1573 = vadd.f32 %v1550, %v1553
    %v1574 = vadd.f32 %v1573, %v1556
    %v1575 = vrot.slane %v1574, 4
    %v1576 = vadd.f32 %v1574, %v1575
    %v1577 = vrot.slane %v1576, 2
    %v1578 = vadd.f32 %v1576, %v1577
    %v1579 = vrot.slane %v1578, 1
    %v1580 = vadd.f32 %v1578, %v1579
    %1581 = vrot.lane.b32.xlu0 %v1564, 32
    %v1582 = vpop.permute.xlu0 %1581
    %1583 = vrot.lane.b32.xlu0 %v1572, 32
    %v1584 = vpop.permute.xlu0 %1583
    %1585 = vrot.lane.b32.xlu0 %v1580, 32
    %v1586 = vpop.permute.xlu0 %1585
    %v1587 = vlaneseq
    %v1588 = vand.u32 %v1587, 127
    %vm1589 = vcmp.lt.s32.totalorder %v1588, 32
    %v1590 = vsel %vm1589, %v1584, %v1586
    %v1591 = vsel %vm1589, %v1582, %v1584
    %v1592 = vsel %vm1589, %v1586, %v1582
    %v1593 = vadd.f32 %v1564, %v1592
    %v1594 = vadd.f32 %v1572, %v1591
    %v1595 = vadd.f32 %v1580, %v1590
    %1596 = vrot.lane.b32.xlu0 %v1593, 64
    %v1597 = vpop.permute.xlu0 %1596
    %1598 = vrot.lane.b32.xlu0 %v1594, 64
    %v1599 = vpop.permute.xlu0 %1598
    %1600 = vrot.lane.b32.xlu0 %v1595, 64
    %v1601 = vpop.permute.xlu0 %1600
    %vm1602 = vcmp.lt.s32.totalorder %v1588, 64
    %v1603 = vsel %vm1602, %v1599, %v1601
    %v1604 = vsel %vm1602, %v1597, %v1599
    %v1605 = vsel %vm1602, %v1601, %v1597
    %v1606 = vadd.f32 %v1593, %v1605
    %v1607 = vadd.f32 %v1594, %v1604
    %v1608 = vadd.f32 %v1595, %v1603
    %v1609 = vadd.f32 %v1606, %v1608
    %v1610 = vadd.f32 %v1607, %v1606
    %v1611 = vadd.f32 %v1608, %v1607
    %v1612 = vadd.f32 %v1609, %v1607
    %v1613 = vadd.f32 %v1610, %v1608
    %v1614 = vadd.f32 %v1611, %v1606
    %v1615 = vmul.f32 %v1612, 0.0034722222
    %v1616 = vmul.f32 %v1613, 0.0034722222
    %v1617 = vmul.f32 %v1614, 0.0034722222
    %v1618 = vlaneseq
    %v1619 = vshrl.u32 %v1618, 7
    %v1620 = vsub.s32 0, %v1619
    %v1621 = vrot.slane %v1615, %v1620
    %v1622 = vlaneseq
    %v1623 = vshrl.u32 %v1622, 7
    %v1624 = vsub.s32 0, %v1623
    %v1625 = vrot.slane %v1616, %v1624
    %v1626 = vlaneseq
    %v1627 = vshrl.u32 %v1626, 7
    %v1628 = vsub.s32 0, %v1627
    %v1629 = vrot.slane %v1617, %v1628
    %v1630 = vsub.f32 %v1548, %v1621
    %v1631 = vsub.f32 %v1549, %v1625
    %v1632 = vsub.f32 %v1550, %v1629
    %v1633 = vsub.f32 %v1551, %v1621
    %v1634 = vsub.f32 %v1552, %v1625
    %v1635 = vsub.f32 %v1553, %v1629
    %v1636 = vsub.f32 %v1554, %v1621
    %v1637 = vsub.f32 %v1555, %v1625
    %v1638 = vsub.f32 %v1556, %v1629
    %v1639 = vmul.f32 %v1630, %v1630
    %v1640 = vmul.f32 %v1631, %v1631
    %v1641 = vmul.f32 %v1632, %v1632
    %v1642 = vmul.f32 %v1633, %v1633
    %v1643 = vmul.f32 %v1634, %v1634
    %v1644 = vmul.f32 %v1635, %v1635
    %v1645 = vmul.f32 %v1636, %v1636
    %v1646 = vmul.f32 %v1637, %v1637
    %v1647 = vmul.f32 %v1638, %v1638
    %v1648 = vadd.f32 %v1639, %v1642
    %v1649 = vadd.f32 %v1648, %v1645
    %v1650 = vrot.slane %v1649, 4
    %v1651 = vadd.f32 %v1649, %v1650
    %v1652 = vrot.slane %v1651, 2
    %v1653 = vadd.f32 %v1651, %v1652
    %v1654 = vrot.slane %v1653, 1
    %v1655 = vadd.f32 %v1653, %v1654
    %v1656 = vadd.f32 %v1640, %v1643
    %v1657 = vadd.f32 %v1656, %v1646
    %v1658 = vrot.slane %v1657, 4
    %v1659 = vadd.f32 %v1657, %v1658
    %v1660 = vrot.slane %v1659, 2
    %v1661 = vadd.f32 %v1659, %v1660
    %v1662 = vrot.slane %v1661, 1
    %v1663 = vadd.f32 %v1661, %v1662
    %v1664 = vadd.f32 %v1641, %v1644
    %v1665 = vadd.f32 %v1664, %v1647
    %v1666 = vrot.slane %v1665, 4
    %v1667 = vadd.f32 %v1665, %v1666
    %v1668 = vrot.slane %v1667, 2
    %v1669 = vadd.f32 %v1667, %v1668
    %v1670 = vrot.slane %v1669, 1
    %v1671 = vadd.f32 %v1669, %v1670
    %1672 = vrot.lane.b32.xlu0 %v1655, 32
    %v1673 = vpop.permute.xlu0 %1672
    %1674 = vrot.lane.b32.xlu0 %v1663, 32
    %v1675 = vpop.permute.xlu0 %1674
    %1676 = vrot.lane.b32.xlu0 %v1671, 32
    %v1677 = vpop.permute.xlu0 %1676
    %v1678 = vsel %vm1589, %v1675, %v1677
    %v1679 = vsel %vm1589, %v1673, %v1675
    %v1680 = vsel %vm1589, %v1677, %v1673
    %v1681 = vadd.f32 %v1655, %v1680
    %v1682 = vadd.f32 %v1663, %v1679
    %v1683 = vadd.f32 %v1671, %v1678
    %1684 = vrot.lane.b32.xlu0 %v1681, 64
    %v1685 = vpop.permute.xlu0 %1684
    %1686 = vrot.lane.b32.xlu0 %v1682, 64
    %v1687 = vpop.permute.xlu0 %1686
    %1688 = vrot.lane.b32.xlu0 %v1683, 64
    %v1689 = vpop.permute.xlu0 %1688
    %v1690 = vsel %vm1602, %v1687, %v1689
    %v1691 = vsel %vm1602, %v1685, %v1687
    %v1692 = vsel %vm1602, %v1689, %v1685
    %v1693 = vadd.f32 %v1681, %v1692
    %v1694 = vadd.f32 %v1682, %v1691
    %v1695 = vadd.f32 %v1683, %v1690
    %v1696 = vadd.f32 %v1693, %v1695
    %v1697 = vadd.f32 %v1694, %v1693
    %v1698 = vadd.f32 %v1695, %v1694
    %v1699 = vadd.f32 %v1696, %v1694
    %v1700 = vadd.f32 %v1697, %v1695
    %v1701 = vadd.f32 %v1698, %v1693
    %v1702 = vmul.f32 %v1699, 0.0034722222
    %v1703 = vmul.f32 %v1700, 0.0034722222
    %v1704 = vmul.f32 %v1701, 0.0034722222
    %v1705 = vld [vmem:[%s9] sm:$0x7]
    %v1706 = vadd.f32 %v1702, 1e-05
    %v1707 = vadd.f32 %v1703, 1e-05
    %v1708 = vadd.f32 %v1704, 1e-05
    %v1709 = vrsqrt.pop %v1706
    %v1710 = vrsqrt.pop %v1707
    %v1711 = vrsqrt.pop %v1708
    %v1715 = vcombine.low %v1709, %v1710
    %v1717 = vunpack.c.l.s4 1966171168
    %v1718 = vunpack.c.0.s8 %v1717
    %v1719 = vlaneseq
    %v1720 = vshrl.u32 %v1719, 7
    %v1721 = vsub.s32 %v1718, %v1720
    %v1722 = vrot.slane %v1715, %v1721
    %v1724 = vunpack.c.l.s4 1966171168
    %v1725 = vunpack.c.0.s8 %v1724
    %v1726 = vlaneseq
    %v1727 = vshrl.u32 %v1726, 7
    %v1728 = vsub.s32 %v1725, %v1727
    %v1729 = vrot.slane %v1711, %v1728
    %v1730 = vcombine.low %v1722, %v1729
    %v1732 = vunpack.c.l.s4 1966171168
    %v1733 = vunpack.c.0.s8 %v1732
    %v1734 = vlaneseq
    %v1735 = vshrl.u32 %v1734, 7
    %v1736 = vsub.s32 %v1733, %v1735
    %v1737 = vrot.slane %v1730, %v1736
    %v1739 = vmul.f32 %v1705, %v1737
    %v1741 = vlaneseq
    %v1742 = vshrl.u32 %v1741, 7
    %v1743 = vsub.s32 0, %v1742
    %v1744 = vrot.slane %v1739, %v1743
    %v1745 = vlaneseq
    %v1746 = vshrl.u32 %v1745, 7
    %v1747 = vsub.s32 1, %v1746
    %v1748 = vrot.slane %v1739, %v1747
    %v1749 = vlaneseq
    %v1750 = vshrl.u32 %v1749, 7
    %v1751 = vsub.s32 2, %v1750
    %v1752 = vrot.slane %v1739, %v1751
    %v1756 = vmul.f32 %v1630, %v1744
    %v1757 = vmul.f32 %v1631, %v1748
    %v1758 = vmul.f32 %v1632, %v1752
    %v1759 = vmul.f32 %v1633, %v1744
    %v1760 = vmul.f32 %v1634, %v1748
    %v1761 = vmul.f32 %v1635, %v1752
    %v1762 = vmul.f32 %v1636, %v1744
    %v1763 = vmul.f32 %v1637, %v1748
    %v1764 = vmul.f32 %v1638, %v1752
    %v1765 = vld [vmem:[%s11] sm:$0x7]
    %v1767 = vlaneseq
    %v1768 = vshrl.u32 %v1767, 7
    %v1769 = vsub.s32 0, %v1768
    %v1770 = vrot.slane %v1765, %v1769
    %v1771 = vlaneseq
    %v1772 = vshrl.u32 %v1771, 7
    %v1773 = vsub.s32 1, %v1772
    %v1774 = vrot.slane %v1765, %v1773
    %v1775 = vlaneseq
    %v1776 = vshrl.u32 %v1775, 7
    %v1777 = vsub.s32 2, %v1776
    %v1778 = vrot.slane %v1765, %v1777
    %v1782 = vadd.f32 %v1756, %v1770
    %v1783 = vadd.f32 %v1757, %v1774
    %v1784 = vadd.f32 %v1758, %v1778
    %v1785 = vadd.f32 %v1759, %v1770
    %v1786 = vadd.f32 %v1760, %v1774
    %v1787 = vadd.f32 %v1761, %v1778
    %v1788 = vadd.f32 %v1762, %v1770
    %v1789 = vadd.f32 %v1763, %v1774
    %v1790 = vadd.f32 %v1764, %v1778
    %v1791 = vpack.c.bf16 %v1785, %v1782
    %v1792 = vpack.c.bf16 %v1786, %v1783
    %v1793 = vpack.c.bf16 %v1787, %v1784
    %v1794 = vpack.c.bf16 %v1788, %v1788
    %v1795 = vpack.c.bf16 %v1789, %v1789
    %v1796 = vpack.c.bf16 %v1790, %v1790
    %v1797 = vld [vmem:[%s13] sm:$0xf]
    %v1798 = vld [vmem:[%s13 + $0x4] sm:$0xf]
    %v1799 = vld [vmem:[%s13 + $0x8] sm:$0xf]
    %v1800 = vld [vmem:[%s13 + $0xc] sm:$0xf]
    %v1801 = vld [vmem:[%s13 + $0x10] sm:$0xf]
    %v1802 = vld [vmem:[%s13 + $0x14] sm:$0xf]
    %v1809 = vunpack.c.l.b16 %v1797
    %v1810 = vunpack.c.l.b16 %v1798
    %v1811 = vunpack.c.l.b16 %v1799
    %v1812 = vunpack.c.l.b16 %v1800
    %v1813 = vunpack.c.l.b16 %v1801
    %v1814 = vunpack.c.l.b16 %v1802
    %v1815 = vpack.c.b16 %v1810, %v1809
    %v1816 = vpack.c.b16 %v1812, %v1811
    %v1817 = vpack.c.b16 %v1814, %v1813
    %vm1818 = vcmask 195584
    %v1820 = vsel %vm1818, %v1815, 0
    %v1823 = vsel %vm1818, %v1816, 0
    %v1826 = vsel %vm1818, %v1817, 0
    %vm1828 = vcmask 1043456
    %v1830 = vsel %vm1828, %v1794, 0
    %v1833 = vsel %vm1828, %v1795, 0
    %v1836 = vsel %vm1828, %v1796, 0
    %1838 = vmatprep.subr.bf16.mxu0 %v1792
    %1839 = vmatpush1.bf16.msra.mxu0 %v1791
    %1840 = vmatprep.subr.bf16.mxu0 %v1833
    %1841 = vmatpush1.bf16.msra.mxu0 %v1830
    %1842 = vmatprep.subr.bf16.mxu0 0
    %1843 = vmatpush1.bf16.msra.mxu0 0
    %1844 = vmatprep.subr.bf16.mxu0 0
    %1845 = vmatpush1.bf16.msra.mxu0 0
    %1846 = vmatprep.subr.bf16.mxu0 0
    %1847 = vmatpush1.bf16.msra.mxu0 0
    %1848 = vmatprep.subr.bf16.mxu0 0
    %1849 = vmatpush1.bf16.msra.mxu0 0
    %1850 = vmatprep.subr.bf16.mxu0 0
    %1851 = vmatpush1.bf16.msra.mxu0 0
    %1852 = vmatprep.subr.bf16.mxu0 0
    %1853 = vmatpush1.bf16.msra.mxu0 0
    %1854 = vmatprep.subr.bf16.mxu0 0
    %1855 = vmatpush1.bf16.msra.mxu0 0
    %1856 = vmatprep.subr.bf16.mxu0 0
    %1857 = vmatpush1.bf16.msra.mxu0 0
    %1858 = vmatprep.subr.bf16.mxu0 0
    %1859 = vmatpush1.bf16.msra.mxu0 0
    %1860 = vmatprep.subr.bf16.mxu0 0
    %1861 = vmatpush1.bf16.msra.mxu0 0
    %1862 = vmatprep.subr.bf16.mxu0 0
    %1863 = vmatpush1.bf16.msra.mxu0 0
    %1864 = vmatprep.subr.bf16.mxu0 0
    %1865 = vmatpush1.bf16.msra.mxu0 0
    %1866 = vmatprep.subr.bf16.mxu0 0
    %1867 = vmatpush1.bf16.msra.mxu0 0
    %1868 = vmatprep.subr.bf16.mxu0 0
    %1869 = vmatpush1.bf16.msra.mxu0 0
    %1870 = vmatprep.mubr.bf16.mxu0 0
    %1871 = vmatmul.mubr.bf16.gmra.mrb[0].mxu0 %v1820
    %v1872 = vpop.f32.mrb[0].mxu0
    %v1873 = vadd.f32 0.0, %v1872
    %v1874 = vpop.f32.mrb[0].mxu0
    %v1875 = vadd.f32 0.0, %v1874
    %v1876 = vpop.f32.mrb[0].mxu0
    %v1877 = vadd.f32 0.0, %v1876
    %v1878 = vpop.f32.mrb[0].mxu0
    %v1879 = vadd.f32 0.0, %v1878
    %1880 = vmatprep.mubr.bf16.mxu0 0
    %1881 = vmatmul.mubr.bf16.gmra.mrb[0].mxu0 %v1823
    %v1882 = vpop.f32.mrb[0].mxu0
    %v1883 = vadd.f32 0.0, %v1882
    %v1884 = vpop.f32.mrb[0].mxu0
    %v1885 = vadd.f32 0.0, %v1884
    %v1886 = vpop.f32.mrb[0].mxu0
    %v1887 = vadd.f32 0.0, %v1886
    %v1888 = vpop.f32.mrb[0].mxu0
    %v1889 = vadd.f32 0.0, %v1888
    %1890 = vmatprep.mubr.bf16.mxu0 0
    %1891 = vmatmul.mubr.bf16.gmra.mrb[0].mxu0 %v1826
    %v1892 = vpop.f32.mrb[0].mxu0
    %v1893 = vadd.f32 0.0, %v1892
    %v1894 = vpop.f32.mrb[0].mxu0
    %v1895 = vadd.f32 0.0, %v1894
    %v1896 = vpop.f32.mrb[0].mxu0
    %v1897 = vadd.f32 0.0, %v1896
    %v1898 = vpop.f32.mrb[0].mxu0
    %v1899 = vadd.f32 0.0, %v1898
    %1900 = vdwg.mxu0
    %1901 = vmatprep.subr.bf16.mxu0 0
    %1902 = vmatpush1.bf16.msra.mxu0 %v1793
    %1903 = vmatprep.subr.bf16.mxu0 0
    %1904 = vmatpush1.bf16.msra.mxu0 %v1836
    %1905 = vmatprep.subr.bf16.mxu0 0
    %1906 = vmatpush1.bf16.msra.mxu0 0
    %1907 = vmatprep.subr.bf16.mxu0 0
    %1908 = vmatpush1.bf16.msra.mxu0 0
    %1909 = vmatprep.subr.bf16.mxu0 0
    %1910 = vmatpush1.bf16.msra.mxu0 0
    %1911 = vmatprep.subr.bf16.mxu0 0
    %1912 = vmatpush1.bf16.msra.mxu0 0
    %1913 = vmatprep.subr.bf16.mxu0 0
    %1914 = vmatpush1.bf16.msra.mxu0 0
    %1915 = vmatprep.subr.bf16.mxu0 0
    %1916 = vmatpush1.bf16.msra.mxu0 0
    %1917 = vmatprep.subr.bf16.mxu0 0
    %1918 = vmatpush1.bf16.msra.mxu0 0
    %1919 = vmatprep.subr.bf16.mxu0 0
    %1920 = vmatpush1.bf16.msra.mxu0 0
    %1921 = vmatprep.subr.bf16.mxu0 0
    %1922 = vmatpush1.bf16.msra.mxu0 0
    %1923 = vmatprep.subr.bf16.mxu0 0
    %1924 = vmatpush1.bf16.msra.mxu0 0
    %1925 = vmatprep.subr.bf16.mxu0 0
    %1926 = vmatpush1.bf16.msra.mxu0 0
    %1927 = vmatprep.subr.bf16.mxu0 0
    %1928 = vmatpush1.bf16.msra.mxu0 0
    %1929 = vmatprep.subr.bf16.mxu0 0
    %1930 = vmatpush1.bf16.msra.mxu0 0
    %1931 = vmatprep.subr.bf16.mxu0 0
    %1932 = vmatpush1.bf16.msra.mxu0 0
    %1933 = vmatprep.mubr.bf16.mxu0 0
    %1934 = vmatmul.mubr.bf16.gmra.mrb[0].mxu0 %v1820
    %v1935 = vpop.f32.mrb[0].mxu0
    %v1936 = vadd.f32 0.0, %v1935
    %v1937 = vpop.f32.mrb[0].mxu0
    %v1938 = vpop.f32.mrb[0].mxu0
    %v1939 = vadd.f32 0.0, %v1938
    %v1940 = vpop.f32.mrb[0].mxu0
    %1941 = vmatprep.mubr.bf16.mxu0 0
    %1942 = vmatmul.mubr.bf16.gmra.mrb[0].mxu0 %v1823
    %v1943 = vpop.f32.mrb[0].mxu0
    %v1944 = vadd.f32 0.0, %v1943
    %v1945 = vpop.f32.mrb[0].mxu0
    %v1946 = vpop.f32.mrb[0].mxu0
    %v1947 = vadd.f32 0.0, %v1946
    %v1948 = vpop.f32.mrb[0].mxu0
    %1949 = vmatprep.mubr.bf16.mxu0 0
    %1950 = vmatmul.mubr.bf16.gmra.mrb[0].mxu0 %v1826
    %v1951 = vpop.f32.mrb[0].mxu0
    %v1952 = vadd.f32 0.0, %v1951
    %v1953 = vpop.f32.mrb[0].mxu0
    %v1954 = vpop.f32.mrb[0].mxu0
    %v1955 = vadd.f32 0.0, %v1954
    %v1956 = vpop.f32.mrb[0].mxu0
    %1957 = vdwg.mxu0
    %v1958 = vpack.c.bf16 %v1877, %v1873
    %v1959 = vpack.c.bf16 %v1879, %v1875
    %v1960 = vpack.c.bf16 %v1939, %v1936
    %v1961 = vpack.c.bf16 %v1887, %v1883
    %v1962 = vpack.c.bf16 %v1889, %v1885
    %v1963 = vpack.c.bf16 %v1947, %v1944
    %v1964 = vpack.c.bf16 %v1897, %v1893
    %v1965 = vpack.c.bf16 %v1899, %v1895
    %v1966 = vpack.c.bf16 %v1955, %v1952
    %v1967 = vld [vmem:[#allocation5] sm:$0xff]
    %v1968 = vld [vmem:[#allocation5 + $0x8] sm:$0xf]
    %v1969 = vld [vmem:[#allocation5 + $0xc] sm:$0xff]
    %v1970 = vld [vmem:[#allocation5 + $0x14] sm:$0xf]
    %v1971 = vld [vmem:[#allocation5 + $0x18] sm:$0xff]
    %v1972 = vld [vmem:[#allocation5 + $0x20] sm:$0xf]
    %v1973 = vld [vmem:[#allocation5 + $0x24] sm:$0xff]
    %v1974 = vld [vmem:[#allocation5 + $0x2c] sm:$0xf]
    %v1975 = vld [vmem:[#allocation5 + $0x30] sm:$0xff]
    %v1976 = vld [vmem:[#allocation5 + $0x38] sm:$0xf]
    %v1977 = vld [vmem:[#allocation5 + $0x3c] sm:$0xff]
    %v1978 = vld [vmem:[#allocation5 + $0x44] sm:$0xf]
    %v1979 = vld [vmem:[#allocation5 + $0x48] sm:$0xff]
    %v1980 = vld [vmem:[#allocation5 + $0x50] sm:$0xf]
    %v1981 = vld [vmem:[#allocation5 + $0x54] sm:$0xff]
    %v1982 = vld [vmem:[#allocation5 + $0x5c] sm:$0xf]
    %v1983 = vld [vmem:[#allocation5 + $0x60] sm:$0xff]
    %v1984 = vld [vmem:[#allocation5 + $0x68] sm:$0xf]
    %v1985 = vld [vmem:[#allocation5 + $0x6c] sm:$0xff]
    %v1986 = vld [vmem:[#allocation5 + $0x74] sm:$0xf]
    %v1987 = vld [vmem:[#allocation5 + $0x78] sm:$0xff]
    %v1988 = vld [vmem:[#allocation5 + $0x80] sm:$0xf]
    %v1989 = vld [vmem:[#allocation5 + $0x84] sm:$0xff]
    %v1990 = vld [vmem:[#allocation5 + $0x8c] sm:$0xf]
    %v1991 = vld [vmem:[#allocation5 + $0x90] sm:$0xff]
    %v1992 = vld [vmem:[#allocation5 + $0x98] sm:$0xf]
    %v1993 = vld [vmem:[#allocation5 + $0x9c] sm:$0xff]
    %v1994 = vld [vmem:[#allocation5 + $0xa4] sm:$0xf]
    %v1995 = vld [vmem:[#allocation5 + $0xa8] sm:$0xff]
    %v1996 = vld [vmem:[#allocation5 + $0xb0] sm:$0xf]
    %v1997 = vld [vmem:[#allocation5 + $0xb4] sm:$0xff]
    %v1998 = vld [vmem:[#allocation5 + $0xbc] sm:$0xf]
    %v1999 = vld [vmem:[#allocation5 + $0xc0] sm:$0xff]
    %v2000 = vld [vmem:[#allocation5 + $0xc8] sm:$0xf]
    %v2001 = vld [vmem:[#allocation5 + $0xcc] sm:$0xff]
    %v2002 = vld [vmem:[#allocation5 + $0xd4] sm:$0xf]
    %v2003 = vld [vmem:[#allocation5 + $0xd8] sm:$0xff]
    %v2004 = vld [vmem:[#allocation5 + $0xe0] sm:$0xf]
    %v2005 = vld [vmem:[#allocation5 + $0xe4] sm:$0xff]
    %v2006 = vld [vmem:[#allocation5 + $0xec] sm:$0xf]
    %v2007 = vld [vmem:[#allocation5 + $0xf0] sm:$0xff]
    %v2008 = vld [vmem:[#allocation5 + $0xf8] sm:$0xf]
    %v2009 = vld [vmem:[#allocation5 + $0xfc] sm:$0xff]
    %v2010 = vld [vmem:[#allocation5 + $0x104] sm:$0xf]
    %v2011 = vld [vmem:[#allocation5 + $0x108] sm:$0xff]
    %v2012 = vld [vmem:[#allocation5 + $0x110] sm:$0xf]
    %v2013 = vld [vmem:[#allocation5 + $0x114] sm:$0xff]
    %v2014 = vld [vmem:[#allocation5 + $0x11c] sm:$0xf]
    %v2015 = vld [vmem:[#allocation5 + $0x120] sm:$0xff]
    %v2016 = vld [vmem:[#allocation5 + $0x128] sm:$0xf]
    %v2017 = vld [vmem:[#allocation5 + $0x12c] sm:$0xff]
    %v2018 = vld [vmem:[#allocation5 + $0x134] sm:$0xf]
    %v2019 = vld [vmem:[#allocation5 + $0x138] sm:$0xff]
    %v2020 = vld [vmem:[#allocation5 + $0x140] sm:$0xf]
    %v2021 = vld [vmem:[#allocation5 + $0x144] sm:$0xff]
    %v2022 = vld [vmem:[#allocation5 + $0x14c] sm:$0xf]
    %v2023 = vld [vmem:[#allocation5 + $0x150] sm:$0xff]
    %v2024 = vld [vmem:[#allocation5 + $0x158] sm:$0xf]
    %v2025 = vld [vmem:[#allocation5 + $0x15c] sm:$0xff]
    %v2026 = vld [vmem:[#allocation5 + $0x164] sm:$0xf]
    %v2027 = vld [vmem:[#allocation5 + $0x168] sm:$0xff]
    %v2028 = vld [vmem:[#allocation5 + $0x170] sm:$0xf]
    %v2029 = vld [vmem:[#allocation5 + $0x174] sm:$0xff]
    %v2030 = vld [vmem:[#allocation5 + $0x17c] sm:$0xf]
    %v2031 = vld [vmem:[#allocation5 + $0x180] sm:$0xff]
    %v2032 = vld [vmem:[#allocation5 + $0x188] sm:$0xf]
    %v2033 = vld [vmem:[#allocation5 + $0x18c] sm:$0xff]
    %v2034 = vld [vmem:[#allocation5 + $0x194] sm:$0xf]
    %v2035 = vld [vmem:[#allocation5 + $0x198] sm:$0xff]
    %v2036 = vld [vmem:[#allocation5 + $0x1a0] sm:$0xf]
    %v2037 = vld [vmem:[#allocation5 + $0x1a4] sm:$0xff]
    %v2038 = vld [vmem:[#allocation5 + $0x1ac] sm:$0xf]
    %v2039 = vld [vmem:[#allocation5 + $0x1b0] sm:$0xff]
    %v2040 = vld [vmem:[#allocation5 + $0x1b8] sm:$0xf]
    %v2041 = vld [vmem:[#allocation5 + $0x1bc] sm:$0xff]
    %v2042 = vld [vmem:[#allocation5 + $0x1c4] sm:$0xf]
    %v2043 = vld [vmem:[#allocation5 + $0x1c8] sm:$0xff]
    %v2044 = vld [vmem:[#allocation5 + $0x1d0] sm:$0xf]
    %v2045 = vld [vmem:[#allocation5 + $0x1d4] sm:$0xff]
    %v2046 = vld [vmem:[#allocation5 + $0x1dc] sm:$0xf]
    %v2047 = vld [vmem:[#allocation5 + $0x1e0] sm:$0xff]
    %v2048 = vld [vmem:[#allocation5 + $0x1e8] sm:$0xf]
    %v2049 = vld [vmem:[#allocation5 + $0x1ec] sm:$0xff]
    %v2050 = vld [vmem:[#allocation5 + $0x1f4] sm:$0xf]
    %v2051 = vld [vmem:[#allocation5 + $0x1f8] sm:$0xff]
    %v2052 = vld [vmem:[#allocation5 + $0x200] sm:$0xf]
    %v2053 = vld [vmem:[#allocation5 + $0x204] sm:$0xff]
    %v2054 = vld [vmem:[#allocation5 + $0x20c] sm:$0xf]
    %v2055 = vld [vmem:[#allocation5 + $0x210] sm:$0xff]
    %v2056 = vld [vmem:[#allocation5 + $0x218] sm:$0xf]
    %v2057 = vld [vmem:[#allocation5 + $0x21c] sm:$0xff]
    %v2058 = vld [vmem:[#allocation5 + $0x224] sm:$0xf]
    %v2059 = vld [vmem:[#allocation5 + $0x228] sm:$0xff]
    %v2060 = vld [vmem:[#allocation5 + $0x230] sm:$0xf]
    %v2061 = vld [vmem:[#allocation5 + $0x234] sm:$0xff]
    %v2062 = vld [vmem:[#allocation5 + $0x23c] sm:$0xf]
    %v2063 = vld [vmem:[#allocation5 + $0x240] sm:$0xff]
    %v2064 = vld [vmem:[#allocation5 + $0x248] sm:$0xf]
    %v2065 = vld [vmem:[#allocation5 + $0x24c] sm:$0xff]
    %v2066 = vld [vmem:[#allocation5 + $0x254] sm:$0xf]
    %v2067 = vld [vmem:[#allocation5 + $0x258] sm:$0xff]
    %v2068 = vld [vmem:[#allocation5 + $0x260] sm:$0xf]
    %v2069 = vld [vmem:[#allocation5 + $0x264] sm:$0xff]
    %v2070 = vld [vmem:[#allocation5 + $0x26c] sm:$0xf]
    %v2071 = vld [vmem:[#allocation5 + $0x270] sm:$0xff]
    %v2072 = vld [vmem:[#allocation5 + $0x278] sm:$0xf]
    %v2073 = vld [vmem:[#allocation5 + $0x27c] sm:$0xff]
    %v2074 = vld [vmem:[#allocation5 + $0x284] sm:$0xf]
    %v2075 = vld [vmem:[#allocation5 + $0x288] sm:$0xff]
    %v2076 = vld [vmem:[#allocation5 + $0x290] sm:$0xf]
    %v2077 = vld [vmem:[#allocation5 + $0x294] sm:$0xff]
    %v2078 = vld [vmem:[#allocation5 + $0x29c] sm:$0xf]
    %v2079 = vld [vmem:[#allocation5 + $0x2a0] sm:$0xff]
    %v2080 = vld [vmem:[#allocation5 + $0x2a8] sm:$0xf]
    %v2081 = vld [vmem:[#allocation5 + $0x2ac] sm:$0xff]
    %v2082 = vld [vmem:[#allocation5 + $0x2b4] sm:$0xf]
    %v2083 = vld [vmem:[#allocation5 + $0x2b8] sm:$0xff]
    %v2084 = vld [vmem:[#allocation5 + $0x2c0] sm:$0xf]
    %v2085 = vld [vmem:[#allocation5 + $0x2c4] sm:$0xff]
    %v2086 = vld [vmem:[#allocation5 + $0x2cc] sm:$0xf]
    %v2087 = vld [vmem:[#allocation5 + $0x2d0] sm:$0xff]
    %v2088 = vld [vmem:[#allocation5 + $0x2d8] sm:$0xf]
    %v2089 = vld [vmem:[#allocation5 + $0x2dc] sm:$0xff]
    %v2090 = vld [vmem:[#allocation5 + $0x2e4] sm:$0xf]
    %v2091 = vld [vmem:[#allocation5 + $0x2e8] sm:$0xff]
    %v2092 = vld [vmem:[#allocation5 + $0x2f0] sm:$0xf]
    %v2093 = vld [vmem:[#allocation5 + $0x2f4] sm:$0xff]
    %v2094 = vld [vmem:[#allocation5 + $0x2fc] sm:$0xf]
    %v2095 = vld [vmem:[#allocation5 + $0x300] sm:$0xff]
    %v2096 = vld [vmem:[#allocation5 + $0x308] sm:$0xf]
    %v2097 = vld [vmem:[#allocation5 + $0x30c] sm:$0xff]
    %v2098 = vld [vmem:[#allocation5 + $0x314] sm:$0xf]
    %v2099 = vld [vmem:[#allocation5 + $0x318] sm:$0xff]
    %v2100 = vld [vmem:[#allocation5 + $0x320] sm:$0xf]
    %v2101 = vld [vmem:[#allocation5 + $0x324] sm:$0xff]
    %v2102 = vld [vmem:[#allocation5 + $0x32c] sm:$0xf]
    %v2103 = vld [vmem:[#allocation5 + $0x330] sm:$0xff]
    %v2104 = vld [vmem:[#allocation5 + $0x338] sm:$0xf]
    %v2105 = vld [vmem:[#allocation5 + $0x33c] sm:$0xff]
    %v2106 = vld [vmem:[#allocation5 + $0x344] sm:$0xf]
    %v2107 = vld [vmem:[#allocation5 + $0x348] sm:$0xff]
    %v2108 = vld [vmem:[#allocation5 + $0x350] sm:$0xf]
    %v2109 = vld [vmem:[#allocation5 + $0x354] sm:$0xff]
    %v2110 = vld [vmem:[#allocation5 + $0x35c] sm:$0xf]
    %v2111 = vld [vmem:[#allocation5 + $0x360] sm:$0xff]
    %v2112 = vld [vmem:[#allocation5 + $0x368] sm:$0xf]
    %v2113 = vld [vmem:[#allocation5 + $0x36c] sm:$0xff]
    %v2114 = vld [vmem:[#allocation5 + $0x374] sm:$0xf]
    %v2115 = vld [vmem:[#allocation5 + $0x378] sm:$0xff]
    %v2116 = vld [vmem:[#allocation5 + $0x380] sm:$0xf]
    %v2117 = vld [vmem:[#allocation5 + $0x384] sm:$0xff]
    %v2118 = vld [vmem:[#allocation5 + $0x38c] sm:$0xf]
    %v2119 = vld [vmem:[#allocation5 + $0x390] sm:$0xff]
    %v2120 = vld [vmem:[#allocation5 + $0x398] sm:$0xf]
    %v2121 = vld [vmem:[#allocation5 + $0x39c] sm:$0xff]
    %v2122 = vld [vmem:[#allocation5 + $0x3a4] sm:$0xf]
    %v2123 = vld [vmem:[#allocation5 + $0x3a8] sm:$0xff]
    %v2124 = vld [vmem:[#allocation5 + $0x3b0] sm:$0xf]
    %v2125 = vld [vmem:[#allocation5 + $0x3b4] sm:$0xff]
    %v2126 = vld [vmem:[#allocation5 + $0x3bc] sm:$0xf]
    %v2127 = vld [vmem:[#allocation5 + $0x3c0] sm:$0xff]
    %v2128 = vld [vmem:[#allocation5 + $0x3c8] sm:$0xf]
    %v2129 = vld [vmem:[#allocation5 + $0x3cc] sm:$0xff]
    %v2130 = vld [vmem:[#allocation5 + $0x3d4] sm:$0xf]
    %v2131 = vld [vmem:[#allocation5 + $0x3d8] sm:$0xff]
    %v2132 = vld [vmem:[#allocation5 + $0x3e0] sm:$0xf]
    %v2133 = vld [vmem:[#allocation5 + $0x3e4] sm:$0xff]
    %v2134 = vld [vmem:[#allocation5 + $0x3ec] sm:$0xf]
    %v2135 = vld [vmem:[#allocation5 + $0x3f0] sm:$0xff]
    %v2136 = vld [vmem:[#allocation5 + $0x3f8] sm:$0xf]
    %v2137 = vld [vmem:[#allocation5 + $0x3fc] sm:$0xff]
    %v2138 = vld [vmem:[#allocation5 + $0x404] sm:$0xf]
    %v2139 = vld [vmem:[#allocation5 + $0x408] sm:$0xff]
    %v2140 = vld [vmem:[#allocation5 + $0x410] sm:$0xf]
    %v2141 = vld [vmem:[#allocation5 + $0x414] sm:$0xff]
    %v2142 = vld [vmem:[#allocation5 + $0x41c] sm:$0xf]
    %v2143 = vld [vmem:[#allocation5 + $0x420] sm:$0xff]
    %v2144 = vld [vmem:[#allocation5 + $0x428] sm:$0xf]
    %v2145 = vld [vmem:[#allocation5 + $0x42c] sm:$0xff]
    %v2146 = vld [vmem:[#allocation5 + $0x434] sm:$0xf]
    %v2147 = vld [vmem:[#allocation5 + $0x438] sm:$0xff]
    %v2148 = vld [vmem:[#allocation5 + $0x440] sm:$0xf]
    %v2149 = vld [vmem:[#allocation5 + $0x444] sm:$0xff]
    %v2150 = vld [vmem:[#allocation5 + $0x44c] sm:$0xf]
    %v2151 = vld [vmem:[#allocation5 + $0x450] sm:$0xff]
    %v2152 = vld [vmem:[#allocation5 + $0x458] sm:$0xf]
    %v2153 = vld [vmem:[#allocation5 + $0x45c] sm:$0xff]
    %v2154 = vld [vmem:[#allocation5 + $0x464] sm:$0xf]
    %v2155 = vld [vmem:[#allocation5 + $0x468] sm:$0xff]
    %v2156 = vld [vmem:[#allocation5 + $0x470] sm:$0xf]
    %v2157 = vld [vmem:[#allocation5 + $0x474] sm:$0xff]
    %v2158 = vld [vmem:[#allocation5 + $0x47c] sm:$0xf]
    %v2159 = vld [vmem:[#allocation5 + $0x480] sm:$0xff]
    %v2160 = vld [vmem:[#allocation5 + $0x488] sm:$0xf]
    %v2161 = vld [vmem:[#allocation5 + $0x48c] sm:$0xff]
    %v2162 = vld [vmem:[#allocation5 + $0x494] sm:$0xf]
    %v2163 = vld [vmem:[#allocation5 + $0x498] sm:$0xff]
    %v2164 = vld [vmem:[#allocation5 + $0x4a0] sm:$0xf]
    %v2165 = vld [vmem:[#allocation5 + $0x4a4] sm:$0xff]
    %v2166 = vld [vmem:[#allocation5 + $0x4ac] sm:$0xf]
    %v2167 = vld [vmem:[#allocation5 + $0x4b0] sm:$0xff]
    %v2168 = vld [vmem:[#allocation5 + $0x4b8] sm:$0xf]
    %v2169 = vld [vmem:[#allocation5 + $0x4bc] sm:$0xff]
    %v2170 = vld [vmem:[#allocation5 + $0x4c4] sm:$0xf]
    %v2171 = vld [vmem:[#allocation5 + $0x4c8] sm:$0xff]
    %v2172 = vld [vmem:[#allocation5 + $0x4d0] sm:$0xf]
    %v2173 = vld [vmem:[#allocation5 + $0x4d4] sm:$0xff]
    %v2174 = vld [vmem:[#allocation5 + $0x4dc] sm:$0xf]
    %v2175 = vld [vmem:[#allocation5 + $0x4e0] sm:$0xff]
    %v2176 = vld [vmem:[#allocation5 + $0x4e8] sm:$0xf]
    %v2177 = vld [vmem:[#allocation5 + $0x4ec] sm:$0xff]
    %v2178 = vld [vmem:[#allocation5 + $0x4f4] sm:$0xf]
    %v2179 = vld [vmem:[#allocation5 + $0x4f8] sm:$0xff]
    %v2180 = vld [vmem:[#allocation5 + $0x500] sm:$0xf]
    %v2181 = vld [vmem:[#allocation5 + $0x504] sm:$0xff]
    %v2182 = vld [vmem:[#allocation5 + $0x50c] sm:$0xf]
    %v2183 = vld [vmem:[#allocation5 + $0x510] sm:$0xff]
    %v2184 = vld [vmem:[#allocation5 + $0x518] sm:$0xf]
    %v2185 = vld [vmem:[#allocation5 + $0x51c] sm:$0xff]
    %v2186 = vld [vmem:[#allocation5 + $0x524] sm:$0xf]
    %v2187 = vld [vmem:[#allocation5 + $0x528] sm:$0xff]
    %v2188 = vld [vmem:[#allocation5 + $0x530] sm:$0xf]
    %v2189 = vld [vmem:[#allocation5 + $0x534] sm:$0xff]
    %v2190 = vld [vmem:[#allocation5 + $0x53c] sm:$0xf]
    %v2191 = vld [vmem:[#allocation5 + $0x540] sm:$0xff]
    %v2192 = vld [vmem:[#allocation5 + $0x548] sm:$0xf]
    %v2193 = vld [vmem:[#allocation5 + $0x54c] sm:$0xff]
    %v2194 = vld [vmem:[#allocation5 + $0x554] sm:$0xf]
    %v2195 = vld [vmem:[#allocation5 + $0x558] sm:$0xff]
    %v2196 = vld [vmem:[#allocation5 + $0x560] sm:$0xf]
    %v2197 = vld [vmem:[#allocation5 + $0x564] sm:$0xff]
    %v2198 = vld [vmem:[#allocation5 + $0x56c] sm:$0xf]
    %v2199 = vld [vmem:[#allocation5 + $0x570] sm:$0xff]
    %v2200 = vld [vmem:[#allocation5 + $0x578] sm:$0xf]
    %v2201 = vld [vmem:[#allocation5 + $0x57c] sm:$0xff]
    %v2202 = vld [vmem:[#allocation5 + $0x584] sm:$0xf]
    %v2203 = vld [vmem:[#allocation5 + $0x588] sm:$0xff]
    %v2204 = vld [vmem:[#allocation5 + $0x590] sm:$0xf]
    %v2205 = vld [vmem:[#allocation5 + $0x594] sm:$0xff]
    %v2206 = vld [vmem:[#allocation5 + $0x59c] sm:$0xf]
    %v2207 = vld [vmem:[#allocation5 + $0x5a0] sm:$0xff]
    %v2208 = vld [vmem:[#allocation5 + $0x5a8] sm:$0xf]
    %v2209 = vld [vmem:[#allocation5 + $0x5ac] sm:$0xff]
    %v2210 = vld [vmem:[#allocation5 + $0x5b4] sm:$0xf]
    %v2211 = vld [vmem:[#allocation5 + $0x5b8] sm:$0xff]
    %v2212 = vld [vmem:[#allocation5 + $0x5c0] sm:$0xf]
    %v2213 = vld [vmem:[#allocation5 + $0x5c4] sm:$0xff]
    %v2214 = vld [vmem:[#allocation5 + $0x5cc] sm:$0xf]
    %v2215 = vld [vmem:[#allocation5 + $0x5d0] sm:$0xff]
    %v2216 = vld [vmem:[#allocation5 + $0x5d8] sm:$0xf]
    %v2217 = vld [vmem:[#allocation5 + $0x5dc] sm:$0xff]
    %v2218 = vld [vmem:[#allocation5 + $0x5e4] sm:$0xf]
    %v2219 = vld [vmem:[#allocation5 + $0x5e8] sm:$0xff]
    %v2220 = vld [vmem:[#allocation5 + $0x5f0] sm:$0xf]
    %v2221 = vld [vmem:[#allocation5 + $0x5f4] sm:$0xff]
    %v2222 = vld [vmem:[#allocation5 + $0x5fc] sm:$0xf]
    %v2223 = vld [vmem:[#allocation5 + $0x600] sm:$0xff]
    %v2224 = vld [vmem:[#allocation5 + $0x608] sm:$0xf]
    %v2225 = vld [vmem:[#allocation5 + $0x60c] sm:$0xff]
    %v2226 = vld [vmem:[#allocation5 + $0x614] sm:$0xf]
    %v2227 = vld [vmem:[#allocation5 + $0x618] sm:$0xff]
    %v2228 = vld [vmem:[#allocation5 + $0x620] sm:$0xf]
    %v2229 = vld [vmem:[#allocation5 + $0x624] sm:$0xff]
    %v2230 = vld [vmem:[#allocation5 + $0x62c] sm:$0xf]
    %v2231 = vld [vmem:[#allocation5 + $0x630] sm:$0xff]
    %v2232 = vld [vmem:[#allocation5 + $0x638] sm:$0xf]
    %v2233 = vld [vmem:[#allocation5 + $0x63c] sm:$0xff]
    %v2234 = vld [vmem:[#allocation5 + $0x644] sm:$0xf]
    %v2235 = vld [vmem:[#allocation5 + $0x648] sm:$0xff]
    %v2236 = vld [vmem:[#allocation5 + $0x650] sm:$0xf]
    %v2237 = vld [vmem:[#allocation5 + $0x654] sm:$0xff]
    %v2238 = vld [vmem:[#allocation5 + $0x65c] sm:$0xf]
    %v2239 = vld [vmem:[#allocation5 + $0x660] sm:$0xff]
    %v2240 = vld [vmem:[#allocation5 + $0x668] sm:$0xf]
    %v2241 = vld [vmem:[#allocation5 + $0x66c] sm:$0xff]
    %v2242 = vld [vmem:[#allocation5 + $0x674] sm:$0xf]
    %v2243 = vld [vmem:[#allocation5 + $0x678] sm:$0xff]
    %v2244 = vld [vmem:[#allocation5 + $0x680] sm:$0xf]
    %v2245 = vld [vmem:[#allocation5 + $0x684] sm:$0xff]
    %v2246 = vld [vmem:[#allocation5 + $0x68c] sm:$0xf]
    %v2247 = vld [vmem:[#allocation5 + $0x690] sm:$0xff]
    %v2248 = vld [vmem:[#allocation5 + $0x698] sm:$0xf]
    %v2249 = vld [vmem:[#allocation5 + $0x69c] sm:$0xff]
    %v2250 = vld [vmem:[#allocation5 + $0x6a4] sm:$0xf]
    %v2251 = vld [vmem:[#allocation5 + $0x6a8] sm:$0xff]
    %v2252 = vld [vmem:[#allocation5 + $0x6b0] sm:$0xf]
    %v2253 = vld [vmem:[#allocation5 + $0x6b4] sm:$0xff]
    %v2254 = vld [vmem:[#allocation5 + $0x6bc] sm:$0xf]
    %v2255 = vld [vmem:[%s17] sm:$0x7]
    %v2257 = vlaneseq
    %v2258 = vshrl.u32 %v2257, 7
    %v2259 = vsub.s32 0, %v2258
    %v2260 = vrot.slane %v2255, %v2259
    %v2261 = vlaneseq
    %v2262 = vshrl.u32 %v2261, 7
    %v2263 = vsub.s32 1, %v2262
    %v2264 = vrot.slane %v2255, %v2263
    %v2265 = vlaneseq
    %v2266 = vshrl.u32 %v2265, 7
    %v2267 = vsub.s32 2, %v2266
    %v2268 = vrot.slane %v2255, %v2267
    %v2560 = vunpack.c.l.b16 %v1967
    %v2561 = vunpack.c.h.b16 %v1967
    %v2562 = vunpack.c.l.b16 %v1968
    %v2563 = vunpack.c.l.b16 %v1969
    %v2564 = vunpack.c.h.b16 %v1969
    %v2565 = vunpack.c.l.b16 %v1970
    %v2566 = vunpack.c.l.b16 %v1971
    %v2567 = vunpack.c.h.b16 %v1971
    %v2568 = vunpack.c.l.b16 %v1972
    %v2569 = vunpack.c.l.b16 %v1973
    %v2570 = vunpack.c.h.b16 %v1973
    %v2571 = vunpack.c.l.b16 %v1974
    %v2572 = vunpack.c.l.b16 %v1975
    %v2573 = vunpack.c.h.b16 %v1975
    %v2574 = vunpack.c.l.b16 %v1976
    %v2575 = vunpack.c.l.b16 %v1977
    %v2576 = vunpack.c.h.b16 %v1977
    %v2577 = vunpack.c.l.b16 %v1978
    %v2578 = vunpack.c.l.b16 %v1979
    %v2579 = vunpack.c.h.b16 %v1979
    %v2580 = vunpack.c.l.b16 %v1980
    %v2581 = vunpack.c.l.b16 %v1981
    %v2582 = vunpack.c.h.b16 %v1981
    %v2583 = vunpack.c.l.b16 %v1982
    %v2584 = vunpack.c.l.b16 %v1983
    %v2585 = vunpack.c.h.b16 %v1983
    %v2586 = vunpack.c.l.b16 %v1984
    %v2587 = vunpack.c.l.b16 %v1985
    %v2588 = vunpack.c.h.b16 %v1985
    %v2589 = vunpack.c.l.b16 %v1986
    %v2590 = vunpack.c.l.b16 %v1987
    %v2591 = vunpack.c.h.b16 %v1987
    %v2592 = vunpack.c.l.b16 %v1988
    %v2593 = vunpack.c.l.b16 %v1989
    %v2594 = vunpack.c.h.b16 %v1989
    %v2595 = vunpack.c.l.b16 %v1990
    %v2596 = vunpack.c.l.b16 %v1991
    %v2597 = vunpack.c.h.b16 %v1991
    %v2598 = vunpack.c.l.b16 %v1992
    %v2599 = vunpack.c.l.b16 %v1993
    %v2600 = vunpack.c.h.b16 %v1993
    %v2601 = vunpack.c.l.b16 %v1994
    %v2602 = vunpack.c.l.b16 %v1995
    %v2603 = vunpack.c.h.b16 %v1995
    %v2604 = vunpack.c.l.b16 %v1996
    %v2605 = vunpack.c.l.b16 %v1997
    %v2606 = vunpack.c.h.b16 %v1997
    %v2607 = vunpack.c.l.b16 %v1998
    %v2608 = vunpack.c.l.b16 %v1999
    %v2609 = vunpack.c.h.b16 %v1999
    %v2610 = vunpack.c.l.b16 %v2000
    %v2611 = vunpack.c.l.b16 %v2001
    %v2612 = vunpack.c.h.b16 %v2001
    %v2613 = vunpack.c.l.b16 %v2002
    %v2614 = vunpack.c.l.b16 %v2003
    %v2615 = vunpack.c.h.b16 %v2003
    %v2616 = vunpack.c.l.b16 %v2004
    %v2617 = vunpack.c.l.b16 %v2005
    %v2618 = vunpack.c.h.b16 %v2005
    %v2619 = vunpack.c.l.b16 %v2006
    %v2620 = vunpack.c.l.b16 %v2007
    %v2621 = vunpack.c.h.b16 %v2007
    %v2622 = vunpack.c.l.b16 %v2008
    %v2623 = vunpack.c.l.b16 %v2009
    %v2624 = vunpack.c.h.b16 %v2009
    %v2625 = vunpack.c.l.b16 %v2010
    %v2626 = vunpack.c.l.b16 %v2011
    %v2627 = vunpack.c.h.b16 %v2011
    %v2628 = vunpack.c.l.b16 %v2012
    %v2629 = vunpack.c.l.b16 %v2013
    %v2630 = vunpack.c.h.b16 %v2013
    %v2631 = vunpack.c.l.b16 %v2014
    %v2632 = vunpack.c.l.b16 %v2015
    %v2633 = vunpack.c.h.b16 %v2015
    %v2634 = vunpack.c.l.b16 %v2016
    %v2635 = vunpack.c.l.b16 %v2017
    %v2636 = vunpack.c.h.b16 %v2017
    %v2637 = vunpack.c.l.b16 %v2018
    %v2638 = vunpack.c.l.b16 %v2019
    %v2639 = vunpack.c.h.b16 %v2019
    %v2640 = vunpack.c.l.b16 %v2020
    %v2641 = vunpack.c.l.b16 %v2021
    %v2642 = vunpack.c.h.b16 %v2021
    %v2643 = vunpack.c.l.b16 %v2022
    %v2644 = vunpack.c.l.b16 %v2023
    %v2645 = vunpack.c.h.b16 %v2023
    %v2646 = vunpack.c.l.b16 %v2024
    %v2647 = vunpack.c.l.b16 %v2025
    %v2648 = vunpack.c.h.b16 %v2025
    %v2649 = vunpack.c.l.b16 %v2026
    %v2650 = vunpack.c.l.b16 %v2027
    %v2651 = vunpack.c.h.b16 %v2027
    %v2652 = vunpack.c.l.b16 %v2028
    %v2653 = vunpack.c.l.b16 %v2029
    %v2654 = vunpack.c.h.b16 %v2029
    %v2655 = vunpack.c.l.b16 %v2030
    %v2656 = vunpack.c.l.b16 %v2031
    %v2657 = vunpack.c.h.b16 %v2031
    %v2658 = vunpack.c.l.b16 %v2032
    %v2659 = vunpack.c.l.b16 %v2033
    %v2660 = vunpack.c.h.b16 %v2033
    %v2661 = vunpack.c.l.b16 %v2034
    %v2662 = vunpack.c.l.b16 %v2035
    %v2663 = vunpack.c.h.b16 %v2035
    %v2664 = vunpack.c.l.b16 %v2036
    %v2665 = vunpack.c.l.b16 %v2037
    %v2666 = vunpack.c.h.b16 %v2037
    %v2667 = vunpack.c.l.b16 %v2038
    %v2668 = vunpack.c.l.b16 %v2039
    %v2669 = vunpack.c.h.b16 %v2039
    %v2670 = vunpack.c.l.b16 %v2040
    %v2671 = vunpack.c.l.b16 %v2041
    %v2672 = vunpack.c.h.b16 %v2041
    %v2673 = vunpack.c.l.b16 %v2042
    %v2674 = vunpack.c.l.b16 %v2043
    %v2675 = vunpack.c.h.b16 %v2043
    %v2676 = vunpack.c.l.b16 %v2044
    %v2677 = vunpack.c.l.b16 %v2045
    %v2678 = vunpack.c.h.b16 %v2045
    %v2679 = vunpack.c.l.b16 %v2046
    %v2680 = vunpack.c.l.b16 %v2047
    %v2681 = vunpack.c.h.b16 %v2047
    %v2682 = vunpack.c.l.b16 %v2048
    %v2683 = vunpack.c.l.b16 %v2049
    %v2684 = vunpack.c.h.b16 %v2049
    %v2685 = vunpack.c.l.b16 %v2050
    %v2686 = vunpack.c.l.b16 %v2051
    %v2687 = vunpack.c.h.b16 %v2051
    %v2688 = vunpack.c.l.b16 %v2052
    %v2689 = vunpack.c.l.b16 %v2053
    %v2690 = vunpack.c.h.b16 %v2053
    %v2691 = vunpack.c.l.b16 %v2054
    %v2692 = vunpack.c.l.b16 %v2055
    %v2693 = vunpack.c.h.b16 %v2055
    %v2694 = vunpack.c.l.b16 %v2056
    %v2695 = vunpack.c.l.b16 %v2057
    %v2696 = vunpack.c.h.b16 %v2057
    %v2697 = vunpack.c.l.b16 %v2058
    %v2698 = vunpack.c.l.b16 %v2059
    %v2699 = vunpack.c.h.b16 %v2059
    %v2700 = vunpack.c.l.b16 %v2060
    %v2701 = vunpack.c.l.b16 %v2061
    %v2702 = vunpack.c.h.b16 %v2061
    %v2703 = vunpack.c.l.b16 %v2062
    %v2704 = vunpack.c.l.b16 %v2063
    %v2705 = vunpack.c.h.b16 %v2063
    %v2706 = vunpack.c.l.b16 %v2064
    %v2707 = vunpack.c.l.b16 %v2065
    %v2708 = vunpack.c.h.b16 %v2065
    %v2709 = vunpack.c.l.b16 %v2066
    %v2710 = vunpack.c.l.b16 %v2067
    %v2711 = vunpack.c.h.b16 %v2067
    %v2712 = vunpack.c.l.b16 %v2068
    %v2713 = vunpack.c.l.b16 %v2069
    %v2714 = vunpack.c.h.b16 %v2069
    %v2715 = vunpack.c.l.b16 %v2070
    %v2716 = vunpack.c.l.b16 %v2071
    %v2717 = vunpack.c.h.b16 %v2071
    %v2718 = vunpack.c.l.b16 %v2072
    %v2719 = vunpack.c.l.b16 %v2073
    %v2720 = vunpack.c.h.b16 %v2073
    %v2721 = vunpack.c.l.b16 %v2074
    %v2722 = vunpack.c.l.b16 %v2075
    %v2723 = vunpack.c.h.b16 %v2075
    %v2724 = vunpack.c.l.b16 %v2076
    %v2725 = vunpack.c.l.b16 %v2077
    %v2726 = vunpack.c.h.b16 %v2077
    %v2727 = vunpack.c.l.b16 %v2078
    %v2728 = vunpack.c.l.b16 %v2079
    %v2729 = vunpack.c.h.b16 %v2079
    %v2730 = vunpack.c.l.b16 %v2080
    %v2731 = vunpack.c.l.b16 %v2081
    %v2732 = vunpack.c.h.b16 %v2081
    %v2733 = vunpack.c.l.b16 %v2082
    %v2734 = vunpack.c.l.b16 %v2083
    %v2735 = vunpack.c.h.b16 %v2083
    %v2736 = vunpack.c.l.b16 %v2084
    %v2737 = vunpack.c.l.b16 %v2085
    %v2738 = vunpack.c.h.b16 %v2085
    %v2739 = vunpack.c.l.b16 %v2086
    %v2740 = vunpack.c.l.b16 %v2087
    %v2741 = vunpack.c.h.b16 %v2087
    %v2742 = vunpack.c.l.b16 %v2088
    %v2743 = vunpack.c.l.b16 %v2089
    %v2744 = vunpack.c.h.b16 %v2089
    %v2745 = vunpack.c.l.b16 %v2090
    %v2746 = vunpack.c.l.b16 %v2091
    %v2747 = vunpack.c.h.b16 %v2091
    %v2748 = vunpack.c.l.b16 %v2092
    %v2749 = vunpack.c.l.b16 %v2093
    %v2750 = vunpack.c.h.b16 %v2093
    %v2751 = vunpack.c.l.b16 %v2094
    %v2752 = vunpack.c.l.b16 %v2095
    %v2753 = vunpack.c.h.b16 %v2095
    %v2754 = vunpack.c.l.b16 %v2096
    %v2755 = vunpack.c.l.b16 %v2097
    %v2756 = vunpack.c.h.b16 %v2097
    %v2757 = vunpack.c.l.b16 %v2098
    %v2758 = vunpack.c.l.b16 %v2099
    %v2759 = vunpack.c.h.b16 %v2099
    %v2760 = vunpack.c.l.b16 %v2100
    %v2761 = vunpack.c.l.b16 %v2101
    %v2762 = vunpack.c.h.b16 %v2101
    %v2763 = vunpack.c.l.b16 %v2102
    %v2764 = vunpack.c.l.b16 %v2103
    %v2765 = vunpack.c.h.b16 %v2103
    %v2766 = vunpack.c.l.b16 %v2104
    %v2767 = vunpack.c.l.b16 %v2105
    %v2768 = vunpack.c.h.b16 %v2105
    %v2769 = vunpack.c.l.b16 %v2106
    %v2770 = vunpack.c.l.b16 %v2107
    %v2771 = vunpack.c.h.b16 %v2107
    %v2772 = vunpack.c.l.b16 %v2108
    %v2773 = vunpack.c.l.b16 %v2109
    %v2774 = vunpack.c.h.b16 %v2109
    %v2775 = vunpack.c.l.b16 %v2110
    %v2776 = vunpack.c.l.b16 %v2111
    %v2777 = vunpack.c.h.b16 %v2111
    %v2778 = vunpack.c.l.b16 %v2112
    %v2779 = vunpack.c.l.b16 %v2113
    %v2780 = vunpack.c.h.b16 %v2113
    %v2781 = vunpack.c.l.b16 %v2114
    %v2782 = vunpack.c.l.b16 %v2115
    %v2783 = vunpack.c.h.b16 %v2115
    %v2784 = vunpack.c.l.b16 %v2116
    %v2785 = vunpack.c.l.b16 %v2117
    %v2786 = vunpack.c.h.b16 %v2117
    %v2787 = vunpack.c.l.b16 %v2118
    %v2788 = vunpack.c.l.b16 %v2119
    %v2789 = vunpack.c.h.b16 %v2119
    %v2790 = vunpack.c.l.b16 %v2120
    %v2791 = vunpack.c.l.b16 %v2121
    %v2792 = vunpack.c.h.b16 %v2121
    %v2793 = vunpack.c.l.b16 %v2122
    %v2794 = vunpack.c.l.b16 %v2123
    %v2795 = vunpack.c.h.b16 %v2123
    %v2796 = vunpack.c.l.b16 %v2124
    %v2797 = vunpack.c.l.b16 %v2125
    %v2798 = vunpack.c.h.b16 %v2125
    %v2799 = vunpack.c.l.b16 %v2126
    %v2800 = vunpack.c.l.b16 %v2127
    %v2801 = vunpack.c.h.b16 %v2127
    %v2802 = vunpack.c.l.b16 %v2128
    %v2803 = vunpack.c.l.b16 %v2129
    %v2804 = vunpack.c.h.b16 %v2129
    %v2805 = vunpack.c.l.b16 %v2130
    %v2806 = vunpack.c.l.b16 %v2131
    %v2807 = vunpack.c.h.b16 %v2131
    %v2808 = vunpack.c.l.b16 %v2132
    %v2809 = vunpack.c.l.b16 %v2133
    %v2810 = vunpack.c.h.b16 %v2133
    %v2811 = vunpack.c.l.b16 %v2134
    %v2812 = vunpack.c.l.b16 %v2135
    %v2813 = vunpack.c.h.b16 %v2135
    %v2814 = vunpack.c.l.b16 %v2136
    %v2815 = vunpack.c.l.b16 %v2137
    %v2816 = vunpack.c.h.b16 %v2137
    %v2817 = vunpack.c.l.b16 %v2138
    %v2818 = vunpack.c.l.b16 %v2139
    %v2819 = vunpack.c.h.b16 %v2139
    %v2820 = vunpack.c.l.b16 %v2140
    %v2821 = vunpack.c.l.b16 %v2141
    %v2822 = vunpack.c.h.b16 %v2141
    %v2823 = vunpack.c.l.b16 %v2142
    %v2824 = vunpack.c.l.b16 %v2143
    %v2825 = vunpack.c.h.b16 %v2143
    %v2826 = vunpack.c.l.b16 %v2144
    %v2827 = vunpack.c.l.b16 %v2145
    %v2828 = vunpack.c.h.b16 %v2145
    %v2829 = vunpack.c.l.b16 %v2146
    %v2830 = vunpack.c.l.b16 %v2147
    %v2831 = vunpack.c.h.b16 %v2147
    %v2832 = vunpack.c.l.b16 %v2148
    %v2833 = vunpack.c.l.b16 %v2149
    %v2834 = vunpack.c.h.b16 %v2149
    %v2835 = vunpack.c.l.b16 %v2150
    %v2836 = vunpack.c.l.b16 %v2151
    %v2837 = vunpack.c.h.b16 %v2151
    %v2838 = vunpack.c.l.b16 %v2152
    %v2839 = vunpack.c.l.b16 %v2153
    %v2840 = vunpack.c.h.b16 %v2153
    %v2841 = vunpack.c.l.b16 %v2154
    %v2842 = vunpack.c.l.b16 %v2155
    %v2843 = vunpack.c.h.b16 %v2155
    %v2844 = vunpack.c.l.b16 %v2156
    %v2845 = vunpack.c.l.b16 %v2157
    %v2846 = vunpack.c.h.b16 %v2157
    %v2847 = vunpack.c.l.b16 %v2158
    %v2848 = vunpack.c.l.b16 %v2159
    %v2849 = vunpack.c.h.b16 %v2159
    %v2850 = vunpack.c.l.b16 %v2160
    %v2851 = vunpack.c.l.b16 %v2161
    %v2852 = vunpack.c.h.b16 %v2161
    %v2853 = vunpack.c.l.b16 %v2162
    %v2854 = vunpack.c.l.b16 %v2163
    %v2855 = vunpack.c.h.b16 %v2163
    %v2856 = vunpack.c.l.b16 %v2164
    %v2857 = vunpack.c.l.b16 %v2165
    %v2858 = vunpack.c.h.b16 %v2165
    %v2859 = vunpack.c.l.b16 %v2166
    %v2860 = vunpack.c.l.b16 %v2167
    %v2861 = vunpack.c.h.b16 %v2167
    %v2862 = vunpack.c.l.b16 %v2168
    %v2863 = vunpack.c.l.b16 %v2169
    %v2864 = vunpack.c.h.b16 %v2169
    %v2865 = vunpack.c.l.b16 %v2170
    %v2866 = vunpack.c.l.b16 %v2171
    %v2867 = vunpack.c.h.b16 %v2171
    %v2868 = vunpack.c.l.b16 %v2172
    %v2869 = vunpack.c.l.b16 %v2173
    %v2870 = vunpack.c.h.b16 %v2173
    %v2871 = vunpack.c.l.b16 %v2174
    %v2872 = vunpack.c.l.b16 %v2175
    %v2873 = vunpack.c.h.b16 %v2175
    %v2874 = vunpack.c.l.b16 %v2176
    %v2875 = vunpack.c.l.b16 %v2177
    %v2876 = vunpack.c.h.b16 %v2177
    %v2877 = vunpack.c.l.b16 %v2178
    %v2878 = vunpack.c.l.b16 %v2179
    %v2879 = vunpack.c.h.b16 %v2179
    %v2880 = vunpack.c.l.b16 %v2180
    %v2881 = vunpack.c.l.b16 %v2181
    %v2882 = vunpack.c.h.b16 %v2181
    %v2883 = vunpack.c.l.b16 %v2182
    %v2884 = vunpack.c.l.b16 %v2183
    %v2885 = vunpack.c.h.b16 %v2183
    %v2886 = vunpack.c.l.b16 %v2184
    %v2887 = vunpack.c.l.b16 %v2185
    %v2888 = vunpack.c.h.b16 %v2185
    %v2889 = vunpack.c.l.b16 %v2186
    %v2890 = vunpack.c.l.b16 %v2187
    %v2891 = vunpack.c.h.b16 %v2187
    %v2892 = vunpack.c.l.b16 %v2188
    %v2893 = vunpack.c.l.b16 %v2189
    %v2894 = vunpack.c.h.b16 %v2189
    %v2895 = vunpack.c.l.b16 %v2190
    %v2896 = vunpack.c.l.b16 %v2191
    %v2897 = vunpack.c.h.b16 %v2191
    %v2898 = vunpack.c.l.b16 %v2192
    %v2899 = vunpack.c.l.b16 %v2193
    %v2900 = vunpack.c.h.b16 %v2193
    %v2901 = vunpack.c.l.b16 %v2194
    %v2902 = vunpack.c.l.b16 %v2195
    %v2903 = vunpack.c.h.b16 %v2195
    %v2904 = vunpack.c.l.b16 %v2196
    %v2905 = vunpack.c.l.b16 %v2197
    %v2906 = vunpack.c.h.b16 %v2197
    %v2907 = vunpack.c.l.b16 %v2198
    %v2908 = vunpack.c.l.b16 %v2199
    %v2909 = vunpack.c.h.b16 %v2199
    %v2910 = vunpack.c.l.b16 %v2200
    %v2911 = vunpack.c.l.b16 %v2201
    %v2912 = vunpack.c.h.b16 %v2201
    %v2913 = vunpack.c.l.b16 %v2202
    %v2914 = vunpack.c.l.b16 %v2203
    %v2915 = vunpack.c.h.b16 %v2203
    %v2916 = vunpack.c.l.b16 %v2204
    %v2917 = vunpack.c.l.b16 %v2205
    %v2918 = vunpack.c.h.b16 %v2205
    %v2919 = vunpack.c.l.b16 %v2206
    %v2920 = vunpack.c.l.b16 %v2207
    %v2921 = vunpack.c.h.b16 %v2207
    %v2922 = vunpack.c.l.b16 %v2208
    %v2923 = vunpack.c.l.b16 %v2209
    %v2924 = vunpack.c.h.b16 %v2209
    %v2925 = vunpack.c.l.b16 %v2210
    %v2926 = vunpack.c.l.b16 %v2211
    %v2927 = vunpack.c.h.b16 %v2211
    %v2928 = vunpack.c.l.b16 %v2212
    %v2929 = vunpack.c.l.b16 %v2213
    %v2930 = vunpack.c.h.b16 %v2213
    %v2931 = vunpack.c.l.b16 %v2214
    %v2932 = vunpack.c.l.b16 %v2215
    %v2933 = vunpack.c.h.b16 %v2215
    %v2934 = vunpack.c.l.b16 %v2216
    %v2935 = vunpack.c.l.b16 %v2217
    %v2936 = vunpack.c.h.b16 %v2217
    %v2937 = vunpack.c.l.b16 %v2218
    %v2938 = vunpack.c.l.b16 %v2219
    %v2939 = vunpack.c.h.b16 %v2219
    %v2940 = vunpack.c.l.b16 %v2220
    %v2941 = vunpack.c.l.b16 %v2221
    %v2942 = vunpack.c.h.b16 %v2221
    %v2943 = vunpack.c.l.b16 %v2222
    %v2944 = vunpack.c.l.b16 %v2223
    %v2945 = vunpack.c.h.b16 %v2223
    %v2946 = vunpack.c.l.b16 %v2224
    %v2947 = vunpack.c.l.b16 %v2225
    %v2948 = vunpack.c.h.b16 %v2225
    %v2949 = vunpack.c.l.b16 %v2226
    %v2950 = vunpack.c.l.b16 %v2227
    %v2951 = vunpack.c.h.b16 %v2227
    %v2952 = vunpack.c.l.b16 %v2228
    %v2953 = vunpack.c.l.b16 %v2229
    %v2954 = vunpack.c.h.b16 %v2229
    %v2955 = vunpack.c.l.b16 %v2230
    %v2956 = vunpack.c.l.b16 %v2231
    %v2957 = vunpack.c.h.b16 %v2231
    %v2958 = vunpack.c.l.b16 %v2232
    %v2959 = vunpack.c.l.b16 %v2233
    %v2960 = vunpack.c.h.b16 %v2233
    %v2961 = vunpack.c.l.b16 %v2234
    %v2962 = vunpack.c.l.b16 %v2235
    %v2963 = vunpack.c.h.b16 %v2235
    %v2964 = vunpack.c.l.b16 %v2236
    %v2965 = vunpack.c.l.b16 %v2237
    %v2966 = vunpack.c.h.b16 %v2237
    %v2967 = vunpack.c.l.b16 %v2238
    %v2968 = vunpack.c.l.b16 %v2239
    %v2969 = vunpack.c.h.b16 %v2239
    %v2970 = vunpack.c.l.b16 %v2240
    %v2971 = vunpack.c.l.b16 %v2241
    %v2972 = vunpack.c.h.b16 %v2241
    %v2973 = vunpack.c.l.b16 %v2242
    %v2974 = vunpack.c.l.b16 %v2243
    %v2975 = vunpack.c.h.b16 %v2243
    %v2976 = vunpack.c.l.b16 %v2244
    %v2977 = vunpack.c.l.b16 %v2245
    %v2978 = vunpack.c.h.b16 %v2245
    %v2979 = vunpack.c.l.b16 %v2246
    %v2980 = vunpack.c.l.b16 %v2247
    %v2981 = vunpack.c.h.b16 %v2247
    %v2982 = vunpack.c.l.b16 %v2248
    %v2983 = vunpack.c.l.b16 %v2249
    %v2984 = vunpack.c.h.b16 %v2249
    %v2985 = vunpack.c.l.b16 %v2250
    %v2986 = vunpack.c.l.b16 %v2251
    %v2987 = vunpack.c.h.b16 %v2251
    %v2988 = vunpack.c.l.b16 %v2252
    %v2989 = vunpack.c.l.b16 %v2253
    %v2990 = vunpack.c.h.b16 %v2253
    %v2991 = vunpack.c.l.b16 %v2254
    %v2992 = vpack.c.b16 %v2563, %v2560
    %v2993 = vpack.c.b16 %v2564, %v2561
    %v2994 = vpack.c.b16 %v2565, %v2562
    %v2995 = vpack.c.b16 %v2569, %v2566
    %v2996 = vpack.c.b16 %v2570, %v2567
    %v2997 = vpack.c.b16 %v2571, %v2568
    %v2998 = vpack.c.b16 %v2575, %v2572
    %v2999 = vpack.c.b16 %v2576, %v2573
    %v3000 = vpack.c.b16 %v2577, %v2574
    %v3001 = vpack.c.b16 %v2581, %v2578
    %v3002 = vpack.c.b16 %v2582, %v2579
    %v3003 = vpack.c.b16 %v2583, %v2580
    %v3004 = vpack.c.b16 %v2587, %v2584
    %v3005 = vpack.c.b16 %v2588, %v2585
    %v3006 = vpack.c.b16 %v2589, %v2586
    %v3007 = vpack.c.b16 %v2593, %v2590
    %v3008 = vpack.c.b16 %v2594, %v2591
    %v3009 = vpack.c.b16 %v2595, %v2592
    %v3010 = vpack.c.b16 %v2599, %v2596
    %v3011 = vpack.c.b16 %v2600, %v2597
    %v3012 = vpack.c.b16 %v2601, %v2598
    %v3013 = vpack.c.b16 %v2605, %v2602
    %v3014 = vpack.c.b16 %v2606, %v2603
    %v3015 = vpack.c.b16 %v2607, %v2604
    %v3016 = vpack.c.b16 %v2611, %v2608
    %v3017 = vpack.c.b16 %v2612, %v2609
    %v3018 = vpack.c.b16 %v2613, %v2610
    %v3019 = vpack.c.b16 %v2617, %v2614
    %v3020 = vpack.c.b16 %v2618, %v2615
    %v3021 = vpack.c.b16 %v2619, %v2616
    %v3022 = vpack.c.b16 %v2623, %v2620
    %v3023 = vpack.c.b16 %v2624, %v2621
    %v3024 = vpack.c.b16 %v2625, %v2622
    %v3025 = vpack.c.b16 %v2629, %v2626
    %v3026 = vpack.c.b16 %v2630, %v2627
    %v3027 = vpack.c.b16 %v2631, %v2628
    %v3028 = vpack.c.b16 %v2635, %v2632
    %v3029 = vpack.c.b16 %v2636, %v2633
    %v3030 = vpack.c.b16 %v2637, %v2634
    %v3031 = vpack.c.b16 %v2641, %v2638
    %v3032 = vpack.c.b16 %v2642, %v2639
    %v3033 = vpack.c.b16 %v2643, %v2640
    %v3034 = vpack.c.b16 %v2647, %v2644
    %v3035 = vpack.c.b16 %v2648, %v2645
    %v3036 = vpack.c.b16 %v2649, %v2646
    %v3037 = vpack.c.b16 %v2653, %v2650
    %v3038 = vpack.c.b16 %v2654, %v2651
    %v3039 = vpack.c.b16 %v2655, %v2652
    %v3040 = vpack.c.b16 %v2659, %v2656
    %v3041 = vpack.c.b16 %v2660, %v2657
    %v3042 = vpack.c.b16 %v2661, %v2658
    %v3043 = vpack.c.b16 %v2665, %v2662
    %v3044 = vpack.c.b16 %v2666, %v2663
    %v3045 = vpack.c.b16 %v2667, %v2664
    %v3046 = vpack.c.b16 %v2671, %v2668
    %v3047 = vpack.c.b16 %v2672, %v2669
    %v3048 = vpack.c.b16 %v2673, %v2670
    %v3049 = vpack.c.b16 %v2677, %v2674
    %v3050 = vpack.c.b16 %v2678, %v2675
    %v3051 = vpack.c.b16 %v2679, %v2676
    %v3052 = vpack.c.b16 %v2683, %v2680
    %v3053 = vpack.c.b16 %v2684, %v2681
    %v3054 = vpack.c.b16 %v2685, %v2682
    %v3055 = vpack.c.b16 %v2689, %v2686
    %v3056 = vpack.c.b16 %v2690, %v2687
    %v3057 = vpack.c.b16 %v2691, %v2688
    %v3058 = vpack.c.b16 %v2695, %v2692
    %v3059 = vpack.c.b16 %v2696, %v2693
    %v3060 = vpack.c.b16 %v2697, %v2694
    %v3061 = vpack.c.b16 %v2701, %v2698
    %v3062 = vpack.c.b16 %v2702, %v2699
    %v3063 = vpack.c.b16 %v2703, %v2700
    %v3064 = vpack.c.b16 %v2707, %v2704
    %v3065 = vpack.c.b16 %v2708, %v2705
    %v3066 = vpack.c.b16 %v2709, %v2706
    %v3067 = vpack.c.b16 %v2713, %v2710
    %v3068 = vpack.c.b16 %v2714, %v2711
    %v3069 = vpack.c.b16 %v2715, %v2712
    %v3070 = vpack.c.b16 %v2719, %v2716
    %v3071 = vpack.c.b16 %v2720, %v2717
    %v3072 = vpack.c.b16 %v2721, %v2718
    %v3073 = vpack.c.b16 %v2725, %v2722
    %v3074 = vpack.c.b16 %v2726, %v2723
    %v3075 = vpack.c.b16 %v2727, %v2724
    %v3076 = vpack.c.b16 %v2731, %v2728
    %v3077 = vpack.c.b16 %v2732, %v2729
    %v3078 = vpack.c.b16 %v2733, %v2730
    %v3079 = vpack.c.b16 %v2737, %v2734
    %v3080 = vpack.c.b16 %v2738, %v2735
    %v3081 = vpack.c.b16 %v2739, %v2736
    %v3082 = vpack.c.b16 %v2743, %v2740
    %v3083 = vpack.c.b16 %v2744, %v2741
    %v3084 = vpack.c.b16 %v2745, %v2742
    %v3085 = vpack.c.b16 %v2749, %v2746
    %v3086 = vpack.c.b16 %v2750, %v2747
    %v3087 = vpack.c.b16 %v2751, %v2748
    %v3088 = vpack.c.b16 %v2755, %v2752
    %v3089 = vpack.c.b16 %v2756, %v2753
    %v3090 = vpack.c.b16 %v2757, %v2754
    %v3091 = vpack.c.b16 %v2761, %v2758
    %v3092 = vpack.c.b16 %v2762, %v2759
    %v3093 = vpack.c.b16 %v2763, %v2760
    %v3094 = vpack.c.b16 %v2767, %v2764
    %v3095 = vpack.c.b16 %v2768, %v2765
    %v3096 = vpack.c.b16 %v2769, %v2766
    %v3097 = vpack.c.b16 %v2773, %v2770
    %v3098 = vpack.c.b16 %v2774, %v2771
    %v3099 = vpack.c.b16 %v2775, %v2772
    %v3100 = vpack.c.b16 %v2779, %v2776
    %v3101 = vpack.c.b16 %v2780, %v2777
    %v3102 = vpack.c.b16 %v2781, %v2778
    %v3103 = vpack.c.b16 %v2785, %v2782
    %v3104 = vpack.c.b16 %v2786, %v2783
    %v3105 = vpack.c.b16 %v2787, %v2784
    %v3106 = vpack.c.b16 %v2791, %v2788
    %v3107 = vpack.c.b16 %v2792, %v2789
    %v3108 = vpack.c.b16 %v2793, %v2790
    %v3109 = vpack.c.b16 %v2797, %v2794
    %v3110 = vpack.c.b16 %v2798, %v2795
    %v3111 = vpack.c.b16 %v2799, %v2796
    %v3112 = vpack.c.b16 %v2803, %v2800
    %v3113 = vpack.c.b16 %v2804, %v2801
    %v3114 = vpack.c.b16 %v2805, %v2802
    %v3115 = vpack.c.b16 %v2809, %v2806
    %v3116 = vpack.c.b16 %v2810, %v2807
    %v3117 = vpack.c.b16 %v2811, %v2808
    %v3118 = vpack.c.b16 %v2815, %v2812
    %v3119 = vpack.c.b16 %v2816, %v2813
    %v3120 = vpack.c.b16 %v2817, %v2814
    %v3121 = vpack.c.b16 %v2821, %v2818
    %v3122 = vpack.c.b16 %v2822, %v2819
    %v3123 = vpack.c.b16 %v2823, %v2820
    %v3124 = vpack.c.b16 %v2827, %v2824
    %v3125 = vpack.c.b16 %v2828, %v2825
    %v3126 = vpack.c.b16 %v2829, %v2826
    %v3127 = vpack.c.b16 %v2833, %v2830
    %v3128 = vpack.c.b16 %v2834, %v2831
    %v3129 = vpack.c.b16 %v2835, %v2832
    %v3130 = vpack.c.b16 %v2839, %v2836
    %v3131 = vpack.c.b16 %v2840, %v2837
    %v3132 = vpack.c.b16 %v2841, %v2838
    %v3133 = vpack.c.b16 %v2845, %v2842
    %v3134 = vpack.c.b16 %v2846, %v2843
    %v3135 = vpack.c.b16 %v2847, %v2844
    %v3136 = vpack.c.b16 %v2851, %v2848
    %v3137 = vpack.c.b16 %v2852, %v2849
    %v3138 = vpack.c.b16 %v2853, %v2850
    %v3139 = vpack.c.b16 %v2857, %v2854
    %v3140 = vpack.c.b16 %v2858, %v2855
    %v3141 = vpack.c.b16 %v2859, %v2856
    %v3142 = vpack.c.b16 %v2863, %v2860
    %v3143 = vpack.c.b16 %v2864, %v2861
    %v3144 = vpack.c.b16 %v2865, %v2862
    %v3145 = vpack.c.b16 %v2869, %v2866
    %v3146 = vpack.c.b16 %v2870, %v2867
    %v3147 = vpack.c.b16 %v2871, %v2868
    %v3148 = vpack.c.b16 %v2875, %v2872
    %v3149 = vpack.c.b16 %v2876, %v2873
    %v3150 = vpack.c.b16 %v2877, %v2874
    %v3151 = vpack.c.b16 %v2881, %v2878
    %v3152 = vpack.c.b16 %v2882, %v2879
    %v3153 = vpack.c.b16 %v2883, %v2880
    %v3154 = vpack.c.b16 %v2887, %v2884
    %v3155 = vpack.c.b16 %v2888, %v2885
    %v3156 = vpack.c.b16 %v2889, %v2886
    %v3157 = vpack.c.b16 %v2893, %v2890
    %v3158 = vpack.c.b16 %v2894, %v2891
    %v3159 = vpack.c.b16 %v2895, %v2892
    %v3160 = vpack.c.b16 %v2899, %v2896
    %v3161 = vpack.c.b16 %v2900, %v2897
    %v3162 = vpack.c.b16 %v2901, %v2898
    %v3163 = vpack.c.b16 %v2905, %v2902
    %v3164 = vpack.c.b16 %v2906, %v2903
    %v3165 = vpack.c.b16 %v2907, %v2904
    %v3166 = vpack.c.b16 %v2911, %v2908
    %v3167 = vpack.c.b16 %v2912, %v2909
    %v3168 = vpack.c.b16 %v2913, %v2910
    %v3169 = vpack.c.b16 %v2917, %v2914
    %v3170 = vpack.c.b16 %v2918, %v2915
    %v3171 = vpack.c.b16 %v2919, %v2916
    %v3172 = vpack.c.b16 %v2923, %v2920
    %v3173 = vpack.c.b16 %v2924, %v2921
    %v3174 = vpack.c.b16 %v2925, %v2922
    %v3175 = vpack.c.b16 %v2929, %v2926
    %v3176 = vpack.c.b16 %v2930, %v2927
    %v3177 = vpack.c.b16 %v2931, %v2928
    %v3178 = vpack.c.b16 %v2935, %v2932
    %v3179 = vpack.c.b16 %v2936, %v2933
    %v3180 = vpack.c.b16 %v2937, %v2934
    %v3181 = vpack.c.b16 %v2941, %v2938
    %v3182 = vpack.c.b16 %v2942, %v2939
    %v3183 = vpack.c.b16 %v2943, %v2940
    %v3184 = vpack.c.b16 %v2947, %v2944
    %v3185 = vpack.c.b16 %v2948, %v2945
    %v3186 = vpack.c.b16 %v2949, %v2946
    %v3187 = vpack.c.b16 %v2953, %v2950
    %v3188 = vpack.c.b16 %v2954, %v2951
    %v3189 = vpack.c.b16 %v2955, %v2952
    %v3190 = vpack.c.b16 %v2959, %v2956
    %v3191 = vpack.c.b16 %v2960, %v2957
    %v3192 = vpack.c.b16 %v2961, %v2958
    %v3193 = vpack.c.b16 %v2965, %v2962
    %v3194 = vpack.c.b16 %v2966, %v2963
    %v3195 = vpack.c.b16 %v2967, %v2964
    %v3196 = vpack.c.b16 %v2971, %v2968
    %v3197 = vpack.c.b16 %v2972, %v2969
    %v3198 = vpack.c.b16 %v2973, %v2970
    %v3199 = vpack.c.b16 %v2977, %v2974
    %v3200 = vpack.c.b16 %v2978, %v2975
    %v3201 = vpack.c.b16 %v2979, %v2976
    %v3202 = vpack.c.b16 %v2983, %v2980
    %v3203 = vpack.c.b16 %v2984, %v2981
    %v3204 = vpack.c.b16 %v2985, %v2982
    %v3205 = vpack.c.b16 %v2989, %v2986
    %v3206 = vpack.c.b16 %v2990, %v2987
    %v3207 = vpack.c.b16 %v2991, %v2988
    %3424 = vmatprep.subr.bf16.mxu0 %v2993
    %3425 = vmatpush1.bf16.msra.mxu0 %v2992
    %3426 = vmatprep.subr.bf16.mxu0 %v2996
    %3427 = vmatpush1.bf16.msra.mxu0 %v2995
    %3428 = vmatprep.subr.bf16.mxu0 %v2999
    %3429 = vmatpush1.bf16.msra.mxu0 %v2998
    %3430 = vmatprep.subr.bf16.mxu0 %v3002
    %3431 = vmatpush1.bf16.msra.mxu0 %v3001
    %3432 = vmatprep.subr.bf16.mxu0 %v3005
    %3433 = vmatpush1.bf16.msra.mxu0 %v3004
    %3434 = vmatprep.subr.bf16.mxu0 %v3008
    %3435 = vmatpush1.bf16.msra.mxu0 %v3007
    %3436 = vmatprep.subr.bf16.mxu0 %v3011
    %3437 = vmatpush1.bf16.msra.mxu0 %v3010
    %3438 = vmatprep.subr.bf16.mxu0 %v3014
    %3439 = vmatpush1.bf16.msra.mxu0 %v3013
    %3440 = vmatprep.subr.bf16.mxu0 %v3017
    %3441 = vmatpush1.bf16.msra.mxu0 %v3016
    %3442 = vmatprep.subr.bf16.mxu0 %v3020
    %3443 = vmatpush1.bf16.msra.mxu0 %v3019
    %3444 = vmatprep.subr.bf16.mxu0 %v3023
    %3445 = vmatpush1.bf16.msra.mxu0 %v3022
    %3446 = vmatprep.subr.bf16.mxu0 %v3026
    %3447 = vmatpush1.bf16.msra.mxu0 %v3025
    %3448 = vmatprep.subr.bf16.mxu0 %v3029
    %3449 = vmatpush1.bf16.msra.mxu0 %v3028
    %3450 = vmatprep.subr.bf16.mxu0 %v3032
    %3451 = vmatpush1.bf16.msra.mxu0 %v3031
    %3452 = vmatprep.subr.bf16.mxu0 %v3035
    %3453 = vmatpush1.bf16.msra.mxu0 %v3034
    %3454 = vmatprep.subr.bf16.mxu0 %v3038
    %3455 = vmatpush1.bf16.msra.mxu0 %v3037
    %3456 = vmatprep.mubr.bf16.mxu0 %v1959
    %3457 = vmatmul.mubr.bf16.gmra.mrb[0].mxu0 %v1958
    %v3458 = vpop.f32.mrb[0].mxu0
    %v3459 = vadd.f32 %v2260, %v3458
    %v3460 = vpop.f32.mrb[0].mxu0
    %v3461 = vadd.f32 %v2264, %v3460
    %v3462 = vpop.f32.mrb[0].mxu0
    %v3463 = vadd.f32 %v2260, %v3462
    %v3464 = vpop.f32.mrb[0].mxu0
    %v3465 = vadd.f32 %v2264, %v3464
    %3466 = vdwg.mxu0
    %3467 = vmatprep.subr.bf16.mxu0 %v3041
    %3468 = vmatpush1.bf16.msra.mxu0 %v3040
    %3469 = vmatprep.subr.bf16.mxu0 %v3044
    %3470 = vmatpush1.bf16.msra.mxu0 %v3043
    %3471 = vmatprep.subr.bf16.mxu0 %v3047
    %3472 = vmatpush1.bf16.msra.mxu0 %v3046
    %3473 = vmatprep.subr.bf16.mxu0 %v3050
    %3474 = vmatpush1.bf16.msra.mxu0 %v3049
    %3475 = vmatprep.subr.bf16.mxu0 %v3053
    %3476 = vmatpush1.bf16.msra.mxu0 %v3052
    %3477 = vmatprep.subr.bf16.mxu0 %v3056
    %3478 = vmatpush1.bf16.msra.mxu0 %v3055
    %3479 = vmatprep.subr.bf16.mxu0 %v3059
    %3480 = vmatpush1.bf16.msra.mxu0 %v3058
    %3481 = vmatprep.subr.bf16.mxu0 %v3062
    %3482 = vmatpush1.bf16.msra.mxu0 %v3061
    %3483 = vmatprep.subr.bf16.mxu0 %v3065
    %3484 = vmatpush1.bf16.msra.mxu0 %v3064
    %3485 = vmatprep.subr.bf16.mxu0 %v3068
    %3486 = vmatpush1.bf16.msra.mxu0 %v3067
    %3487 = vmatprep.subr.bf16.mxu0 %v3071
    %3488 = vmatpush1.bf16.msra.mxu0 %v3070
    %3489 = vmatprep.subr.bf16.mxu0 %v3074
    %3490 = vmatpush1.bf16.msra.mxu0 %v3073
    %3491 = vmatprep.subr.bf16.mxu0 %v3077
    %3492 = vmatpush1.bf16.msra.mxu0 %v3076
    %3493 = vmatprep.subr.bf16.mxu0 %v3080
    %3494 = vmatpush1.bf16.msra.mxu0 %v3079
    %3495 = vmatprep.subr.bf16.mxu0 %v3083
    %3496 = vmatpush1.bf16.msra.mxu0 %v3082
    %3497 = vmatprep.subr.bf16.mxu0 %v3086
    %3498 = vmatpush1.bf16.msra.mxu0 %v3085
    %3499 = vmatprep.mubr.bf16.mxu0 %v1961
    %3500 = vmatmul.mubr.bf16.gmra.mrb[0].mxu0 %v1960
    %v3501 = vpop.f32.mrb[0].mxu0
    %v3502 = vadd.f32 %v3459, %v3501
    %v3503 = vpop.f32.mrb[0].mxu0
    %v3504 = vadd.f32 %v3461, %v3503
    %v3505 = vpop.f32.mrb[0].mxu0
    %v3506 = vadd.f32 %v3463, %v3505
    %v3507 = vpop.f32.mrb[0].mxu0
    %v3508 = vadd.f32 %v3465, %v3507
    %3509 = vdwg.mxu0
    %3510 = vmatprep.subr.bf16.mxu0 %v3089
    %3511 = vmatpush1.bf16.msra.mxu0 %v3088
    %3512 = vmatprep.subr.bf16.mxu0 %v3092
    %3513 = vmatpush1.bf16.msra.mxu0 %v3091
    %3514 = vmatprep.subr.bf16.mxu0 %v3095
    %3515 = vmatpush1.bf16.msra.mxu0 %v3094
    %3516 = vmatprep.subr.bf16.mxu0 %v3098
    %3517 = vmatpush1.bf16.msra.mxu0 %v3097
    %3518 = vmatprep.subr.bf16.mxu0 %v3101
    %3519 = vmatpush1.bf16.msra.mxu0 %v3100
    %3520 = vmatprep.subr.bf16.mxu0 %v3104
    %3521 = vmatpush1.bf16.msra.mxu0 %v3103
    %3522 = vmatprep.subr.bf16.mxu0 %v3107
    %3523 = vmatpush1.bf16.msra.mxu0 %v3106
    %3524 = vmatprep.subr.bf16.mxu0 %v3110
    %3525 = vmatpush1.bf16.msra.mxu0 %v3109
    %3526 = vmatprep.subr.bf16.mxu0 %v3113
    %3527 = vmatpush1.bf16.msra.mxu0 %v3112
    %3528 = vmatprep.subr.bf16.mxu0 %v3116
    %3529 = vmatpush1.bf16.msra.mxu0 %v3115
    %3530 = vmatprep.subr.bf16.mxu0 %v3119
    %3531 = vmatpush1.bf16.msra.mxu0 %v3118
    %3532 = vmatprep.subr.bf16.mxu0 %v3122
    %3533 = vmatpush1.bf16.msra.mxu0 %v3121
    %3534 = vmatprep.subr.bf16.mxu0 %v3125
    %3535 = vmatpush1.bf16.msra.mxu0 %v3124
    %3536 = vmatprep.subr.bf16.mxu0 %v3128
    %3537 = vmatpush1.bf16.msra.mxu0 %v3127
    %3538 = vmatprep.subr.bf16.mxu0 %v3131
    %3539 = vmatpush1.bf16.msra.mxu0 %v3130
    %3540 = vmatprep.subr.bf16.mxu0 %v3134
    %3541 = vmatpush1.bf16.msra.mxu0 %v3133
    %3542 = vmatprep.mubr.bf16.mxu0 %v1963
    %3543 = vmatmul.mubr.bf16.gmra.mrb[0].mxu0 %v1962
    %v3544 = vpop.f32.mrb[0].mxu0
    %v3545 = vadd.f32 %v3502, %v3544
    %v3546 = vpop.f32.mrb[0].mxu0
    %v3547 = vadd.f32 %v3504, %v3546
    %v3548 = vpop.f32.mrb[0].mxu0
    %v3549 = vadd.f32 %v3506, %v3548
    %v3550 = vpop.f32.mrb[0].mxu0
    %v3551 = vadd.f32 %v3508, %v3550
    %3552 = vdwg.mxu0
    %3553 = vmatprep.subr.bf16.mxu0 %v3137
    %3554 = vmatpush1.bf16.msra.mxu0 %v3136
    %3555 = vmatprep.subr.bf16.mxu0 %v3140
    %3556 = vmatpush1.bf16.msra.mxu0 %v3139
    %3557 = vmatprep.subr.bf16.mxu0 %v3143
    %3558 = vmatpush1.bf16.msra.mxu0 %v3142
    %3559 = vmatprep.subr.bf16.mxu0 %v3146
    %3560 = vmatpush1.bf16.msra.mxu0 %v3145
    %3561 = vmatprep.subr.bf16.mxu0 %v3149
    %3562 = vmatpush1.bf16.msra.mxu0 %v3148
    %3563 = vmatprep.subr.bf16.mxu0 %v3152
    %3564 = vmatpush1.bf16.msra.mxu0 %v3151
    %3565 = vmatprep.subr.bf16.mxu0 %v3155
    %3566 = vmatpush1.bf16.msra.mxu0 %v3154
    %3567 = vmatprep.subr.bf16.mxu0 %v3158
    %3568 = vmatpush1.bf16.msra.mxu0 %v3157
    %3569 = vmatprep.subr.bf16.mxu0 %v3161
    %3570 = vmatpush1.bf16.msra.mxu0 %v3160
    %3571 = vmatprep.subr.bf16.mxu0 %v3164
    %3572 = vmatpush1.bf16.msra.mxu0 %v3163
    %3573 = vmatprep.subr.bf16.mxu0 %v3167
    %3574 = vmatpush1.bf16.msra.mxu0 %v3166
    %3575 = vmatprep.subr.bf16.mxu0 %v3170
    %3576 = vmatpush1.bf16.msra.mxu0 %v3169
    %3577 = vmatprep.subr.bf16.mxu0 %v3173
    %3578 = vmatpush1.bf16.msra.mxu0 %v3172
    %3579 = vmatprep.subr.bf16.mxu0 %v3176
    %3580 = vmatpush1.bf16.msra.mxu0 %v3175
    %3581 = vmatprep.subr.bf16.mxu0 %v3179
    %3582 = vmatpush1.bf16.msra.mxu0 %v3178
    %3583 = vmatprep.subr.bf16.mxu0 %v3182
    %3584 = vmatpush1.bf16.msra.mxu0 %v3181
    %3585 = vmatprep.mubr.bf16.mxu0 %v1965
    %3586 = vmatmul.mubr.bf16.gmra.mrb[0].mxu0 %v1964
    %v3587 = vpop.f32.mrb[0].mxu0
    %v3588 = vadd.f32 %v3545, %v3587
    %v3589 = vpop.f32.mrb[0].mxu0
    %v3590 = vadd.f32 %v3547, %v3589
    %v3591 = vpop.f32.mrb[0].mxu0
    %v3592 = vadd.f32 %v3549, %v3591
    %v3593 = vpop.f32.mrb[0].mxu0
    %v3594 = vadd.f32 %v3551, %v3593
    %3595 = vdwg.mxu0
    %3596 = vmatprep.subr.bf16.mxu0 %v3185
    %3597 = vmatpush1.bf16.msra.mxu0 %v3184
    %3598 = vmatprep.subr.bf16.mxu0 %v3188
    %3599 = vmatpush1.bf16.msra.mxu0 %v3187
    %3600 = vmatprep.subr.bf16.mxu0 %v3191
    %3601 = vmatpush1.bf16.msra.mxu0 %v3190
    %3602 = vmatprep.subr.bf16.mxu0 %v3194
    %3603 = vmatpush1.bf16.msra.mxu0 %v3193
    %3604 = vmatprep.subr.bf16.mxu0 %v3197
    %3605 = vmatpush1.bf16.msra.mxu0 %v3196
    %3606 = vmatprep.subr.bf16.mxu0 %v3200
    %3607 = vmatpush1.bf16.msra.mxu0 %v3199
    %3608 = vmatprep.subr.bf16.mxu0 %v3203
    %3609 = vmatpush1.bf16.msra.mxu0 %v3202
    %3610 = vmatprep.subr.bf16.mxu0 %v3206
    %3611 = vmatpush1.bf16.msra.mxu0 %v3205
    %3612 = vmatprep.subr.bf16.mxu0 0
    %3613 = vmatpush1.bf16.msra.mxu0 0
    %3614 = vmatprep.subr.bf16.mxu0 0
    %3615 = vmatpush1.bf16.msra.mxu0 0
    %3616 = vmatprep.subr.bf16.mxu0 0
    %3617 = vmatpush1.bf16.msra.mxu0 0
    %3618 = vmatprep.subr.bf16.mxu0 0
    %3619 = vmatpush1.bf16.msra.mxu0 0
    %3620 = vmatprep.subr.bf16.mxu0 0
    %3621 = vmatpush1.bf16.msra.mxu0 0
    %3622 = vmatprep.subr.bf16.mxu0 0
    %3623 = vmatpush1.bf16.msra.mxu0 0
    %3624 = vmatprep.subr.bf16.mxu0 0
    %3625 = vmatpush1.bf16.msra.mxu0 0
    %3626 = vmatprep.subr.bf16.mxu0 0
    %3627 = vmatpush1.bf16.msra.mxu0 0
    %3628 = vmatprep.mubr.bf16.mxu0 0
    %3629 = vmatmul.mubr.bf16.gmra.mrb[0].mxu0 %v1966
    %v3630 = vpop.f32.mrb[0].mxu0
    %v3631 = vadd.f32 %v3588, %v3630
    %v3632 = vpop.f32.mrb[0].mxu0
    %v3633 = vadd.f32 %v3590, %v3632
    %v3634 = vpop.f32.mrb[0].mxu0
    %v3635 = vadd.f32 %v3592, %v3634
    %v3636 = vpop.f32.mrb[0].mxu0
    %v3637 = vadd.f32 %v3594, %v3636
    %3638 = vdwg.mxu0
    %3639 = vmatprep.subr.bf16.mxu0 0
    %3640 = vmatpush1.bf16.msra.mxu0 %v2994
    %3641 = vmatprep.subr.bf16.mxu0 0
    %3642 = vmatpush1.bf16.msra.mxu0 %v2997
    %3643 = vmatprep.subr.bf16.mxu0 0
    %3644 = vmatpush1.bf16.msra.mxu0 %v3000
    %3645 = vmatprep.subr.bf16.mxu0 0
    %3646 = vmatpush1.bf16.msra.mxu0 %v3003
    %3647 = vmatprep.subr.bf16.mxu0 0
    %3648 = vmatpush1.bf16.msra.mxu0 %v3006
    %3649 = vmatprep.subr.bf16.mxu0 0
    %3650 = vmatpush1.bf16.msra.mxu0 %v3009
    %3651 = vmatprep.subr.bf16.mxu0 0
    %3652 = vmatpush1.bf16.msra.mxu0 %v3012
    %3653 = vmatprep.subr.bf16.mxu0 0
    %3654 = vmatpush1.bf16.msra.mxu0 %v3015
    %3655 = vmatprep.subr.bf16.mxu0 0
    %3656 = vmatpush1.bf16.msra.mxu0 %v3018
    %3657 = vmatprep.subr.bf16.mxu0 0
    %3658 = vmatpush1.bf16.msra.mxu0 %v3021
    %3659 = vmatprep.subr.bf16.mxu0 0
    %3660 = vmatpush1.bf16.msra.mxu0 %v3024
    %3661 = vmatprep.subr.bf16.mxu0 0
    %3662 = vmatpush1.bf16.msra.mxu0 %v3027
    %3663 = vmatprep.subr.bf16.mxu0 0
    %3664 = vmatpush1.bf16.msra.mxu0 %v3030
    %3665 = vmatprep.subr.bf16.mxu0 0
    %3666 = vmatpush1.bf16.msra.mxu0 %v3033
    %3667 = vmatprep.subr.bf16.mxu0 0
    %3668 = vmatpush1.bf16.msra.mxu0 %v3036
    %3669 = vmatprep.subr.bf16.mxu0 0
    %3670 = vmatpush1.bf16.msra.mxu0 %v3039
    %3671 = vmatprep.mubr.bf16.mxu0 %v1959
    %3672 = vmatmul.mubr.bf16.gmra.mrb[0].mxu0 %v1958
    %v3673 = vpop.f32.mrb[0].mxu0
    %v3674 = vadd.f32 %v2268, %v3673
    %v3675 = vpop.f32.mrb[0].mxu0
    %v3676 = vpop.f32.mrb[0].mxu0
    %v3677 = vadd.f32 %v2268, %v3676
    %v3678 = vpop.f32.mrb[0].mxu0
    %3679 = vdwg.mxu0
    %3680 = vmatprep.subr.bf16.mxu0 0
    %3681 = vmatpush1.bf16.msra.mxu0 %v3042
    %3682 = vmatprep.subr.bf16.mxu0 0
    %3683 = vmatpush1.bf16.msra.mxu0 %v3045
    %3684 = vmatprep.subr.bf16.mxu0 0
    %3685 = vmatpush1.bf16.msra.mxu0 %v3048
    %3686 = vmatprep.subr.bf16.mxu0 0
    %3687 = vmatpush1.bf16.msra.mxu0 %v3051
    %3688 = vmatprep.subr.bf16.mxu0 0
    %3689 = vmatpush1.bf16.msra.mxu0 %v3054
    %3690 = vmatprep.subr.bf16.mxu0 0
    %3691 = vmatpush1.bf16.msra.mxu0 %v3057
    %3692 = vmatprep.subr.bf16.mxu0 0
    %3693 = vmatpush1.bf16.msra.mxu0 %v3060
    %3694 = vmatprep.subr.bf16.mxu0 0
    %3695 = vmatpush1.bf16.msra.mxu0 %v3063
    %3696 = vmatprep.subr.bf16.mxu0 0
    %3697 = vmatpush1.bf16.msra.mxu0 %v3066
    %3698 = vmatprep.subr.bf16.mxu0 0
    %3699 = vmatpush1.bf16.msra.mxu0 %v3069
    %3700 = vmatprep.subr.bf16.mxu0 0
    %3701 = vmatpush1.bf16.msra.mxu0 %v3072
    %3702 = vmatprep.subr.bf16.mxu0 0
    %3703 = vmatpush1.bf16.msra.mxu0 %v3075
    %3704 = vmatprep.subr.bf16.mxu0 0
    %3705 = vmatpush1.bf16.msra.mxu0 %v3078
    %3706 = vmatprep.subr.bf16.mxu0 0
    %3707 = vmatpush1.bf16.msra.mxu0 %v3081
    %3708 = vmatprep.subr.bf16.mxu0 0
    %3709 = vmatpush1.bf16.msra.mxu0 %v3084
    %3710 = vmatprep.subr.bf16.mxu0 0
    %3711 = vmatpush1.bf16.msra.mxu0 %v3087
    %3712 = vmatprep.mubr.bf16.mxu0 %v1961
    %3713 = vmatmul.mubr.bf16.gmra.mrb[0].mxu0 %v1960
    %v3714 = vpop.f32.mrb[0].mxu0
    %v3715 = vadd.f32 %v3674, %v3714
    %v3716 = vpop.f32.mrb[0].mxu0
    %v3717 = vpop.f32.mrb[0].mxu0
    %v3718 = vadd.f32 %v3677, %v3717
    %v3719 = vpop.f32.mrb[0].mxu0
    %3720 = vdwg.mxu0
    %3721 = vmatprep.subr.bf16.mxu0 0
    %3722 = vmatpush1.bf16.msra.mxu0 %v3090
    %3723 = vmatprep.subr.bf16.mxu0 0
    %3724 = vmatpush1.bf16.msra.mxu0 %v3093
    %3725 = vmatprep.subr.bf16.mxu0 0
    %3726 = vmatpush1.bf16.msra.mxu0 %v3096
    %3727 = vmatprep.subr.bf16.mxu0 0
    %3728 = vmatpush1.bf16.msra.mxu0 %v3099
    %3729 = vmatprep.subr.bf16.mxu0 0
    %3730 = vmatpush1.bf16.msra.mxu0 %v3102
    %3731 = vmatprep.subr.bf16.mxu0 0
    %3732 = vmatpush1.bf16.msra.mxu0 %v3105
    %3733 = vmatprep.subr.bf16.mxu0 0
    %3734 = vmatpush1.bf16.msra.mxu0 %v3108
    %3735 = vmatprep.subr.bf16.mxu0 0
    %3736 = vmatpush1.bf16.msra.mxu0 %v3111
    %3737 = vmatprep.subr.bf16.mxu0 0
    %3738 = vmatpush1.bf16.msra.mxu0 %v3114
    %3739 = vmatprep.subr.bf16.mxu0 0
    %3740 = vmatpush1.bf16.msra.mxu0 %v3117
    %3741 = vmatprep.subr.bf16.mxu0 0
    %3742 = vmatpush1.bf16.msra.mxu0 %v3120
    %3743 = vmatprep.subr.bf16.mxu0 0
    %3744 = vmatpush1.bf16.msra.mxu0 %v3123
    %3745 = vmatprep.subr.bf16.mxu0 0
    %3746 = vmatpush1.bf16.msra.mxu0 %v3126
    %3747 = vmatprep.subr.bf16.mxu0 0
    %3748 = vmatpush1.bf16.msra.mxu0 %v3129
    %3749 = vmatprep.subr.bf16.mxu0 0
    %3750 = vmatpush1.bf16.msra.mxu0 %v3132
    %3751 = vmatprep.subr.bf16.mxu0 0
    %3752 = vmatpush1.bf16.msra.mxu0 %v3135
    %3753 = vmatprep.mubr.bf16.mxu0 %v1963
    %3754 = vmatmul.mubr.bf16.gmra.mrb[0].mxu0 %v1962
    %v3755 = vpop.f32.mrb[0].mxu0
    %v3756 = vadd.f32 %v3715, %v3755
    %v3757 = vpop.f32.mrb[0].mxu0
    %v3758 = vpop.f32.mrb[0].mxu0
    %v3759 = vadd.f32 %v3718, %v3758
    %v3760 = vpop.f32.mrb[0].mxu0
    %3761 = vdwg.mxu0
    %3762 = vmatprep.subr.bf16.mxu0 0
    %3763 = vmatpush1.bf16.msra.mxu0 %v3138
    %3764 = vmatprep.subr.bf16.mxu0 0
    %3765 = vmatpush1.bf16.msra.mxu0 %v3141
    %3766 = vmatprep.subr.bf16.mxu0 0
    %3767 = vmatpush1.bf16.msra.mxu0 %v3144
    %3768 = vmatprep.subr.bf16.mxu0 0
    %3769 = vmatpush1.bf16.msra.mxu0 %v3147
    %3770 = vmatprep.subr.bf16.mxu0 0
    %3771 = vmatpush1.bf16.msra.mxu0 %v3150
    %3772 = vmatprep.subr.bf16.mxu0 0
    %3773 = vmatpush1.bf16.msra.mxu0 %v3153
    %3774 = vmatprep.subr.bf16.mxu0 0
    %3775 = vmatpush1.bf16.msra.mxu0 %v3156
    %3776 = vmatprep.subr.bf16.mxu0 0
    %3777 = vmatpush1.bf16.msra.mxu0 %v3159
    %3778 = vmatprep.subr.bf16.mxu0 0
    %3779 = vmatpush1.bf16.msra.mxu0 %v3162
    %3780 = vmatprep.subr.bf16.mxu0 0
    %3781 = vmatpush1.bf16.msra.mxu0 %v3165
    %3782 = vmatprep.subr.bf16.mxu0 0
    %3783 = vmatpush1.bf16.msra.mxu0 %v3168
    %3784 = vmatprep.subr.bf16.mxu0 0
    %3785 = vmatpush1.bf16.msra.mxu0 %v3171
    %3786 = vmatprep.subr.bf16.mxu0 0
    %3787 = vmatpush1.bf16.msra.mxu0 %v3174
    %3788 = vmatprep.subr.bf16.mxu0 0
    %3789 = vmatpush1.bf16.msra.mxu0 %v3177
    %3790 = vmatprep.subr.bf16.mxu0 0
    %3791 = vmatpush1.bf16.msra.mxu0 %v3180
    %3792 = vmatprep.subr.bf16.mxu0 0
    %3793 = vmatpush1.bf16.msra.mxu0 %v3183
    %3794 = vmatprep.mubr.bf16.mxu0 %v1965
    %3795 = vmatmul.mubr.bf16.gmra.mrb[0].mxu0 %v1964
    %v3796 = vpop.f32.mrb[0].mxu0
    %v3797 = vadd.f32 %v3756, %v3796
    %v3798 = vpop.f32.mrb[0].mxu0
    %v3799 = vpop.f32.mrb[0].mxu0
    %v3800 = vadd.f32 %v3759, %v3799
    %v3801 = vpop.f32.mrb[0].mxu0
    %3802 = vdwg.mxu0
    %3803 = vmatprep.subr.bf16.mxu0 0
    %3804 = vmatpush1.bf16.msra.mxu0 %v3186
    %3805 = vmatprep.subr.bf16.mxu0 0
    %3806 = vmatpush1.bf16.msra.mxu0 %v3189
    %3807 = vmatprep.subr.bf16.mxu0 0
    %3808 = vmatpush1.bf16.msra.mxu0 %v3192
    %3809 = vmatprep.subr.bf16.mxu0 0
    %3810 = vmatpush1.bf16.msra.mxu0 %v3195
    %3811 = vmatprep.subr.bf16.mxu0 0
    %3812 = vmatpush1.bf16.msra.mxu0 %v3198
    %3813 = vmatprep.subr.bf16.mxu0 0
    %3814 = vmatpush1.bf16.msra.mxu0 %v3201
    %3815 = vmatprep.subr.bf16.mxu0 0
    %3816 = vmatpush1.bf16.msra.mxu0 %v3204
    %3817 = vmatprep.subr.bf16.mxu0 0
    %3818 = vmatpush1.bf16.msra.mxu0 %v3207
    %3819 = vmatprep.subr.bf16.mxu0 0
    %3820 = vmatpush1.bf16.msra.mxu0 0
    %3821 = vmatprep.subr.bf16.mxu0 0
    %3822 = vmatpush1.bf16.msra.mxu0 0
    %3823 = vmatprep.subr.bf16.mxu0 0
    %3824 = vmatpush1.bf16.msra.mxu0 0
    %3825 = vmatprep.subr.bf16.mxu0 0
    %3826 = vmatpush1.bf16.msra.mxu0 0
    %3827 = vmatprep.subr.bf16.mxu0 0
    %3828 = vmatpush1.bf16.msra.mxu0 0
    %3829 = vmatprep.subr.bf16.mxu0 0
    %3830 = vmatpush1.bf16.msra.mxu0 0
    %3831 = vmatprep.subr.bf16.mxu0 0
    %3832 = vmatpush1.bf16.msra.mxu0 0
    %3833 = vmatprep.subr.bf16.mxu0 0
    %3834 = vmatpush1.bf16.msra.mxu0 0
    %3835 = vmatprep.mubr.bf16.mxu0 0
    %3836 = vmatmul.mubr.bf16.gmra.mrb[0].mxu0 %v1966
    %v3837 = vpop.f32.mrb[0].mxu0
    %v3838 = vadd.f32 %v3797, %v3837
    %v3839 = vpop.f32.mrb[0].mxu0
    %v3840 = vpop.f32.mrb[0].mxu0
    %v3841 = vadd.f32 %v3800, %v3840
    %v3842 = vpop.f32.mrb[0].mxu0
    %3843 = vdwg.mxu0
    %v3844 = vmax.f32 %v3631, 0.0
    %v3845 = vmax.f32 %v3633, 0.0
    %v3846 = vmax.f32 %v3838, 0.0
    %v3847 = vmax.f32 %v3635, 0.0
    %v3848 = vmax.f32 %v3637, 0.0
    %v3849 = vmax.f32 %v3841, 0.0
    %v3850 = vlaneseq
    %v3851 = vshrl.u32 %v3850, 7
    %v3852 = vadd.s32 %v3851, 8
    %vm3853 = vcmp.lt.s32.totalorder %v3851, 12
    %vm3854 = vcmp.lt.s32.totalorder %v3852, 12
    %v3855 = vsel %vm3853, 1, 0
    %v3856 = vsel %vm3854, 1, 0
    %v3857 = vcvt.s32.f32 %v3855
    %v3858 = vcvt.s32.f32 %v3856
    %v3859 = vmul.f32 %v3844, %v3857
    %v3860 = vmul.f32 %v3845, %v3857
    %v3861 = vmul.f32 %v3846, %v3857
    %v3862 = vmul.f32 %v3847, %v3858
    %v3863 = vmul.f32 %v3848, %v3858
    %v3864 = vmul.f32 %v3849, %v3858
    %v3865 = vadd.f32 %v3859, %v3862
    %v3866 = vrot.slane %v3865, 4
    %v3867 = vadd.f32 %v3865, %v3866
    %v3868 = vrot.slane %v3867, 2
    %v3869 = vadd.f32 %v3867, %v3868
    %v3870 = vrot.slane %v3869, 1
    %v3871 = vadd.f32 %v3869, %v3870
    %v3872 = vadd.f32 %v3860, %v3863
    %v3873 = vrot.slane %v3872, 4
    %v3874 = vadd.f32 %v3872, %v3873
    %v3875 = vrot.slane %v3874, 2
    %v3876 = vadd.f32 %v3874, %v3875
    %v3877 = vrot.slane %v3876, 1
    %v3878 = vadd.f32 %v3876, %v3877
    %v3879 = vadd.f32 %v3861, %v3864
    %v3880 = vrot.slane %v3879, 4
    %v3881 = vadd.f32 %v3879, %v3880
    %v3882 = vrot.slane %v3881, 2
    %v3883 = vadd.f32 %v3881, %v3882
    %v3884 = vrot.slane %v3883, 1
    %v3885 = vadd.f32 %v3883, %v3884
    %3886 = vrot.lane.b32.xlu0 %v3871, 64
    %v3887 = vpop.permute.xlu0 %3886
    %3888 = vrot.lane.b32.xlu0 %v3878, 64
    %v3889 = vpop.permute.xlu0 %3888
    %3890 = vrot.lane.b32.xlu0 %v3885, 64
    %v3891 = vpop.permute.xlu0 %3890
    %v3892 = vsel %vm1602, %v3889, %v3891
    %v3893 = vsel %vm1602, %v3887, %v3889
    %v3894 = vsel %vm1602, %v3891, %v3887
    %v3895 = vadd.f32 %v3871, %v3894
    %v3896 = vadd.f32 %v3878, %v3893
    %v3897 = vadd.f32 %v3885, %v3892
    %v3898 = vadd.f32 %v3895, %v3897
    %v3899 = vadd.f32 %v3896, %v3895
    %v3900 = vadd.f32 %v3897, %v3896
    %v3901 = vadd.f32 %v3898, %v3896
    %v3902 = vadd.f32 %v3899, %v3897
    %v3903 = vadd.f32 %v3900, %v3895
    %v3904 = vmul.f32 %v3901, 0.013888889
    %v3905 = vmul.f32 %v3902, 0.013888889
    %v3906 = vmul.f32 %v3903, 0.013888889
    %v3907 = vlaneseq
    %v3908 = vshrl.u32 %v3907, 7
    %v3909 = vsub.s32 0, %v3908
    %v3910 = vrot.slane %v3904, %v3909
    %v3911 = vlaneseq
    %v3912 = vshrl.u32 %v3911, 7
    %v3913 = vsub.s32 0, %v3912
    %v3914 = vrot.slane %v3905, %v3913
    %v3915 = vlaneseq
    %v3916 = vshrl.u32 %v3915, 7
    %v3917 = vsub.s32 0, %v3916
    %v3918 = vrot.slane %v3906, %v3917
    %v3919 = vsub.f32 %v3844, %v3910
    %v3920 = vsub.f32 %v3845, %v3914
    %v3921 = vsub.f32 %v3846, %v3918
    %v3922 = vsub.f32 %v3847, %v3910
    %v3923 = vsub.f32 %v3848, %v3914
    %v3924 = vsub.f32 %v3849, %v3918
    %v3925 = vmul.f32 %v3919, %v3857
    %v3926 = vmul.f32 %v3920, %v3857
    %v3927 = vmul.f32 %v3921, %v3857
    %v3928 = vmul.f32 %v3922, %v3858
    %v3929 = vmul.f32 %v3923, %v3858
    %v3930 = vmul.f32 %v3924, %v3858
    %v3931 = vmul.f32 %v3925, %v3925
    %v3932 = vmul.f32 %v3926, %v3926
    %v3933 = vmul.f32 %v3927, %v3927
    %v3934 = vmul.f32 %v3928, %v3928
    %v3935 = vmul.f32 %v3929, %v3929
    %v3936 = vmul.f32 %v3930, %v3930
    %v3937 = vadd.f32 %v3931, %v3934
    %v3938 = vrot.slane %v3937, 4
    %v3939 = vadd.f32 %v3937, %v3938
    %v3940 = vrot.slane %v3939, 2
    %v3941 = vadd.f32 %v3939, %v3940
    %v3942 = vrot.slane %v3941, 1
    %v3943 = vadd.f32 %v3941, %v3942
    %v3944 = vadd.f32 %v3932, %v3935
    %v3945 = vrot.slane %v3944, 4
    %v3946 = vadd.f32 %v3944, %v3945
    %v3947 = vrot.slane %v3946, 2
    %v3948 = vadd.f32 %v3946, %v3947
    %v3949 = vrot.slane %v3948, 1
    %v3950 = vadd.f32 %v3948, %v3949
    %v3951 = vadd.f32 %v3933, %v3936
    %v3952 = vrot.slane %v3951, 4
    %v3953 = vadd.f32 %v3951, %v3952
    %v3954 = vrot.slane %v3953, 2
    %v3955 = vadd.f32 %v3953, %v3954
    %v3956 = vrot.slane %v3955, 1
    %v3957 = vadd.f32 %v3955, %v3956
    %3958 = vrot.lane.b32.xlu0 %v3943, 64
    %v3959 = vpop.permute.xlu0 %3958
    %3960 = vrot.lane.b32.xlu0 %v3950, 64
    %v3961 = vpop.permute.xlu0 %3960
    %3962 = vrot.lane.b32.xlu0 %v3957, 64
    %v3963 = vpop.permute.xlu0 %3962
    %v3964 = vsel %vm1602, %v3961, %v3963
    %v3965 = vsel %vm1602, %v3959, %v3961
    %v3966 = vsel %vm1602, %v3963, %v3959
    %v3967 = vadd.f32 %v3943, %v3966
    %v3968 = vadd.f32 %v3950, %v3965
    %v3969 = vadd.f32 %v3957, %v3964
    %v3970 = vadd.f32 %v3967, %v3969
    %v3971 = vadd.f32 %v3968, %v3967
    %v3972 = vadd.f32 %v3969, %v3968
    %v3973 = vadd.f32 %v3970, %v3968
    %v3974 = vadd.f32 %v3971, %v3969
    %v3975 = vadd.f32 %v3972, %v3967
    %v3976 = vmul.f32 %v3973, 0.013888889
    %v3977 = vmul.f32 %v3974, 0.013888889
    %v3978 = vmul.f32 %v3975, 0.013888889
    %v3979 = vld [vmem:[%s19] sm:$0x7]
    %v3980 = vadd.f32 %v3976, 1e-05
    %v3981 = vadd.f32 %v3977, 1e-05
    %v3982 = vadd.f32 %v3978, 1e-05
    %v3983 = vrsqrt.pop %v3980
    %v3984 = vrsqrt.pop %v3981
    %v3985 = vrsqrt.pop %v3982
    %v3989 = vcombine.low %v3983, %v3984
    %v3991 = vunpack.c.l.s4 1966171168
    %v3992 = vunpack.c.0.s8 %v3991
    %v3993 = vlaneseq
    %v3994 = vshrl.u32 %v3993, 7
    %v3995 = vsub.s32 %v3992, %v3994
    %v3996 = vrot.slane %v3989, %v3995
    %v3998 = vunpack.c.l.s4 1966171168
    %v3999 = vunpack.c.0.s8 %v3998
    %v4000 = vlaneseq
    %v4001 = vshrl.u32 %v4000, 7
    %v4002 = vsub.s32 %v3999, %v4001
    %v4003 = vrot.slane %v3985, %v4002
    %v4004 = vcombine.low %v3996, %v4003
    %v4006 = vunpack.c.l.s4 1966171168
    %v4007 = vunpack.c.0.s8 %v4006
    %v4008 = vlaneseq
    %v4009 = vshrl.u32 %v4008, 7
    %v4010 = vsub.s32 %v4007, %v4009
    %v4011 = vrot.slane %v4004, %v4010
    %v4013 = vmul.f32 %v3979, %v4011
    %v4015 = vlaneseq
    %v4016 = vshrl.u32 %v4015, 7
    %v4017 = vsub.s32 0, %v4016
    %v4018 = vrot.slane %v4013, %v4017
    %v4019 = vlaneseq
    %v4020 = vshrl.u32 %v4019, 7
    %v4021 = vsub.s32 1, %v4020
    %v4022 = vrot.slane %v4013, %v4021
    %v4023 = vlaneseq
    %v4024 = vshrl.u32 %v4023, 7
    %v4025 = vsub.s32 2, %v4024
    %v4026 = vrot.slane %v4013, %v4025
    %v4030 = vmul.f32 %v3919, %v4018
    %v4031 = vmul.f32 %v3920, %v4022
    %v4032 = vmul.f32 %v3921, %v4026
    %v4033 = vmul.f32 %v3922, %v4018
    %v4034 = vmul.f32 %v3923, %v4022
    %v4035 = vmul.f32 %v3924, %v4026
    %v4036 = vld [vmem:[%s21] sm:$0x7]
    %v4038 = vlaneseq
    %v4039 = vshrl.u32 %v4038, 7
    %v4040 = vsub.s32 0, %v4039
    %v4041 = vrot.slane %v4036, %v4040
    %v4042 = vlaneseq
    %v4043 = vshrl.u32 %v4042, 7
    %v4044 = vsub.s32 1, %v4043
    %v4045 = vrot.slane %v4036, %v4044
    %v4046 = vlaneseq
    %v4047 = vshrl.u32 %v4046, 7
    %v4048 = vsub.s32 2, %v4047
    %v4049 = vrot.slane %v4036, %v4048
    %v4053 = vadd.f32 %v4030, %v4041
    %v4054 = vadd.f32 %v4031, %v4045
    %v4055 = vadd.f32 %v4032, %v4049
    %v4056 = vadd.f32 %v4033, %v4041
    %v4057 = vadd.f32 %v4034, %v4045
    %v4058 = vadd.f32 %v4035, %v4049
    %v4059 = vpack.c.bf16 %v4056, %v4053
    %v4060 = vpack.c.bf16 %v4057, %v4054
    %v4061 = vpack.c.bf16 %v4058, %v4055
    %v4062 = vld [vmem:[%s23] sm:$0xf]
    %v4063 = vld [vmem:[%s23 + $0x4] sm:$0xf]
    %v4064 = vld [vmem:[%s23 + $0x8] sm:$0xf]
    %v4068 = vunpack.c.l.b16 %v4062
    %v4069 = vunpack.c.l.b16 %v4063
    %v4070 = vunpack.c.l.b16 %v4064
    %v4071 = vpack.c.b16 %v4069, %v4068
    %v4072 = vpack.c.b16 %v4070, %v4070
    %vm4073 = vcmask 130048
    %v4075 = vsel %vm4073, %v4071, 0
    %v4078 = vsel %vm4073, %v4072, 0
    %4080 = vmatprep.subr.bf16.mxu0 %v4060
    %4081 = vmatpush1.bf16.msra.mxu0 %v4059
    %4082 = vmatprep.subr.bf16.mxu0 0
    %4083 = vmatpush1.bf16.msra.mxu0 0
    %4084 = vmatprep.subr.bf16.mxu0 0
    %4085 = vmatpush1.bf16.msra.mxu0 0
    %4086 = vmatprep.subr.bf16.mxu0 0
    %4087 = vmatpush1.bf16.msra.mxu0 0
    %4088 = vmatprep.subr.bf16.mxu0 0
    %4089 = vmatpush1.bf16.msra.mxu0 0
    %4090 = vmatprep.subr.bf16.mxu0 0
    %4091 = vmatpush1.bf16.msra.mxu0 0
    %4092 = vmatprep.subr.bf16.mxu0 0
    %4093 = vmatpush1.bf16.msra.mxu0 0
    %4094 = vmatprep.subr.bf16.mxu0 0
    %4095 = vmatpush1.bf16.msra.mxu0 0
    %4096 = vmatprep.subr.bf16.mxu0 0
    %4097 = vmatpush1.bf16.msra.mxu0 0
    %4098 = vmatprep.subr.bf16.mxu0 0
    %4099 = vmatpush1.bf16.msra.mxu0 0
    %4100 = vmatprep.subr.bf16.mxu0 0
    %4101 = vmatpush1.bf16.msra.mxu0 0
    %4102 = vmatprep.subr.bf16.mxu0 0
    %4103 = vmatpush1.bf16.msra.mxu0 0
    %4104 = vmatprep.subr.bf16.mxu0 0
    %4105 = vmatpush1.bf16.msra.mxu0 0
    %4106 = vmatprep.subr.bf16.mxu0 0
    %4107 = vmatpush1.bf16.msra.mxu0 0
    %4108 = vmatprep.subr.bf16.mxu0 0
    %4109 = vmatpush1.bf16.msra.mxu0 0
    %4110 = vmatprep.subr.bf16.mxu0 0
    %4111 = vmatpush1.bf16.msra.mxu0 0
    %4112 = vmatprep.mubr.bf16.mxu0 0
    %4113 = vmatmul.mubr.bf16.gmra.mrb[0].mxu0 %v4075
    %v4114 = vpop.f32.mrb[0].mxu0
    %v4115 = vadd.f32 0.0, %v4114
    %v4116 = vpop.f32.mrb[0].mxu0
    %v4117 = vadd.f32 0.0, %v4116
    %v4118 = vpop.f32.mrb[0].mxu0
    %v4119 = vadd.f32 0.0, %v4118
    %v4120 = vpop.f32.mrb[0].mxu0
    %v4121 = vadd.f32 0.0, %v4120
    %4122 = vmatprep.mubr.bf16.mxu0 0
    %4123 = vmatmul.mubr.bf16.gmra.mrb[0].mxu0 %v4078
    %v4124 = vpop.f32.mrb[0].mxu0
    %v4125 = vadd.f32 0.0, %v4124
    %v4126 = vpop.f32.mrb[0].mxu0
    %v4127 = vadd.f32 0.0, %v4126
    %v4128 = vpop.f32.mrb[0].mxu0
    %v4129 = vpop.f32.mrb[0].mxu0
    %4130 = vdwg.mxu0
    %4131 = vmatprep.subr.bf16.mxu0 0
    %4132 = vmatpush1.bf16.msra.mxu0 %v4061
    %4133 = vmatprep.subr.bf16.mxu0 0
    %4134 = vmatpush1.bf16.msra.mxu0 0
    %4135 = vmatprep.subr.bf16.mxu0 0
    %4136 = vmatpush1.bf16.msra.mxu0 0
    %4137 = vmatprep.subr.bf16.mxu0 0
    %4138 = vmatpush1.bf16.msra.mxu0 0
    %4139 = vmatprep.subr.bf16.mxu0 0
    %4140 = vmatpush1.bf16.msra.mxu0 0
    %4141 = vmatprep.subr.bf16.mxu0 0
    %4142 = vmatpush1.bf16.msra.mxu0 0
    %4143 = vmatprep.subr.bf16.mxu0 0
    %4144 = vmatpush1.bf16.msra.mxu0 0
    %4145 = vmatprep.subr.bf16.mxu0 0
    %4146 = vmatpush1.bf16.msra.mxu0 0
    %4147 = vmatprep.subr.bf16.mxu0 0
    %4148 = vmatpush1.bf16.msra.mxu0 0
    %4149 = vmatprep.subr.bf16.mxu0 0
    %4150 = vmatpush1.bf16.msra.mxu0 0
    %4151 = vmatprep.subr.bf16.mxu0 0
    %4152 = vmatpush1.bf16.msra.mxu0 0
    %4153 = vmatprep.subr.bf16.mxu0 0
    %4154 = vmatpush1.bf16.msra.mxu0 0
    %4155 = vmatprep.subr.bf16.mxu0 0
    %4156 = vmatpush1.bf16.msra.mxu0 0
    %4157 = vmatprep.subr.bf16.mxu0 0
    %4158 = vmatpush1.bf16.msra.mxu0 0
    %4159 = vmatprep.subr.bf16.mxu0 0
    %4160 = vmatpush1.bf16.msra.mxu0 0
    %4161 = vmatprep.subr.bf16.mxu0 0
    %4162 = vmatpush1.bf16.msra.mxu0 0
    %4163 = vmatprep.mubr.bf16.mxu0 0
    %4164 = vmatmul.mubr.bf16.gmra.mrb[0].mxu0 %v4075
    %v4165 = vpop.f32.mrb[0].mxu0
    %v4166 = vadd.f32 0.0, %v4165
    %v4167 = vpop.f32.mrb[0].mxu0
    %v4168 = vpop.f32.mrb[0].mxu0
    %v4169 = vadd.f32 0.0, %v4168
    %v4170 = vpop.f32.mrb[0].mxu0
    %4171 = vmatprep.mubr.bf16.mxu0 0
    %4172 = vmatmul.mubr.bf16.gmra.mrb[0].mxu0 %v4078
    %v4173 = vpop.f32.mrb[0].mxu0
    %v4174 = vadd.f32 0.0, %v4173
    %v4175 = vpop.f32.mrb[0].mxu0
    %v4176 = vpop.f32.mrb[0].mxu0
    %v4177 = vpop.f32.mrb[0].mxu0
    %4178 = vdwg.mxu0
    %v4179 = vpack.c.bf16 %v4115, %v4115
    %v4180 = vpack.c.bf16 %v4117, %v4117
    %v4181 = vpack.c.bf16 %v4166, %v4166
    %v4182 = vpack.c.bf16 %v4119, %v4119
    %v4183 = vpack.c.bf16 %v4121, %v4121
    %v4184 = vpack.c.bf16 %v4169, %v4169
    %v4185 = vpack.c.bf16 %v4125, %v4125
    %v4186 = vpack.c.bf16 %v4127, %v4127
    %v4187 = vpack.c.bf16 %v4174, %v4174
    %v4188 = vld [vmem:[#allocation7] sm:$0xff]
    %v4189 = vld [vmem:[#allocation7 + $0x8] sm:$0xf]
    %v4190 = vld [vmem:[#allocation7 + $0xc] sm:$0xff]
    %v4191 = vld [vmem:[#allocation7 + $0x14] sm:$0xf]
    %v4192 = vld [vmem:[#allocation7 + $0x18] sm:$0xff]
    %v4193 = vld [vmem:[#allocation7 + $0x20] sm:$0xf]
    %v4194 = vld [vmem:[#allocation7 + $0x24] sm:$0xff]
    %v4195 = vld [vmem:[#allocation7 + $0x2c] sm:$0xf]
    %v4196 = vld [vmem:[#allocation7 + $0x30] sm:$0xff]
    %v4197 = vld [vmem:[#allocation7 + $0x38] sm:$0xf]
    %v4198 = vld [vmem:[#allocation7 + $0x3c] sm:$0xff]
    %v4199 = vld [vmem:[#allocation7 + $0x44] sm:$0xf]
    %v4200 = vld [vmem:[#allocation7 + $0x48] sm:$0xff]
    %v4201 = vld [vmem:[#allocation7 + $0x50] sm:$0xf]
    %v4202 = vld [vmem:[#allocation7 + $0x54] sm:$0xff]
    %v4203 = vld [vmem:[#allocation7 + $0x5c] sm:$0xf]
    %v4204 = vld [vmem:[#allocation7 + $0x60] sm:$0xff]
    %v4205 = vld [vmem:[#allocation7 + $0x68] sm:$0xf]
    %v4206 = vld [vmem:[#allocation7 + $0x6c] sm:$0xff]
    %v4207 = vld [vmem:[#allocation7 + $0x74] sm:$0xf]
    %v4208 = vld [vmem:[#allocation7 + $0x78] sm:$0xff]
    %v4209 = vld [vmem:[#allocation7 + $0x80] sm:$0xf]
    %v4210 = vld [vmem:[#allocation7 + $0x84] sm:$0xff]
    %v4211 = vld [vmem:[#allocation7 + $0x8c] sm:$0xf]
    %v4212 = vld [vmem:[#allocation7 + $0x90] sm:$0xff]
    %v4213 = vld [vmem:[#allocation7 + $0x98] sm:$0xf]
    %v4214 = vld [vmem:[#allocation7 + $0x9c] sm:$0xff]
    %v4215 = vld [vmem:[#allocation7 + $0xa4] sm:$0xf]
    %v4216 = vld [vmem:[#allocation7 + $0xa8] sm:$0xff]
    %v4217 = vld [vmem:[#allocation7 + $0xb0] sm:$0xf]
    %v4218 = vld [vmem:[#allocation7 + $0xb4] sm:$0xff]
    %v4219 = vld [vmem:[#allocation7 + $0xbc] sm:$0xf]
    %v4220 = vld [vmem:[#allocation7 + $0xc0] sm:$0xff]
    %v4221 = vld [vmem:[#allocation7 + $0xc8] sm:$0xf]
    %v4222 = vld [vmem:[#allocation7 + $0xcc] sm:$0xff]
    %v4223 = vld [vmem:[#allocation7 + $0xd4] sm:$0xf]
    %v4224 = vld [vmem:[#allocation7 + $0xd8] sm:$0xff]
    %v4225 = vld [vmem:[#allocation7 + $0xe0] sm:$0xf]
    %v4226 = vld [vmem:[#allocation7 + $0xe4] sm:$0xff]
    %v4227 = vld [vmem:[#allocation7 + $0xec] sm:$0xf]
    %v4228 = vld [vmem:[#allocation7 + $0xf0] sm:$0xff]
    %v4229 = vld [vmem:[#allocation7 + $0xf8] sm:$0xf]
    %v4230 = vld [vmem:[#allocation7 + $0xfc] sm:$0xff]
    %v4231 = vld [vmem:[#allocation7 + $0x104] sm:$0xf]
    %v4232 = vld [vmem:[#allocation7 + $0x108] sm:$0xff]
    %v4233 = vld [vmem:[#allocation7 + $0x110] sm:$0xf]
    %v4234 = vld [vmem:[#allocation7 + $0x114] sm:$0xff]
    %v4235 = vld [vmem:[#allocation7 + $0x11c] sm:$0xf]
    %v4236 = vld [vmem:[#allocation7 + $0x120] sm:$0xff]
    %v4237 = vld [vmem:[#allocation7 + $0x128] sm:$0xf]
    %v4238 = vld [vmem:[#allocation7 + $0x12c] sm:$0xff]
    %v4239 = vld [vmem:[#allocation7 + $0x134] sm:$0xf]
    %v4240 = vld [vmem:[#allocation7 + $0x138] sm:$0xff]
    %v4241 = vld [vmem:[#allocation7 + $0x140] sm:$0xf]
    %v4242 = vld [vmem:[#allocation7 + $0x144] sm:$0xff]
    %v4243 = vld [vmem:[#allocation7 + $0x14c] sm:$0xf]
    %v4244 = vld [vmem:[#allocation7 + $0x150] sm:$0xff]
    %v4245 = vld [vmem:[#allocation7 + $0x158] sm:$0xf]
    %v4246 = vld [vmem:[#allocation7 + $0x15c] sm:$0xff]
    %v4247 = vld [vmem:[#allocation7 + $0x164] sm:$0xf]
    %v4248 = vld [vmem:[#allocation7 + $0x168] sm:$0xff]
    %v4249 = vld [vmem:[#allocation7 + $0x170] sm:$0xf]
    %v4250 = vld [vmem:[#allocation7 + $0x174] sm:$0xff]
    %v4251 = vld [vmem:[#allocation7 + $0x17c] sm:$0xf]
    %v4252 = vld [vmem:[#allocation7 + $0x180] sm:$0xff]
    %v4253 = vld [vmem:[#allocation7 + $0x188] sm:$0xf]
    %v4254 = vld [vmem:[#allocation7 + $0x18c] sm:$0xff]
    %v4255 = vld [vmem:[#allocation7 + $0x194] sm:$0xf]
    %v4256 = vld [vmem:[#allocation7 + $0x198] sm:$0xff]
    %v4257 = vld [vmem:[#allocation7 + $0x1a0] sm:$0xf]
    %v4258 = vld [vmem:[#allocation7 + $0x1a4] sm:$0xff]
    %v4259 = vld [vmem:[#allocation7 + $0x1ac] sm:$0xf]
    %v4260 = vld [vmem:[#allocation7 + $0x1b0] sm:$0xff]
    %v4261 = vld [vmem:[#allocation7 + $0x1b8] sm:$0xf]
    %v4262 = vld [vmem:[#allocation7 + $0x1bc] sm:$0xff]
    %v4263 = vld [vmem:[#allocation7 + $0x1c4] sm:$0xf]
    %v4264 = vld [vmem:[#allocation7 + $0x1c8] sm:$0xff]
    %v4265 = vld [vmem:[#allocation7 + $0x1d0] sm:$0xf]
    %v4266 = vld [vmem:[#allocation7 + $0x1d4] sm:$0xff]
    %v4267 = vld [vmem:[#allocation7 + $0x1dc] sm:$0xf]
    %v4268 = vld [vmem:[#allocation7 + $0x1e0] sm:$0xff]
    %v4269 = vld [vmem:[#allocation7 + $0x1e8] sm:$0xf]
    %v4270 = vld [vmem:[#allocation7 + $0x1ec] sm:$0xff]
    %v4271 = vld [vmem:[#allocation7 + $0x1f4] sm:$0xf]
    %v4272 = vld [vmem:[#allocation7 + $0x1f8] sm:$0xff]
    %v4273 = vld [vmem:[#allocation7 + $0x200] sm:$0xf]
    %v4274 = vld [vmem:[#allocation7 + $0x204] sm:$0xff]
    %v4275 = vld [vmem:[#allocation7 + $0x20c] sm:$0xf]
    %v4276 = vld [vmem:[#allocation7 + $0x210] sm:$0xff]
    %v4277 = vld [vmem:[#allocation7 + $0x218] sm:$0xf]
    %v4278 = vld [vmem:[#allocation7 + $0x21c] sm:$0xff]
    %v4279 = vld [vmem:[#allocation7 + $0x224] sm:$0xf]
    %v4280 = vld [vmem:[#allocation7 + $0x228] sm:$0xff]
    %v4281 = vld [vmem:[#allocation7 + $0x230] sm:$0xf]
    %v4282 = vld [vmem:[#allocation7 + $0x234] sm:$0xff]
    %v4283 = vld [vmem:[#allocation7 + $0x23c] sm:$0xf]
    %v4284 = vld [vmem:[#allocation7 + $0x240] sm:$0xff]
    %v4285 = vld [vmem:[#allocation7 + $0x248] sm:$0xf]
    %v4286 = vld [vmem:[#allocation7 + $0x24c] sm:$0xff]
    %v4287 = vld [vmem:[#allocation7 + $0x254] sm:$0xf]
    %v4288 = vld [vmem:[#allocation7 + $0x258] sm:$0xff]
    %v4289 = vld [vmem:[#allocation7 + $0x260] sm:$0xf]
    %v4290 = vld [vmem:[#allocation7 + $0x264] sm:$0xff]
    %v4291 = vld [vmem:[#allocation7 + $0x26c] sm:$0xf]
    %v4292 = vld [vmem:[#allocation7 + $0x270] sm:$0xff]
    %v4293 = vld [vmem:[#allocation7 + $0x278] sm:$0xf]
    %v4294 = vld [vmem:[#allocation7 + $0x27c] sm:$0xff]
    %v4295 = vld [vmem:[#allocation7 + $0x284] sm:$0xf]
    %v4296 = vld [vmem:[#allocation7 + $0x288] sm:$0xff]
    %v4297 = vld [vmem:[#allocation7 + $0x290] sm:$0xf]
    %v4298 = vld [vmem:[#allocation7 + $0x294] sm:$0xff]
    %v4299 = vld [vmem:[#allocation7 + $0x29c] sm:$0xf]
    %v4300 = vld [vmem:[#allocation7 + $0x2a0] sm:$0xff]
    %v4301 = vld [vmem:[#allocation7 + $0x2a8] sm:$0xf]
    %v4302 = vld [vmem:[#allocation7 + $0x2ac] sm:$0xff]
    %v4303 = vld [vmem:[#allocation7 + $0x2b4] sm:$0xf]
    %v4304 = vld [vmem:[#allocation7 + $0x2b8] sm:$0xff]
    %v4305 = vld [vmem:[#allocation7 + $0x2c0] sm:$0xf]
    %v4306 = vld [vmem:[#allocation7 + $0x2c4] sm:$0xff]
    %v4307 = vld [vmem:[#allocation7 + $0x2cc] sm:$0xf]
    %v4308 = vld [vmem:[#allocation7 + $0x2d0] sm:$0xff]
    %v4309 = vld [vmem:[#allocation7 + $0x2d8] sm:$0xf]
    %v4310 = vld [vmem:[#allocation7 + $0x2dc] sm:$0xff]
    %v4311 = vld [vmem:[#allocation7 + $0x2e4] sm:$0xf]
    %v4312 = vld [vmem:[#allocation7 + $0x2e8] sm:$0xff]
    %v4313 = vld [vmem:[#allocation7 + $0x2f0] sm:$0xf]
    %v4314 = vld [vmem:[#allocation7 + $0x2f4] sm:$0xff]
    %v4315 = vld [vmem:[#allocation7 + $0x2fc] sm:$0xf]
    %v4316 = vld [vmem:[#allocation7 + $0x300] sm:$0xff]
    %v4317 = vld [vmem:[#allocation7 + $0x308] sm:$0xf]
    %v4318 = vld [vmem:[#allocation7 + $0x30c] sm:$0xff]
    %v4319 = vld [vmem:[#allocation7 + $0x314] sm:$0xf]
    %v4320 = vld [vmem:[#allocation7 + $0x318] sm:$0xff]
    %v4321 = vld [vmem:[#allocation7 + $0x320] sm:$0xf]
    %v4322 = vld [vmem:[#allocation7 + $0x324] sm:$0xff]
    %v4323 = vld [vmem:[#allocation7 + $0x32c] sm:$0xf]
    %v4324 = vld [vmem:[#allocation7 + $0x330] sm:$0xff]
    %v4325 = vld [vmem:[#allocation7 + $0x338] sm:$0xf]
    %v4326 = vld [vmem:[#allocation7 + $0x33c] sm:$0xff]
    %v4327 = vld [vmem:[#allocation7 + $0x344] sm:$0xf]
    %v4328 = vld [vmem:[#allocation7 + $0x348] sm:$0xff]
    %v4329 = vld [vmem:[#allocation7 + $0x350] sm:$0xf]
    %v4330 = vld [vmem:[#allocation7 + $0x354] sm:$0xff]
    %v4331 = vld [vmem:[#allocation7 + $0x35c] sm:$0xf]
    %v4332 = vld [vmem:[#allocation7 + $0x360] sm:$0xff]
    %v4333 = vld [vmem:[#allocation7 + $0x368] sm:$0xf]
    %v4334 = vld [vmem:[#allocation7 + $0x36c] sm:$0xff]
    %v4335 = vld [vmem:[#allocation7 + $0x374] sm:$0xf]
    %v4336 = vld [vmem:[#allocation7 + $0x378] sm:$0xff]
    %v4337 = vld [vmem:[#allocation7 + $0x380] sm:$0xf]
    %v4338 = vld [vmem:[#allocation7 + $0x384] sm:$0xff]
    %v4339 = vld [vmem:[#allocation7 + $0x38c] sm:$0xf]
    %v4340 = vld [vmem:[#allocation7 + $0x390] sm:$0xff]
    %v4341 = vld [vmem:[#allocation7 + $0x398] sm:$0xf]
    %v4342 = vld [vmem:[#allocation7 + $0x39c] sm:$0xff]
    %v4343 = vld [vmem:[#allocation7 + $0x3a4] sm:$0xf]
    %v4344 = vld [vmem:[#allocation7 + $0x3a8] sm:$0xff]
    %v4345 = vld [vmem:[#allocation7 + $0x3b0] sm:$0xf]
    %v4346 = vld [vmem:[#allocation7 + $0x3b4] sm:$0xff]
    %v4347 = vld [vmem:[#allocation7 + $0x3bc] sm:$0xf]
    %v4348 = vld [vmem:[#allocation7 + $0x3c0] sm:$0xff]
    %v4349 = vld [vmem:[#allocation7 + $0x3c8] sm:$0xf]
    %v4350 = vld [vmem:[#allocation7 + $0x3cc] sm:$0xff]
    %v4351 = vld [vmem:[#allocation7 + $0x3d4] sm:$0xf]
    %v4352 = vld [vmem:[#allocation7 + $0x3d8] sm:$0xff]
    %v4353 = vld [vmem:[#allocation7 + $0x3e0] sm:$0xf]
    %v4354 = vld [vmem:[#allocation7 + $0x3e4] sm:$0xff]
    %v4355 = vld [vmem:[#allocation7 + $0x3ec] sm:$0xf]
    %v4356 = vld [vmem:[#allocation7 + $0x3f0] sm:$0xff]
    %v4357 = vld [vmem:[#allocation7 + $0x3f8] sm:$0xf]
    %v4358 = vld [vmem:[#allocation7 + $0x3fc] sm:$0xff]
    %v4359 = vld [vmem:[#allocation7 + $0x404] sm:$0xf]
    %v4360 = vld [vmem:[#allocation7 + $0x408] sm:$0xff]
    %v4361 = vld [vmem:[#allocation7 + $0x410] sm:$0xf]
    %v4362 = vld [vmem:[#allocation7 + $0x414] sm:$0xff]
    %v4363 = vld [vmem:[#allocation7 + $0x41c] sm:$0xf]
    %v4364 = vld [vmem:[#allocation7 + $0x420] sm:$0xff]
    %v4365 = vld [vmem:[#allocation7 + $0x428] sm:$0xf]
    %v4366 = vld [vmem:[#allocation7 + $0x42c] sm:$0xff]
    %v4367 = vld [vmem:[#allocation7 + $0x434] sm:$0xf]
    %v4368 = vld [vmem:[#allocation7 + $0x438] sm:$0xff]
    %v4369 = vld [vmem:[#allocation7 + $0x440] sm:$0xf]
    %v4370 = vld [vmem:[#allocation7 + $0x444] sm:$0xff]
    %v4371 = vld [vmem:[#allocation7 + $0x44c] sm:$0xf]
    %v4372 = vld [vmem:[#allocation7 + $0x450] sm:$0xff]
    %v4373 = vld [vmem:[#allocation7 + $0x458] sm:$0xf]
    %v4374 = vld [vmem:[#allocation7 + $0x45c] sm:$0xff]
    %v4375 = vld [vmem:[#allocation7 + $0x464] sm:$0xf]
    %v4376 = vld [vmem:[#allocation7 + $0x468] sm:$0xff]
    %v4377 = vld [vmem:[#allocation7 + $0x470] sm:$0xf]
    %v4378 = vld [vmem:[#allocation7 + $0x474] sm:$0xff]
    %v4379 = vld [vmem:[#allocation7 + $0x47c] sm:$0xf]
    %v4380 = vld [vmem:[#allocation7 + $0x480] sm:$0xff]
    %v4381 = vld [vmem:[#allocation7 + $0x488] sm:$0xf]
    %v4382 = vld [vmem:[#allocation7 + $0x48c] sm:$0xff]
    %v4383 = vld [vmem:[#allocation7 + $0x494] sm:$0xf]
    %v4384 = vld [vmem:[#allocation7 + $0x498] sm:$0xff]
    %v4385 = vld [vmem:[#allocation7 + $0x4a0] sm:$0xf]
    %v4386 = vld [vmem:[#allocation7 + $0x4a4] sm:$0xff]
    %v4387 = vld [vmem:[#allocation7 + $0x4ac] sm:$0xf]
    %v4388 = vld [vmem:[#allocation7 + $0x4b0] sm:$0xff]
    %v4389 = vld [vmem:[#allocation7 + $0x4b8] sm:$0xf]
    %v4390 = vld [vmem:[#allocation7 + $0x4bc] sm:$0xff]
    %v4391 = vld [vmem:[#allocation7 + $0x4c4] sm:$0xf]
    %v4392 = vld [vmem:[#allocation7 + $0x4c8] sm:$0xff]
    %v4393 = vld [vmem:[#allocation7 + $0x4d0] sm:$0xf]
    %v4394 = vld [vmem:[#allocation7 + $0x4d4] sm:$0xff]
    %v4395 = vld [vmem:[#allocation7 + $0x4dc] sm:$0xf]
    %v4396 = vld [vmem:[#allocation7 + $0x4e0] sm:$0xff]
    %v4397 = vld [vmem:[#allocation7 + $0x4e8] sm:$0xf]
    %v4398 = vld [vmem:[#allocation7 + $0x4ec] sm:$0xff]
    %v4399 = vld [vmem:[#allocation7 + $0x4f4] sm:$0xf]
    %v4400 = vld [vmem:[#allocation7 + $0x4f8] sm:$0xff]
    %v4401 = vld [vmem:[#allocation7 + $0x500] sm:$0xf]
    %v4402 = vld [vmem:[#allocation7 + $0x504] sm:$0xff]
    %v4403 = vld [vmem:[#allocation7 + $0x50c] sm:$0xf]
    %v4404 = vld [vmem:[#allocation7 + $0x510] sm:$0xff]
    %v4405 = vld [vmem:[#allocation7 + $0x518] sm:$0xf]
    %v4406 = vld [vmem:[#allocation7 + $0x51c] sm:$0xff]
    %v4407 = vld [vmem:[#allocation7 + $0x524] sm:$0xf]
    %v4408 = vld [vmem:[#allocation7 + $0x528] sm:$0xff]
    %v4409 = vld [vmem:[#allocation7 + $0x530] sm:$0xf]
    %v4410 = vld [vmem:[#allocation7 + $0x534] sm:$0xff]
    %v4411 = vld [vmem:[#allocation7 + $0x53c] sm:$0xf]
    %v4412 = vld [vmem:[#allocation7 + $0x540] sm:$0xff]
    %v4413 = vld [vmem:[#allocation7 + $0x548] sm:$0xf]
    %v4414 = vld [vmem:[#allocation7 + $0x54c] sm:$0xff]
    %v4415 = vld [vmem:[#allocation7 + $0x554] sm:$0xf]
    %v4416 = vld [vmem:[#allocation7 + $0x558] sm:$0xff]
    %v4417 = vld [vmem:[#allocation7 + $0x560] sm:$0xf]
    %v4418 = vld [vmem:[#allocation7 + $0x564] sm:$0xff]
    %v4419 = vld [vmem:[#allocation7 + $0x56c] sm:$0xf]
    %v4420 = vld [vmem:[#allocation7 + $0x570] sm:$0xff]
    %v4421 = vld [vmem:[#allocation7 + $0x578] sm:$0xf]
    %v4422 = vld [vmem:[#allocation7 + $0x57c] sm:$0xff]
    %v4423 = vld [vmem:[#allocation7 + $0x584] sm:$0xf]
    %v4424 = vld [vmem:[#allocation7 + $0x588] sm:$0xff]
    %v4425 = vld [vmem:[#allocation7 + $0x590] sm:$0xf]
    %v4426 = vld [vmem:[#allocation7 + $0x594] sm:$0xff]
    %v4427 = vld [vmem:[#allocation7 + $0x59c] sm:$0xf]
    %v4428 = vld [vmem:[#allocation7 + $0x5a0] sm:$0xff]
    %v4429 = vld [vmem:[#allocation7 + $0x5a8] sm:$0xf]
    %v4430 = vld [vmem:[#allocation7 + $0x5ac] sm:$0xff]
    %v4431 = vld [vmem:[#allocation7 + $0x5b4] sm:$0xf]
    %v4432 = vld [vmem:[#allocation7 + $0x5b8] sm:$0xff]
    %v4433 = vld [vmem:[#allocation7 + $0x5c0] sm:$0xf]
    %v4434 = vld [vmem:[#allocation7 + $0x5c4] sm:$0xff]
    %v4435 = vld [vmem:[#allocation7 + $0x5cc] sm:$0xf]
    %v4436 = vld [vmem:[#allocation7 + $0x5d0] sm:$0xff]
    %v4437 = vld [vmem:[#allocation7 + $0x5d8] sm:$0xf]
    %v4438 = vld [vmem:[#allocation7 + $0x5dc] sm:$0xff]
    %v4439 = vld [vmem:[#allocation7 + $0x5e4] sm:$0xf]
    %v4440 = vld [vmem:[#allocation7 + $0x5e8] sm:$0xff]
    %v4441 = vld [vmem:[#allocation7 + $0x5f0] sm:$0xf]
    %v4442 = vld [vmem:[#allocation7 + $0x5f4] sm:$0xff]
    %v4443 = vld [vmem:[#allocation7 + $0x5fc] sm:$0xf]
    %v4444 = vld [vmem:[#allocation7 + $0x600] sm:$0xff]
    %v4445 = vld [vmem:[#allocation7 + $0x608] sm:$0xf]
    %v4446 = vld [vmem:[#allocation7 + $0x60c] sm:$0xff]
    %v4447 = vld [vmem:[#allocation7 + $0x614] sm:$0xf]
    %v4448 = vld [vmem:[#allocation7 + $0x618] sm:$0xff]
    %v4449 = vld [vmem:[#allocation7 + $0x620] sm:$0xf]
    %v4450 = vld [vmem:[#allocation7 + $0x624] sm:$0xff]
    %v4451 = vld [vmem:[#allocation7 + $0x62c] sm:$0xf]
    %v4452 = vld [vmem:[#allocation7 + $0x630] sm:$0xff]
    %v4453 = vld [vmem:[#allocation7 + $0x638] sm:$0xf]
    %v4454 = vld [vmem:[#allocation7 + $0x63c] sm:$0xff]
    %v4455 = vld [vmem:[#allocation7 + $0x644] sm:$0xf]
    %v4456 = vld [vmem:[#allocation7 + $0x648] sm:$0xff]
    %v4457 = vld [vmem:[#allocation7 + $0x650] sm:$0xf]
    %v4458 = vld [vmem:[#allocation7 + $0x654] sm:$0xff]
    %v4459 = vld [vmem:[#allocation7 + $0x65c] sm:$0xf]
    %v4460 = vld [vmem:[#allocation7 + $0x660] sm:$0xff]
    %v4461 = vld [vmem:[#allocation7 + $0x668] sm:$0xf]
    %v4462 = vld [vmem:[#allocation7 + $0x66c] sm:$0xff]
    %v4463 = vld [vmem:[#allocation7 + $0x674] sm:$0xf]
    %v4464 = vld [vmem:[#allocation7 + $0x678] sm:$0xff]
    %v4465 = vld [vmem:[#allocation7 + $0x680] sm:$0xf]
    %v4466 = vld [vmem:[#allocation7 + $0x684] sm:$0xff]
    %v4467 = vld [vmem:[#allocation7 + $0x68c] sm:$0xf]
    %v4468 = vld [vmem:[#allocation7 + $0x690] sm:$0xff]
    %v4469 = vld [vmem:[#allocation7 + $0x698] sm:$0xf]
    %v4470 = vld [vmem:[#allocation7 + $0x69c] sm:$0xff]
    %v4471 = vld [vmem:[#allocation7 + $0x6a4] sm:$0xf]
    %v4472 = vld [vmem:[#allocation7 + $0x6a8] sm:$0xff]
    %v4473 = vld [vmem:[#allocation7 + $0x6b0] sm:$0xf]
    %v4474 = vld [vmem:[#allocation7 + $0x6b4] sm:$0xff]
    %v4475 = vld [vmem:[#allocation7 + $0x6bc] sm:$0xf]
    %v4476 = vld [vmem:[%s27] sm:$0x7]
    %v4478 = vlaneseq
    %v4479 = vshrl.u32 %v4478, 7
    %v4480 = vsub.s32 0, %v4479
    %v4481 = vrot.slane %v4476, %v4480
    %v4482 = vlaneseq
    %v4483 = vshrl.u32 %v4482, 7
    %v4484 = vsub.s32 1, %v4483
    %v4485 = vrot.slane %v4476, %v4484
    %v4486 = vlaneseq
    %v4487 = vshrl.u32 %v4486, 7
    %v4488 = vsub.s32 2, %v4487
    %v4489 = vrot.slane %v4476, %v4488
    %v4781 = vunpack.c.l.b16 %v4188
    %v4782 = vunpack.c.h.b16 %v4188
    %v4783 = vunpack.c.l.b16 %v4189
    %v4784 = vunpack.c.l.b16 %v4190
    %v4785 = vunpack.c.h.b16 %v4190
    %v4786 = vunpack.c.l.b16 %v4191
    %v4787 = vunpack.c.l.b16 %v4192
    %v4788 = vunpack.c.h.b16 %v4192
    %v4789 = vunpack.c.l.b16 %v4193
    %v4790 = vunpack.c.l.b16 %v4194
    %v4791 = vunpack.c.h.b16 %v4194
    %v4792 = vunpack.c.l.b16 %v4195
    %v4793 = vunpack.c.l.b16 %v4196
    %v4794 = vunpack.c.h.b16 %v4196
    %v4795 = vunpack.c.l.b16 %v4197
    %v4796 = vunpack.c.l.b16 %v4198
    %v4797 = vunpack.c.h.b16 %v4198
    %v4798 = vunpack.c.l.b16 %v4199
    %v4799 = vunpack.c.l.b16 %v4200
    %v4800 = vunpack.c.h.b16 %v4200
    %v4801 = vunpack.c.l.b16 %v4201
    %v4802 = vunpack.c.l.b16 %v4202
    %v4803 = vunpack.c.h.b16 %v4202
    %v4804 = vunpack.c.l.b16 %v4203
    %v4805 = vunpack.c.l.b16 %v4204
    %v4806 = vunpack.c.h.b16 %v4204
    %v4807 = vunpack.c.l.b16 %v4205
    %v4808 = vunpack.c.l.b16 %v4206
    %v4809 = vunpack.c.h.b16 %v4206
    %v4810 = vunpack.c.l.b16 %v4207
    %v4811 = vunpack.c.l.b16 %v4208
    %v4812 = vunpack.c.h.b16 %v4208
    %v4813 = vunpack.c.l.b16 %v4209
    %v4814 = vunpack.c.l.b16 %v4210
    %v4815 = vunpack.c.h.b16 %v4210
    %v4816 = vunpack.c.l.b16 %v4211
    %v4817 = vunpack.c.l.b16 %v4212
    %v4818 = vunpack.c.h.b16 %v4212
    %v4819 = vunpack.c.l.b16 %v4213
    %v4820 = vunpack.c.l.b16 %v4214
    %v4821 = vunpack.c.h.b16 %v4214
    %v4822 = vunpack.c.l.b16 %v4215
    %v4823 = vunpack.c.l.b16 %v4216
    %v4824 = vunpack.c.h.b16 %v4216
    %v4825 = vunpack.c.l.b16 %v4217
    %v4826 = vunpack.c.l.b16 %v4218
    %v4827 = vunpack.c.h.b16 %v4218
    %v4828 = vunpack.c.l.b16 %v4219
    %v4829 = vunpack.c.l.b16 %v4220
    %v4830 = vunpack.c.h.b16 %v4220
    %v4831 = vunpack.c.l.b16 %v4221
    %v4832 = vunpack.c.l.b16 %v4222
    %v4833 = vunpack.c.h.b16 %v4222
    %v4834 = vunpack.c.l.b16 %v4223
    %v4835 = vunpack.c.l.b16 %v4224
    %v4836 = vunpack.c.h.b16 %v4224
    %v4837 = vunpack.c.l.b16 %v4225
    %v4838 = vunpack.c.l.b16 %v4226
    %v4839 = vunpack.c.h.b16 %v4226
    %v4840 = vunpack.c.l.b16 %v4227
    %v4841 = vunpack.c.l.b16 %v4228
    %v4842 = vunpack.c.h.b16 %v4228
    %v4843 = vunpack.c.l.b16 %v4229
    %v4844 = vunpack.c.l.b16 %v4230
    %v4845 = vunpack.c.h.b16 %v4230
    %v4846 = vunpack.c.l.b16 %v4231
    %v4847 = vunpack.c.l.b16 %v4232
    %v4848 = vunpack.c.h.b16 %v4232
    %v4849 = vunpack.c.l.b16 %v4233
    %v4850 = vunpack.c.l.b16 %v4234
    %v4851 = vunpack.c.h.b16 %v4234
    %v4852 = vunpack.c.l.b16 %v4235
    %v4853 = vunpack.c.l.b16 %v4236
    %v4854 = vunpack.c.h.b16 %v4236
    %v4855 = vunpack.c.l.b16 %v4237
    %v4856 = vunpack.c.l.b16 %v4238
    %v4857 = vunpack.c.h.b16 %v4238
    %v4858 = vunpack.c.l.b16 %v4239
    %v4859 = vunpack.c.l.b16 %v4240
    %v4860 = vunpack.c.h.b16 %v4240
    %v4861 = vunpack.c.l.b16 %v4241
    %v4862 = vunpack.c.l.b16 %v4242
    %v4863 = vunpack.c.h.b16 %v4242
    %v4864 = vunpack.c.l.b16 %v4243
    %v4865 = vunpack.c.l.b16 %v4244
    %v4866 = vunpack.c.h.b16 %v4244
    %v4867 = vunpack.c.l.b16 %v4245
    %v4868 = vunpack.c.l.b16 %v4246
    %v4869 = vunpack.c.h.b16 %v4246
    %v4870 = vunpack.c.l.b16 %v4247
    %v4871 = vunpack.c.l.b16 %v4248
    %v4872 = vunpack.c.h.b16 %v4248
    %v4873 = vunpack.c.l.b16 %v4249
    %v4874 = vunpack.c.l.b16 %v4250
    %v4875 = vunpack.c.h.b16 %v4250
    %v4876 = vunpack.c.l.b16 %v4251
    %v4877 = vunpack.c.l.b16 %v4252
    %v4878 = vunpack.c.h.b16 %v4252
    %v4879 = vunpack.c.l.b16 %v4253
    %v4880 = vunpack.c.l.b16 %v4254
    %v4881 = vunpack.c.h.b16 %v4254
    %v4882 = vunpack.c.l.b16 %v4255
    %v4883 = vunpack.c.l.b16 %v4256
    %v4884 = vunpack.c.h.b16 %v4256
    %v4885 = vunpack.c.l.b16 %v4257
    %v4886 = vunpack.c.l.b16 %v4258
    %v4887 = vunpack.c.h.b16 %v4258
    %v4888 = vunpack.c.l.b16 %v4259
    %v4889 = vunpack.c.l.b16 %v4260
    %v4890 = vunpack.c.h.b16 %v4260
    %v4891 = vunpack.c.l.b16 %v4261
    %v4892 = vunpack.c.l.b16 %v4262
    %v4893 = vunpack.c.h.b16 %v4262
    %v4894 = vunpack.c.l.b16 %v4263
    %v4895 = vunpack.c.l.b16 %v4264
    %v4896 = vunpack.c.h.b16 %v4264
    %v4897 = vunpack.c.l.b16 %v4265
    %v4898 = vunpack.c.l.b16 %v4266
    %v4899 = vunpack.c.h.b16 %v4266
    %v4900 = vunpack.c.l.b16 %v4267
    %v4901 = vunpack.c.l.b16 %v4268
    %v4902 = vunpack.c.h.b16 %v4268
    %v4903 = vunpack.c.l.b16 %v4269
    %v4904 = vunpack.c.l.b16 %v4270
    %v4905 = vunpack.c.h.b16 %v4270
    %v4906 = vunpack.c.l.b16 %v4271
    %v4907 = vunpack.c.l.b16 %v4272
    %v4908 = vunpack.c.h.b16 %v4272
    %v4909 = vunpack.c.l.b16 %v4273
    %v4910 = vunpack.c.l.b16 %v4274
    %v4911 = vunpack.c.h.b16 %v4274
    %v4912 = vunpack.c.l.b16 %v4275
    %v4913 = vunpack.c.l.b16 %v4276
    %v4914 = vunpack.c.h.b16 %v4276
    %v4915 = vunpack.c.l.b16 %v4277
    %v4916 = vunpack.c.l.b16 %v4278
    %v4917 = vunpack.c.h.b16 %v4278
    %v4918 = vunpack.c.l.b16 %v4279
    %v4919 = vunpack.c.l.b16 %v4280
    %v4920 = vunpack.c.h.b16 %v4280
    %v4921 = vunpack.c.l.b16 %v4281
    %v4922 = vunpack.c.l.b16 %v4282
    %v4923 = vunpack.c.h.b16 %v4282
    %v4924 = vunpack.c.l.b16 %v4283
    %v4925 = vunpack.c.l.b16 %v4284
    %v4926 = vunpack.c.h.b16 %v4284
    %v4927 = vunpack.c.l.b16 %v4285
    %v4928 = vunpack.c.l.b16 %v4286
    %v4929 = vunpack.c.h.b16 %v4286
    %v4930 = vunpack.c.l.b16 %v4287
    %v4931 = vunpack.c.l.b16 %v4288
    %v4932 = vunpack.c.h.b16 %v4288
    %v4933 = vunpack.c.l.b16 %v4289
    %v4934 = vunpack.c.l.b16 %v4290
    %v4935 = vunpack.c.h.b16 %v4290
    %v4936 = vunpack.c.l.b16 %v4291
    %v4937 = vunpack.c.l.b16 %v4292
    %v4938 = vunpack.c.h.b16 %v4292
    %v4939 = vunpack.c.l.b16 %v4293
    %v4940 = vunpack.c.l.b16 %v4294
    %v4941 = vunpack.c.h.b16 %v4294
    %v4942 = vunpack.c.l.b16 %v4295
    %v4943 = vunpack.c.l.b16 %v4296
    %v4944 = vunpack.c.h.b16 %v4296
    %v4945 = vunpack.c.l.b16 %v4297
    %v4946 = vunpack.c.l.b16 %v4298
    %v4947 = vunpack.c.h.b16 %v4298
    %v4948 = vunpack.c.l.b16 %v4299
    %v4949 = vunpack.c.l.b16 %v4300
    %v4950 = vunpack.c.h.b16 %v4300
    %v4951 = vunpack.c.l.b16 %v4301
    %v4952 = vunpack.c.l.b16 %v4302
    %v4953 = vunpack.c.h.b16 %v4302
    %v4954 = vunpack.c.l.b16 %v4303
    %v4955 = vunpack.c.l.b16 %v4304
    %v4956 = vunpack.c.h.b16 %v4304
    %v4957 = vunpack.c.l.b16 %v4305
    %v4958 = vunpack.c.l.b16 %v4306
    %v4959 = vunpack.c.h.b16 %v4306
    %v4960 = vunpack.c.l.b16 %v4307
    %v4961 = vunpack.c.l.b16 %v4308
    %v4962 = vunpack.c.h.b16 %v4308
    %v4963 = vunpack.c.l.b16 %v4309
    %v4964 = vunpack.c.l.b16 %v4310
    %v4965 = vunpack.c.h.b16 %v4310
    %v4966 = vunpack.c.l.b16 %v4311
    %v4967 = vunpack.c.l.b16 %v4312
    %v4968 = vunpack.c.h.b16 %v4312
    %v4969 = vunpack.c.l.b16 %v4313
    %v4970 = vunpack.c.l.b16 %v4314
    %v4971 = vunpack.c.h.b16 %v4314
    %v4972 = vunpack.c.l.b16 %v4315
    %v4973 = vunpack.c.l.b16 %v4316
    %v4974 = vunpack.c.h.b16 %v4316
    %v4975 = vunpack.c.l.b16 %v4317
    %v4976 = vunpack.c.l.b16 %v4318
    %v4977 = vunpack.c.h.b16 %v4318
    %v4978 = vunpack.c.l.b16 %v4319
    %v4979 = vunpack.c.l.b16 %v4320
    %v4980 = vunpack.c.h.b16 %v4320
    %v4981 = vunpack.c.l.b16 %v4321
    %v4982 = vunpack.c.l.b16 %v4322
    %v4983 = vunpack.c.h.b16 %v4322
    %v4984 = vunpack.c.l.b16 %v4323
    %v4985 = vunpack.c.l.b16 %v4324
    %v4986 = vunpack.c.h.b16 %v4324
    %v4987 = vunpack.c.l.b16 %v4325
    %v4988 = vunpack.c.l.b16 %v4326
    %v4989 = vunpack.c.h.b16 %v4326
    %v4990 = vunpack.c.l.b16 %v4327
    %v4991 = vunpack.c.l.b16 %v4328
    %v4992 = vunpack.c.h.b16 %v4328
    %v4993 = vunpack.c.l.b16 %v4329
    %v4994 = vunpack.c.l.b16 %v4330
    %v4995 = vunpack.c.h.b16 %v4330
    %v4996 = vunpack.c.l.b16 %v4331
    %v4997 = vunpack.c.l.b16 %v4332
    %v4998 = vunpack.c.h.b16 %v4332
    %v4999 = vunpack.c.l.b16 %v4333
    %v5000 = vunpack.c.l.b16 %v4334
    %v5001 = vunpack.c.h.b16 %v4334
    %v5002 = vunpack.c.l.b16 %v4335
    %v5003 = vunpack.c.l.b16 %v4336
    %v5004 = vunpack.c.h.b16 %v4336
    %v5005 = vunpack.c.l.b16 %v4337
    %v5006 = vunpack.c.l.b16 %v4338
    %v5007 = vunpack.c.h.b16 %v4338
    %v5008 = vunpack.c.l.b16 %v4339
    %v5009 = vunpack.c.l.b16 %v4340
    %v5010 = vunpack.c.h.b16 %v4340
    %v5011 = vunpack.c.l.b16 %v4341
    %v5012 = vunpack.c.l.b16 %v4342
    %v5013 = vunpack.c.h.b16 %v4342
    %v5014 = vunpack.c.l.b16 %v4343
    %v5015 = vunpack.c.l.b16 %v4344
    %v5016 = vunpack.c.h.b16 %v4344
    %v5017 = vunpack.c.l.b16 %v4345
    %v5018 = vunpack.c.l.b16 %v4346
    %v5019 = vunpack.c.h.b16 %v4346
    %v5020 = vunpack.c.l.b16 %v4347
    %v5021 = vunpack.c.l.b16 %v4348
    %v5022 = vunpack.c.h.b16 %v4348
    %v5023 = vunpack.c.l.b16 %v4349
    %v5024 = vunpack.c.l.b16 %v4350
    %v5025 = vunpack.c.h.b16 %v4350
    %v5026 = vunpack.c.l.b16 %v4351
    %v5027 = vunpack.c.l.b16 %v4352
    %v5028 = vunpack.c.h.b16 %v4352
    %v5029 = vunpack.c.l.b16 %v4353
    %v5030 = vunpack.c.l.b16 %v4354
    %v5031 = vunpack.c.h.b16 %v4354
    %v5032 = vunpack.c.l.b16 %v4355
    %v5033 = vunpack.c.l.b16 %v4356
    %v5034 = vunpack.c.h.b16 %v4356
    %v5035 = vunpack.c.l.b16 %v4357
    %v5036 = vunpack.c.l.b16 %v4358
    %v5037 = vunpack.c.h.b16 %v4358
    %v5038 = vunpack.c.l.b16 %v4359
    %v5039 = vunpack.c.l.b16 %v4360
    %v5040 = vunpack.c.h.b16 %v4360
    %v5041 = vunpack.c.l.b16 %v4361
    %v5042 = vunpack.c.l.b16 %v4362
    %v5043 = vunpack.c.h.b16 %v4362
    %v5044 = vunpack.c.l.b16 %v4363
    %v5045 = vunpack.c.l.b16 %v4364
    %v5046 = vunpack.c.h.b16 %v4364
    %v5047 = vunpack.c.l.b16 %v4365
    %v5048 = vunpack.c.l.b16 %v4366
    %v5049 = vunpack.c.h.b16 %v4366
    %v5050 = vunpack.c.l.b16 %v4367
    %v5051 = vunpack.c.l.b16 %v4368
    %v5052 = vunpack.c.h.b16 %v4368
    %v5053 = vunpack.c.l.b16 %v4369
    %v5054 = vunpack.c.l.b16 %v4370
    %v5055 = vunpack.c.h.b16 %v4370
    %v5056 = vunpack.c.l.b16 %v4371
    %v5057 = vunpack.c.l.b16 %v4372
    %v5058 = vunpack.c.h.b16 %v4372
    %v5059 = vunpack.c.l.b16 %v4373
    %v5060 = vunpack.c.l.b16 %v4374
    %v5061 = vunpack.c.h.b16 %v4374
    %v5062 = vunpack.c.l.b16 %v4375
    %v5063 = vunpack.c.l.b16 %v4376
    %v5064 = vunpack.c.h.b16 %v4376
    %v5065 = vunpack.c.l.b16 %v4377
    %v5066 = vunpack.c.l.b16 %v4378
    %v5067 = vunpack.c.h.b16 %v4378
    %v5068 = vunpack.c.l.b16 %v4379
    %v5069 = vunpack.c.l.b16 %v4380
    %v5070 = vunpack.c.h.b16 %v4380
    %v5071 = vunpack.c.l.b16 %v4381
    %v5072 = vunpack.c.l.b16 %v4382
    %v5073 = vunpack.c.h.b16 %v4382
    %v5074 = vunpack.c.l.b16 %v4383
    %v5075 = vunpack.c.l.b16 %v4384
    %v5076 = vunpack.c.h.b16 %v4384
    %v5077 = vunpack.c.l.b16 %v4385
    %v5078 = vunpack.c.l.b16 %v4386
    %v5079 = vunpack.c.h.b16 %v4386
    %v5080 = vunpack.c.l.b16 %v4387
    %v5081 = vunpack.c.l.b16 %v4388
    %v5082 = vunpack.c.h.b16 %v4388
    %v5083 = vunpack.c.l.b16 %v4389
    %v5084 = vunpack.c.l.b16 %v4390
    %v5085 = vunpack.c.h.b16 %v4390
    %v5086 = vunpack.c.l.b16 %v4391
    %v5087 = vunpack.c.l.b16 %v4392
    %v5088 = vunpack.c.h.b16 %v4392
    %v5089 = vunpack.c.l.b16 %v4393
    %v5090 = vunpack.c.l.b16 %v4394
    %v5091 = vunpack.c.h.b16 %v4394
    %v5092 = vunpack.c.l.b16 %v4395
    %v5093 = vunpack.c.l.b16 %v4396
    %v5094 = vunpack.c.h.b16 %v4396
    %v5095 = vunpack.c.l.b16 %v4397
    %v5096 = vunpack.c.l.b16 %v4398
    %v5097 = vunpack.c.h.b16 %v4398
    %v5098 = vunpack.c.l.b16 %v4399
    %v5099 = vunpack.c.l.b16 %v4400
    %v5100 = vunpack.c.h.b16 %v4400
    %v5101 = vunpack.c.l.b16 %v4401
    %v5102 = vunpack.c.l.b16 %v4402
    %v5103 = vunpack.c.h.b16 %v4402
    %v5104 = vunpack.c.l.b16 %v4403
    %v5105 = vunpack.c.l.b16 %v4404
    %v5106 = vunpack.c.h.b16 %v4404
    %v5107 = vunpack.c.l.b16 %v4405
    %v5108 = vunpack.c.l.b16 %v4406
    %v5109 = vunpack.c.h.b16 %v4406
    %v5110 = vunpack.c.l.b16 %v4407
    %v5111 = vunpack.c.l.b16 %v4408
    %v5112 = vunpack.c.h.b16 %v4408
    %v5113 = vunpack.c.l.b16 %v4409
    %v5114 = vunpack.c.l.b16 %v4410
    %v5115 = vunpack.c.h.b16 %v4410
    %v5116 = vunpack.c.l.b16 %v4411
    %v5117 = vunpack.c.l.b16 %v4412
    %v5118 = vunpack.c.h.b16 %v4412
    %v5119 = vunpack.c.l.b16 %v4413
    %v5120 = vunpack.c.l.b16 %v4414
    %v5121 = vunpack.c.h.b16 %v4414
    %v5122 = vunpack.c.l.b16 %v4415
    %v5123 = vunpack.c.l.b16 %v4416
    %v5124 = vunpack.c.h.b16 %v4416
    %v5125 = vunpack.c.l.b16 %v4417
    %v5126 = vunpack.c.l.b16 %v4418
    %v5127 = vunpack.c.h.b16 %v4418
    %v5128 = vunpack.c.l.b16 %v4419
    %v5129 = vunpack.c.l.b16 %v4420
    %v5130 = vunpack.c.h.b16 %v4420
    %v5131 = vunpack.c.l.b16 %v4421
    %v5132 = vunpack.c.l.b16 %v4422
    %v5133 = vunpack.c.h.b16 %v4422
    %v5134 = vunpack.c.l.b16 %v4423
    %v5135 = vunpack.c.l.b16 %v4424
    %v5136 = vunpack.c.h.b16 %v4424
    %v5137 = vunpack.c.l.b16 %v4425
    %v5138 = vunpack.c.l.b16 %v4426
    %v5139 = vunpack.c.h.b16 %v4426
    %v5140 = vunpack.c.l.b16 %v4427
    %v5141 = vunpack.c.l.b16 %v4428
    %v5142 = vunpack.c.h.b16 %v4428
    %v5143 = vunpack.c.l.b16 %v4429
    %v5144 = vunpack.c.l.b16 %v4430
    %v5145 = vunpack.c.h.b16 %v4430
    %v5146 = vunpack.c.l.b16 %v4431
    %v5147 = vunpack.c.l.b16 %v4432
    %v5148 = vunpack.c.h.b16 %v4432
    %v5149 = vunpack.c.l.b16 %v4433
    %v5150 = vunpack.c.l.b16 %v4434
    %v5151 = vunpack.c.h.b16 %v4434
    %v5152 = vunpack.c.l.b16 %v4435
    %v5153 = vunpack.c.l.b16 %v4436
    %v5154 = vunpack.c.h.b16 %v4436
    %v5155 = vunpack.c.l.b16 %v4437
    %v5156 = vunpack.c.l.b16 %v4438
    %v5157 = vunpack.c.h.b16 %v4438
    %v5158 = vunpack.c.l.b16 %v4439
    %v5159 = vunpack.c.l.b16 %v4440
    %v5160 = vunpack.c.h.b16 %v4440
    %v5161 = vunpack.c.l.b16 %v4441
    %v5162 = vunpack.c.l.b16 %v4442
    %v5163 = vunpack.c.h.b16 %v4442
    %v5164 = vunpack.c.l.b16 %v4443
    %v5165 = vunpack.c.l.b16 %v4444
    %v5166 = vunpack.c.h.b16 %v4444
    %v5167 = vunpack.c.l.b16 %v4445
    %v5168 = vunpack.c.l.b16 %v4446
    %v5169 = vunpack.c.h.b16 %v4446
    %v5170 = vunpack.c.l.b16 %v4447
    %v5171 = vunpack.c.l.b16 %v4448
    %v5172 = vunpack.c.h.b16 %v4448
    %v5173 = vunpack.c.l.b16 %v4449
    %v5174 = vunpack.c.l.b16 %v4450
    %v5175 = vunpack.c.h.b16 %v4450
    %v5176 = vunpack.c.l.b16 %v4451
    %v5177 = vunpack.c.l.b16 %v4452
    %v5178 = vunpack.c.h.b16 %v4452
    %v5179 = vunpack.c.l.b16 %v4453
    %v5180 = vunpack.c.l.b16 %v4454
    %v5181 = vunpack.c.h.b16 %v4454
    %v5182 = vunpack.c.l.b16 %v4455
    %v5183 = vunpack.c.l.b16 %v4456
    %v5184 = vunpack.c.h.b16 %v4456
    %v5185 = vunpack.c.l.b16 %v4457
    %v5186 = vunpack.c.l.b16 %v4458
    %v5187 = vunpack.c.h.b16 %v4458
    %v5188 = vunpack.c.l.b16 %v4459
    %v5189 = vunpack.c.l.b16 %v4460
    %v5190 = vunpack.c.h.b16 %v4460
    %v5191 = vunpack.c.l.b16 %v4461
    %v5192 = vunpack.c.l.b16 %v4462
    %v5193 = vunpack.c.h.b16 %v4462
    %v5194 = vunpack.c.l.b16 %v4463
    %v5195 = vunpack.c.l.b16 %v4464
    %v5196 = vunpack.c.h.b16 %v4464
    %v5197 = vunpack.c.l.b16 %v4465
    %v5198 = vunpack.c.l.b16 %v4466
    %v5199 = vunpack.c.h.b16 %v4466
    %v5200 = vunpack.c.l.b16 %v4467
    %v5201 = vunpack.c.l.b16 %v4468
    %v5202 = vunpack.c.h.b16 %v4468
    %v5203 = vunpack.c.l.b16 %v4469
    %v5204 = vunpack.c.l.b16 %v4470
    %v5205 = vunpack.c.h.b16 %v4470
    %v5206 = vunpack.c.l.b16 %v4471
    %v5207 = vunpack.c.l.b16 %v4472
    %v5208 = vunpack.c.h.b16 %v4472
    %v5209 = vunpack.c.l.b16 %v4473
    %v5210 = vunpack.c.l.b16 %v4474
    %v5211 = vunpack.c.h.b16 %v4474
    %v5212 = vunpack.c.l.b16 %v4475
    %v5213 = vpack.c.b16 %v4784, %v4781
    %v5214 = vpack.c.b16 %v4785, %v4782
    %v5215 = vpack.c.b16 %v4786, %v4783
    %v5216 = vpack.c.b16 %v4790, %v4787
    %v5217 = vpack.c.b16 %v4791, %v4788
    %v5218 = vpack.c.b16 %v4792, %v4789
    %v5219 = vpack.c.b16 %v4796, %v4793
    %v5220 = vpack.c.b16 %v4797, %v4794
    %v5221 = vpack.c.b16 %v4798, %v4795
    %v5222 = vpack.c.b16 %v4802, %v4799
    %v5223 = vpack.c.b16 %v4803, %v4800
    %v5224 = vpack.c.b16 %v4804, %v4801
    %v5225 = vpack.c.b16 %v4808, %v4805
    %v5226 = vpack.c.b16 %v4809, %v4806
    %v5227 = vpack.c.b16 %v4810, %v4807
    %v5228 = vpack.c.b16 %v4814, %v4811
    %v5229 = vpack.c.b16 %v4815, %v4812
    %v5230 = vpack.c.b16 %v4816, %v4813
    %v5231 = vpack.c.b16 %v4820, %v4817
    %v5232 = vpack.c.b16 %v4821, %v4818
    %v5233 = vpack.c.b16 %v4822, %v4819
    %v5234 = vpack.c.b16 %v4826, %v4823
    %v5235 = vpack.c.b16 %v4827, %v4824
    %v5236 = vpack.c.b16 %v4828, %v4825
    %v5237 = vpack.c.b16 %v4832, %v4829
    %v5238 = vpack.c.b16 %v4833, %v4830
    %v5239 = vpack.c.b16 %v4834, %v4831
    %v5240 = vpack.c.b16 %v4838, %v4835
    %v5241 = vpack.c.b16 %v4839, %v4836
    %v5242 = vpack.c.b16 %v4840, %v4837
    %v5243 = vpack.c.b16 %v4844, %v4841
    %v5244 = vpack.c.b16 %v4845, %v4842
    %v5245 = vpack.c.b16 %v4846, %v4843
    %v5246 = vpack.c.b16 %v4850, %v4847
    %v5247 = vpack.c.b16 %v4851, %v4848
    %v5248 = vpack.c.b16 %v4852, %v4849
    %v5249 = vpack.c.b16 %v4856, %v4853
    %v5250 = vpack.c.b16 %v4857, %v4854
    %v5251 = vpack.c.b16 %v4858, %v4855
    %v5252 = vpack.c.b16 %v4862, %v4859
    %v5253 = vpack.c.b16 %v4863, %v4860
    %v5254 = vpack.c.b16 %v4864, %v4861
    %v5255 = vpack.c.b16 %v4868, %v4865
    %v5256 = vpack.c.b16 %v4869, %v4866
    %v5257 = vpack.c.b16 %v4870, %v4867
    %v5258 = vpack.c.b16 %v4874, %v4871
    %v5259 = vpack.c.b16 %v4875, %v4872
    %v5260 = vpack.c.b16 %v4876, %v4873
    %v5261 = vpack.c.b16 %v4880, %v4877
    %v5262 = vpack.c.b16 %v4881, %v4878
    %v5263 = vpack.c.b16 %v4882, %v4879
    %v5264 = vpack.c.b16 %v4886, %v4883
    %v5265 = vpack.c.b16 %v4887, %v4884
    %v5266 = vpack.c.b16 %v4888, %v4885
    %v5267 = vpack.c.b16 %v4892, %v4889
    %v5268 = vpack.c.b16 %v4893, %v4890
    %v5269 = vpack.c.b16 %v4894, %v4891
    %v5270 = vpack.c.b16 %v4898, %v4895
    %v5271 = vpack.c.b16 %v4899, %v4896
    %v5272 = vpack.c.b16 %v4900, %v4897
    %v5273 = vpack.c.b16 %v4904, %v4901
    %v5274 = vpack.c.b16 %v4905, %v4902
    %v5275 = vpack.c.b16 %v4906, %v4903
    %v5276 = vpack.c.b16 %v4910, %v4907
    %v5277 = vpack.c.b16 %v4911, %v4908
    %v5278 = vpack.c.b16 %v4912, %v4909
    %v5279 = vpack.c.b16 %v4916, %v4913
    %v5280 = vpack.c.b16 %v4917, %v4914
    %v5281 = vpack.c.b16 %v4918, %v4915
    %v5282 = vpack.c.b16 %v4922, %v4919
    %v5283 = vpack.c.b16 %v4923, %v4920
    %v5284 = vpack.c.b16 %v4924, %v4921
    %v5285 = vpack.c.b16 %v4928, %v4925
    %v5286 = vpack.c.b16 %v4929, %v4926
    %v5287 = vpack.c.b16 %v4930, %v4927
    %v5288 = vpack.c.b16 %v4934, %v4931
    %v5289 = vpack.c.b16 %v4935, %v4932
    %v5290 = vpack.c.b16 %v4936, %v4933
    %v5291 = vpack.c.b16 %v4940, %v4937
    %v5292 = vpack.c.b16 %v4941, %v4938
    %v5293 = vpack.c.b16 %v4942, %v4939
    %v5294 = vpack.c.b16 %v4946, %v4943
    %v5295 = vpack.c.b16 %v4947, %v4944
    %v5296 = vpack.c.b16 %v4948, %v4945
    %v5297 = vpack.c.b16 %v4952, %v4949
    %v5298 = vpack.c.b16 %v4953, %v4950
    %v5299 = vpack.c.b16 %v4954, %v4951
    %v5300 = vpack.c.b16 %v4958, %v4955
    %v5301 = vpack.c.b16 %v4959, %v4956
    %v5302 = vpack.c.b16 %v4960, %v4957
    %v5303 = vpack.c.b16 %v4964, %v4961
    %v5304 = vpack.c.b16 %v4965, %v4962
    %v5305 = vpack.c.b16 %v4966, %v4963
    %v5306 = vpack.c.b16 %v4970, %v4967
    %v5307 = vpack.c.b16 %v4971, %v4968
    %v5308 = vpack.c.b16 %v4972, %v4969
    %v5309 = vpack.c.b16 %v4976, %v4973
    %v5310 = vpack.c.b16 %v4977, %v4974
    %v5311 = vpack.c.b16 %v4978, %v4975
    %v5312 = vpack.c.b16 %v4982, %v4979
    %v5313 = vpack.c.b16 %v4983, %v4980
    %v5314 = vpack.c.b16 %v4984, %v4981
    %v5315 = vpack.c.b16 %v4988, %v4985
    %v5316 = vpack.c.b16 %v4989, %v4986
    %v5317 = vpack.c.b16 %v4990, %v4987
    %v5318 = vpack.c.b16 %v4994, %v4991
    %v5319 = vpack.c.b16 %v4995, %v4992
    %v5320 = vpack.c.b16 %v4996, %v4993
    %v5321 = vpack.c.b16 %v5000, %v4997
    %v5322 = vpack.c.b16 %v5001, %v4998
    %v5323 = vpack.c.b16 %v5002, %v4999
    %v5324 = vpack.c.b16 %v5006, %v5003
    %v5325 = vpack.c.b16 %v5007, %v5004
    %v5326 = vpack.c.b16 %v5008, %v5005
    %v5327 = vpack.c.b16 %v5012, %v5009
    %v5328 = vpack.c.b16 %v5013, %v5010
    %v5329 = vpack.c.b16 %v5014, %v5011
    %v5330 = vpack.c.b16 %v5018, %v5015
    %v5331 = vpack.c.b16 %v5019, %v5016
    %v5332 = vpack.c.b16 %v5020, %v5017
    %v5333 = vpack.c.b16 %v5024, %v5021
    %v5334 = vpack.c.b16 %v5025, %v5022
    %v5335 = vpack.c.b16 %v5026, %v5023
    %v5336 = vpack.c.b16 %v5030, %v5027
    %v5337 = vpack.c.b16 %v5031, %v5028
    %v5338 = vpack.c.b16 %v5032, %v5029
    %v5339 = vpack.c.b16 %v5036, %v5033
    %v5340 = vpack.c.b16 %v5037, %v5034
    %v5341 = vpack.c.b16 %v5038, %v5035
    %v5342 = vpack.c.b16 %v5042, %v5039
    %v5343 = vpack.c.b16 %v5043, %v5040
    %v5344 = vpack.c.b16 %v5044, %v5041
    %v5345 = vpack.c.b16 %v5048, %v5045
    %v5346 = vpack.c.b16 %v5049, %v5046
    %v5347 = vpack.c.b16 %v5050, %v5047
    %v5348 = vpack.c.b16 %v5054, %v5051
    %v5349 = vpack.c.b16 %v5055, %v5052
    %v5350 = vpack.c.b16 %v5056, %v5053
    %v5351 = vpack.c.b16 %v5060, %v5057
    %v5352 = vpack.c.b16 %v5061, %v5058
    %v5353 = vpack.c.b16 %v5062, %v5059
    %v5354 = vpack.c.b16 %v5066, %v5063
    %v5355 = vpack.c.b16 %v5067, %v5064
    %v5356 = vpack.c.b16 %v5068, %v5065
    %v5357 = vpack.c.b16 %v5072, %v5069
    %v5358 = vpack.c.b16 %v5073, %v5070
    %v5359 = vpack.c.b16 %v5074, %v5071
    %v5360 = vpack.c.b16 %v5078, %v5075
    %v5361 = vpack.c.b16 %v5079, %v5076
    %v5362 = vpack.c.b16 %v5080, %v5077
    %v5363 = vpack.c.b16 %v5084, %v5081
    %v5364 = vpack.c.b16 %v5085, %v5082
    %v5365 = vpack.c.b16 %v5086, %v5083
    %v5366 = vpack.c.b16 %v5090, %v5087
    %v5367 = vpack.c.b16 %v5091, %v5088
    %v5368 = vpack.c.b16 %v5092, %v5089
    %v5369 = vpack.c.b16 %v5096, %v5093
    %v5370 = vpack.c.b16 %v5097, %v5094
    %v5371 = vpack.c.b16 %v5098, %v5095
    %v5372 = vpack.c.b16 %v5102, %v5099
    %v5373 = vpack.c.b16 %v5103, %v5100
    %v5374 = vpack.c.b16 %v5104, %v5101
    %v5375 = vpack.c.b16 %v5108, %v5105
    %v5376 = vpack.c.b16 %v5109, %v5106
    %v5377 = vpack.c.b16 %v5110, %v5107
    %v5378 = vpack.c.b16 %v5114, %v5111
    %v5379 = vpack.c.b16 %v5115, %v5112
    %v5380 = vpack.c.b16 %v5116, %v5113
    %v5381 = vpack.c.b16 %v5120, %v5117
    %v5382 = vpack.c.b16 %v5121, %v5118
    %v5383 = vpack.c.b16 %v5122, %v5119
    %v5384 = vpack.c.b16 %v5126, %v5123
    %v5385 = vpack.c.b16 %v5127, %v5124
    %v5386 = vpack.c.b16 %v5128, %v5125
    %v5387 = vpack.c.b16 %v5132, %v5129
    %v5388 = vpack.c.b16 %v5133, %v5130
    %v5389 = vpack.c.b16 %v5134, %v5131
    %v5390 = vpack.c.b16 %v5138, %v5135
    %v5391 = vpack.c.b16 %v5139, %v5136
    %v5392 = vpack.c.b16 %v5140, %v5137
    %v5393 = vpack.c.b16 %v5144, %v5141
    %v5394 = vpack.c.b16 %v5145, %v5142
    %v5395 = vpack.c.b16 %v5146, %v5143
    %v5396 = vpack.c.b16 %v5150, %v5147
    %v5397 = vpack.c.b16 %v5151, %v5148
    %v5398 = vpack.c.b16 %v5152, %v5149
    %v5399 = vpack.c.b16 %v5156, %v5153
    %v5400 = vpack.c.b16 %v5157, %v5154
    %v5401 = vpack.c.b16 %v5158, %v5155
    %v5402 = vpack.c.b16 %v5162, %v5159
    %v5403 = vpack.c.b16 %v5163, %v5160
    %v5404 = vpack.c.b16 %v5164, %v5161
    %v5405 = vpack.c.b16 %v5168, %v5165
    %v5406 = vpack.c.b16 %v5169, %v5166
    %v5407 = vpack.c.b16 %v5170, %v5167
    %v5408 = vpack.c.b16 %v5174, %v5171
    %v5409 = vpack.c.b16 %v5175, %v5172
    %v5410 = vpack.c.b16 %v5176, %v5173
    %v5411 = vpack.c.b16 %v5180, %v5177
    %v5412 = vpack.c.b16 %v5181, %v5178
    %v5413 = vpack.c.b16 %v5182, %v5179
    %v5414 = vpack.c.b16 %v5186, %v5183
    %v5415 = vpack.c.b16 %v5187, %v5184
    %v5416 = vpack.c.b16 %v5188, %v5185
    %v5417 = vpack.c.b16 %v5192, %v5189
    %v5418 = vpack.c.b16 %v5193, %v5190
    %v5419 = vpack.c.b16 %v5194, %v5191
    %v5420 = vpack.c.b16 %v5198, %v5195
    %v5421 = vpack.c.b16 %v5199, %v5196
    %v5422 = vpack.c.b16 %v5200, %v5197
    %v5423 = vpack.c.b16 %v5204, %v5201
    %v5424 = vpack.c.b16 %v5205, %v5202
    %v5425 = vpack.c.b16 %v5206, %v5203
    %v5426 = vpack.c.b16 %v5210, %v5207
    %v5427 = vpack.c.b16 %v5211, %v5208
    %v5428 = vpack.c.b16 %v5212, %v5209
    %5645 = vmatprep.subr.bf16.mxu0 %v5214
    %5646 = vmatpush1.bf16.msra.mxu0 %v5213
    %5647 = vmatprep.subr.bf16.mxu0 %v5217
    %5648 = vmatpush1.bf16.msra.mxu0 %v5216
    %5649 = vmatprep.subr.bf16.mxu0 %v5220
    %5650 = vmatpush1.bf16.msra.mxu0 %v5219
    %5651 = vmatprep.subr.bf16.mxu0 %v5223
    %5652 = vmatpush1.bf16.msra.mxu0 %v5222
    %5653 = vmatprep.subr.bf16.mxu0 %v5226
    %5654 = vmatpush1.bf16.msra.mxu0 %v5225
    %5655 = vmatprep.subr.bf16.mxu0 %v5229
    %5656 = vmatpush1.bf16.msra.mxu0 %v5228
    %5657 = vmatprep.subr.bf16.mxu0 %v5232
    %5658 = vmatpush1.bf16.msra.mxu0 %v5231
    %5659 = vmatprep.subr.bf16.mxu0 %v5235
    %5660 = vmatpush1.bf16.msra.mxu0 %v5234
    %5661 = vmatprep.subr.bf16.mxu0 %v5238
    %5662 = vmatpush1.bf16.msra.mxu0 %v5237
    %5663 = vmatprep.subr.bf16.mxu0 %v5241
    %5664 = vmatpush1.bf16.msra.mxu0 %v5240
    %5665 = vmatprep.subr.bf16.mxu0 %v5244
    %5666 = vmatpush1.bf16.msra.mxu0 %v5243
    %5667 = vmatprep.subr.bf16.mxu0 %v5247
    %5668 = vmatpush1.bf16.msra.mxu0 %v5246
    %5669 = vmatprep.subr.bf16.mxu0 %v5250
    %5670 = vmatpush1.bf16.msra.mxu0 %v5249
    %5671 = vmatprep.subr.bf16.mxu0 %v5253
    %5672 = vmatpush1.bf16.msra.mxu0 %v5252
    %5673 = vmatprep.subr.bf16.mxu0 %v5256
    %5674 = vmatpush1.bf16.msra.mxu0 %v5255
    %5675 = vmatprep.subr.bf16.mxu0 %v5259
    %5676 = vmatpush1.bf16.msra.mxu0 %v5258
    %5677 = vmatprep.mubr.bf16.mxu0 %v4180
    %5678 = vmatmul.mubr.bf16.gmra.mrb[0].mxu0 %v4179
    %v5679 = vpop.f32.mrb[0].mxu0
    %v5680 = vadd.f32 %v4481, %v5679
    %v5681 = vpop.f32.mrb[0].mxu0
    %v5682 = vadd.f32 %v4485, %v5681
    %v5683 = vpop.f32.mrb[0].mxu0
    %v5684 = vpop.f32.mrb[0].mxu0
    %5685 = vdwg.mxu0
    %5686 = vmatprep.subr.bf16.mxu0 %v5262
    %5687 = vmatpush1.bf16.msra.mxu0 %v5261
    %5688 = vmatprep.subr.bf16.mxu0 %v5265
    %5689 = vmatpush1.bf16.msra.mxu0 %v5264
    %5690 = vmatprep.subr.bf16.mxu0 %v5268
    %5691 = vmatpush1.bf16.msra.mxu0 %v5267
    %5692 = vmatprep.subr.bf16.mxu0 %v5271
    %5693 = vmatpush1.bf16.msra.mxu0 %v5270
    %5694 = vmatprep.subr.bf16.mxu0 %v5274
    %5695 = vmatpush1.bf16.msra.mxu0 %v5273
    %5696 = vmatprep.subr.bf16.mxu0 %v5277
    %5697 = vmatpush1.bf16.msra.mxu0 %v5276
    %5698 = vmatprep.subr.bf16.mxu0 %v5280
    %5699 = vmatpush1.bf16.msra.mxu0 %v5279
    %5700 = vmatprep.subr.bf16.mxu0 %v5283
    %5701 = vmatpush1.bf16.msra.mxu0 %v5282
    %5702 = vmatprep.subr.bf16.mxu0 %v5286
    %5703 = vmatpush1.bf16.msra.mxu0 %v5285
    %5704 = vmatprep.subr.bf16.mxu0 %v5289
    %5705 = vmatpush1.bf16.msra.mxu0 %v5288
    %5706 = vmatprep.subr.bf16.mxu0 %v5292
    %5707 = vmatpush1.bf16.msra.mxu0 %v5291
    %5708 = vmatprep.subr.bf16.mxu0 %v5295
    %5709 = vmatpush1.bf16.msra.mxu0 %v5294
    %5710 = vmatprep.subr.bf16.mxu0 %v5298
    %5711 = vmatpush1.bf16.msra.mxu0 %v5297
    %5712 = vmatprep.subr.bf16.mxu0 %v5301
    %5713 = vmatpush1.bf16.msra.mxu0 %v5300
    %5714 = vmatprep.subr.bf16.mxu0 %v5304
    %5715 = vmatpush1.bf16.msra.mxu0 %v5303
    %5716 = vmatprep.subr.bf16.mxu0 %v5307
    %5717 = vmatpush1.bf16.msra.mxu0 %v5306
    %5718 = vmatprep.mubr.bf16.mxu0 %v4182
    %5719 = vmatmul.mubr.bf16.gmra.mrb[0].mxu0 %v4181
    %v5720 = vpop.f32.mrb[0].mxu0
    %v5721 = vadd.f32 %v5680, %v5720
    %v5722 = vpop.f32.mrb[0].mxu0
    %v5723 = vadd.f32 %v5682, %v5722
    %v5724 = vpop.f32.mrb[0].mxu0
    %v5725 = vpop.f32.mrb[0].mxu0
    %5726 = vdwg.mxu0
    %5727 = vmatprep.subr.bf16.mxu0 %v5310
    %5728 = vmatpush1.bf16.msra.mxu0 %v5309
    %5729 = vmatprep.subr.bf16.mxu0 %v5313
    %5730 = vmatpush1.bf16.msra.mxu0 %v5312
    %5731 = vmatprep.subr.bf16.mxu0 %v5316
    %5732 = vmatpush1.bf16.msra.mxu0 %v5315
    %5733 = vmatprep.subr.bf16.mxu0 %v5319
    %5734 = vmatpush1.bf16.msra.mxu0 %v5318
    %5735 = vmatprep.subr.bf16.mxu0 %v5322
    %5736 = vmatpush1.bf16.msra.mxu0 %v5321
    %5737 = vmatprep.subr.bf16.mxu0 %v5325
    %5738 = vmatpush1.bf16.msra.mxu0 %v5324
    %5739 = vmatprep.subr.bf16.mxu0 %v5328
    %5740 = vmatpush1.bf16.msra.mxu0 %v5327
    %5741 = vmatprep.subr.bf16.mxu0 %v5331
    %5742 = vmatpush1.bf16.msra.mxu0 %v5330
    %5743 = vmatprep.subr.bf16.mxu0 %v5334
    %5744 = vmatpush1.bf16.msra.mxu0 %v5333
    %5745 = vmatprep.subr.bf16.mxu0 %v5337
    %5746 = vmatpush1.bf16.msra.mxu0 %v5336
    %5747 = vmatprep.subr.bf16.mxu0 %v5340
    %5748 = vmatpush1.bf16.msra.mxu0 %v5339
    %5749 = vmatprep.subr.bf16.mxu0 %v5343
    %5750 = vmatpush1.bf16.msra.mxu0 %v5342
    %5751 = vmatprep.subr.bf16.mxu0 %v5346
    %5752 = vmatpush1.bf16.msra.mxu0 %v5345
    %5753 = vmatprep.subr.bf16.mxu0 %v5349
    %5754 = vmatpush1.bf16.msra.mxu0 %v5348
    %5755 = vmatprep.subr.bf16.mxu0 %v5352
    %5756 = vmatpush1.bf16.msra.mxu0 %v5351
    %5757 = vmatprep.subr.bf16.mxu0 %v5355
    %5758 = vmatpush1.bf16.msra.mxu0 %v5354
    %5759 = vmatprep.mubr.bf16.mxu0 %v4184
    %5760 = vmatmul.mubr.bf16.gmra.mrb[0].mxu0 %v4183
    %v5761 = vpop.f32.mrb[0].mxu0
    %v5762 = vadd.f32 %v5721, %v5761
    %v5763 = vpop.f32.mrb[0].mxu0
    %v5764 = vadd.f32 %v5723, %v5763
    %v5765 = vpop.f32.mrb[0].mxu0
    %v5766 = vpop.f32.mrb[0].mxu0
    %5767 = vdwg.mxu0
    %5768 = vmatprep.subr.bf16.mxu0 %v5358
    %5769 = vmatpush1.bf16.msra.mxu0 %v5357
    %5770 = vmatprep.subr.bf16.mxu0 %v5361
    %5771 = vmatpush1.bf16.msra.mxu0 %v5360
    %5772 = vmatprep.subr.bf16.mxu0 %v5364
    %5773 = vmatpush1.bf16.msra.mxu0 %v5363
    %5774 = vmatprep.subr.bf16.mxu0 %v5367
    %5775 = vmatpush1.bf16.msra.mxu0 %v5366
    %5776 = vmatprep.subr.bf16.mxu0 %v5370
    %5777 = vmatpush1.bf16.msra.mxu0 %v5369
    %5778 = vmatprep.subr.bf16.mxu0 %v5373
    %5779 = vmatpush1.bf16.msra.mxu0 %v5372
    %5780 = vmatprep.subr.bf16.mxu0 %v5376
    %5781 = vmatpush1.bf16.msra.mxu0 %v5375
    %5782 = vmatprep.subr.bf16.mxu0 %v5379
    %5783 = vmatpush1.bf16.msra.mxu0 %v5378
    %5784 = vmatprep.subr.bf16.mxu0 %v5382
    %5785 = vmatpush1.bf16.msra.mxu0 %v5381
    %5786 = vmatprep.subr.bf16.mxu0 %v5385
    %5787 = vmatpush1.bf16.msra.mxu0 %v5384
    %5788 = vmatprep.subr.bf16.mxu0 %v5388
    %5789 = vmatpush1.bf16.msra.mxu0 %v5387
    %5790 = vmatprep.subr.bf16.mxu0 %v5391
    %5791 = vmatpush1.bf16.msra.mxu0 %v5390
    %5792 = vmatprep.subr.bf16.mxu0 %v5394
    %5793 = vmatpush1.bf16.msra.mxu0 %v5393
    %5794 = vmatprep.subr.bf16.mxu0 %v5397
    %5795 = vmatpush1.bf16.msra.mxu0 %v5396
    %5796 = vmatprep.subr.bf16.mxu0 %v5400
    %5797 = vmatpush1.bf16.msra.mxu0 %v5399
    %5798 = vmatprep.subr.bf16.mxu0 %v5403
    %5799 = vmatpush1.bf16.msra.mxu0 %v5402
    %5800 = vmatprep.mubr.bf16.mxu0 %v4186
    %5801 = vmatmul.mubr.bf16.gmra.mrb[0].mxu0 %v4185
    %v5802 = vpop.f32.mrb[0].mxu0
    %v5803 = vadd.f32 %v5762, %v5802
    %v5804 = vpop.f32.mrb[0].mxu0
    %v5805 = vadd.f32 %v5764, %v5804
    %v5806 = vpop.f32.mrb[0].mxu0
    %v5807 = vpop.f32.mrb[0].mxu0
    %5808 = vdwg.mxu0
    %5809 = vmatprep.subr.bf16.mxu0 %v5406
    %5810 = vmatpush1.bf16.msra.mxu0 %v5405
    %5811 = vmatprep.subr.bf16.mxu0 %v5409
    %5812 = vmatpush1.bf16.msra.mxu0 %v5408
    %5813 = vmatprep.subr.bf16.mxu0 %v5412
    %5814 = vmatpush1.bf16.msra.mxu0 %v5411
    %5815 = vmatprep.subr.bf16.mxu0 %v5415
    %5816 = vmatpush1.bf16.msra.mxu0 %v5414
    %5817 = vmatprep.subr.bf16.mxu0 %v5418
    %5818 = vmatpush1.bf16.msra.mxu0 %v5417
    %5819 = vmatprep.subr.bf16.mxu0 %v5421
    %5820 = vmatpush1.bf16.msra.mxu0 %v5420
    %5821 = vmatprep.subr.bf16.mxu0 %v5424
    %5822 = vmatpush1.bf16.msra.mxu0 %v5423
    %5823 = vmatprep.subr.bf16.mxu0 %v5427
    %5824 = vmatpush1.bf16.msra.mxu0 %v5426
    %5825 = vmatprep.subr.bf16.mxu0 0
    %5826 = vmatpush1.bf16.msra.mxu0 0
    %5827 = vmatprep.subr.bf16.mxu0 0
    %5828 = vmatpush1.bf16.msra.mxu0 0
    %5829 = vmatprep.subr.bf16.mxu0 0
    %5830 = vmatpush1.bf16.msra.mxu0 0
    %5831 = vmatprep.subr.bf16.mxu0 0
    %5832 = vmatpush1.bf16.msra.mxu0 0
    %5833 = vmatprep.subr.bf16.mxu0 0
    %5834 = vmatpush1.bf16.msra.mxu0 0
    %5835 = vmatprep.subr.bf16.mxu0 0
    %5836 = vmatpush1.bf16.msra.mxu0 0
    %5837 = vmatprep.subr.bf16.mxu0 0
    %5838 = vmatpush1.bf16.msra.mxu0 0
    %5839 = vmatprep.subr.bf16.mxu0 0
    %5840 = vmatpush1.bf16.msra.mxu0 0
    %5841 = vmatprep.mubr.bf16.mxu0 0
    %5842 = vmatmul.mubr.bf16.gmra.mrb[0].mxu0 %v4187
    %v5843 = vpop.f32.mrb[0].mxu0
    %v5844 = vadd.f32 %v5803, %v5843
    %v5845 = vpop.f32.mrb[0].mxu0
    %v5846 = vadd.f32 %v5805, %v5845
    %v5847 = vpop.f32.mrb[0].mxu0
    %v5848 = vpop.f32.mrb[0].mxu0
    %5849 = vdwg.mxu0
    %5850 = vmatprep.subr.bf16.mxu0 0
    %5851 = vmatpush1.bf16.msra.mxu0 %v5215
    %5852 = vmatprep.subr.bf16.mxu0 0
    %5853 = vmatpush1.bf16.msra.mxu0 %v5218
    %5854 = vmatprep.subr.bf16.mxu0 0
    %5855 = vmatpush1.bf16.msra.mxu0 %v5221
    %5856 = vmatprep.subr.bf16.mxu0 0
    %5857 = vmatpush1.bf16.msra.mxu0 %v5224
    %5858 = vmatprep.subr.bf16.mxu0 0
    %5859 = vmatpush1.bf16.msra.mxu0 %v5227
    %5860 = vmatprep.subr.bf16.mxu0 0
    %5861 = vmatpush1.bf16.msra.mxu0 %v5230
    %5862 = vmatprep.subr.bf16.mxu0 0
    %5863 = vmatpush1.bf16.msra.mxu0 %v5233
    %5864 = vmatprep.subr.bf16.mxu0 0
    %5865 = vmatpush1.bf16.msra.mxu0 %v5236
    %5866 = vmatprep.subr.bf16.mxu0 0
    %5867 = vmatpush1.bf16.msra.mxu0 %v5239
    %5868 = vmatprep.subr.bf16.mxu0 0
    %5869 = vmatpush1.bf16.msra.mxu0 %v5242
    %5870 = vmatprep.subr.bf16.mxu0 0
    %5871 = vmatpush1.bf16.msra.mxu0 %v5245
    %5872 = vmatprep.subr.bf16.mxu0 0
    %5873 = vmatpush1.bf16.msra.mxu0 %v5248
    %5874 = vmatprep.subr.bf16.mxu0 0
    %5875 = vmatpush1.bf16.msra.mxu0 %v5251
    %5876 = vmatprep.subr.bf16.mxu0 0
    %5877 = vmatpush1.bf16.msra.mxu0 %v5254
    %5878 = vmatprep.subr.bf16.mxu0 0
    %5879 = vmatpush1.bf16.msra.mxu0 %v5257
    %5880 = vmatprep.subr.bf16.mxu0 0
    %5881 = vmatpush1.bf16.msra.mxu0 %v5260
    %5882 = vmatprep.mubr.bf16.mxu0 %v4180
    %5883 = vmatmul.mubr.bf16.gmra.mrb[0].mxu0 %v4179
    %v5884 = vpop.f32.mrb[0].mxu0
    %v5885 = vadd.f32 %v4489, %v5884
    %v5886 = vpop.f32.mrb[0].mxu0
    %v5887 = vpop.f32.mrb[0].mxu0
    %v5888 = vpop.f32.mrb[0].mxu0
    %5889 = vdwg.mxu0
    %5890 = vmatprep.subr.bf16.mxu0 0
    %5891 = vmatpush1.bf16.msra.mxu0 %v5263
    %5892 = vmatprep.subr.bf16.mxu0 0
    %5893 = vmatpush1.bf16.msra.mxu0 %v5266
    %5894 = vmatprep.subr.bf16.mxu0 0
    %5895 = vmatpush1.bf16.msra.mxu0 %v5269
    %5896 = vmatprep.subr.bf16.mxu0 0
    %5897 = vmatpush1.bf16.msra.mxu0 %v5272
    %5898 = vmatprep.subr.bf16.mxu0 0
    %5899 = vmatpush1.bf16.msra.mxu0 %v5275
    %5900 = vmatprep.subr.bf16.mxu0 0
    %5901 = vmatpush1.bf16.msra.mxu0 %v5278
    %5902 = vmatprep.subr.bf16.mxu0 0
    %5903 = vmatpush1.bf16.msra.mxu0 %v5281
    %5904 = vmatprep.subr.bf16.mxu0 0
    %5905 = vmatpush1.bf16.msra.mxu0 %v5284
    %5906 = vmatprep.subr.bf16.mxu0 0
    %5907 = vmatpush1.bf16.msra.mxu0 %v5287
    %5908 = vmatprep.subr.bf16.mxu0 0
    %5909 = vmatpush1.bf16.msra.mxu0 %v5290
    %5910 = vmatprep.subr.bf16.mxu0 0
    %5911 = vmatpush1.bf16.msra.mxu0 %v5293
    %5912 = vmatprep.subr.bf16.mxu0 0
    %5913 = vmatpush1.bf16.msra.mxu0 %v5296
    %5914 = vmatprep.subr.bf16.mxu0 0
    %5915 = vmatpush1.bf16.msra.mxu0 %v5299
    %5916 = vmatprep.subr.bf16.mxu0 0
    %5917 = vmatpush1.bf16.msra.mxu0 %v5302
    %5918 = vmatprep.subr.bf16.mxu0 0
    %5919 = vmatpush1.bf16.msra.mxu0 %v5305
    %5920 = vmatprep.subr.bf16.mxu0 0
    %5921 = vmatpush1.bf16.msra.mxu0 %v5308
    %5922 = vmatprep.mubr.bf16.mxu0 %v4182
    %5923 = vmatmul.mubr.bf16.gmra.mrb[0].mxu0 %v4181
    %v5924 = vpop.f32.mrb[0].mxu0
    %v5925 = vadd.f32 %v5885, %v5924
    %v5926 = vpop.f32.mrb[0].mxu0
    %v5927 = vpop.f32.mrb[0].mxu0
    %v5928 = vpop.f32.mrb[0].mxu0
    %5929 = vdwg.mxu0
    %5930 = vmatprep.subr.bf16.mxu0 0
    %5931 = vmatpush1.bf16.msra.mxu0 %v5311
    %5932 = vmatprep.subr.bf16.mxu0 0
    %5933 = vmatpush1.bf16.msra.mxu0 %v5314
    %5934 = vmatprep.subr.bf16.mxu0 0
    %5935 = vmatpush1.bf16.msra.mxu0 %v5317
    %5936 = vmatprep.subr.bf16.mxu0 0
    %5937 = vmatpush1.bf16.msra.mxu0 %v5320
    %5938 = vmatprep.subr.bf16.mxu0 0
    %5939 = vmatpush1.bf16.msra.mxu0 %v5323
    %5940 = vmatprep.subr.bf16.mxu0 0
    %5941 = vmatpush1.bf16.msra.mxu0 %v5326
    %5942 = vmatprep.subr.bf16.mxu0 0
    %5943 = vmatpush1.bf16.msra.mxu0 %v5329
    %5944 = vmatprep.subr.bf16.mxu0 0
    %5945 = vmatpush1.bf16.msra.mxu0 %v5332
    %5946 = vmatprep.subr.bf16.mxu0 0
    %5947 = vmatpush1.bf16.msra.mxu0 %v5335
    %5948 = vmatprep.subr.bf16.mxu0 0
    %5949 = vmatpush1.bf16.msra.mxu0 %v5338
    %5950 = vmatprep.subr.bf16.mxu0 0
    %5951 = vmatpush1.bf16.msra.mxu0 %v5341
    %5952 = vmatprep.subr.bf16.mxu0 0
    %5953 = vmatpush1.bf16.msra.mxu0 %v5344
    %5954 = vmatprep.subr.bf16.mxu0 0
    %5955 = vmatpush1.bf16.msra.mxu0 %v5347
    %5956 = vmatprep.subr.bf16.mxu0 0
    %5957 = vmatpush1.bf16.msra.mxu0 %v5350
    %5958 = vmatprep.subr.bf16.mxu0 0
    %5959 = vmatpush1.bf16.msra.mxu0 %v5353
    %5960 = vmatprep.subr.bf16.mxu0 0
    %5961 = vmatpush1.bf16.msra.mxu0 %v5356
    %5962 = vmatprep.mubr.bf16.mxu0 %v4184
    %5963 = vmatmul.mubr.bf16.gmra.mrb[0].mxu0 %v4183
    %v5964 = vpop.f32.mrb[0].mxu0
    %v5965 = vadd.f32 %v5925, %v5964
    %v5966 = vpop.f32.mrb[0].mxu0
    %v5967 = vpop.f32.mrb[0].mxu0
    %v5968 = vpop.f32.mrb[0].mxu0
    %5969 = vdwg.mxu0
    %5970 = vmatprep.subr.bf16.mxu0 0
    %5971 = vmatpush1.bf16.msra.mxu0 %v5359
    %5972 = vmatprep.subr.bf16.mxu0 0
    %5973 = vmatpush1.bf16.msra.mxu0 %v5362
    %5974 = vmatprep.subr.bf16.mxu0 0
    %5975 = vmatpush1.bf16.msra.mxu0 %v5365
    %5976 = vmatprep.subr.bf16.mxu0 0
    %5977 = vmatpush1.bf16.msra.mxu0 %v5368
    %5978 = vmatprep.subr.bf16.mxu0 0
    %5979 = vmatpush1.bf16.msra.mxu0 %v5371
    %5980 = vmatprep.subr.bf16.mxu0 0
    %5981 = vmatpush1.bf16.msra.mxu0 %v5374
    %5982 = vmatprep.subr.bf16.mxu0 0
    %5983 = vmatpush1.bf16.msra.mxu0 %v5377
    %5984 = vmatprep.subr.bf16.mxu0 0
    %5985 = vmatpush1.bf16.msra.mxu0 %v5380
    %5986 = vmatprep.subr.bf16.mxu0 0
    %5987 = vmatpush1.bf16.msra.mxu0 %v5383
    %5988 = vmatprep.subr.bf16.mxu0 0
    %5989 = vmatpush1.bf16.msra.mxu0 %v5386
    %5990 = vmatprep.subr.bf16.mxu0 0
    %5991 = vmatpush1.bf16.msra.mxu0 %v5389
    %5992 = vmatprep.subr.bf16.mxu0 0
    %5993 = vmatpush1.bf16.msra.mxu0 %v5392
    %5994 = vmatprep.subr.bf16.mxu0 0
    %5995 = vmatpush1.bf16.msra.mxu0 %v5395
    %5996 = vmatprep.subr.bf16.mxu0 0
    %5997 = vmatpush1.bf16.msra.mxu0 %v5398
    %5998 = vmatprep.subr.bf16.mxu0 0
    %5999 = vmatpush1.bf16.msra.mxu0 %v5401
    %6000 = vmatprep.subr.bf16.mxu0 0
    %6001 = vmatpush1.bf16.msra.mxu0 %v5404
    %6002 = vmatprep.mubr.bf16.mxu0 %v4186
    %6003 = vmatmul.mubr.bf16.gmra.mrb[0].mxu0 %v4185
    %v6004 = vpop.f32.mrb[0].mxu0
    %v6005 = vadd.f32 %v5965, %v6004
    %v6006 = vpop.f32.mrb[0].mxu0
    %v6007 = vpop.f32.mrb[0].mxu0
    %v6008 = vpop.f32.mrb[0].mxu0
    %6009 = vdwg.mxu0
    %6010 = vmatprep.subr.bf16.mxu0 0
    %6011 = vmatpush1.bf16.msra.mxu0 %v5407
    %6012 = vmatprep.subr.bf16.mxu0 0
    %6013 = vmatpush1.bf16.msra.mxu0 %v5410
    %6014 = vmatprep.subr.bf16.mxu0 0
    %6015 = vmatpush1.bf16.msra.mxu0 %v5413
    %6016 = vmatprep.subr.bf16.mxu0 0
    %6017 = vmatpush1.bf16.msra.mxu0 %v5416
    %6018 = vmatprep.subr.bf16.mxu0 0
    %6019 = vmatpush1.bf16.msra.mxu0 %v5419
    %6020 = vmatprep.subr.bf16.mxu0 0
    %6021 = vmatpush1.bf16.msra.mxu0 %v5422
    %6022 = vmatprep.subr.bf16.mxu0 0
    %6023 = vmatpush1.bf16.msra.mxu0 %v5425
    %6024 = vmatprep.subr.bf16.mxu0 0
    %6025 = vmatpush1.bf16.msra.mxu0 %v5428
    %6026 = vmatprep.subr.bf16.mxu0 0
    %6027 = vmatpush1.bf16.msra.mxu0 0
    %6028 = vmatprep.subr.bf16.mxu0 0
    %6029 = vmatpush1.bf16.msra.mxu0 0
    %6030 = vmatprep.subr.bf16.mxu0 0
    %6031 = vmatpush1.bf16.msra.mxu0 0
    %6032 = vmatprep.subr.bf16.mxu0 0
    %6033 = vmatpush1.bf16.msra.mxu0 0
    %6034 = vmatprep.subr.bf16.mxu0 0
    %6035 = vmatpush1.bf16.msra.mxu0 0
    %6036 = vmatprep.subr.bf16.mxu0 0
    %6037 = vmatpush1.bf16.msra.mxu0 0
    %6038 = vmatprep.subr.bf16.mxu0 0
    %6039 = vmatpush1.bf16.msra.mxu0 0
    %6040 = vmatprep.subr.bf16.mxu0 0
    %6041 = vmatpush1.bf16.msra.mxu0 0
    %6042 = vmatprep.mubr.bf16.mxu0 0
    %6043 = vmatmul.mubr.bf16.gmra.mrb[0].mxu0 %v4187
    %v6044 = vpop.f32.mrb[0].mxu0
    %v6045 = vadd.f32 %v6005, %v6044
    %v6046 = vpop.f32.mrb[0].mxu0
    %v6047 = vpop.f32.mrb[0].mxu0
    %v6048 = vpop.f32.mrb[0].mxu0
    %6049 = vdwg.mxu0
    %v6050 = vmax.f32 %v5844, 0.0
    %v6051 = vmax.f32 %v5846, 0.0
    %v6052 = vmax.f32 %v6045, 0.0
    %vm6053 = vcmp.lt.s32.totalorder %v3851, 6
    %v6054 = vsel %vm6053, 1, 0
    %v6055 = vcvt.s32.f32 %v6054
    %v6056 = vmul.f32 %v6050, %v6055
    %v6057 = vmul.f32 %v6051, %v6055
    %v6058 = vmul.f32 %v6052, %v6055
    %v6059 = vrot.slane %v6056, 4
    %v6060 = vadd.f32 %v6056, %v6059
    %v6061 = vrot.slane %v6060, 2
    %v6062 = vadd.f32 %v6060, %v6061
    %v6063 = vrot.slane %v6062, 1
    %v6064 = vadd.f32 %v6062, %v6063
    %v6065 = vrot.slane %v6057, 4
    %v6066 = vadd.f32 %v6057, %v6065
    %v6067 = vrot.slane %v6066, 2
    %v6068 = vadd.f32 %v6066, %v6067
    %v6069 = vrot.slane %v6068, 1
    %v6070 = vadd.f32 %v6068, %v6069
    %v6071 = vrot.slane %v6058, 4
    %v6072 = vadd.f32 %v6058, %v6071
    %v6073 = vrot.slane %v6072, 2
    %v6074 = vadd.f32 %v6072, %v6073
    %v6075 = vrot.slane %v6074, 1
    %v6076 = vadd.f32 %v6074, %v6075
    %v6077 = vadd.f32 %v6064, %v6076
    %v6078 = vadd.f32 %v6070, %v6064
    %v6079 = vadd.f32 %v6076, %v6070
    %v6080 = vadd.f32 %v6077, %v6070
    %v6081 = vadd.f32 %v6078, %v6076
    %v6082 = vadd.f32 %v6079, %v6064
    %v6083 = vmul.f32 %v6080, 0.055555556
    %v6084 = vmul.f32 %v6081, 0.055555556
    %v6085 = vmul.f32 %v6082, 0.055555556
    %v6086 = vlaneseq
    %v6087 = vshrl.u32 %v6086, 7
    %v6088 = vsub.s32 0, %v6087
    %v6089 = vrot.slane %v6083, %v6088
    %v6090 = vlaneseq
    %v6091 = vshrl.u32 %v6090, 7
    %v6092 = vsub.s32 0, %v6091
    %v6093 = vrot.slane %v6084, %v6092
    %v6094 = vlaneseq
    %v6095 = vshrl.u32 %v6094, 7
    %v6096 = vsub.s32 0, %v6095
    %v6097 = vrot.slane %v6085, %v6096
    %v6098 = vsub.f32 %v6050, %v6089
    %v6099 = vsub.f32 %v6051, %v6093
    %v6100 = vsub.f32 %v6052, %v6097
    %v6101 = vmul.f32 %v6098, %v6055
    %v6102 = vmul.f32 %v6099, %v6055
    %v6103 = vmul.f32 %v6100, %v6055
    %v6104 = vmul.f32 %v6101, %v6101
    %v6105 = vmul.f32 %v6102, %v6102
    %v6106 = vmul.f32 %v6103, %v6103
    %v6107 = vrot.slane %v6104, 4
    %v6108 = vadd.f32 %v6104, %v6107
    %v6109 = vrot.slane %v6108, 2
    %v6110 = vadd.f32 %v6108, %v6109
    %v6111 = vrot.slane %v6110, 1
    %v6112 = vadd.f32 %v6110, %v6111
    %v6113 = vrot.slane %v6105, 4
    %v6114 = vadd.f32 %v6105, %v6113
    %v6115 = vrot.slane %v6114, 2
    %v6116 = vadd.f32 %v6114, %v6115
    %v6117 = vrot.slane %v6116, 1
    %v6118 = vadd.f32 %v6116, %v6117
    %v6119 = vrot.slane %v6106, 4
    %v6120 = vadd.f32 %v6106, %v6119
    %v6121 = vrot.slane %v6120, 2
    %v6122 = vadd.f32 %v6120, %v6121
    %v6123 = vrot.slane %v6122, 1
    %v6124 = vadd.f32 %v6122, %v6123
    %v6125 = vadd.f32 %v6112, %v6124
    %v6126 = vadd.f32 %v6118, %v6112
    %v6127 = vadd.f32 %v6124, %v6118
    %v6128 = vadd.f32 %v6125, %v6118
    %v6129 = vadd.f32 %v6126, %v6124
    %v6130 = vadd.f32 %v6127, %v6112
    %v6131 = vmul.f32 %v6128, 0.055555556
    %v6132 = vmul.f32 %v6129, 0.055555556
    %v6133 = vmul.f32 %v6130, 0.055555556
    %v6134 = vld [vmem:[%s29] sm:$0x7]
    %v6135 = vadd.f32 %v6131, 1e-05
    %v6136 = vadd.f32 %v6132, 1e-05
    %v6137 = vadd.f32 %v6133, 1e-05
    %v6138 = vrsqrt.pop %v6135
    %v6139 = vrsqrt.pop %v6136
    %v6140 = vrsqrt.pop %v6137
    %v6144 = vcombine.low %v6138, %v6139
    %v6146 = vunpack.c.l.s4 1966171168
    %v6147 = vunpack.c.0.s8 %v6146
    %v6148 = vlaneseq
    %v6149 = vshrl.u32 %v6148, 7
    %v6150 = vsub.s32 %v6147, %v6149
    %v6151 = vrot.slane %v6144, %v6150
    %v6153 = vunpack.c.l.s4 1966171168
    %v6154 = vunpack.c.0.s8 %v6153
    %v6155 = vlaneseq
    %v6156 = vshrl.u32 %v6155, 7
    %v6157 = vsub.s32 %v6154, %v6156
    %v6158 = vrot.slane %v6140, %v6157
    %v6159 = vcombine.low %v6151, %v6158
    %v6161 = vunpack.c.l.s4 1966171168
    %v6162 = vunpack.c.0.s8 %v6161
    %v6163 = vlaneseq
    %v6164 = vshrl.u32 %v6163, 7
    %v6165 = vsub.s32 %v6162, %v6164
    %v6166 = vrot.slane %v6159, %v6165
    %v6168 = vmul.f32 %v6134, %v6166
    %v6170 = vlaneseq
    %v6171 = vshrl.u32 %v6170, 7
    %v6172 = vsub.s32 0, %v6171
    %v6173 = vrot.slane %v6168, %v6172
    %v6174 = vlaneseq
    %v6175 = vshrl.u32 %v6174, 7
    %v6176 = vsub.s32 1, %v6175
    %v6177 = vrot.slane %v6168, %v6176
    %v6178 = vlaneseq
    %v6179 = vshrl.u32 %v6178, 7
    %v6180 = vsub.s32 2, %v6179
    %v6181 = vrot.slane %v6168, %v6180
    %v6185 = vmul.f32 %v6098, %v6173
    %v6186 = vmul.f32 %v6099, %v6177
    %v6187 = vmul.f32 %v6100, %v6181
    %v6188 = vld [vmem:[%s31] sm:$0x7]
    %v6190 = vlaneseq
    %v6191 = vshrl.u32 %v6190, 7
    %v6192 = vsub.s32 0, %v6191
    %v6193 = vrot.slane %v6188, %v6192
    %v6194 = vlaneseq
    %v6195 = vshrl.u32 %v6194, 7
    %v6196 = vsub.s32 1, %v6195
    %v6197 = vrot.slane %v6188, %v6196
    %v6198 = vlaneseq
    %v6199 = vshrl.u32 %v6198, 7
    %v6200 = vsub.s32 2, %v6199
    %v6201 = vrot.slane %v6188, %v6200
    %v6205 = vadd.f32 %v6185, %v6193
    %v6206 = vadd.f32 %v6186, %v6197
    %v6207 = vadd.f32 %v6187, %v6201
    %v6208 = vpack.c.bf16 %v6205, %v6205
    %v6209 = vpack.c.bf16 %v6206, %v6206
    %v6210 = vpack.c.bf16 %v6207, %v6207
    %v6211 = vld [vmem:[%s33] sm:$0xf]
    %v6212 = vld [vmem:[%s33 + $0x4] sm:$0xf]
    %v6213 = vld [vmem:[%s33 + $0x8] sm:$0xf]
    %v6217 = vunpack.c.l.b16 %v6211
    %v6218 = vunpack.c.l.b16 %v6212
    %v6219 = vunpack.c.l.b16 %v6213
    %v6220 = vpack.c.b16 %v6218, %v6217
    %v6221 = vpack.c.b16 %v6219, %v6219
    %vm6222 = vcmask 64512
    %v6224 = vsel %vm6222, %v6220, 0
    %v6227 = vsel %vm6222, %v6221, 0
    %v6230 = vsel %vm1828, %v6208, 0
    %v6233 = vsel %vm1828, %v6209, 0
    %v6236 = vsel %vm1828, %v6210, 0
    %6238 = vmatprep.subr.bf16.mxu0 %v6233
    %6239 = vmatpush1.bf16.msra.mxu0 %v6230
    %6240 = vmatprep.subr.bf16.mxu0 0
    %6241 = vmatpush1.bf16.msra.mxu0 0
    %6242 = vmatprep.subr.bf16.mxu0 0
    %6243 = vmatpush1.bf16.msra.mxu0 0
    %6244 = vmatprep.subr.bf16.mxu0 0
    %6245 = vmatpush1.bf16.msra.mxu0 0
    %6246 = vmatprep.subr.bf16.mxu0 0
    %6247 = vmatpush1.bf16.msra.mxu0 0
    %6248 = vmatprep.subr.bf16.mxu0 0
    %6249 = vmatpush1.bf16.msra.mxu0 0
    %6250 = vmatprep.subr.bf16.mxu0 0
    %6251 = vmatpush1.bf16.msra.mxu0 0
    %6252 = vmatprep.subr.bf16.mxu0 0
    %6253 = vmatpush1.bf16.msra.mxu0 0
    %6254 = vmatprep.subr.bf16.mxu0 0
    %6255 = vmatpush1.bf16.msra.mxu0 0
    %6256 = vmatprep.subr.bf16.mxu0 0
    %6257 = vmatpush1.bf16.msra.mxu0 0
    %6258 = vmatprep.subr.bf16.mxu0 0
    %6259 = vmatpush1.bf16.msra.mxu0 0
    %6260 = vmatprep.subr.bf16.mxu0 0
    %6261 = vmatpush1.bf16.msra.mxu0 0
    %6262 = vmatprep.subr.bf16.mxu0 0
    %6263 = vmatpush1.bf16.msra.mxu0 0
    %6264 = vmatprep.subr.bf16.mxu0 0
    %6265 = vmatpush1.bf16.msra.mxu0 0
    %6266 = vmatprep.subr.bf16.mxu0 0
    %6267 = vmatpush1.bf16.msra.mxu0 0
    %6268 = vmatprep.subr.bf16.mxu0 0
    %6269 = vmatpush1.bf16.msra.mxu0 0
    %6270 = vmatprep.mubr.bf16.mxu0 0
    %6271 = vmatmul.mubr.bf16.gmra.mrb[0].mxu0 %v6224
    %v6272 = vpop.f32.mrb[0].mxu0
    %v6273 = vadd.f32 0.0, %v6272
    %v6274 = vpop.f32.mrb[0].mxu0
    %v6275 = vadd.f32 0.0, %v6274
    %v6276 = vpop.f32.mrb[0].mxu0
    %v6277 = vadd.f32 0.0, %v6276
    %v6278 = vpop.f32.mrb[0].mxu0
    %v6279 = vadd.f32 0.0, %v6278
    %6280 = vmatprep.mubr.bf16.mxu0 0
    %6281 = vmatmul.mubr.bf16.gmra.mrb[0].mxu0 %v6227
    %v6282 = vpop.f32.mrb[0].mxu0
    %v6283 = vadd.f32 0.0, %v6282
    %v6284 = vpop.f32.mrb[0].mxu0
    %v6285 = vadd.f32 0.0, %v6284
    %v6286 = vpop.f32.mrb[0].mxu0
    %v6287 = vpop.f32.mrb[0].mxu0
    %6288 = vdwg.mxu0
    %6289 = vmatprep.subr.bf16.mxu0 0
    %6290 = vmatpush1.bf16.msra.mxu0 %v6236
    %6291 = vmatprep.subr.bf16.mxu0 0
    %6292 = vmatpush1.bf16.msra.mxu0 0
    %6293 = vmatprep.subr.bf16.mxu0 0
    %6294 = vmatpush1.bf16.msra.mxu0 0
    %6295 = vmatprep.subr.bf16.mxu0 0
    %6296 = vmatpush1.bf16.msra.mxu0 0
    %6297 = vmatprep.subr.bf16.mxu0 0
    %6298 = vmatpush1.bf16.msra.mxu0 0
    %6299 = vmatprep.subr.bf16.mxu0 0
    %6300 = vmatpush1.bf16.msra.mxu0 0
    %6301 = vmatprep.subr.bf16.mxu0 0
    %6302 = vmatpush1.bf16.msra.mxu0 0
    %6303 = vmatprep.subr.bf16.mxu0 0
    %6304 = vmatpush1.bf16.msra.mxu0 0
    %6305 = vmatprep.subr.bf16.mxu0 0
    %6306 = vmatpush1.bf16.msra.mxu0 0
    %6307 = vmatprep.subr.bf16.mxu0 0
    %6308 = vmatpush1.bf16.msra.mxu0 0
    %6309 = vmatprep.subr.bf16.mxu0 0
    %6310 = vmatpush1.bf16.msra.mxu0 0
    %6311 = vmatprep.subr.bf16.mxu0 0
    %6312 = vmatpush1.bf16.msra.mxu0 0
    %6313 = vmatprep.subr.bf16.mxu0 0
    %6314 = vmatpush1.bf16.msra.mxu0 0
    %6315 = vmatprep.subr.bf16.mxu0 0
    %6316 = vmatpush1.bf16.msra.mxu0 0
    %6317 = vmatprep.subr.bf16.mxu0 0
    %6318 = vmatpush1.bf16.msra.mxu0 0
    %6319 = vmatprep.subr.bf16.mxu0 0
    %6320 = vmatpush1.bf16.msra.mxu0 0
    %6321 = vmatprep.mubr.bf16.mxu0 0
    %6322 = vmatmul.mubr.bf16.gmra.mrb[0].mxu0 %v6224
    %v6323 = vpop.f32.mrb[0].mxu0
    %v6324 = vadd.f32 0.0, %v6323
    %v6325 = vpop.f32.mrb[0].mxu0
    %v6326 = vpop.f32.mrb[0].mxu0
    %v6327 = vadd.f32 0.0, %v6326
    %v6328 = vpop.f32.mrb[0].mxu0
    %6329 = vmatprep.mubr.bf16.mxu0 0
    %6330 = vmatmul.mubr.bf16.gmra.mrb[0].mxu0 %v6227
    %v6331 = vpop.f32.mrb[0].mxu0
    %v6332 = vadd.f32 0.0, %v6331
    %v6333 = vpop.f32.mrb[0].mxu0
    %v6334 = vpop.f32.mrb[0].mxu0
    %v6335 = vpop.f32.mrb[0].mxu0
    %6336 = vdwg.mxu0
    %v6337 = vpack.c.bf16 %v6273, %v6273
    %v6338 = vpack.c.bf16 %v6275, %v6275
    %v6339 = vpack.c.bf16 %v6324, %v6324
    %v6340 = vpack.c.bf16 %v6277, %v6277
    %v6341 = vpack.c.bf16 %v6279, %v6279
    %v6342 = vpack.c.bf16 %v6327, %v6327
    %v6343 = vpack.c.bf16 %v6283, %v6283
    %v6344 = vpack.c.bf16 %v6285, %v6285
    %v6345 = vpack.c.bf16 %v6332, %v6332
    %v6346 = vld [vmem:[#allocation8] sm:$0xf]
    %v6347 = vld [vmem:[#allocation8 + $0x4] sm:$0xf]
    %v6348 = vld [vmem:[#allocation8 + $0x8] sm:$0xf]
    %v6349 = vld [vmem:[#allocation8 + $0xc] sm:$0xf]
    %v6350 = vld [vmem:[#allocation8 + $0x10] sm:$0xf]
    %v6351 = vld [vmem:[#allocation8 + $0x14] sm:$0xf]
    %v6352 = vld [vmem:[#allocation8 + $0x18] sm:$0xf]
    %v6353 = vld [vmem:[#allocation8 + $0x1c] sm:$0xf]
    %v6354 = vld [vmem:[#allocation8 + $0x20] sm:$0xf]
    %v6355 = vld [vmem:[#allocation8 + $0x24] sm:$0xf]
    %v6356 = vld [vmem:[#allocation8 + $0x28] sm:$0xf]
    %v6357 = vld [vmem:[#allocation8 + $0x2c] sm:$0xf]
    %v6358 = vld [vmem:[#allocation8 + $0x30] sm:$0xf]
    %v6359 = vld [vmem:[#allocation8 + $0x34] sm:$0xf]
    %v6360 = vld [vmem:[#allocation8 + $0x38] sm:$0xf]
    %v6361 = vld [vmem:[#allocation8 + $0x3c] sm:$0xf]
    %v6362 = vld [vmem:[#allocation8 + $0x40] sm:$0xf]
    %v6363 = vld [vmem:[#allocation8 + $0x44] sm:$0xf]
    %v6364 = vld [vmem:[#allocation8 + $0x48] sm:$0xf]
    %v6365 = vld [vmem:[#allocation8 + $0x4c] sm:$0xf]
    %v6366 = vld [vmem:[#allocation8 + $0x50] sm:$0xf]
    %v6367 = vld [vmem:[#allocation8 + $0x54] sm:$0xf]
    %v6368 = vld [vmem:[#allocation8 + $0x58] sm:$0xf]
    %v6369 = vld [vmem:[#allocation8 + $0x5c] sm:$0xf]
    %v6370 = vld [vmem:[#allocation8 + $0x60] sm:$0xf]
    %v6371 = vld [vmem:[#allocation8 + $0x64] sm:$0xf]
    %v6372 = vld [vmem:[#allocation8 + $0x68] sm:$0xf]
    %v6373 = vld [vmem:[#allocation8 + $0x6c] sm:$0xf]
    %v6374 = vld [vmem:[#allocation8 + $0x70] sm:$0xf]
    %v6375 = vld [vmem:[#allocation8 + $0x74] sm:$0xf]
    %v6376 = vld [vmem:[#allocation8 + $0x78] sm:$0xf]
    %v6377 = vld [vmem:[#allocation8 + $0x7c] sm:$0xf]
    %v6378 = vld [vmem:[#allocation8 + $0x80] sm:$0xf]
    %v6379 = vld [vmem:[#allocation8 + $0x84] sm:$0xf]
    %v6380 = vld [vmem:[#allocation8 + $0x88] sm:$0xf]
    %v6381 = vld [vmem:[#allocation8 + $0x8c] sm:$0xf]
    %v6382 = vld [vmem:[#allocation8 + $0x90] sm:$0xf]
    %v6383 = vld [vmem:[#allocation8 + $0x94] sm:$0xf]
    %v6384 = vld [vmem:[#allocation8 + $0x98] sm:$0xf]
    %v6385 = vld [vmem:[#allocation8 + $0x9c] sm:$0xf]
    %v6386 = vld [vmem:[#allocation8 + $0xa0] sm:$0xf]
    %v6387 = vld [vmem:[#allocation8 + $0xa4] sm:$0xf]
    %v6388 = vld [vmem:[#allocation8 + $0xa8] sm:$0xf]
    %v6389 = vld [vmem:[#allocation8 + $0xac] sm:$0xf]
    %v6390 = vld [vmem:[#allocation8 + $0xb0] sm:$0xf]
    %v6391 = vld [vmem:[#allocation8 + $0xb4] sm:$0xf]
    %v6392 = vld [vmem:[#allocation8 + $0xb8] sm:$0xf]
    %v6393 = vld [vmem:[#allocation8 + $0xbc] sm:$0xf]
    %v6394 = vld [vmem:[#allocation8 + $0xc0] sm:$0xf]
    %v6395 = vld [vmem:[#allocation8 + $0xc4] sm:$0xf]
    %v6396 = vld [vmem:[#allocation8 + $0xc8] sm:$0xf]
    %v6397 = vld [vmem:[#allocation8 + $0xcc] sm:$0xf]
    %v6398 = vld [vmem:[#allocation8 + $0xd0] sm:$0xf]
    %v6399 = vld [vmem:[#allocation8 + $0xd4] sm:$0xf]
    %v6400 = vld [vmem:[#allocation8 + $0xd8] sm:$0xf]
    %v6401 = vld [vmem:[#allocation8 + $0xdc] sm:$0xf]
    %v6402 = vld [vmem:[#allocation8 + $0xe0] sm:$0xf]
    %v6403 = vld [vmem:[#allocation8 + $0xe4] sm:$0xf]
    %v6404 = vld [vmem:[#allocation8 + $0xe8] sm:$0xf]
    %v6405 = vld [vmem:[#allocation8 + $0xec] sm:$0xf]
    %v6406 = vld [vmem:[#allocation8 + $0xf0] sm:$0xf]
    %v6407 = vld [vmem:[#allocation8 + $0xf4] sm:$0xf]
    %v6408 = vld [vmem:[#allocation8 + $0xf8] sm:$0xf]
    %v6409 = vld [vmem:[#allocation8 + $0xfc] sm:$0xf]
    %v6410 = vld [vmem:[#allocation8 + $0x100] sm:$0xf]
    %v6411 = vld [vmem:[#allocation8 + $0x104] sm:$0xf]
    %v6412 = vld [vmem:[#allocation8 + $0x108] sm:$0xf]
    %v6413 = vld [vmem:[#allocation8 + $0x10c] sm:$0xf]
    %v6414 = vld [vmem:[#allocation8 + $0x110] sm:$0xf]
    %v6415 = vld [vmem:[#allocation8 + $0x114] sm:$0xf]
    %v6416 = vld [vmem:[#allocation8 + $0x118] sm:$0xf]
    %v6417 = vld [vmem:[#allocation8 + $0x11c] sm:$0xf]
    %v6418 = vld [vmem:[#allocation8 + $0x120] sm:$0xf]
    %v6419 = vld [vmem:[#allocation8 + $0x124] sm:$0xf]
    %v6420 = vld [vmem:[#allocation8 + $0x128] sm:$0xf]
    %v6421 = vld [vmem:[#allocation8 + $0x12c] sm:$0xf]
    %v6422 = vld [vmem:[#allocation8 + $0x130] sm:$0xf]
    %v6423 = vld [vmem:[#allocation8 + $0x134] sm:$0xf]
    %v6424 = vld [vmem:[#allocation8 + $0x138] sm:$0xf]
    %v6425 = vld [vmem:[#allocation8 + $0x13c] sm:$0xf]
    %v6426 = vld [vmem:[#allocation8 + $0x140] sm:$0xf]
    %v6427 = vld [vmem:[#allocation8 + $0x144] sm:$0xf]
    %v6428 = vld [vmem:[#allocation8 + $0x148] sm:$0xf]
    %v6429 = vld [vmem:[#allocation8 + $0x14c] sm:$0xf]
    %v6430 = vld [vmem:[#allocation8 + $0x150] sm:$0xf]
    %v6431 = vld [vmem:[#allocation8 + $0x154] sm:$0xf]
    %v6432 = vld [vmem:[#allocation8 + $0x158] sm:$0xf]
    %v6433 = vld [vmem:[#allocation8 + $0x15c] sm:$0xf]
    %v6434 = vld [vmem:[#allocation8 + $0x160] sm:$0xf]
    %v6435 = vld [vmem:[#allocation8 + $0x164] sm:$0xf]
    %v6436 = vld [vmem:[#allocation8 + $0x168] sm:$0xf]
    %v6437 = vld [vmem:[#allocation8 + $0x16c] sm:$0xf]
    %v6438 = vld [vmem:[#allocation8 + $0x170] sm:$0xf]
    %v6439 = vld [vmem:[#allocation8 + $0x174] sm:$0xf]
    %v6440 = vld [vmem:[#allocation8 + $0x178] sm:$0xf]
    %v6441 = vld [vmem:[#allocation8 + $0x17c] sm:$0xf]
    %v6442 = vld [vmem:[#allocation8 + $0x180] sm:$0xf]
    %v6443 = vld [vmem:[#allocation8 + $0x184] sm:$0xf]
    %v6444 = vld [vmem:[#allocation8 + $0x188] sm:$0xf]
    %v6445 = vld [vmem:[#allocation8 + $0x18c] sm:$0xf]
    %v6446 = vld [vmem:[#allocation8 + $0x190] sm:$0xf]
    %v6447 = vld [vmem:[#allocation8 + $0x194] sm:$0xf]
    %v6448 = vld [vmem:[#allocation8 + $0x198] sm:$0xf]
    %v6449 = vld [vmem:[#allocation8 + $0x19c] sm:$0xf]
    %v6450 = vld [vmem:[#allocation8 + $0x1a0] sm:$0xf]
    %v6451 = vld [vmem:[#allocation8 + $0x1a4] sm:$0xf]
    %v6452 = vld [vmem:[#allocation8 + $0x1a8] sm:$0xf]
    %v6453 = vld [vmem:[#allocation8 + $0x1ac] sm:$0xf]
    %v6454 = vld [vmem:[#allocation8 + $0x1b0] sm:$0xf]
    %v6455 = vld [vmem:[#allocation8 + $0x1b4] sm:$0xf]
    %v6456 = vld [vmem:[#allocation8 + $0x1b8] sm:$0xf]
    %v6457 = vld [vmem:[#allocation8 + $0x1bc] sm:$0xf]
    %v6458 = vld [vmem:[#allocation8 + $0x1c0] sm:$0xf]
    %v6459 = vld [vmem:[#allocation8 + $0x1c4] sm:$0xf]
    %v6460 = vld [vmem:[#allocation8 + $0x1c8] sm:$0xf]
    %v6461 = vld [vmem:[#allocation8 + $0x1cc] sm:$0xf]
    %v6462 = vld [vmem:[#allocation8 + $0x1d0] sm:$0xf]
    %v6463 = vld [vmem:[#allocation8 + $0x1d4] sm:$0xf]
    %v6464 = vld [vmem:[#allocation8 + $0x1d8] sm:$0xf]
    %v6465 = vld [vmem:[#allocation8 + $0x1dc] sm:$0xf]
    %v6466 = vld [vmem:[#allocation8 + $0x1e0] sm:$0xf]
    %v6467 = vld [vmem:[#allocation8 + $0x1e4] sm:$0xf]
    %v6468 = vld [vmem:[#allocation8 + $0x1e8] sm:$0xf]
    %v6469 = vld [vmem:[#allocation8 + $0x1ec] sm:$0xf]
    %v6470 = vld [vmem:[#allocation8 + $0x1f0] sm:$0xf]
    %v6471 = vld [vmem:[#allocation8 + $0x1f4] sm:$0xf]
    %v6472 = vld [vmem:[#allocation8 + $0x1f8] sm:$0xf]
    %v6473 = vld [vmem:[#allocation8 + $0x1fc] sm:$0xf]
    %v6474 = vld [vmem:[#allocation8 + $0x200] sm:$0xf]
    %v6475 = vld [vmem:[#allocation8 + $0x204] sm:$0xf]
    %v6476 = vld [vmem:[#allocation8 + $0x208] sm:$0xf]
    %v6477 = vld [vmem:[#allocation8 + $0x20c] sm:$0xf]
    %v6478 = vld [vmem:[#allocation8 + $0x210] sm:$0xf]
    %v6479 = vld [vmem:[#allocation8 + $0x214] sm:$0xf]
    %v6480 = vld [vmem:[#allocation8 + $0x218] sm:$0xf]
    %v6481 = vld [vmem:[#allocation8 + $0x21c] sm:$0xf]
    %v6482 = vld [vmem:[#allocation8 + $0x220] sm:$0xf]
    %v6483 = vld [vmem:[#allocation8 + $0x224] sm:$0xf]
    %v6484 = vld [vmem:[#allocation8 + $0x228] sm:$0xf]
    %v6485 = vld [vmem:[#allocation8 + $0x22c] sm:$0xf]
    %v6486 = vld [vmem:[#allocation8 + $0x230] sm:$0xf]
    %v6487 = vld [vmem:[#allocation8 + $0x234] sm:$0xf]
    %v6488 = vld [vmem:[#allocation8 + $0x238] sm:$0xf]
    %v6489 = vld [vmem:[#allocation8 + $0x23c] sm:$0xf]
    %v6490 = vld [vmem:[%s37] sm:$0x1]
    %v6492 = vlaneseq
    %v6493 = vshrl.u32 %v6492, 7
    %v6494 = vsub.s32 0, %v6493
    %v6495 = vrot.slane %v6490, %v6494
    %v6641 = vunpack.c.l.b16 %v6346
    %v6642 = vunpack.c.l.b16 %v6347
    %v6643 = vunpack.c.l.b16 %v6348
    %v6644 = vunpack.c.l.b16 %v6349
    %v6645 = vunpack.c.l.b16 %v6350
    %v6646 = vunpack.c.l.b16 %v6351
    %v6647 = vunpack.c.l.b16 %v6352
    %v6648 = vunpack.c.l.b16 %v6353
    %v6649 = vunpack.c.l.b16 %v6354
    %v6650 = vunpack.c.l.b16 %v6355
    %v6651 = vunpack.c.l.b16 %v6356
    %v6652 = vunpack.c.l.b16 %v6357
    %v6653 = vunpack.c.l.b16 %v6358
    %v6654 = vunpack.c.l.b16 %v6359
    %v6655 = vunpack.c.l.b16 %v6360
    %v6656 = vunpack.c.l.b16 %v6361
    %v6657 = vunpack.c.l.b16 %v6362
    %v6658 = vunpack.c.l.b16 %v6363
    %v6659 = vunpack.c.l.b16 %v6364
    %v6660 = vunpack.c.l.b16 %v6365
    %v6661 = vunpack.c.l.b16 %v6366
    %v6662 = vunpack.c.l.b16 %v6367
    %v6663 = vunpack.c.l.b16 %v6368
    %v6664 = vunpack.c.l.b16 %v6369
    %v6665 = vunpack.c.l.b16 %v6370
    %v6666 = vunpack.c.l.b16 %v6371
    %v6667 = vunpack.c.l.b16 %v6372
    %v6668 = vunpack.c.l.b16 %v6373
    %v6669 = vunpack.c.l.b16 %v6374
    %v6670 = vunpack.c.l.b16 %v6375
    %v6671 = vunpack.c.l.b16 %v6376
    %v6672 = vunpack.c.l.b16 %v6377
    %v6673 = vunpack.c.l.b16 %v6378
    %v6674 = vunpack.c.l.b16 %v6379
    %v6675 = vunpack.c.l.b16 %v6380
    %v6676 = vunpack.c.l.b16 %v6381
    %v6677 = vunpack.c.l.b16 %v6382
    %v6678 = vunpack.c.l.b16 %v6383
    %v6679 = vunpack.c.l.b16 %v6384
    %v6680 = vunpack.c.l.b16 %v6385
    %v6681 = vunpack.c.l.b16 %v6386
    %v6682 = vunpack.c.l.b16 %v6387
    %v6683 = vunpack.c.l.b16 %v6388
    %v6684 = vunpack.c.l.b16 %v6389
    %v6685 = vunpack.c.l.b16 %v6390
    %v6686 = vunpack.c.l.b16 %v6391
    %v6687 = vunpack.c.l.b16 %v6392
    %v6688 = vunpack.c.l.b16 %v6393
    %v6689 = vunpack.c.l.b16 %v6394
    %v6690 = vunpack.c.l.b16 %v6395
    %v6691 = vunpack.c.l.b16 %v6396
    %v6692 = vunpack.c.l.b16 %v6397
    %v6693 = vunpack.c.l.b16 %v6398
    %v6694 = vunpack.c.l.b16 %v6399
    %v6695 = vunpack.c.l.b16 %v6400
    %v6696 = vunpack.c.l.b16 %v6401
    %v6697 = vunpack.c.l.b16 %v6402
    %v6698 = vunpack.c.l.b16 %v6403
    %v6699 = vunpack.c.l.b16 %v6404
    %v6700 = vunpack.c.l.b16 %v6405
    %v6701 = vunpack.c.l.b16 %v6406
    %v6702 = vunpack.c.l.b16 %v6407
    %v6703 = vunpack.c.l.b16 %v6408
    %v6704 = vunpack.c.l.b16 %v6409
    %v6705 = vunpack.c.l.b16 %v6410
    %v6706 = vunpack.c.l.b16 %v6411
    %v6707 = vunpack.c.l.b16 %v6412
    %v6708 = vunpack.c.l.b16 %v6413
    %v6709 = vunpack.c.l.b16 %v6414
    %v6710 = vunpack.c.l.b16 %v6415
    %v6711 = vunpack.c.l.b16 %v6416
    %v6712 = vunpack.c.l.b16 %v6417
    %v6713 = vunpack.c.l.b16 %v6418
    %v6714 = vunpack.c.l.b16 %v6419
    %v6715 = vunpack.c.l.b16 %v6420
    %v6716 = vunpack.c.l.b16 %v6421
    %v6717 = vunpack.c.l.b16 %v6422
    %v6718 = vunpack.c.l.b16 %v6423
    %v6719 = vunpack.c.l.b16 %v6424
    %v6720 = vunpack.c.l.b16 %v6425
    %v6721 = vunpack.c.l.b16 %v6426
    %v6722 = vunpack.c.l.b16 %v6427
    %v6723 = vunpack.c.l.b16 %v6428
    %v6724 = vunpack.c.l.b16 %v6429
    %v6725 = vunpack.c.l.b16 %v6430
    %v6726 = vunpack.c.l.b16 %v6431
    %v6727 = vunpack.c.l.b16 %v6432
    %v6728 = vunpack.c.l.b16 %v6433
    %v6729 = vunpack.c.l.b16 %v6434
    %v6730 = vunpack.c.l.b16 %v6435
    %v6731 = vunpack.c.l.b16 %v6436
    %v6732 = vunpack.c.l.b16 %v6437
    %v6733 = vunpack.c.l.b16 %v6438
    %v6734 = vunpack.c.l.b16 %v6439
    %v6735 = vunpack.c.l.b16 %v6440
    %v6736 = vunpack.c.l.b16 %v6441
    %v6737 = vunpack.c.l.b16 %v6442
    %v6738 = vunpack.c.l.b16 %v6443
    %v6739 = vunpack.c.l.b16 %v6444
    %v6740 = vunpack.c.l.b16 %v6445
    %v6741 = vunpack.c.l.b16 %v6446
    %v6742 = vunpack.c.l.b16 %v6447
    %v6743 = vunpack.c.l.b16 %v6448
    %v6744 = vunpack.c.l.b16 %v6449
    %v6745 = vunpack.c.l.b16 %v6450
    %v6746 = vunpack.c.l.b16 %v6451
    %v6747 = vunpack.c.l.b16 %v6452
    %v6748 = vunpack.c.l.b16 %v6453
    %v6749 = vunpack.c.l.b16 %v6454
    %v6750 = vunpack.c.l.b16 %v6455
    %v6751 = vunpack.c.l.b16 %v6456
    %v6752 = vunpack.c.l.b16 %v6457
    %v6753 = vunpack.c.l.b16 %v6458
    %v6754 = vunpack.c.l.b16 %v6459
    %v6755 = vunpack.c.l.b16 %v6460
    %v6756 = vunpack.c.l.b16 %v6461
    %v6757 = vunpack.c.l.b16 %v6462
    %v6758 = vunpack.c.l.b16 %v6463
    %v6759 = vunpack.c.l.b16 %v6464
    %v6760 = vunpack.c.l.b16 %v6465
    %v6761 = vunpack.c.l.b16 %v6466
    %v6762 = vunpack.c.l.b16 %v6467
    %v6763 = vunpack.c.l.b16 %v6468
    %v6764 = vunpack.c.l.b16 %v6469
    %v6765 = vunpack.c.l.b16 %v6470
    %v6766 = vunpack.c.l.b16 %v6471
    %v6767 = vunpack.c.l.b16 %v6472
    %v6768 = vunpack.c.l.b16 %v6473
    %v6769 = vunpack.c.l.b16 %v6474
    %v6770 = vunpack.c.l.b16 %v6475
    %v6771 = vunpack.c.l.b16 %v6476
    %v6772 = vunpack.c.l.b16 %v6477
    %v6773 = vunpack.c.l.b16 %v6478
    %v6774 = vunpack.c.l.b16 %v6479
    %v6775 = vunpack.c.l.b16 %v6480
    %v6776 = vunpack.c.l.b16 %v6481
    %v6777 = vunpack.c.l.b16 %v6482
    %v6778 = vunpack.c.l.b16 %v6483
    %v6779 = vunpack.c.l.b16 %v6484
    %v6780 = vunpack.c.l.b16 %v6485
    %v6781 = vunpack.c.l.b16 %v6486
    %v6782 = vunpack.c.l.b16 %v6487
    %v6783 = vunpack.c.l.b16 %v6488
    %v6784 = vunpack.c.l.b16 %v6489
    %v6785 = vpack.c.b16 %v6642, %v6641
    %v6786 = vpack.c.b16 %v6644, %v6643
    %v6787 = vpack.c.b16 %v6646, %v6645
    %v6788 = vpack.c.b16 %v6648, %v6647
    %v6789 = vpack.c.b16 %v6650, %v6649
    %v6790 = vpack.c.b16 %v6652, %v6651
    %v6791 = vpack.c.b16 %v6654, %v6653
    %v6792 = vpack.c.b16 %v6656, %v6655
    %v6793 = vpack.c.b16 %v6658, %v6657
    %v6794 = vpack.c.b16 %v6660, %v6659
    %v6795 = vpack.c.b16 %v6662, %v6661
    %v6796 = vpack.c.b16 %v6664, %v6663
    %v6797 = vpack.c.b16 %v6666, %v6665
    %v6798 = vpack.c.b16 %v6668, %v6667
    %v6799 = vpack.c.b16 %v6670, %v6669
    %v6800 = vpack.c.b16 %v6672, %v6671
    %v6801 = vpack.c.b16 %v6674, %v6673
    %v6802 = vpack.c.b16 %v6676, %v6675
    %v6803 = vpack.c.b16 %v6678, %v6677
    %v6804 = vpack.c.b16 %v6680, %v6679
    %v6805 = vpack.c.b16 %v6682, %v6681
    %v6806 = vpack.c.b16 %v6684, %v6683
    %v6807 = vpack.c.b16 %v6686, %v6685
    %v6808 = vpack.c.b16 %v6688, %v6687
    %v6809 = vpack.c.b16 %v6690, %v6689
    %v6810 = vpack.c.b16 %v6692, %v6691
    %v6811 = vpack.c.b16 %v6694, %v6693
    %v6812 = vpack.c.b16 %v6696, %v6695
    %v6813 = vpack.c.b16 %v6698, %v6697
    %v6814 = vpack.c.b16 %v6700, %v6699
    %v6815 = vpack.c.b16 %v6702, %v6701
    %v6816 = vpack.c.b16 %v6704, %v6703
    %v6817 = vpack.c.b16 %v6706, %v6705
    %v6818 = vpack.c.b16 %v6708, %v6707
    %v6819 = vpack.c.b16 %v6710, %v6709
    %v6820 = vpack.c.b16 %v6712, %v6711
    %v6821 = vpack.c.b16 %v6714, %v6713
    %v6822 = vpack.c.b16 %v6716, %v6715
    %v6823 = vpack.c.b16 %v6718, %v6717
    %v6824 = vpack.c.b16 %v6720, %v6719
    %v6825 = vpack.c.b16 %v6722, %v6721
    %v6826 = vpack.c.b16 %v6724, %v6723
    %v6827 = vpack.c.b16 %v6726, %v6725
    %v6828 = vpack.c.b16 %v6728, %v6727
    %v6829 = vpack.c.b16 %v6730, %v6729
    %v6830 = vpack.c.b16 %v6732, %v6731
    %v6831 = vpack.c.b16 %v6734, %v6733
    %v6832 = vpack.c.b16 %v6736, %v6735
    %v6833 = vpack.c.b16 %v6738, %v6737
    %v6834 = vpack.c.b16 %v6740, %v6739
    %v6835 = vpack.c.b16 %v6742, %v6741
    %v6836 = vpack.c.b16 %v6744, %v6743
    %v6837 = vpack.c.b16 %v6746, %v6745
    %v6838 = vpack.c.b16 %v6748, %v6747
    %v6839 = vpack.c.b16 %v6750, %v6749
    %v6840 = vpack.c.b16 %v6752, %v6751
    %v6841 = vpack.c.b16 %v6754, %v6753
    %v6842 = vpack.c.b16 %v6756, %v6755
    %v6843 = vpack.c.b16 %v6758, %v6757
    %v6844 = vpack.c.b16 %v6760, %v6759
    %v6845 = vpack.c.b16 %v6762, %v6761
    %v6846 = vpack.c.b16 %v6764, %v6763
    %v6847 = vpack.c.b16 %v6766, %v6765
    %v6848 = vpack.c.b16 %v6768, %v6767
    %v6849 = vpack.c.b16 %v6770, %v6769
    %v6850 = vpack.c.b16 %v6772, %v6771
    %v6851 = vpack.c.b16 %v6774, %v6773
    %v6852 = vpack.c.b16 %v6776, %v6775
    %v6853 = vpack.c.b16 %v6778, %v6777
    %v6854 = vpack.c.b16 %v6780, %v6779
    %v6855 = vpack.c.b16 %v6782, %v6781
    %v6856 = vpack.c.b16 %v6784, %v6783
    %6929 = vmatprep.subr.bf16.mxu0 0
    %6930 = vmatpush1.bf16.msra.mxu0 %v6785
    %6931 = vmatprep.subr.bf16.mxu0 0
    %6932 = vmatpush1.bf16.msra.mxu0 %v6786
    %6933 = vmatprep.subr.bf16.mxu0 0
    %6934 = vmatpush1.bf16.msra.mxu0 %v6787
    %6935 = vmatprep.subr.bf16.mxu0 0
    %6936 = vmatpush1.bf16.msra.mxu0 %v6788
    %6937 = vmatprep.subr.bf16.mxu0 0
    %6938 = vmatpush1.bf16.msra.mxu0 %v6789
    %6939 = vmatprep.subr.bf16.mxu0 0
    %6940 = vmatpush1.bf16.msra.mxu0 %v6790
    %6941 = vmatprep.subr.bf16.mxu0 0
    %6942 = vmatpush1.bf16.msra.mxu0 %v6791
    %6943 = vmatprep.subr.bf16.mxu0 0
    %6944 = vmatpush1.bf16.msra.mxu0 %v6792
    %6945 = vmatprep.subr.bf16.mxu0 0
    %6946 = vmatpush1.bf16.msra.mxu0 %v6793
    %6947 = vmatprep.subr.bf16.mxu0 0
    %6948 = vmatpush1.bf16.msra.mxu0 %v6794
    %6949 = vmatprep.subr.bf16.mxu0 0
    %6950 = vmatpush1.bf16.msra.mxu0 %v6795
    %6951 = vmatprep.subr.bf16.mxu0 0
    %6952 = vmatpush1.bf16.msra.mxu0 %v6796
    %6953 = vmatprep.subr.bf16.mxu0 0
    %6954 = vmatpush1.bf16.msra.mxu0 %v6797
    %6955 = vmatprep.subr.bf16.mxu0 0
    %6956 = vmatpush1.bf16.msra.mxu0 %v6798
    %6957 = vmatprep.subr.bf16.mxu0 0
    %6958 = vmatpush1.bf16.msra.mxu0 %v6799
    %6959 = vmatprep.subr.bf16.mxu0 0
    %6960 = vmatpush1.bf16.msra.mxu0 %v6800
    %6961 = vmatprep.mubr.bf16.mxu0 %v6338
    %6962 = vmatmul.mubr.bf16.gmra.mrb[0].mxu0 %v6337
    %v6963 = vpop.f32.mrb[0].mxu0
    %v6964 = vadd.f32 %v6495, %v6963
    %v6965 = vpop.f32.mrb[0].mxu0
    %v6966 = vpop.f32.mrb[0].mxu0
    %v6967 = vpop.f32.mrb[0].mxu0
    %6968 = vdwg.mxu0
    %6969 = vmatprep.subr.bf16.mxu0 0
    %6970 = vmatpush1.bf16.msra.mxu0 %v6801
    %6971 = vmatprep.subr.bf16.mxu0 0
    %6972 = vmatpush1.bf16.msra.mxu0 %v6802
    %6973 = vmatprep.subr.bf16.mxu0 0
    %6974 = vmatpush1.bf16.msra.mxu0 %v6803
    %6975 = vmatprep.subr.bf16.mxu0 0
    %6976 = vmatpush1.bf16.msra.mxu0 %v6804
    %6977 = vmatprep.subr.bf16.mxu0 0
    %6978 = vmatpush1.bf16.msra.mxu0 %v6805
    %6979 = vmatprep.subr.bf16.mxu0 0
    %6980 = vmatpush1.bf16.msra.mxu0 %v6806
    %6981 = vmatprep.subr.bf16.mxu0 0
    %6982 = vmatpush1.bf16.msra.mxu0 %v6807
    %6983 = vmatprep.subr.bf16.mxu0 0
    %6984 = vmatpush1.bf16.msra.mxu0 %v6808
    %6985 = vmatprep.subr.bf16.mxu0 0
    %6986 = vmatpush1.bf16.msra.mxu0 %v6809
    %6987 = vmatprep.subr.bf16.mxu0 0
    %6988 = vmatpush1.bf16.msra.mxu0 %v6810
    %6989 = vmatprep.subr.bf16.mxu0 0
    %6990 = vmatpush1.bf16.msra.mxu0 %v6811
    %6991 = vmatprep.subr.bf16.mxu0 0
    %6992 = vmatpush1.bf16.msra.mxu0 %v6812
    %6993 = vmatprep.subr.bf16.mxu0 0
    %6994 = vmatpush1.bf16.msra.mxu0 %v6813
    %6995 = vmatprep.subr.bf16.mxu0 0
    %6996 = vmatpush1.bf16.msra.mxu0 %v6814
    %6997 = vmatprep.subr.bf16.mxu0 0
    %6998 = vmatpush1.bf16.msra.mxu0 %v6815
    %6999 = vmatprep.subr.bf16.mxu0 0
    %7000 = vmatpush1.bf16.msra.mxu0 %v6816
    %7001 = vmatprep.mubr.bf16.mxu0 %v6340
    %7002 = vmatmul.mubr.bf16.gmra.mrb[0].mxu0 %v6339
    %v7003 = vpop.f32.mrb[0].mxu0
    %v7004 = vadd.f32 %v6964, %v7003
    %v7005 = vpop.f32.mrb[0].mxu0
    %v7006 = vpop.f32.mrb[0].mxu0
    %v7007 = vpop.f32.mrb[0].mxu0
    %7008 = vdwg.mxu0
    %7009 = vmatprep.subr.bf16.mxu0 0
    %7010 = vmatpush1.bf16.msra.mxu0 %v6817
    %7011 = vmatprep.subr.bf16.mxu0 0
    %7012 = vmatpush1.bf16.msra.mxu0 %v6818
    %7013 = vmatprep.subr.bf16.mxu0 0
    %7014 = vmatpush1.bf16.msra.mxu0 %v6819
    %7015 = vmatprep.subr.bf16.mxu0 0
    %7016 = vmatpush1.bf16.msra.mxu0 %v6820
    %7017 = vmatprep.subr.bf16.mxu0 0
    %7018 = vmatpush1.bf16.msra.mxu0 %v6821
    %7019 = vmatprep.subr.bf16.mxu0 0
    %7020 = vmatpush1.bf16.msra.mxu0 %v6822
    %7021 = vmatprep.subr.bf16.mxu0 0
    %7022 = vmatpush1.bf16.msra.mxu0 %v6823
    %7023 = vmatprep.subr.bf16.mxu0 0
    %7024 = vmatpush1.bf16.msra.mxu0 %v6824
    %7025 = vmatprep.subr.bf16.mxu0 0
    %7026 = vmatpush1.bf16.msra.mxu0 %v6825
    %7027 = vmatprep.subr.bf16.mxu0 0
    %7028 = vmatpush1.bf16.msra.mxu0 %v6826
    %7029 = vmatprep.subr.bf16.mxu0 0
    %7030 = vmatpush1.bf16.msra.mxu0 %v6827
    %7031 = vmatprep.subr.bf16.mxu0 0
    %7032 = vmatpush1.bf16.msra.mxu0 %v6828
    %7033 = vmatprep.subr.bf16.mxu0 0
    %7034 = vmatpush1.bf16.msra.mxu0 %v6829
    %7035 = vmatprep.subr.bf16.mxu0 0
    %7036 = vmatpush1.bf16.msra.mxu0 %v6830
    %7037 = vmatprep.subr.bf16.mxu0 0
    %7038 = vmatpush1.bf16.msra.mxu0 %v6831
    %7039 = vmatprep.subr.bf16.mxu0 0
    %7040 = vmatpush1.bf16.msra.mxu0 %v6832
    %7041 = vmatprep.mubr.bf16.mxu0 %v6342
    %7042 = vmatmul.mubr.bf16.gmra.mrb[0].mxu0 %v6341
    %v7043 = vpop.f32.mrb[0].mxu0
    %v7044 = vadd.f32 %v7004, %v7043
    %v7045 = vpop.f32.mrb[0].mxu0
    %v7046 = vpop.f32.mrb[0].mxu0
    %v7047 = vpop.f32.mrb[0].mxu0
    %7048 = vdwg.mxu0
    %7049 = vmatprep.subr.bf16.mxu0 0
    %7050 = vmatpush1.bf16.msra.mxu0 %v6833
    %7051 = vmatprep.subr.bf16.mxu0 0
    %7052 = vmatpush1.bf16.msra.mxu0 %v6834
    %7053 = vmatprep.subr.bf16.mxu0 0
    %7054 = vmatpush1.bf16.msra.mxu0 %v6835
    %7055 = vmatprep.subr.bf16.mxu0 0
    %7056 = vmatpush1.bf16.msra.mxu0 %v6836
    %7057 = vmatprep.subr.bf16.mxu0 0
    %7058 = vmatpush1.bf16.msra.mxu0 %v6837
    %7059 = vmatprep.subr.bf16.mxu0 0
    %7060 = vmatpush1.bf16.msra.mxu0 %v6838
    %7061 = vmatprep.subr.bf16.mxu0 0
    %7062 = vmatpush1.bf16.msra.mxu0 %v6839
    %7063 = vmatprep.subr.bf16.mxu0 0
    %7064 = vmatpush1.bf16.msra.mxu0 %v6840
    %7065 = vmatprep.subr.bf16.mxu0 0
    %7066 = vmatpush1.bf16.msra.mxu0 %v6841
    %7067 = vmatprep.subr.bf16.mxu0 0
    %7068 = vmatpush1.bf16.msra.mxu0 %v6842
    %7069 = vmatprep.subr.bf16.mxu0 0
    %7070 = vmatpush1.bf16.msra.mxu0 %v6843
    %7071 = vmatprep.subr.bf16.mxu0 0
    %7072 = vmatpush1.bf16.msra.mxu0 %v6844
    %7073 = vmatprep.subr.bf16.mxu0 0
    %7074 = vmatpush1.bf16.msra.mxu0 %v6845
    %7075 = vmatprep.subr.bf16.mxu0 0
    %7076 = vmatpush1.bf16.msra.mxu0 %v6846
    %7077 = vmatprep.subr.bf16.mxu0 0
    %7078 = vmatpush1.bf16.msra.mxu0 %v6847
    %7079 = vmatprep.subr.bf16.mxu0 0
    %7080 = vmatpush1.bf16.msra.mxu0 %v6848
    %7081 = vmatprep.mubr.bf16.mxu0 %v6344
    %7082 = vmatmul.mubr.bf16.gmra.mrb[0].mxu0 %v6343
    %v7083 = vpop.f32.mrb[0].mxu0
    %v7084 = vadd.f32 %v7044, %v7083
    %v7085 = vpop.f32.mrb[0].mxu0
    %v7086 = vpop.f32.mrb[0].mxu0
    %v7087 = vpop.f32.mrb[0].mxu0
    %7088 = vdwg.mxu0
    %7089 = vmatprep.subr.bf16.mxu0 0
    %7090 = vmatpush1.bf16.msra.mxu0 %v6849
    %7091 = vmatprep.subr.bf16.mxu0 0
    %7092 = vmatpush1.bf16.msra.mxu0 %v6850
    %7093 = vmatprep.subr.bf16.mxu0 0
    %7094 = vmatpush1.bf16.msra.mxu0 %v6851
    %7095 = vmatprep.subr.bf16.mxu0 0
    %7096 = vmatpush1.bf16.msra.mxu0 %v6852
    %7097 = vmatprep.subr.bf16.mxu0 0
    %7098 = vmatpush1.bf16.msra.mxu0 %v6853
    %7099 = vmatprep.subr.bf16.mxu0 0
    %7100 = vmatpush1.bf16.msra.mxu0 %v6854
    %7101 = vmatprep.subr.bf16.mxu0 0
    %7102 = vmatpush1.bf16.msra.mxu0 %v6855
    %7103 = vmatprep.subr.bf16.mxu0 0
    %7104 = vmatpush1.bf16.msra.mxu0 %v6856
    %7105 = vmatprep.subr.bf16.mxu0 0
    %7106 = vmatpush1.bf16.msra.mxu0 0
    %7107 = vmatprep.subr.bf16.mxu0 0
    %7108 = vmatpush1.bf16.msra.mxu0 0
    %7109 = vmatprep.subr.bf16.mxu0 0
    %7110 = vmatpush1.bf16.msra.mxu0 0
    %7111 = vmatprep.subr.bf16.mxu0 0
    %7112 = vmatpush1.bf16.msra.mxu0 0
    %7113 = vmatprep.subr.bf16.mxu0 0
    %7114 = vmatpush1.bf16.msra.mxu0 0
    %7115 = vmatprep.subr.bf16.mxu0 0
    %7116 = vmatpush1.bf16.msra.mxu0 0
    %7117 = vmatprep.subr.bf16.mxu0 0
    %7118 = vmatpush1.bf16.msra.mxu0 0
    %7119 = vmatprep.subr.bf16.mxu0 0
    %7120 = vmatpush1.bf16.msra.mxu0 0
    %7121 = vmatprep.mubr.bf16.mxu0 0
    %7122 = vmatmul.mubr.bf16.gmra.mrb[0].mxu0 %v6345
    %v7123 = vpop.f32.mrb[0].mxu0
    %v7124 = vadd.f32 %v7084, %v7123
    %v7125 = vpop.f32.mrb[0].mxu0
    %v7126 = vpop.f32.mrb[0].mxu0
    %v7127 = vpop.f32.mrb[0].mxu0
    %7128 = vdwg.mxu0
    %v7129 = vpack.c.bf16 %v7124, %v7124
    %v7130 = vld [vmem:[%s39] sm:$0xf]
    %v7131 = vld [vmem:[%s39 + $0x4] sm:$0xf]
    %v7132 = vld [vmem:[%s39 + $0x8] sm:$0xf]
    %v7136 = vunpack.c.l.b16 %v7130
    %v7137 = vunpack.c.l.b16 %v7131
    %v7138 = vunpack.c.l.b16 %v7132
    %v7139 = vpack.c.b16 %v7137, %v7136
    %v7140 = vpack.c.b16 %v7138, %v7138
    %v7142 = vsel %vm6222, %v7139, 0
    %v7145 = vsel %vm6222, %v7140, 0
    %v7148 = vsel %vm1828, %v7129, 0
    %7150 = vmatprep.subr.bf16.mxu0 0
    %7151 = vmatpush1.bf16.msra.mxu0 %v7148
    %7152 = vmatprep.subr.bf16.mxu0 0
    %7153 = vmatpush1.bf16.msra.mxu0 0
    %7154 = vmatprep.subr.bf16.mxu0 0
    %7155 = vmatpush1.bf16.msra.mxu0 0
    %7156 = vmatprep.subr.bf16.mxu0 0
    %7157 = vmatpush1.bf16.msra.mxu0 0
    %7158 = vmatprep.subr.bf16.mxu0 0
    %7159 = vmatpush1.bf16.msra.mxu0 0
    %7160 = vmatprep.subr.bf16.mxu0 0
    %7161 = vmatpush1.bf16.msra.mxu0 0
    %7162 = vmatprep.subr.bf16.mxu0 0
    %7163 = vmatpush1.bf16.msra.mxu0 0
    %7164 = vmatprep.subr.bf16.mxu0 0
    %7165 = vmatpush1.bf16.msra.mxu0 0
    %7166 = vmatprep.subr.bf16.mxu0 0
    %7167 = vmatpush1.bf16.msra.mxu0 0
    %7168 = vmatprep.subr.bf16.mxu0 0
    %7169 = vmatpush1.bf16.msra.mxu0 0
    %7170 = vmatprep.subr.bf16.mxu0 0
    %7171 = vmatpush1.bf16.msra.mxu0 0
    %7172 = vmatprep.subr.bf16.mxu0 0
    %7173 = vmatpush1.bf16.msra.mxu0 0
    %7174 = vmatprep.subr.bf16.mxu0 0
    %7175 = vmatpush1.bf16.msra.mxu0 0
    %7176 = vmatprep.subr.bf16.mxu0 0
    %7177 = vmatpush1.bf16.msra.mxu0 0
    %7178 = vmatprep.subr.bf16.mxu0 0
    %7179 = vmatpush1.bf16.msra.mxu0 0
    %7180 = vmatprep.subr.bf16.mxu0 0
    %7181 = vmatpush1.bf16.msra.mxu0 0
    %7182 = vmatprep.mubr.bf16.mxu0 0
    %7183 = vmatmul.mubr.bf16.gmra.mrb[0].mxu0 %v7142
    %v7184 = vpop.f32.mrb[0].mxu0
    %v7185 = vadd.f32 0.0, %v7184
    %v7186 = vpop.f32.mrb[0].mxu0
    %v7187 = vpop.f32.mrb[0].mxu0
    %v7188 = vadd.f32 0.0, %v7187
    %v7189 = vpop.f32.mrb[0].mxu0
    %7190 = vmatprep.mubr.bf16.mxu0 0
    %7191 = vmatmul.mubr.bf16.gmra.mrb[0].mxu0 %v7145
    %v7192 = vpop.f32.mrb[0].mxu0
    %v7193 = vadd.f32 0.0, %v7192
    %v7194 = vpop.f32.mrb[0].mxu0
    %v7195 = vpop.f32.mrb[0].mxu0
    %v7196 = vpop.f32.mrb[0].mxu0
    %7197 = vdwg.mxu0
    %v7198 = vpack.c.bf16 %v7185, %v7185
    %v7199 = vpack.c.bf16 %v7188, %v7188
    %v7200 = vpack.c.bf16 %v7193, %v7193
    %v7201 = vld [vmem:[#allocation10] sm:$0xff]
    %v7202 = vld [vmem:[#allocation10 + $0x8] sm:$0xf]
    %v7203 = vld [vmem:[#allocation10 + $0xc] sm:$0xff]
    %v7204 = vld [vmem:[#allocation10 + $0x14] sm:$0xf]
    %v7205 = vld [vmem:[#allocation10 + $0x18] sm:$0xff]
    %v7206 = vld [vmem:[#allocation10 + $0x20] sm:$0xf]
    %v7207 = vld [vmem:[#allocation10 + $0x24] sm:$0xff]
    %v7208 = vld [vmem:[#allocation10 + $0x2c] sm:$0xf]
    %v7209 = vld [vmem:[#allocation10 + $0x30] sm:$0xff]
    %v7210 = vld [vmem:[#allocation10 + $0x38] sm:$0xf]
    %v7211 = vld [vmem:[#allocation10 + $0x3c] sm:$0xff]
    %v7212 = vld [vmem:[#allocation10 + $0x44] sm:$0xf]
    %v7213 = vld [vmem:[#allocation10 + $0x48] sm:$0xff]
    %v7214 = vld [vmem:[#allocation10 + $0x50] sm:$0xf]
    %v7215 = vld [vmem:[#allocation10 + $0x54] sm:$0xff]
    %v7216 = vld [vmem:[#allocation10 + $0x5c] sm:$0xf]
    %v7217 = vld [vmem:[#allocation10 + $0x60] sm:$0xff]
    %v7218 = vld [vmem:[#allocation10 + $0x68] sm:$0xf]
    %v7219 = vld [vmem:[#allocation10 + $0x6c] sm:$0xff]
    %v7220 = vld [vmem:[#allocation10 + $0x74] sm:$0xf]
    %v7221 = vld [vmem:[#allocation10 + $0x78] sm:$0xff]
    %v7222 = vld [vmem:[#allocation10 + $0x80] sm:$0xf]
    %v7223 = vld [vmem:[#allocation10 + $0x84] sm:$0xff]
    %v7224 = vld [vmem:[#allocation10 + $0x8c] sm:$0xf]
    %v7225 = vld [vmem:[#allocation10 + $0x90] sm:$0xff]
    %v7226 = vld [vmem:[#allocation10 + $0x98] sm:$0xf]
    %v7227 = vld [vmem:[#allocation10 + $0x9c] sm:$0xff]
    %v7228 = vld [vmem:[#allocation10 + $0xa4] sm:$0xf]
    %v7229 = vld [vmem:[#allocation10 + $0xa8] sm:$0xff]
    %v7230 = vld [vmem:[#allocation10 + $0xb0] sm:$0xf]
    %v7231 = vld [vmem:[#allocation10 + $0xb4] sm:$0xff]
    %v7232 = vld [vmem:[#allocation10 + $0xbc] sm:$0xf]
    %v7233 = vld [vmem:[#allocation10 + $0xc0] sm:$0xff]
    %v7234 = vld [vmem:[#allocation10 + $0xc8] sm:$0xf]
    %v7235 = vld [vmem:[#allocation10 + $0xcc] sm:$0xff]
    %v7236 = vld [vmem:[#allocation10 + $0xd4] sm:$0xf]
    %v7237 = vld [vmem:[#allocation10 + $0xd8] sm:$0xff]
    %v7238 = vld [vmem:[#allocation10 + $0xe0] sm:$0xf]
    %v7239 = vld [vmem:[#allocation10 + $0xe4] sm:$0xff]
    %v7240 = vld [vmem:[#allocation10 + $0xec] sm:$0xf]
    %v7241 = vld [vmem:[#allocation10 + $0xf0] sm:$0xff]
    %v7242 = vld [vmem:[#allocation10 + $0xf8] sm:$0xf]
    %v7243 = vld [vmem:[#allocation10 + $0xfc] sm:$0xff]
    %v7244 = vld [vmem:[#allocation10 + $0x104] sm:$0xf]
    %v7245 = vld [vmem:[#allocation10 + $0x108] sm:$0xff]
    %v7246 = vld [vmem:[#allocation10 + $0x110] sm:$0xf]
    %v7247 = vld [vmem:[#allocation10 + $0x114] sm:$0xff]
    %v7248 = vld [vmem:[#allocation10 + $0x11c] sm:$0xf]
    %v7249 = vld [vmem:[#allocation10 + $0x120] sm:$0xff]
    %v7250 = vld [vmem:[#allocation10 + $0x128] sm:$0xf]
    %v7251 = vld [vmem:[#allocation10 + $0x12c] sm:$0xff]
    %v7252 = vld [vmem:[#allocation10 + $0x134] sm:$0xf]
    %v7253 = vld [vmem:[#allocation10 + $0x138] sm:$0xff]
    %v7254 = vld [vmem:[#allocation10 + $0x140] sm:$0xf]
    %v7255 = vld [vmem:[#allocation10 + $0x144] sm:$0xff]
    %v7256 = vld [vmem:[#allocation10 + $0x14c] sm:$0xf]
    %v7257 = vld [vmem:[#allocation10 + $0x150] sm:$0xff]
    %v7258 = vld [vmem:[#allocation10 + $0x158] sm:$0xf]
    %v7259 = vld [vmem:[#allocation10 + $0x15c] sm:$0xff]
    %v7260 = vld [vmem:[#allocation10 + $0x164] sm:$0xf]
    %v7261 = vld [vmem:[#allocation10 + $0x168] sm:$0xff]
    %v7262 = vld [vmem:[#allocation10 + $0x170] sm:$0xf]
    %v7263 = vld [vmem:[#allocation10 + $0x174] sm:$0xff]
    %v7264 = vld [vmem:[#allocation10 + $0x17c] sm:$0xf]
    %v7265 = vld [vmem:[#allocation10 + $0x180] sm:$0xff]
    %v7266 = vld [vmem:[#allocation10 + $0x188] sm:$0xf]
    %v7267 = vld [vmem:[#allocation10 + $0x18c] sm:$0xff]
    %v7268 = vld [vmem:[#allocation10 + $0x194] sm:$0xf]
    %v7269 = vld [vmem:[#allocation10 + $0x198] sm:$0xff]
    %v7270 = vld [vmem:[#allocation10 + $0x1a0] sm:$0xf]
    %v7271 = vld [vmem:[#allocation10 + $0x1a4] sm:$0xff]
    %v7272 = vld [vmem:[#allocation10 + $0x1ac] sm:$0xf]
    %v7273 = vld [vmem:[#allocation10 + $0x1b0] sm:$0xff]
    %v7274 = vld [vmem:[#allocation10 + $0x1b8] sm:$0xf]
    %v7275 = vld [vmem:[#allocation10 + $0x1bc] sm:$0xff]
    %v7276 = vld [vmem:[#allocation10 + $0x1c4] sm:$0xf]
    %v7277 = vld [vmem:[#allocation10 + $0x1c8] sm:$0xff]
    %v7278 = vld [vmem:[#allocation10 + $0x1d0] sm:$0xf]
    %v7279 = vld [vmem:[#allocation10 + $0x1d4] sm:$0xff]
    %v7280 = vld [vmem:[#allocation10 + $0x1dc] sm:$0xf]
    %v7281 = vld [vmem:[#allocation10 + $0x1e0] sm:$0xff]
    %v7282 = vld [vmem:[#allocation10 + $0x1e8] sm:$0xf]
    %v7283 = vld [vmem:[#allocation10 + $0x1ec] sm:$0xff]
    %v7284 = vld [vmem:[#allocation10 + $0x1f4] sm:$0xf]
    %v7285 = vld [vmem:[#allocation10 + $0x1f8] sm:$0xff]
    %v7286 = vld [vmem:[#allocation10 + $0x200] sm:$0xf]
    %v7287 = vld [vmem:[#allocation10 + $0x204] sm:$0xff]
    %v7288 = vld [vmem:[#allocation10 + $0x20c] sm:$0xf]
    %v7289 = vld [vmem:[#allocation10 + $0x210] sm:$0xff]
    %v7290 = vld [vmem:[#allocation10 + $0x218] sm:$0xf]
    %v7291 = vld [vmem:[#allocation10 + $0x21c] sm:$0xff]
    %v7292 = vld [vmem:[#allocation10 + $0x224] sm:$0xf]
    %v7293 = vld [vmem:[#allocation10 + $0x228] sm:$0xff]
    %v7294 = vld [vmem:[#allocation10 + $0x230] sm:$0xf]
    %v7295 = vld [vmem:[#allocation10 + $0x234] sm:$0xff]
    %v7296 = vld [vmem:[#allocation10 + $0x23c] sm:$0xf]
    %v7297 = vld [vmem:[%s43] sm:$0xff]
    %v7298 = vld [vmem:[%s43 + $0x8] sm:$0xff]
    %v7299 = vld [vmem:[%s43 + $0x10] sm:$0xff]
    %v7396 = vunpack.c.l.b16 %v7201
    %v7397 = vunpack.c.h.b16 %v7201
    %v7398 = vunpack.c.l.b16 %v7202
    %v7399 = vunpack.c.l.b16 %v7203
    %v7400 = vunpack.c.h.b16 %v7203
    %v7401 = vunpack.c.l.b16 %v7204
    %v7402 = vunpack.c.l.b16 %v7205
    %v7403 = vunpack.c.h.b16 %v7205
    %v7404 = vunpack.c.l.b16 %v7206
    %v7405 = vunpack.c.l.b16 %v7207
    %v7406 = vunpack.c.h.b16 %v7207
    %v7407 = vunpack.c.l.b16 %v7208
    %v7408 = vunpack.c.l.b16 %v7209
    %v7409 = vunpack.c.h.b16 %v7209
    %v7410 = vunpack.c.l.b16 %v7210
    %v7411 = vunpack.c.l.b16 %v7211
    %v7412 = vunpack.c.h.b16 %v7211
    %v7413 = vunpack.c.l.b16 %v7212
    %v7414 = vunpack.c.l.b16 %v7213
    %v7415 = vunpack.c.h.b16 %v7213
    %v7416 = vunpack.c.l.b16 %v7214
    %v7417 = vunpack.c.l.b16 %v7215
    %v7418 = vunpack.c.h.b16 %v7215
    %v7419 = vunpack.c.l.b16 %v7216
    %v7420 = vunpack.c.l.b16 %v7217
    %v7421 = vunpack.c.h.b16 %v7217
    %v7422 = vunpack.c.l.b16 %v7218
    %v7423 = vunpack.c.l.b16 %v7219
    %v7424 = vunpack.c.h.b16 %v7219
    %v7425 = vunpack.c.l.b16 %v7220
    %v7426 = vunpack.c.l.b16 %v7221
    %v7427 = vunpack.c.h.b16 %v7221
    %v7428 = vunpack.c.l.b16 %v7222
    %v7429 = vunpack.c.l.b16 %v7223
    %v7430 = vunpack.c.h.b16 %v7223
    %v7431 = vunpack.c.l.b16 %v7224
    %v7432 = vunpack.c.l.b16 %v7225
    %v7433 = vunpack.c.h.b16 %v7225
    %v7434 = vunpack.c.l.b16 %v7226
    %v7435 = vunpack.c.l.b16 %v7227
    %v7436 = vunpack.c.h.b16 %v7227
    %v7437 = vunpack.c.l.b16 %v7228
    %v7438 = vunpack.c.l.b16 %v7229
    %v7439 = vunpack.c.h.b16 %v7229
    %v7440 = vunpack.c.l.b16 %v7230
    %v7441 = vunpack.c.l.b16 %v7231
    %v7442 = vunpack.c.h.b16 %v7231
    %v7443 = vunpack.c.l.b16 %v7232
    %v7444 = vunpack.c.l.b16 %v7233
    %v7445 = vunpack.c.h.b16 %v7233
    %v7446 = vunpack.c.l.b16 %v7234
    %v7447 = vunpack.c.l.b16 %v7235
    %v7448 = vunpack.c.h.b16 %v7235
    %v7449 = vunpack.c.l.b16 %v7236
    %v7450 = vunpack.c.l.b16 %v7237
    %v7451 = vunpack.c.h.b16 %v7237
    %v7452 = vunpack.c.l.b16 %v7238
    %v7453 = vunpack.c.l.b16 %v7239
    %v7454 = vunpack.c.h.b16 %v7239
    %v7455 = vunpack.c.l.b16 %v7240
    %v7456 = vunpack.c.l.b16 %v7241
    %v7457 = vunpack.c.h.b16 %v7241
    %v7458 = vunpack.c.l.b16 %v7242
    %v7459 = vunpack.c.l.b16 %v7243
    %v7460 = vunpack.c.h.b16 %v7243
    %v7461 = vunpack.c.l.b16 %v7244
    %v7462 = vunpack.c.l.b16 %v7245
    %v7463 = vunpack.c.h.b16 %v7245
    %v7464 = vunpack.c.l.b16 %v7246
    %v7465 = vunpack.c.l.b16 %v7247
    %v7466 = vunpack.c.h.b16 %v7247
    %v7467 = vunpack.c.l.b16 %v7248
    %v7468 = vunpack.c.l.b16 %v7249
    %v7469 = vunpack.c.h.b16 %v7249
    %v7470 = vunpack.c.l.b16 %v7250
    %v7471 = vunpack.c.l.b16 %v7251
    %v7472 = vunpack.c.h.b16 %v7251
    %v7473 = vunpack.c.l.b16 %v7252
    %v7474 = vunpack.c.l.b16 %v7253
    %v7475 = vunpack.c.h.b16 %v7253
    %v7476 = vunpack.c.l.b16 %v7254
    %v7477 = vunpack.c.l.b16 %v7255
    %v7478 = vunpack.c.h.b16 %v7255
    %v7479 = vunpack.c.l.b16 %v7256
    %v7480 = vunpack.c.l.b16 %v7257
    %v7481 = vunpack.c.h.b16 %v7257
    %v7482 = vunpack.c.l.b16 %v7258
    %v7483 = vunpack.c.l.b16 %v7259
    %v7484 = vunpack.c.h.b16 %v7259
    %v7485 = vunpack.c.l.b16 %v7260
    %v7486 = vunpack.c.l.b16 %v7261
    %v7487 = vunpack.c.h.b16 %v7261
    %v7488 = vunpack.c.l.b16 %v7262
    %v7489 = vunpack.c.l.b16 %v7263
    %v7490 = vunpack.c.h.b16 %v7263
    %v7491 = vunpack.c.l.b16 %v7264
    %v7492 = vunpack.c.l.b16 %v7265
    %v7493 = vunpack.c.h.b16 %v7265
    %v7494 = vunpack.c.l.b16 %v7266
    %v7495 = vunpack.c.l.b16 %v7267
    %v7496 = vunpack.c.h.b16 %v7267
    %v7497 = vunpack.c.l.b16 %v7268
    %v7498 = vunpack.c.l.b16 %v7269
    %v7499 = vunpack.c.h.b16 %v7269
    %v7500 = vunpack.c.l.b16 %v7270
    %v7501 = vunpack.c.l.b16 %v7271
    %v7502 = vunpack.c.h.b16 %v7271
    %v7503 = vunpack.c.l.b16 %v7272
    %v7504 = vunpack.c.l.b16 %v7273
    %v7505 = vunpack.c.h.b16 %v7273
    %v7506 = vunpack.c.l.b16 %v7274
    %v7507 = vunpack.c.l.b16 %v7275
    %v7508 = vunpack.c.h.b16 %v7275
    %v7509 = vunpack.c.l.b16 %v7276
    %v7510 = vunpack.c.l.b16 %v7277
    %v7511 = vunpack.c.h.b16 %v7277
    %v7512 = vunpack.c.l.b16 %v7278
    %v7513 = vunpack.c.l.b16 %v7279
    %v7514 = vunpack.c.h.b16 %v7279
    %v7515 = vunpack.c.l.b16 %v7280
    %v7516 = vunpack.c.l.b16 %v7281
    %v7517 = vunpack.c.h.b16 %v7281
    %v7518 = vunpack.c.l.b16 %v7282
    %v7519 = vunpack.c.l.b16 %v7283
    %v7520 = vunpack.c.h.b16 %v7283
    %v7521 = vunpack.c.l.b16 %v7284
    %v7522 = vunpack.c.l.b16 %v7285
    %v7523 = vunpack.c.h.b16 %v7285
    %v7524 = vunpack.c.l.b16 %v7286
    %v7525 = vunpack.c.l.b16 %v7287
    %v7526 = vunpack.c.h.b16 %v7287
    %v7527 = vunpack.c.l.b16 %v7288
    %v7528 = vunpack.c.l.b16 %v7289
    %v7529 = vunpack.c.h.b16 %v7289
    %v7530 = vunpack.c.l.b16 %v7290
    %v7531 = vunpack.c.l.b16 %v7291
    %v7532 = vunpack.c.h.b16 %v7291
    %v7533 = vunpack.c.l.b16 %v7292
    %v7534 = vunpack.c.l.b16 %v7293
    %v7535 = vunpack.c.h.b16 %v7293
    %v7536 = vunpack.c.l.b16 %v7294
    %v7537 = vunpack.c.l.b16 %v7295
    %v7538 = vunpack.c.h.b16 %v7295
    %v7539 = vunpack.c.l.b16 %v7296
    %v7540 = vpack.c.b16 %v7399, %v7396
    %v7541 = vpack.c.b16 %v7400, %v7397
    %v7542 = vpack.c.b16 %v7401, %v7398
    %v7543 = vpack.c.b16 %v7405, %v7402
    %v7544 = vpack.c.b16 %v7406, %v7403
    %v7545 = vpack.c.b16 %v7407, %v7404
    %v7546 = vpack.c.b16 %v7411, %v7408
    %v7547 = vpack.c.b16 %v7412, %v7409
    %v7548 = vpack.c.b16 %v7413, %v7410
    %v7549 = vpack.c.b16 %v7417, %v7414
    %v7550 = vpack.c.b16 %v7418, %v7415
    %v7551 = vpack.c.b16 %v7419, %v7416
    %v7552 = vpack.c.b16 %v7423, %v7420
    %v7553 = vpack.c.b16 %v7424, %v7421
    %v7554 = vpack.c.b16 %v7425, %v7422
    %v7555 = vpack.c.b16 %v7429, %v7426
    %v7556 = vpack.c.b16 %v7430, %v7427
    %v7557 = vpack.c.b16 %v7431, %v7428
    %v7558 = vpack.c.b16 %v7435, %v7432
    %v7559 = vpack.c.b16 %v7436, %v7433
    %v7560 = vpack.c.b16 %v7437, %v7434
    %v7561 = vpack.c.b16 %v7441, %v7438
    %v7562 = vpack.c.b16 %v7442, %v7439
    %v7563 = vpack.c.b16 %v7443, %v7440
    %v7564 = vpack.c.b16 %v7447, %v7444
    %v7565 = vpack.c.b16 %v7448, %v7445
    %v7566 = vpack.c.b16 %v7449, %v7446
    %v7567 = vpack.c.b16 %v7453, %v7450
    %v7568 = vpack.c.b16 %v7454, %v7451
    %v7569 = vpack.c.b16 %v7455, %v7452
    %v7570 = vpack.c.b16 %v7459, %v7456
    %v7571 = vpack.c.b16 %v7460, %v7457
    %v7572 = vpack.c.b16 %v7461, %v7458
    %v7573 = vpack.c.b16 %v7465, %v7462
    %v7574 = vpack.c.b16 %v7466, %v7463
    %v7575 = vpack.c.b16 %v7467, %v7464
    %v7576 = vpack.c.b16 %v7471, %v7468
    %v7577 = vpack.c.b16 %v7472, %v7469
    %v7578 = vpack.c.b16 %v7473, %v7470
    %v7579 = vpack.c.b16 %v7477, %v7474
    %v7580 = vpack.c.b16 %v7478, %v7475
    %v7581 = vpack.c.b16 %v7479, %v7476
    %v7582 = vpack.c.b16 %v7483, %v7480
    %v7583 = vpack.c.b16 %v7484, %v7481
    %v7584 = vpack.c.b16 %v7485, %v7482
    %v7585 = vpack.c.b16 %v7489, %v7486
    %v7586 = vpack.c.b16 %v7490, %v7487
    %v7587 = vpack.c.b16 %v7491, %v7488
    %v7588 = vpack.c.b16 %v7495, %v7492
    %v7589 = vpack.c.b16 %v7496, %v7493
    %v7590 = vpack.c.b16 %v7497, %v7494
    %v7591 = vpack.c.b16 %v7501, %v7498
    %v7592 = vpack.c.b16 %v7502, %v7499
    %v7593 = vpack.c.b16 %v7503, %v7500
    %v7594 = vpack.c.b16 %v7507, %v7504
    %v7595 = vpack.c.b16 %v7508, %v7505
    %v7596 = vpack.c.b16 %v7509, %v7506
    %v7597 = vpack.c.b16 %v7513, %v7510
    %v7598 = vpack.c.b16 %v7514, %v7511
    %v7599 = vpack.c.b16 %v7515, %v7512
    %v7600 = vpack.c.b16 %v7519, %v7516
    %v7601 = vpack.c.b16 %v7520, %v7517
    %v7602 = vpack.c.b16 %v7521, %v7518
    %v7603 = vpack.c.b16 %v7525, %v7522
    %v7604 = vpack.c.b16 %v7526, %v7523
    %v7605 = vpack.c.b16 %v7527, %v7524
    %v7606 = vpack.c.b16 %v7531, %v7528
    %v7607 = vpack.c.b16 %v7532, %v7529
    %v7608 = vpack.c.b16 %v7533, %v7530
    %v7609 = vpack.c.b16 %v7537, %v7534
    %v7610 = vpack.c.b16 %v7538, %v7535
    %v7611 = vpack.c.b16 %v7539, %v7536
    %7684 = vmatprep.subr.bf16.mxu0 %v7541
    %7685 = vmatpush1.bf16.msra.mxu0 %v7540
    %7686 = vmatprep.subr.bf16.mxu0 %v7544
    %7687 = vmatpush1.bf16.msra.mxu0 %v7543
    %7688 = vmatprep.subr.bf16.mxu0 %v7547
    %7689 = vmatpush1.bf16.msra.mxu0 %v7546
    %7690 = vmatprep.subr.bf16.mxu0 %v7550
    %7691 = vmatpush1.bf16.msra.mxu0 %v7549
    %7692 = vmatprep.subr.bf16.mxu0 %v7553
    %7693 = vmatpush1.bf16.msra.mxu0 %v7552
    %7694 = vmatprep.subr.bf16.mxu0 %v7556
    %7695 = vmatpush1.bf16.msra.mxu0 %v7555
    %7696 = vmatprep.subr.bf16.mxu0 %v7559
    %7697 = vmatpush1.bf16.msra.mxu0 %v7558
    %7698 = vmatprep.subr.bf16.mxu0 %v7562
    %7699 = vmatpush1.bf16.msra.mxu0 %v7561
    %7700 = vmatprep.subr.bf16.mxu0 %v7565
    %7701 = vmatpush1.bf16.msra.mxu0 %v7564
    %7702 = vmatprep.subr.bf16.mxu0 %v7568
    %7703 = vmatpush1.bf16.msra.mxu0 %v7567
    %7704 = vmatprep.subr.bf16.mxu0 %v7571
    %7705 = vmatpush1.bf16.msra.mxu0 %v7570
    %7706 = vmatprep.subr.bf16.mxu0 %v7574
    %7707 = vmatpush1.bf16.msra.mxu0 %v7573
    %7708 = vmatprep.subr.bf16.mxu0 %v7577
    %7709 = vmatpush1.bf16.msra.mxu0 %v7576
    %7710 = vmatprep.subr.bf16.mxu0 %v7580
    %7711 = vmatpush1.bf16.msra.mxu0 %v7579
    %7712 = vmatprep.subr.bf16.mxu0 %v7583
    %7713 = vmatpush1.bf16.msra.mxu0 %v7582
    %7714 = vmatprep.subr.bf16.mxu0 %v7586
    %7715 = vmatpush1.bf16.msra.mxu0 %v7585
    %7716 = vmatprep.mubr.bf16.mxu0 %v7199
    %7717 = vmatmul.mubr.bf16.gmra.mrb[0].mxu0 %v7198
    %v7718 = vpop.f32.mrb[0].mxu0
    %v7719 = vadd.f32 %v7297, %v7718
    %v7720 = vpop.f32.mrb[0].mxu0
    %v7721 = vadd.f32 %v7298, %v7720
    %v7722 = vpop.f32.mrb[0].mxu0
    %v7723 = vpop.f32.mrb[0].mxu0
    %7724 = vdwg.mxu0
    %7725 = vmatprep.subr.bf16.mxu0 %v7589
    %7726 = vmatpush1.bf16.msra.mxu0 %v7588
    %7727 = vmatprep.subr.bf16.mxu0 %v7592
    %7728 = vmatpush1.bf16.msra.mxu0 %v7591
    %7729 = vmatprep.subr.bf16.mxu0 %v7595
    %7730 = vmatpush1.bf16.msra.mxu0 %v7594
    %7731 = vmatprep.subr.bf16.mxu0 %v7598
    %7732 = vmatpush1.bf16.msra.mxu0 %v7597
    %7733 = vmatprep.subr.bf16.mxu0 %v7601
    %7734 = vmatpush1.bf16.msra.mxu0 %v7600
    %7735 = vmatprep.subr.bf16.mxu0 %v7604
    %7736 = vmatpush1.bf16.msra.mxu0 %v7603
    %7737 = vmatprep.subr.bf16.mxu0 %v7607
    %7738 = vmatpush1.bf16.msra.mxu0 %v7606
    %7739 = vmatprep.subr.bf16.mxu0 %v7610
    %7740 = vmatpush1.bf16.msra.mxu0 %v7609
    %7741 = vmatprep.subr.bf16.mxu0 0
    %7742 = vmatpush1.bf16.msra.mxu0 0
    %7743 = vmatprep.subr.bf16.mxu0 0
    %7744 = vmatpush1.bf16.msra.mxu0 0
    %7745 = vmatprep.subr.bf16.mxu0 0
    %7746 = vmatpush1.bf16.msra.mxu0 0
    %7747 = vmatprep.subr.bf16.mxu0 0
    %7748 = vmatpush1.bf16.msra.mxu0 0
    %7749 = vmatprep.subr.bf16.mxu0 0
    %7750 = vmatpush1.bf16.msra.mxu0 0
    %7751 = vmatprep.subr.bf16.mxu0 0
    %7752 = vmatpush1.bf16.msra.mxu0 0
    %7753 = vmatprep.subr.bf16.mxu0 0
    %7754 = vmatpush1.bf16.msra.mxu0 0
    %7755 = vmatprep.subr.bf16.mxu0 0
    %7756 = vmatpush1.bf16.msra.mxu0 0
    %7757 = vmatprep.mubr.bf16.mxu0 0
    %7758 = vmatmul.mubr.bf16.gmra.mrb[0].mxu0 %v7200
    %v7759 = vpop.f32.mrb[0].mxu0
    %v7760 = vadd.f32 %v7719, %v7759
    %v7761 = vpop.f32.mrb[0].mxu0
    %v7762 = vadd.f32 %v7721, %v7761
    %v7763 = vpop.f32.mrb[0].mxu0
    %v7764 = vpop.f32.mrb[0].mxu0
    %7765 = vdwg.mxu0
    %7766 = vmatprep.subr.bf16.mxu0 0
    %7767 = vmatpush1.bf16.msra.mxu0 %v7542
    %7768 = vmatprep.subr.bf16.mxu0 0
    %7769 = vmatpush1.bf16.msra.mxu0 %v7545
    %7770 = vmatprep.subr.bf16.mxu0 0
    %7771 = vmatpush1.bf16.msra.mxu0 %v7548
    %7772 = vmatprep.subr.bf16.mxu0 0
    %7773 = vmatpush1.bf16.msra.mxu0 %v7551
    %7774 = vmatprep.subr.bf16.mxu0 0
    %7775 = vmatpush1.bf16.msra.mxu0 %v7554
    %7776 = vmatprep.subr.bf16.mxu0 0
    %7777 = vmatpush1.bf16.msra.mxu0 %v7557
    %7778 = vmatprep.subr.bf16.mxu0 0
    %7779 = vmatpush1.bf16.msra.mxu0 %v7560
    %7780 = vmatprep.subr.bf16.mxu0 0
    %7781 = vmatpush1.bf16.msra.mxu0 %v7563
    %7782 = vmatprep.subr.bf16.mxu0 0
    %7783 = vmatpush1.bf16.msra.mxu0 %v7566
    %7784 = vmatprep.subr.bf16.mxu0 0
    %7785 = vmatpush1.bf16.msra.mxu0 %v7569
    %7786 = vmatprep.subr.bf16.mxu0 0
    %7787 = vmatpush1.bf16.msra.mxu0 %v7572
    %7788 = vmatprep.subr.bf16.mxu0 0
    %7789 = vmatpush1.bf16.msra.mxu0 %v7575
    %7790 = vmatprep.subr.bf16.mxu0 0
    %7791 = vmatpush1.bf16.msra.mxu0 %v7578
    %7792 = vmatprep.subr.bf16.mxu0 0
    %7793 = vmatpush1.bf16.msra.mxu0 %v7581
    %7794 = vmatprep.subr.bf16.mxu0 0
    %7795 = vmatpush1.bf16.msra.mxu0 %v7584
    %7796 = vmatprep.subr.bf16.mxu0 0
    %7797 = vmatpush1.bf16.msra.mxu0 %v7587
    %7798 = vmatprep.mubr.bf16.mxu0 %v7199
    %7799 = vmatmul.mubr.bf16.gmra.mrb[0].mxu0 %v7198
    %v7800 = vpop.f32.mrb[0].mxu0
    %v7801 = vadd.f32 %v7299, %v7800
    %v7802 = vpop.f32.mrb[0].mxu0
    %v7803 = vpop.f32.mrb[0].mxu0
    %v7804 = vpop.f32.mrb[0].mxu0
    %7805 = vdwg.mxu0
    %7806 = vmatprep.subr.bf16.mxu0 0
    %7807 = vmatpush1.bf16.msra.mxu0 %v7590
    %7808 = vmatprep.subr.bf16.mxu0 0
    %7809 = vmatpush1.bf16.msra.mxu0 %v7593
    %7810 = vmatprep.subr.bf16.mxu0 0
    %7811 = vmatpush1.bf16.msra.mxu0 %v7596
    %7812 = vmatprep.subr.bf16.mxu0 0
    %7813 = vmatpush1.bf16.msra.mxu0 %v7599
    %7814 = vmatprep.subr.bf16.mxu0 0
    %7815 = vmatpush1.bf16.msra.mxu0 %v7602
    %7816 = vmatprep.subr.bf16.mxu0 0
    %7817 = vmatpush1.bf16.msra.mxu0 %v7605
    %7818 = vmatprep.subr.bf16.mxu0 0
    %7819 = vmatpush1.bf16.msra.mxu0 %v7608
    %7820 = vmatprep.subr.bf16.mxu0 0
    %7821 = vmatpush1.bf16.msra.mxu0 %v7611
    %7822 = vmatprep.subr.bf16.mxu0 0
    %7823 = vmatpush1.bf16.msra.mxu0 0
    %7824 = vmatprep.subr.bf16.mxu0 0
    %7825 = vmatpush1.bf16.msra.mxu0 0
    %7826 = vmatprep.subr.bf16.mxu0 0
    %7827 = vmatpush1.bf16.msra.mxu0 0
    %7828 = vmatprep.subr.bf16.mxu0 0
    %7829 = vmatpush1.bf16.msra.mxu0 0
    %7830 = vmatprep.subr.bf16.mxu0 0
    %7831 = vmatpush1.bf16.msra.mxu0 0
    %7832 = vmatprep.subr.bf16.mxu0 0
    %7833 = vmatpush1.bf16.msra.mxu0 0
    %7834 = vmatprep.subr.bf16.mxu0 0
    %7835 = vmatpush1.bf16.msra.mxu0 0
    %7836 = vmatprep.subr.bf16.mxu0 0
    %7837 = vmatpush1.bf16.msra.mxu0 0
    %7838 = vmatprep.mubr.bf16.mxu0 0
    %7839 = vmatmul.mubr.bf16.gmra.mrb[0].mxu0 %v7200
    %v7840 = vpop.f32.mrb[0].mxu0
    %v7841 = vadd.f32 %v7801, %v7840
    %v7842 = vpop.f32.mrb[0].mxu0
    %v7843 = vpop.f32.mrb[0].mxu0
    %v7844 = vpop.f32.mrb[0].mxu0
    %7845 = vdwg.mxu0
    %v7846 = vpack.c.bf16 %v7760, %v7760
    %v7847 = vpack.c.bf16 %v7762, %v7762
    %v7848 = vpack.c.bf16 %v7841, %v7841
    %v7849 = vld [vmem:[%s45] sm:$0xf]
    %v7850 = vld [vmem:[%s45 + $0x4] sm:$0xf]
    %v7851 = vld [vmem:[%s45 + $0x8] sm:$0xf]
    %v7852 = vld [vmem:[%s45 + $0xc] sm:$0xf]
    %v7853 = vld [vmem:[%s45 + $0x10] sm:$0xf]
    %v7854 = vld [vmem:[%s45 + $0x14] sm:$0xf]
    %v7861 = vunpack.c.l.b16 %v7849
    %v7862 = vunpack.c.l.b16 %v7850
    %v7863 = vunpack.c.l.b16 %v7851
    %v7864 = vunpack.c.l.b16 %v7852
    %v7865 = vunpack.c.l.b16 %v7853
    %v7866 = vunpack.c.l.b16 %v7854
    %v7867 = vpack.c.b16 %v7862, %v7861
    %v7868 = vpack.c.b16 %v7864, %v7863
    %v7869 = vpack.c.b16 %v7866, %v7865
    %v7871 = vsel %vm6222, %v7867, 0
    %v7874 = vsel %vm6222, %v7868, 0
    %v7877 = vsel %vm6222, %v7869, 0
    %v7880 = vsel %vm1828, %v7846, 0
    %v7883 = vsel %vm1828, %v7847, 0
    %v7886 = vsel %vm1828, %v7848, 0
    %7888 = vmatprep.subr.bf16.mxu0 %v7883
    %7889 = vmatpush1.bf16.msra.mxu0 %v7880
    %7890 = vmatprep.subr.bf16.mxu0 0
    %7891 = vmatpush1.bf16.msra.mxu0 0
    %7892 = vmatprep.subr.bf16.mxu0 0
    %7893 = vmatpush1.bf16.msra.mxu0 0
    %7894 = vmatprep.subr.bf16.mxu0 0
    %7895 = vmatpush1.bf16.msra.mxu0 0
    %7896 = vmatprep.subr.bf16.mxu0 0
    %7897 = vmatpush1.bf16.msra.mxu0 0
    %7898 = vmatprep.subr.bf16.mxu0 0
    %7899 = vmatpush1.bf16.msra.mxu0 0
    %7900 = vmatprep.subr.bf16.mxu0 0
    %7901 = vmatpush1.bf16.msra.mxu0 0
    %7902 = vmatprep.subr.bf16.mxu0 0
    %7903 = vmatpush1.bf16.msra.mxu0 0
    %7904 = vmatprep.subr.bf16.mxu0 0
    %7905 = vmatpush1.bf16.msra.mxu0 0
    %7906 = vmatprep.subr.bf16.mxu0 0
    %7907 = vmatpush1.bf16.msra.mxu0 0
    %7908 = vmatprep.subr.bf16.mxu0 0
    %7909 = vmatpush1.bf16.msra.mxu0 0
    %7910 = vmatprep.subr.bf16.mxu0 0
    %7911 = vmatpush1.bf16.msra.mxu0 0
    %7912 = vmatprep.subr.bf16.mxu0 0
    %7913 = vmatpush1.bf16.msra.mxu0 0
    %7914 = vmatprep.subr.bf16.mxu0 0
    %7915 = vmatpush1.bf16.msra.mxu0 0
    %7916 = vmatprep.subr.bf16.mxu0 0
    %7917 = vmatpush1.bf16.msra.mxu0 0
    %7918 = vmatprep.subr.bf16.mxu0 0
    %7919 = vmatpush1.bf16.msra.mxu0 0
    %7920 = vmatprep.mubr.bf16.mxu0 0
    %7921 = vmatmul.mubr.bf16.gmra.mrb[0].mxu0 %v7871
    %v7922 = vpop.f32.mrb[0].mxu0
    %v7923 = vadd.f32 0.0, %v7922
    %v7924 = vpop.f32.mrb[0].mxu0
    %v7925 = vadd.f32 0.0, %v7924
    %v7926 = vpop.f32.mrb[0].mxu0
    %v7927 = vadd.f32 0.0, %v7926
    %v7928 = vpop.f32.mrb[0].mxu0
    %v7929 = vadd.f32 0.0, %v7928
    %7930 = vmatprep.mubr.bf16.mxu0 0
    %7931 = vmatmul.mubr.bf16.gmra.mrb[0].mxu0 %v7874
    %v7932 = vpop.f32.mrb[0].mxu0
    %v7933 = vadd.f32 0.0, %v7932
    %v7934 = vpop.f32.mrb[0].mxu0
    %v7935 = vadd.f32 0.0, %v7934
    %v7936 = vpop.f32.mrb[0].mxu0
    %v7937 = vadd.f32 0.0, %v7936
    %v7938 = vpop.f32.mrb[0].mxu0
    %v7939 = vadd.f32 0.0, %v7938
    %7940 = vmatprep.mubr.bf16.mxu0 0
    %7941 = vmatmul.mubr.bf16.gmra.mrb[0].mxu0 %v7877
    %v7942 = vpop.f32.mrb[0].mxu0
    %v7943 = vadd.f32 0.0, %v7942
    %v7944 = vpop.f32.mrb[0].mxu0
    %v7945 = vadd.f32 0.0, %v7944
    %v7946 = vpop.f32.mrb[0].mxu0
    %v7947 = vadd.f32 0.0, %v7946
    %v7948 = vpop.f32.mrb[0].mxu0
    %v7949 = vadd.f32 0.0, %v7948
    %7950 = vdwg.mxu0
    %7951 = vmatprep.subr.bf16.mxu0 0
    %7952 = vmatpush1.bf16.msra.mxu0 %v7886
    %7953 = vmatprep.subr.bf16.mxu0 0
    %7954 = vmatpush1.bf16.msra.mxu0 0
    %7955 = vmatprep.subr.bf16.mxu0 0
    %7956 = vmatpush1.bf16.msra.mxu0 0
    %7957 = vmatprep.subr.bf16.mxu0 0
    %7958 = vmatpush1.bf16.msra.mxu0 0
    %7959 = vmatprep.subr.bf16.mxu0 0
    %7960 = vmatpush1.bf16.msra.mxu0 0
    %7961 = vmatprep.subr.bf16.mxu0 0
    %7962 = vmatpush1.bf16.msra.mxu0 0
    %7963 = vmatprep.subr.bf16.mxu0 0
    %7964 = vmatpush1.bf16.msra.mxu0 0
    %7965 = vmatprep.subr.bf16.mxu0 0
    %7966 = vmatpush1.bf16.msra.mxu0 0
    %7967 = vmatprep.subr.bf16.mxu0 0
    %7968 = vmatpush1.bf16.msra.mxu0 0
    %7969 = vmatprep.subr.bf16.mxu0 0
    %7970 = vmatpush1.bf16.msra.mxu0 0
    %7971 = vmatprep.subr.bf16.mxu0 0
    %7972 = vmatpush1.bf16.msra.mxu0 0
    %7973 = vmatprep.subr.bf16.mxu0 0
    %7974 = vmatpush1.bf16.msra.mxu0 0
    %7975 = vmatprep.subr.bf16.mxu0 0
    %7976 = vmatpush1.bf16.msra.mxu0 0
    %7977 = vmatprep.subr.bf16.mxu0 0
    %7978 = vmatpush1.bf16.msra.mxu0 0
    %7979 = vmatprep.subr.bf16.mxu0 0
    %7980 = vmatpush1.bf16.msra.mxu0 0
    %7981 = vmatprep.subr.bf16.mxu0 0
    %7982 = vmatpush1.bf16.msra.mxu0 0
    %7983 = vmatprep.mubr.bf16.mxu0 0
    %7984 = vmatmul.mubr.bf16.gmra.mrb[0].mxu0 %v7871
    %v7985 = vpop.f32.mrb[0].mxu0
    %v7986 = vadd.f32 0.0, %v7985
    %v7987 = vpop.f32.mrb[0].mxu0
    %v7988 = vpop.f32.mrb[0].mxu0
    %v7989 = vadd.f32 0.0, %v7988
    %v7990 = vpop.f32.mrb[0].mxu0
    %7991 = vmatprep.mubr.bf16.mxu0 0
    %7992 = vmatmul.mubr.bf16.gmra.mrb[0].mxu0 %v7874
    %v7993 = vpop.f32.mrb[0].mxu0
    %v7994 = vadd.f32 0.0, %v7993
    %v7995 = vpop.f32.mrb[0].mxu0
    %v7996 = vpop.f32.mrb[0].mxu0
    %v7997 = vadd.f32 0.0, %v7996
    %v7998 = vpop.f32.mrb[0].mxu0
    %7999 = vmatprep.mubr.bf16.mxu0 0
    %8000 = vmatmul.mubr.bf16.gmra.mrb[0].mxu0 %v7877
    %v8001 = vpop.f32.mrb[0].mxu0
    %v8002 = vadd.f32 0.0, %v8001
    %v8003 = vpop.f32.mrb[0].mxu0
    %v8004 = vpop.f32.mrb[0].mxu0
    %v8005 = vadd.f32 0.0, %v8004
    %v8006 = vpop.f32.mrb[0].mxu0
    %8007 = vdwg.mxu0
    %v8008 = vpack.c.bf16 %v7927, %v7923
    %v8009 = vpack.c.bf16 %v7929, %v7925
    %v8010 = vpack.c.bf16 %v7989, %v7986
    %v8011 = vpack.c.bf16 %v7937, %v7933
    %v8012 = vpack.c.bf16 %v7939, %v7935
    %v8013 = vpack.c.bf16 %v7997, %v7994
    %v8014 = vpack.c.bf16 %v7947, %v7943
    %v8015 = vpack.c.bf16 %v7949, %v7945
    %v8016 = vpack.c.bf16 %v8005, %v8002
    %v8017 = vld [vmem:[#allocation11] sm:$0xff]
    %v8018 = vld [vmem:[#allocation11 + $0x8] sm:$0xf]
    %v8019 = vld [vmem:[#allocation11 + $0xc] sm:$0xff]
    %v8020 = vld [vmem:[#allocation11 + $0x14] sm:$0xf]
    %v8021 = vld [vmem:[#allocation11 + $0x18] sm:$0xff]
    %v8022 = vld [vmem:[#allocation11 + $0x20] sm:$0xf]
    %v8023 = vld [vmem:[#allocation11 + $0x24] sm:$0xff]
    %v8024 = vld [vmem:[#allocation11 + $0x2c] sm:$0xf]
    %v8025 = vld [vmem:[#allocation11 + $0x30] sm:$0xff]
    %v8026 = vld [vmem:[#allocation11 + $0x38] sm:$0xf]
    %v8027 = vld [vmem:[#allocation11 + $0x3c] sm:$0xff]
    %v8028 = vld [vmem:[#allocation11 + $0x44] sm:$0xf]
    %v8029 = vld [vmem:[#allocation11 + $0x48] sm:$0xff]
    %v8030 = vld [vmem:[#allocation11 + $0x50] sm:$0xf]
    %v8031 = vld [vmem:[#allocation11 + $0x54] sm:$0xff]
    %v8032 = vld [vmem:[#allocation11 + $0x5c] sm:$0xf]
    %v8033 = vld [vmem:[#allocation11 + $0x60] sm:$0xff]
    %v8034 = vld [vmem:[#allocation11 + $0x68] sm:$0xf]
    %v8035 = vld [vmem:[#allocation11 + $0x6c] sm:$0xff]
    %v8036 = vld [vmem:[#allocation11 + $0x74] sm:$0xf]
    %v8037 = vld [vmem:[#allocation11 + $0x78] sm:$0xff]
    %v8038 = vld [vmem:[#allocation11 + $0x80] sm:$0xf]
    %v8039 = vld [vmem:[#allocation11 + $0x84] sm:$0xff]
    %v8040 = vld [vmem:[#allocation11 + $0x8c] sm:$0xf]
    %v8041 = vld [vmem:[#allocation11 + $0x90] sm:$0xff]
    %v8042 = vld [vmem:[#allocation11 + $0x98] sm:$0xf]
    %v8043 = vld [vmem:[#allocation11 + $0x9c] sm:$0xff]
    %v8044 = vld [vmem:[#allocation11 + $0xa4] sm:$0xf]
    %v8045 = vld [vmem:[#allocation11 + $0xa8] sm:$0xff]
    %v8046 = vld [vmem:[#allocation11 + $0xb0] sm:$0xf]
    %v8047 = vld [vmem:[#allocation11 + $0xb4] sm:$0xff]
    %v8048 = vld [vmem:[#allocation11 + $0xbc] sm:$0xf]
    %v8049 = vld [vmem:[#allocation11 + $0xc0] sm:$0xff]
    %v8050 = vld [vmem:[#allocation11 + $0xc8] sm:$0xf]
    %v8051 = vld [vmem:[#allocation11 + $0xcc] sm:$0xff]
    %v8052 = vld [vmem:[#allocation11 + $0xd4] sm:$0xf]
    %v8053 = vld [vmem:[#allocation11 + $0xd8] sm:$0xff]
    %v8054 = vld [vmem:[#allocation11 + $0xe0] sm:$0xf]
    %v8055 = vld [vmem:[#allocation11 + $0xe4] sm:$0xff]
    %v8056 = vld [vmem:[#allocation11 + $0xec] sm:$0xf]
    %v8057 = vld [vmem:[#allocation11 + $0xf0] sm:$0xff]
    %v8058 = vld [vmem:[#allocation11 + $0xf8] sm:$0xf]
    %v8059 = vld [vmem:[#allocation11 + $0xfc] sm:$0xff]
    %v8060 = vld [vmem:[#allocation11 + $0x104] sm:$0xf]
    %v8061 = vld [vmem:[#allocation11 + $0x108] sm:$0xff]
    %v8062 = vld [vmem:[#allocation11 + $0x110] sm:$0xf]
    %v8063 = vld [vmem:[#allocation11 + $0x114] sm:$0xff]
    %v8064 = vld [vmem:[#allocation11 + $0x11c] sm:$0xf]
    %v8065 = vld [vmem:[#allocation11 + $0x120] sm:$0xff]
    %v8066 = vld [vmem:[#allocation11 + $0x128] sm:$0xf]
    %v8067 = vld [vmem:[#allocation11 + $0x12c] sm:$0xff]
    %v8068 = vld [vmem:[#allocation11 + $0x134] sm:$0xf]
    %v8069 = vld [vmem:[#allocation11 + $0x138] sm:$0xff]
    %v8070 = vld [vmem:[#allocation11 + $0x140] sm:$0xf]
    %v8071 = vld [vmem:[#allocation11 + $0x144] sm:$0xff]
    %v8072 = vld [vmem:[#allocation11 + $0x14c] sm:$0xf]
    %v8073 = vld [vmem:[#allocation11 + $0x150] sm:$0xff]
    %v8074 = vld [vmem:[#allocation11 + $0x158] sm:$0xf]
    %v8075 = vld [vmem:[#allocation11 + $0x15c] sm:$0xff]
    %v8076 = vld [vmem:[#allocation11 + $0x164] sm:$0xf]
    %v8077 = vld [vmem:[#allocation11 + $0x168] sm:$0xff]
    %v8078 = vld [vmem:[#allocation11 + $0x170] sm:$0xf]
    %v8079 = vld [vmem:[#allocation11 + $0x174] sm:$0xff]
    %v8080 = vld [vmem:[#allocation11 + $0x17c] sm:$0xf]
    %v8081 = vld [vmem:[#allocation11 + $0x180] sm:$0xff]
    %v8082 = vld [vmem:[#allocation11 + $0x188] sm:$0xf]
    %v8083 = vld [vmem:[#allocation11 + $0x18c] sm:$0xff]
    %v8084 = vld [vmem:[#allocation11 + $0x194] sm:$0xf]
    %v8085 = vld [vmem:[#allocation11 + $0x198] sm:$0xff]
    %v8086 = vld [vmem:[#allocation11 + $0x1a0] sm:$0xf]
    %v8087 = vld [vmem:[#allocation11 + $0x1a4] sm:$0xff]
    %v8088 = vld [vmem:[#allocation11 + $0x1ac] sm:$0xf]
    %v8089 = vld [vmem:[#allocation11 + $0x1b0] sm:$0xff]
    %v8090 = vld [vmem:[#allocation11 + $0x1b8] sm:$0xf]
    %v8091 = vld [vmem:[#allocation11 + $0x1bc] sm:$0xff]
    %v8092 = vld [vmem:[#allocation11 + $0x1c4] sm:$0xf]
    %v8093 = vld [vmem:[#allocation11 + $0x1c8] sm:$0xff]
    %v8094 = vld [vmem:[#allocation11 + $0x1d0] sm:$0xf]
    %v8095 = vld [vmem:[#allocation11 + $0x1d4] sm:$0xff]
    %v8096 = vld [vmem:[#allocation11 + $0x1dc] sm:$0xf]
    %v8097 = vld [vmem:[#allocation11 + $0x1e0] sm:$0xff]
    %v8098 = vld [vmem:[#allocation11 + $0x1e8] sm:$0xf]
    %v8099 = vld [vmem:[#allocation11 + $0x1ec] sm:$0xff]
    %v8100 = vld [vmem:[#allocation11 + $0x1f4] sm:$0xf]
    %v8101 = vld [vmem:[#allocation11 + $0x1f8] sm:$0xff]
    %v8102 = vld [vmem:[#allocation11 + $0x200] sm:$0xf]
    %v8103 = vld [vmem:[#allocation11 + $0x204] sm:$0xff]
    %v8104 = vld [vmem:[#allocation11 + $0x20c] sm:$0xf]
    %v8105 = vld [vmem:[#allocation11 + $0x210] sm:$0xff]
    %v8106 = vld [vmem:[#allocation11 + $0x218] sm:$0xf]
    %v8107 = vld [vmem:[#allocation11 + $0x21c] sm:$0xff]
    %v8108 = vld [vmem:[#allocation11 + $0x224] sm:$0xf]
    %v8109 = vld [vmem:[#allocation11 + $0x228] sm:$0xff]
    %v8110 = vld [vmem:[#allocation11 + $0x230] sm:$0xf]
    %v8111 = vld [vmem:[#allocation11 + $0x234] sm:$0xff]
    %v8112 = vld [vmem:[#allocation11 + $0x23c] sm:$0xf]
    %v8113 = vld [vmem:[#allocation11 + $0x240] sm:$0xff]
    %v8114 = vld [vmem:[#allocation11 + $0x248] sm:$0xf]
    %v8115 = vld [vmem:[#allocation11 + $0x24c] sm:$0xff]
    %v8116 = vld [vmem:[#allocation11 + $0x254] sm:$0xf]
    %v8117 = vld [vmem:[#allocation11 + $0x258] sm:$0xff]
    %v8118 = vld [vmem:[#allocation11 + $0x260] sm:$0xf]
    %v8119 = vld [vmem:[#allocation11 + $0x264] sm:$0xff]
    %v8120 = vld [vmem:[#allocation11 + $0x26c] sm:$0xf]
    %v8121 = vld [vmem:[#allocation11 + $0x270] sm:$0xff]
    %v8122 = vld [vmem:[#allocation11 + $0x278] sm:$0xf]
    %v8123 = vld [vmem:[#allocation11 + $0x27c] sm:$0xff]
    %v8124 = vld [vmem:[#allocation11 + $0x284] sm:$0xf]
    %v8125 = vld [vmem:[#allocation11 + $0x288] sm:$0xff]
    %v8126 = vld [vmem:[#allocation11 + $0x290] sm:$0xf]
    %v8127 = vld [vmem:[#allocation11 + $0x294] sm:$0xff]
    %v8128 = vld [vmem:[#allocation11 + $0x29c] sm:$0xf]
    %v8129 = vld [vmem:[#allocation11 + $0x2a0] sm:$0xff]
    %v8130 = vld [vmem:[#allocation11 + $0x2a8] sm:$0xf]
    %v8131 = vld [vmem:[#allocation11 + $0x2ac] sm:$0xff]
    %v8132 = vld [vmem:[#allocation11 + $0x2b4] sm:$0xf]
    %v8133 = vld [vmem:[#allocation11 + $0x2b8] sm:$0xff]
    %v8134 = vld [vmem:[#allocation11 + $0x2c0] sm:$0xf]
    %v8135 = vld [vmem:[#allocation11 + $0x2c4] sm:$0xff]
    %v8136 = vld [vmem:[#allocation11 + $0x2cc] sm:$0xf]
    %v8137 = vld [vmem:[#allocation11 + $0x2d0] sm:$0xff]
    %v8138 = vld [vmem:[#allocation11 + $0x2d8] sm:$0xf]
    %v8139 = vld [vmem:[#allocation11 + $0x2dc] sm:$0xff]
    %v8140 = vld [vmem:[#allocation11 + $0x2e4] sm:$0xf]
    %v8141 = vld [vmem:[#allocation11 + $0x2e8] sm:$0xff]
    %v8142 = vld [vmem:[#allocation11 + $0x2f0] sm:$0xf]
    %v8143 = vld [vmem:[#allocation11 + $0x2f4] sm:$0xff]
    %v8144 = vld [vmem:[#allocation11 + $0x2fc] sm:$0xf]
    %v8145 = vld [vmem:[#allocation11 + $0x300] sm:$0xff]
    %v8146 = vld [vmem:[#allocation11 + $0x308] sm:$0xf]
    %v8147 = vld [vmem:[#allocation11 + $0x30c] sm:$0xff]
    %v8148 = vld [vmem:[#allocation11 + $0x314] sm:$0xf]
    %v8149 = vld [vmem:[#allocation11 + $0x318] sm:$0xff]
    %v8150 = vld [vmem:[#allocation11 + $0x320] sm:$0xf]
    %v8151 = vld [vmem:[#allocation11 + $0x324] sm:$0xff]
    %v8152 = vld [vmem:[#allocation11 + $0x32c] sm:$0xf]
    %v8153 = vld [vmem:[#allocation11 + $0x330] sm:$0xff]
    %v8154 = vld [vmem:[#allocation11 + $0x338] sm:$0xf]
    %v8155 = vld [vmem:[#allocation11 + $0x33c] sm:$0xff]
    %v8156 = vld [vmem:[#allocation11 + $0x344] sm:$0xf]
    %v8157 = vld [vmem:[#allocation11 + $0x348] sm:$0xff]
    %v8158 = vld [vmem:[#allocation11 + $0x350] sm:$0xf]
    %v8159 = vld [vmem:[#allocation11 + $0x354] sm:$0xff]
    %v8160 = vld [vmem:[#allocation11 + $0x35c] sm:$0xf]
    %v8161 = vld [vmem:[#allocation11 + $0x360] sm:$0xff]
    %v8162 = vld [vmem:[#allocation11 + $0x368] sm:$0xf]
    %v8163 = vld [vmem:[#allocation11 + $0x36c] sm:$0xff]
    %v8164 = vld [vmem:[#allocation11 + $0x374] sm:$0xf]
    %v8165 = vld [vmem:[#allocation11 + $0x378] sm:$0xff]
    %v8166 = vld [vmem:[#allocation11 + $0x380] sm:$0xf]
    %v8167 = vld [vmem:[#allocation11 + $0x384] sm:$0xff]
    %v8168 = vld [vmem:[#allocation11 + $0x38c] sm:$0xf]
    %v8169 = vld [vmem:[#allocation11 + $0x390] sm:$0xff]
    %v8170 = vld [vmem:[#allocation11 + $0x398] sm:$0xf]
    %v8171 = vld [vmem:[#allocation11 + $0x39c] sm:$0xff]
    %v8172 = vld [vmem:[#allocation11 + $0x3a4] sm:$0xf]
    %v8173 = vld [vmem:[#allocation11 + $0x3a8] sm:$0xff]
    %v8174 = vld [vmem:[#allocation11 + $0x3b0] sm:$0xf]
    %v8175 = vld [vmem:[#allocation11 + $0x3b4] sm:$0xff]
    %v8176 = vld [vmem:[#allocation11 + $0x3bc] sm:$0xf]
    %v8177 = vld [vmem:[#allocation11 + $0x3c0] sm:$0xff]
    %v8178 = vld [vmem:[#allocation11 + $0x3c8] sm:$0xf]
    %v8179 = vld [vmem:[#allocation11 + $0x3cc] sm:$0xff]
    %v8180 = vld [vmem:[#allocation11 + $0x3d4] sm:$0xf]
    %v8181 = vld [vmem:[#allocation11 + $0x3d8] sm:$0xff]
    %v8182 = vld [vmem:[#allocation11 + $0x3e0] sm:$0xf]
    %v8183 = vld [vmem:[#allocation11 + $0x3e4] sm:$0xff]
    %v8184 = vld [vmem:[#allocation11 + $0x3ec] sm:$0xf]
    %v8185 = vld [vmem:[#allocation11 + $0x3f0] sm:$0xff]
    %v8186 = vld [vmem:[#allocation11 + $0x3f8] sm:$0xf]
    %v8187 = vld [vmem:[#allocation11 + $0x3fc] sm:$0xff]
    %v8188 = vld [vmem:[#allocation11 + $0x404] sm:$0xf]
    %v8189 = vld [vmem:[#allocation11 + $0x408] sm:$0xff]
    %v8190 = vld [vmem:[#allocation11 + $0x410] sm:$0xf]
    %v8191 = vld [vmem:[#allocation11 + $0x414] sm:$0xff]
    %v8192 = vld [vmem:[#allocation11 + $0x41c] sm:$0xf]
    %v8193 = vld [vmem:[#allocation11 + $0x420] sm:$0xff]
    %v8194 = vld [vmem:[#allocation11 + $0x428] sm:$0xf]
    %v8195 = vld [vmem:[#allocation11 + $0x42c] sm:$0xff]
    %v8196 = vld [vmem:[#allocation11 + $0x434] sm:$0xf]
    %v8197 = vld [vmem:[#allocation11 + $0x438] sm:$0xff]
    %v8198 = vld [vmem:[#allocation11 + $0x440] sm:$0xf]
    %v8199 = vld [vmem:[#allocation11 + $0x444] sm:$0xff]
    %v8200 = vld [vmem:[#allocation11 + $0x44c] sm:$0xf]
    %v8201 = vld [vmem:[#allocation11 + $0x450] sm:$0xff]
    %v8202 = vld [vmem:[#allocation11 + $0x458] sm:$0xf]
    %v8203 = vld [vmem:[#allocation11 + $0x45c] sm:$0xff]
    %v8204 = vld [vmem:[#allocation11 + $0x464] sm:$0xf]
    %v8205 = vld [vmem:[#allocation11 + $0x468] sm:$0xff]
    %v8206 = vld [vmem:[#allocation11 + $0x470] sm:$0xf]
    %v8207 = vld [vmem:[#allocation11 + $0x474] sm:$0xff]
    %v8208 = vld [vmem:[#allocation11 + $0x47c] sm:$0xf]
    %v8209 = vld [vmem:[#allocation11 + $0x480] sm:$0xff]
    %v8210 = vld [vmem:[#allocation11 + $0x488] sm:$0xf]
    %v8211 = vld [vmem:[#allocation11 + $0x48c] sm:$0xff]
    %v8212 = vld [vmem:[#allocation11 + $0x494] sm:$0xf]
    %v8213 = vld [vmem:[#allocation11 + $0x498] sm:$0xff]
    %v8214 = vld [vmem:[#allocation11 + $0x4a0] sm:$0xf]
    %v8215 = vld [vmem:[#allocation11 + $0x4a4] sm:$0xff]
    %v8216 = vld [vmem:[#allocation11 + $0x4ac] sm:$0xf]
    %v8217 = vld [vmem:[#allocation11 + $0x4b0] sm:$0xff]
    %v8218 = vld [vmem:[#allocation11 + $0x4b8] sm:$0xf]
    %v8219 = vld [vmem:[#allocation11 + $0x4bc] sm:$0xff]
    %v8220 = vld [vmem:[#allocation11 + $0x4c4] sm:$0xf]
    %v8221 = vld [vmem:[#allocation11 + $0x4c8] sm:$0xff]
    %v8222 = vld [vmem:[#allocation11 + $0x4d0] sm:$0xf]
    %v8223 = vld [vmem:[#allocation11 + $0x4d4] sm:$0xff]
    %v8224 = vld [vmem:[#allocation11 + $0x4dc] sm:$0xf]
    %v8225 = vld [vmem:[#allocation11 + $0x4e0] sm:$0xff]
    %v8226 = vld [vmem:[#allocation11 + $0x4e8] sm:$0xf]
    %v8227 = vld [vmem:[#allocation11 + $0x4ec] sm:$0xff]
    %v8228 = vld [vmem:[#allocation11 + $0x4f4] sm:$0xf]
    %v8229 = vld [vmem:[#allocation11 + $0x4f8] sm:$0xff]
    %v8230 = vld [vmem:[#allocation11 + $0x500] sm:$0xf]
    %v8231 = vld [vmem:[#allocation11 + $0x504] sm:$0xff]
    %v8232 = vld [vmem:[#allocation11 + $0x50c] sm:$0xf]
    %v8233 = vld [vmem:[#allocation11 + $0x510] sm:$0xff]
    %v8234 = vld [vmem:[#allocation11 + $0x518] sm:$0xf]
    %v8235 = vld [vmem:[#allocation11 + $0x51c] sm:$0xff]
    %v8236 = vld [vmem:[#allocation11 + $0x524] sm:$0xf]
    %v8237 = vld [vmem:[#allocation11 + $0x528] sm:$0xff]
    %v8238 = vld [vmem:[#allocation11 + $0x530] sm:$0xf]
    %v8239 = vld [vmem:[#allocation11 + $0x534] sm:$0xff]
    %v8240 = vld [vmem:[#allocation11 + $0x53c] sm:$0xf]
    %v8241 = vld [vmem:[#allocation11 + $0x540] sm:$0xff]
    %v8242 = vld [vmem:[#allocation11 + $0x548] sm:$0xf]
    %v8243 = vld [vmem:[#allocation11 + $0x54c] sm:$0xff]
    %v8244 = vld [vmem:[#allocation11 + $0x554] sm:$0xf]
    %v8245 = vld [vmem:[#allocation11 + $0x558] sm:$0xff]
    %v8246 = vld [vmem:[#allocation11 + $0x560] sm:$0xf]
    %v8247 = vld [vmem:[#allocation11 + $0x564] sm:$0xff]
    %v8248 = vld [vmem:[#allocation11 + $0x56c] sm:$0xf]
    %v8249 = vld [vmem:[#allocation11 + $0x570] sm:$0xff]
    %v8250 = vld [vmem:[#allocation11 + $0x578] sm:$0xf]
    %v8251 = vld [vmem:[#allocation11 + $0x57c] sm:$0xff]
    %v8252 = vld [vmem:[#allocation11 + $0x584] sm:$0xf]
    %v8253 = vld [vmem:[#allocation11 + $0x588] sm:$0xff]
    %v8254 = vld [vmem:[#allocation11 + $0x590] sm:$0xf]
    %v8255 = vld [vmem:[#allocation11 + $0x594] sm:$0xff]
    %v8256 = vld [vmem:[#allocation11 + $0x59c] sm:$0xf]
    %v8257 = vld [vmem:[#allocation11 + $0x5a0] sm:$0xff]
    %v8258 = vld [vmem:[#allocation11 + $0x5a8] sm:$0xf]
    %v8259 = vld [vmem:[#allocation11 + $0x5ac] sm:$0xff]
    %v8260 = vld [vmem:[#allocation11 + $0x5b4] sm:$0xf]
    %v8261 = vld [vmem:[#allocation11 + $0x5b8] sm:$0xff]
    %v8262 = vld [vmem:[#allocation11 + $0x5c0] sm:$0xf]
    %v8263 = vld [vmem:[#allocation11 + $0x5c4] sm:$0xff]
    %v8264 = vld [vmem:[#allocation11 + $0x5cc] sm:$0xf]
    %v8265 = vld [vmem:[#allocation11 + $0x5d0] sm:$0xff]
    %v8266 = vld [vmem:[#allocation11 + $0x5d8] sm:$0xf]
    %v8267 = vld [vmem:[#allocation11 + $0x5dc] sm:$0xff]
    %v8268 = vld [vmem:[#allocation11 + $0x5e4] sm:$0xf]
    %v8269 = vld [vmem:[#allocation11 + $0x5e8] sm:$0xff]
    %v8270 = vld [vmem:[#allocation11 + $0x5f0] sm:$0xf]
    %v8271 = vld [vmem:[#allocation11 + $0x5f4] sm:$0xff]
    %v8272 = vld [vmem:[#allocation11 + $0x5fc] sm:$0xf]
    %v8273 = vld [vmem:[#allocation11 + $0x600] sm:$0xff]
    %v8274 = vld [vmem:[#allocation11 + $0x608] sm:$0xf]
    %v8275 = vld [vmem:[#allocation11 + $0x60c] sm:$0xff]
    %v8276 = vld [vmem:[#allocation11 + $0x614] sm:$0xf]
    %v8277 = vld [vmem:[#allocation11 + $0x618] sm:$0xff]
    %v8278 = vld [vmem:[#allocation11 + $0x620] sm:$0xf]
    %v8279 = vld [vmem:[#allocation11 + $0x624] sm:$0xff]
    %v8280 = vld [vmem:[#allocation11 + $0x62c] sm:$0xf]
    %v8281 = vld [vmem:[#allocation11 + $0x630] sm:$0xff]
    %v8282 = vld [vmem:[#allocation11 + $0x638] sm:$0xf]
    %v8283 = vld [vmem:[#allocation11 + $0x63c] sm:$0xff]
    %v8284 = vld [vmem:[#allocation11 + $0x644] sm:$0xf]
    %v8285 = vld [vmem:[#allocation11 + $0x648] sm:$0xff]
    %v8286 = vld [vmem:[#allocation11 + $0x650] sm:$0xf]
    %v8287 = vld [vmem:[#allocation11 + $0x654] sm:$0xff]
    %v8288 = vld [vmem:[#allocation11 + $0x65c] sm:$0xf]
    %v8289 = vld [vmem:[#allocation11 + $0x660] sm:$0xff]
    %v8290 = vld [vmem:[#allocation11 + $0x668] sm:$0xf]
    %v8291 = vld [vmem:[#allocation11 + $0x66c] sm:$0xff]
    %v8292 = vld [vmem:[#allocation11 + $0x674] sm:$0xf]
    %v8293 = vld [vmem:[#allocation11 + $0x678] sm:$0xff]
    %v8294 = vld [vmem:[#allocation11 + $0x680] sm:$0xf]
    %v8295 = vld [vmem:[#allocation11 + $0x684] sm:$0xff]
    %v8296 = vld [vmem:[#allocation11 + $0x68c] sm:$0xf]
    %v8297 = vld [vmem:[#allocation11 + $0x690] sm:$0xff]
    %v8298 = vld [vmem:[#allocation11 + $0x698] sm:$0xf]
    %v8299 = vld [vmem:[#allocation11 + $0x69c] sm:$0xff]
    %v8300 = vld [vmem:[#allocation11 + $0x6a4] sm:$0xf]
    %v8301 = vld [vmem:[#allocation11 + $0x6a8] sm:$0xff]
    %v8302 = vld [vmem:[#allocation11 + $0x6b0] sm:$0xf]
    %v8303 = vld [vmem:[#allocation11 + $0x6b4] sm:$0xff]
    %v8304 = vld [vmem:[#allocation11 + $0x6bc] sm:$0xf]
    %v8305 = vld [vmem:[%s49] sm:$0x7]
    %v8307 = vlaneseq
    %v8308 = vshrl.u32 %v8307, 7
    %v8309 = vsub.s32 0, %v8308
    %v8310 = vrot.slane %v8305, %v8309
    %v8311 = vlaneseq
    %v8312 = vshrl.u32 %v8311, 7
    %v8313 = vsub.s32 1, %v8312
    %v8314 = vrot.slane %v8305, %v8313
    %v8315 = vlaneseq
    %v8316 = vshrl.u32 %v8315, 7
    %v8317 = vsub.s32 2, %v8316
    %v8318 = vrot.slane %v8305, %v8317
    %v8610 = vunpack.c.l.b16 %v8017
    %v8611 = vunpack.c.h.b16 %v8017
    %v8612 = vunpack.c.l.b16 %v8018
    %v8613 = vunpack.c.l.b16 %v8019
    %v8614 = vunpack.c.h.b16 %v8019
    %v8615 = vunpack.c.l.b16 %v8020
    %v8616 = vunpack.c.l.b16 %v8021
    %v8617 = vunpack.c.h.b16 %v8021
    %v8618 = vunpack.c.l.b16 %v8022
    %v8619 = vunpack.c.l.b16 %v8023
    %v8620 = vunpack.c.h.b16 %v8023
    %v8621 = vunpack.c.l.b16 %v8024
    %v8622 = vunpack.c.l.b16 %v8025
    %v8623 = vunpack.c.h.b16 %v8025
    %v8624 = vunpack.c.l.b16 %v8026
    %v8625 = vunpack.c.l.b16 %v8027
    %v8626 = vunpack.c.h.b16 %v8027
    %v8627 = vunpack.c.l.b16 %v8028
    %v8628 = vunpack.c.l.b16 %v8029
    %v8629 = vunpack.c.h.b16 %v8029
    %v8630 = vunpack.c.l.b16 %v8030
    %v8631 = vunpack.c.l.b16 %v8031
    %v8632 = vunpack.c.h.b16 %v8031
    %v8633 = vunpack.c.l.b16 %v8032
    %v8634 = vunpack.c.l.b16 %v8033
    %v8635 = vunpack.c.h.b16 %v8033
    %v8636 = vunpack.c.l.b16 %v8034
    %v8637 = vunpack.c.l.b16 %v8035
    %v8638 = vunpack.c.h.b16 %v8035
    %v8639 = vunpack.c.l.b16 %v8036
    %v8640 = vunpack.c.l.b16 %v8037
    %v8641 = vunpack.c.h.b16 %v8037
    %v8642 = vunpack.c.l.b16 %v8038
    %v8643 = vunpack.c.l.b16 %v8039
    %v8644 = vunpack.c.h.b16 %v8039
    %v8645 = vunpack.c.l.b16 %v8040
    %v8646 = vunpack.c.l.b16 %v8041
    %v8647 = vunpack.c.h.b16 %v8041
    %v8648 = vunpack.c.l.b16 %v8042
    %v8649 = vunpack.c.l.b16 %v8043
    %v8650 = vunpack.c.h.b16 %v8043
    %v8651 = vunpack.c.l.b16 %v8044
    %v8652 = vunpack.c.l.b16 %v8045
    %v8653 = vunpack.c.h.b16 %v8045
    %v8654 = vunpack.c.l.b16 %v8046
    %v8655 = vunpack.c.l.b16 %v8047
    %v8656 = vunpack.c.h.b16 %v8047
    %v8657 = vunpack.c.l.b16 %v8048
    %v8658 = vunpack.c.l.b16 %v8049
    %v8659 = vunpack.c.h.b16 %v8049
    %v8660 = vunpack.c.l.b16 %v8050
    %v8661 = vunpack.c.l.b16 %v8051
    %v8662 = vunpack.c.h.b16 %v8051
    %v8663 = vunpack.c.l.b16 %v8052
    %v8664 = vunpack.c.l.b16 %v8053
    %v8665 = vunpack.c.h.b16 %v8053
    %v8666 = vunpack.c.l.b16 %v8054
    %v8667 = vunpack.c.l.b16 %v8055
    %v8668 = vunpack.c.h.b16 %v8055
    %v8669 = vunpack.c.l.b16 %v8056
    %v8670 = vunpack.c.l.b16 %v8057
    %v8671 = vunpack.c.h.b16 %v8057
    %v8672 = vunpack.c.l.b16 %v8058
    %v8673 = vunpack.c.l.b16 %v8059
    %v8674 = vunpack.c.h.b16 %v8059
    %v8675 = vunpack.c.l.b16 %v8060
    %v8676 = vunpack.c.l.b16 %v8061
    %v8677 = vunpack.c.h.b16 %v8061
    %v8678 = vunpack.c.l.b16 %v8062
    %v8679 = vunpack.c.l.b16 %v8063
    %v8680 = vunpack.c.h.b16 %v8063
    %v8681 = vunpack.c.l.b16 %v8064
    %v8682 = vunpack.c.l.b16 %v8065
    %v8683 = vunpack.c.h.b16 %v8065
    %v8684 = vunpack.c.l.b16 %v8066
    %v8685 = vunpack.c.l.b16 %v8067
    %v8686 = vunpack.c.h.b16 %v8067
    %v8687 = vunpack.c.l.b16 %v8068
    %v8688 = vunpack.c.l.b16 %v8069
    %v8689 = vunpack.c.h.b16 %v8069
    %v8690 = vunpack.c.l.b16 %v8070
    %v8691 = vunpack.c.l.b16 %v8071
    %v8692 = vunpack.c.h.b16 %v8071
    %v8693 = vunpack.c.l.b16 %v8072
    %v8694 = vunpack.c.l.b16 %v8073
    %v8695 = vunpack.c.h.b16 %v8073
    %v8696 = vunpack.c.l.b16 %v8074
    %v8697 = vunpack.c.l.b16 %v8075
    %v8698 = vunpack.c.h.b16 %v8075
    %v8699 = vunpack.c.l.b16 %v8076
    %v8700 = vunpack.c.l.b16 %v8077
    %v8701 = vunpack.c.h.b16 %v8077
    %v8702 = vunpack.c.l.b16 %v8078
    %v8703 = vunpack.c.l.b16 %v8079
    %v8704 = vunpack.c.h.b16 %v8079
    %v8705 = vunpack.c.l.b16 %v8080
    %v8706 = vunpack.c.l.b16 %v8081
    %v8707 = vunpack.c.h.b16 %v8081
    %v8708 = vunpack.c.l.b16 %v8082
    %v8709 = vunpack.c.l.b16 %v8083
    %v8710 = vunpack.c.h.b16 %v8083
    %v8711 = vunpack.c.l.b16 %v8084
    %v8712 = vunpack.c.l.b16 %v8085
    %v8713 = vunpack.c.h.b16 %v8085
    %v8714 = vunpack.c.l.b16 %v8086
    %v8715 = vunpack.c.l.b16 %v8087
    %v8716 = vunpack.c.h.b16 %v8087
    %v8717 = vunpack.c.l.b16 %v8088
    %v8718 = vunpack.c.l.b16 %v8089
    %v8719 = vunpack.c.h.b16 %v8089
    %v8720 = vunpack.c.l.b16 %v8090
    %v8721 = vunpack.c.l.b16 %v8091
    %v8722 = vunpack.c.h.b16 %v8091
    %v8723 = vunpack.c.l.b16 %v8092
    %v8724 = vunpack.c.l.b16 %v8093
    %v8725 = vunpack.c.h.b16 %v8093
    %v8726 = vunpack.c.l.b16 %v8094
    %v8727 = vunpack.c.l.b16 %v8095
    %v8728 = vunpack.c.h.b16 %v8095
    %v8729 = vunpack.c.l.b16 %v8096
    %v8730 = vunpack.c.l.b16 %v8097
    %v8731 = vunpack.c.h.b16 %v8097
    %v8732 = vunpack.c.l.b16 %v8098
    %v8733 = vunpack.c.l.b16 %v8099
    %v8734 = vunpack.c.h.b16 %v8099
    %v8735 = vunpack.c.l.b16 %v8100
    %v8736 = vunpack.c.l.b16 %v8101
    %v8737 = vunpack.c.h.b16 %v8101
    %v8738 = vunpack.c.l.b16 %v8102
    %v8739 = vunpack.c.l.b16 %v8103
    %v8740 = vunpack.c.h.b16 %v8103
    %v8741 = vunpack.c.l.b16 %v8104
    %v8742 = vunpack.c.l.b16 %v8105
    %v8743 = vunpack.c.h.b16 %v8105
    %v8744 = vunpack.c.l.b16 %v8106
    %v8745 = vunpack.c.l.b16 %v8107
    %v8746 = vunpack.c.h.b16 %v8107
    %v8747 = vunpack.c.l.b16 %v8108
    %v8748 = vunpack.c.l.b16 %v8109
    %v8749 = vunpack.c.h.b16 %v8109
    %v8750 = vunpack.c.l.b16 %v8110
    %v8751 = vunpack.c.l.b16 %v8111
    %v8752 = vunpack.c.h.b16 %v8111
    %v8753 = vunpack.c.l.b16 %v8112
    %v8754 = vunpack.c.l.b16 %v8113
    %v8755 = vunpack.c.h.b16 %v8113
    %v8756 = vunpack.c.l.b16 %v8114
    %v8757 = vunpack.c.l.b16 %v8115
    %v8758 = vunpack.c.h.b16 %v8115
    %v8759 = vunpack.c.l.b16 %v8116
    %v8760 = vunpack.c.l.b16 %v8117
    %v8761 = vunpack.c.h.b16 %v8117
    %v8762 = vunpack.c.l.b16 %v8118
    %v8763 = vunpack.c.l.b16 %v8119
    %v8764 = vunpack.c.h.b16 %v8119
    %v8765 = vunpack.c.l.b16 %v8120
    %v8766 = vunpack.c.l.b16 %v8121
    %v8767 = vunpack.c.h.b16 %v8121
    %v8768 = vunpack.c.l.b16 %v8122
    %v8769 = vunpack.c.l.b16 %v8123
    %v8770 = vunpack.c.h.b16 %v8123
    %v8771 = vunpack.c.l.b16 %v8124
    %v8772 = vunpack.c.l.b16 %v8125
    %v8773 = vunpack.c.h.b16 %v8125
    %v8774 = vunpack.c.l.b16 %v8126
    %v8775 = vunpack.c.l.b16 %v8127
    %v8776 = vunpack.c.h.b16 %v8127
    %v8777 = vunpack.c.l.b16 %v8128
    %v8778 = vunpack.c.l.b16 %v8129
    %v8779 = vunpack.c.h.b16 %v8129
    %v8780 = vunpack.c.l.b16 %v8130
    %v8781 = vunpack.c.l.b16 %v8131
    %v8782 = vunpack.c.h.b16 %v8131
    %v8783 = vunpack.c.l.b16 %v8132
    %v8784 = vunpack.c.l.b16 %v8133
    %v8785 = vunpack.c.h.b16 %v8133
    %v8786 = vunpack.c.l.b16 %v8134
    %v8787 = vunpack.c.l.b16 %v8135
    %v8788 = vunpack.c.h.b16 %v8135
    %v8789 = vunpack.c.l.b16 %v8136
    %v8790 = vunpack.c.l.b16 %v8137
    %v8791 = vunpack.c.h.b16 %v8137
    %v8792 = vunpack.c.l.b16 %v8138
    %v8793 = vunpack.c.l.b16 %v8139
    %v8794 = vunpack.c.h.b16 %v8139
    %v8795 = vunpack.c.l.b16 %v8140
    %v8796 = vunpack.c.l.b16 %v8141
    %v8797 = vunpack.c.h.b16 %v8141
    %v8798 = vunpack.c.l.b16 %v8142
    %v8799 = vunpack.c.l.b16 %v8143
    %v8800 = vunpack.c.h.b16 %v8143
    %v8801 = vunpack.c.l.b16 %v8144
    %v8802 = vunpack.c.l.b16 %v8145
    %v8803 = vunpack.c.h.b16 %v8145
    %v8804 = vunpack.c.l.b16 %v8146
    %v8805 = vunpack.c.l.b16 %v8147
    %v8806 = vunpack.c.h.b16 %v8147
    %v8807 = vunpack.c.l.b16 %v8148
    %v8808 = vunpack.c.l.b16 %v8149
    %v8809 = vunpack.c.h.b16 %v8149
    %v8810 = vunpack.c.l.b16 %v8150
    %v8811 = vunpack.c.l.b16 %v8151
    %v8812 = vunpack.c.h.b16 %v8151
    %v8813 = vunpack.c.l.b16 %v8152
    %v8814 = vunpack.c.l.b16 %v8153
    %v8815 = vunpack.c.h.b16 %v8153
    %v8816 = vunpack.c.l.b16 %v8154
    %v8817 = vunpack.c.l.b16 %v8155
    %v8818 = vunpack.c.h.b16 %v8155
    %v8819 = vunpack.c.l.b16 %v8156
    %v8820 = vunpack.c.l.b16 %v8157
    %v8821 = vunpack.c.h.b16 %v8157
    %v8822 = vunpack.c.l.b16 %v8158
    %v8823 = vunpack.c.l.b16 %v8159
    %v8824 = vunpack.c.h.b16 %v8159
    %v8825 = vunpack.c.l.b16 %v8160
    %v8826 = vunpack.c.l.b16 %v8161
    %v8827 = vunpack.c.h.b16 %v8161
    %v8828 = vunpack.c.l.b16 %v8162
    %v8829 = vunpack.c.l.b16 %v8163
    %v8830 = vunpack.c.h.b16 %v8163
    %v8831 = vunpack.c.l.b16 %v8164
    %v8832 = vunpack.c.l.b16 %v8165
    %v8833 = vunpack.c.h.b16 %v8165
    %v8834 = vunpack.c.l.b16 %v8166
    %v8835 = vunpack.c.l.b16 %v8167
    %v8836 = vunpack.c.h.b16 %v8167
    %v8837 = vunpack.c.l.b16 %v8168
    %v8838 = vunpack.c.l.b16 %v8169
    %v8839 = vunpack.c.h.b16 %v8169
    %v8840 = vunpack.c.l.b16 %v8170
    %v8841 = vunpack.c.l.b16 %v8171
    %v8842 = vunpack.c.h.b16 %v8171
    %v8843 = vunpack.c.l.b16 %v8172
    %v8844 = vunpack.c.l.b16 %v8173
    %v8845 = vunpack.c.h.b16 %v8173
    %v8846 = vunpack.c.l.b16 %v8174
    %v8847 = vunpack.c.l.b16 %v8175
    %v8848 = vunpack.c.h.b16 %v8175
    %v8849 = vunpack.c.l.b16 %v8176
    %v8850 = vunpack.c.l.b16 %v8177
    %v8851 = vunpack.c.h.b16 %v8177
    %v8852 = vunpack.c.l.b16 %v8178
    %v8853 = vunpack.c.l.b16 %v8179
    %v8854 = vunpack.c.h.b16 %v8179
    %v8855 = vunpack.c.l.b16 %v8180
    %v8856 = vunpack.c.l.b16 %v8181
    %v8857 = vunpack.c.h.b16 %v8181
    %v8858 = vunpack.c.l.b16 %v8182
    %v8859 = vunpack.c.l.b16 %v8183
    %v8860 = vunpack.c.h.b16 %v8183
    %v8861 = vunpack.c.l.b16 %v8184
    %v8862 = vunpack.c.l.b16 %v8185
    %v8863 = vunpack.c.h.b16 %v8185
    %v8864 = vunpack.c.l.b16 %v8186
    %v8865 = vunpack.c.l.b16 %v8187
    %v8866 = vunpack.c.h.b16 %v8187
    %v8867 = vunpack.c.l.b16 %v8188
    %v8868 = vunpack.c.l.b16 %v8189
    %v8869 = vunpack.c.h.b16 %v8189
    %v8870 = vunpack.c.l.b16 %v8190
    %v8871 = vunpack.c.l.b16 %v8191
    %v8872 = vunpack.c.h.b16 %v8191
    %v8873 = vunpack.c.l.b16 %v8192
    %v8874 = vunpack.c.l.b16 %v8193
    %v8875 = vunpack.c.h.b16 %v8193
    %v8876 = vunpack.c.l.b16 %v8194
    %v8877 = vunpack.c.l.b16 %v8195
    %v8878 = vunpack.c.h.b16 %v8195
    %v8879 = vunpack.c.l.b16 %v8196
    %v8880 = vunpack.c.l.b16 %v8197
    %v8881 = vunpack.c.h.b16 %v8197
    %v8882 = vunpack.c.l.b16 %v8198
    %v8883 = vunpack.c.l.b16 %v8199
    %v8884 = vunpack.c.h.b16 %v8199
    %v8885 = vunpack.c.l.b16 %v8200
    %v8886 = vunpack.c.l.b16 %v8201
    %v8887 = vunpack.c.h.b16 %v8201
    %v8888 = vunpack.c.l.b16 %v8202
    %v8889 = vunpack.c.l.b16 %v8203
    %v8890 = vunpack.c.h.b16 %v8203
    %v8891 = vunpack.c.l.b16 %v8204
    %v8892 = vunpack.c.l.b16 %v8205
    %v8893 = vunpack.c.h.b16 %v8205
    %v8894 = vunpack.c.l.b16 %v8206
    %v8895 = vunpack.c.l.b16 %v8207
    %v8896 = vunpack.c.h.b16 %v8207
    %v8897 = vunpack.c.l.b16 %v8208
    %v8898 = vunpack.c.l.b16 %v8209
    %v8899 = vunpack.c.h.b16 %v8209
    %v8900 = vunpack.c.l.b16 %v8210
    %v8901 = vunpack.c.l.b16 %v8211
    %v8902 = vunpack.c.h.b16 %v8211
    %v8903 = vunpack.c.l.b16 %v8212
    %v8904 = vunpack.c.l.b16 %v8213
    %v8905 = vunpack.c.h.b16 %v8213
    %v8906 = vunpack.c.l.b16 %v8214
    %v8907 = vunpack.c.l.b16 %v8215
    %v8908 = vunpack.c.h.b16 %v8215
    %v8909 = vunpack.c.l.b16 %v8216
    %v8910 = vunpack.c.l.b16 %v8217
    %v8911 = vunpack.c.h.b16 %v8217
    %v8912 = vunpack.c.l.b16 %v8218
    %v8913 = vunpack.c.l.b16 %v8219
    %v8914 = vunpack.c.h.b16 %v8219
    %v8915 = vunpack.c.l.b16 %v8220
    %v8916 = vunpack.c.l.b16 %v8221
    %v8917 = vunpack.c.h.b16 %v8221
    %v8918 = vunpack.c.l.b16 %v8222
    %v8919 = vunpack.c.l.b16 %v8223
    %v8920 = vunpack.c.h.b16 %v8223
    %v8921 = vunpack.c.l.b16 %v8224
    %v8922 = vunpack.c.l.b16 %v8225
    %v8923 = vunpack.c.h.b16 %v8225
    %v8924 = vunpack.c.l.b16 %v8226
    %v8925 = vunpack.c.l.b16 %v8227
    %v8926 = vunpack.c.h.b16 %v8227
    %v8927 = vunpack.c.l.b16 %v8228
    %v8928 = vunpack.c.l.b16 %v8229
    %v8929 = vunpack.c.h.b16 %v8229
    %v8930 = vunpack.c.l.b16 %v8230
    %v8931 = vunpack.c.l.b16 %v8231
    %v8932 = vunpack.c.h.b16 %v8231
    %v8933 = vunpack.c.l.b16 %v8232
    %v8934 = vunpack.c.l.b16 %v8233
    %v8935 = vunpack.c.h.b16 %v8233
    %v8936 = vunpack.c.l.b16 %v8234
    %v8937 = vunpack.c.l.b16 %v8235
    %v8938 = vunpack.c.h.b16 %v8235
    %v8939 = vunpack.c.l.b16 %v8236
    %v8940 = vunpack.c.l.b16 %v8237
    %v8941 = vunpack.c.h.b16 %v8237
    %v8942 = vunpack.c.l.b16 %v8238
    %v8943 = vunpack.c.l.b16 %v8239
    %v8944 = vunpack.c.h.b16 %v8239
    %v8945 = vunpack.c.l.b16 %v8240
    %v8946 = vunpack.c.l.b16 %v8241
    %v8947 = vunpack.c.h.b16 %v8241
    %v8948 = vunpack.c.l.b16 %v8242
    %v8949 = vunpack.c.l.b16 %v8243
    %v8950 = vunpack.c.h.b16 %v8243
    %v8951 = vunpack.c.l.b16 %v8244
    %v8952 = vunpack.c.l.b16 %v8245
    %v8953 = vunpack.c.h.b16 %v8245
    %v8954 = vunpack.c.l.b16 %v8246
    %v8955 = vunpack.c.l.b16 %v8247
    %v8956 = vunpack.c.h.b16 %v8247
    %v8957 = vunpack.c.l.b16 %v8248
    %v8958 = vunpack.c.l.b16 %v8249
    %v8959 = vunpack.c.h.b16 %v8249
    %v8960 = vunpack.c.l.b16 %v8250
    %v8961 = vunpack.c.l.b16 %v8251
    %v8962 = vunpack.c.h.b16 %v8251
    %v8963 = vunpack.c.l.b16 %v8252
    %v8964 = vunpack.c.l.b16 %v8253
    %v8965 = vunpack.c.h.b16 %v8253
    %v8966 = vunpack.c.l.b16 %v8254
    %v8967 = vunpack.c.l.b16 %v8255
    %v8968 = vunpack.c.h.b16 %v8255
    %v8969 = vunpack.c.l.b16 %v8256
    %v8970 = vunpack.c.l.b16 %v8257
    %v8971 = vunpack.c.h.b16 %v8257
    %v8972 = vunpack.c.l.b16 %v8258
    %v8973 = vunpack.c.l.b16 %v8259
    %v8974 = vunpack.c.h.b16 %v8259
    %v8975 = vunpack.c.l.b16 %v8260
    %v8976 = vunpack.c.l.b16 %v8261
    %v8977 = vunpack.c.h.b16 %v8261
    %v8978 = vunpack.c.l.b16 %v8262
    %v8979 = vunpack.c.l.b16 %v8263
    %v8980 = vunpack.c.h.b16 %v8263
    %v8981 = vunpack.c.l.b16 %v8264
    %v8982 = vunpack.c.l.b16 %v8265
    %v8983 = vunpack.c.h.b16 %v8265
    %v8984 = vunpack.c.l.b16 %v8266
    %v8985 = vunpack.c.l.b16 %v8267
    %v8986 = vunpack.c.h.b16 %v8267
    %v8987 = vunpack.c.l.b16 %v8268
    %v8988 = vunpack.c.l.b16 %v8269
    %v8989 = vunpack.c.h.b16 %v8269
    %v8990 = vunpack.c.l.b16 %v8270
    %v8991 = vunpack.c.l.b16 %v8271
    %v8992 = vunpack.c.h.b16 %v8271
    %v8993 = vunpack.c.l.b16 %v8272
    %v8994 = vunpack.c.l.b16 %v8273
    %v8995 = vunpack.c.h.b16 %v8273
    %v8996 = vunpack.c.l.b16 %v8274
    %v8997 = vunpack.c.l.b16 %v8275
    %v8998 = vunpack.c.h.b16 %v8275
    %v8999 = vunpack.c.l.b16 %v8276
    %v9000 = vunpack.c.l.b16 %v8277
    %v9001 = vunpack.c.h.b16 %v8277
    %v9002 = vunpack.c.l.b16 %v8278
    %v9003 = vunpack.c.l.b16 %v8279
    %v9004 = vunpack.c.h.b16 %v8279
    %v9005 = vunpack.c.l.b16 %v8280
    %v9006 = vunpack.c.l.b16 %v8281
    %v9007 = vunpack.c.h.b16 %v8281
    %v9008 = vunpack.c.l.b16 %v8282
    %v9009 = vunpack.c.l.b16 %v8283
    %v9010 = vunpack.c.h.b16 %v8283
    %v9011 = vunpack.c.l.b16 %v8284
    %v9012 = vunpack.c.l.b16 %v8285
    %v9013 = vunpack.c.h.b16 %v8285
    %v9014 = vunpack.c.l.b16 %v8286
    %v9015 = vunpack.c.l.b16 %v8287
    %v9016 = vunpack.c.h.b16 %v8287
    %v9017 = vunpack.c.l.b16 %v8288
    %v9018 = vunpack.c.l.b16 %v8289
    %v9019 = vunpack.c.h.b16 %v8289
    %v9020 = vunpack.c.l.b16 %v8290
    %v9021 = vunpack.c.l.b16 %v8291
    %v9022 = vunpack.c.h.b16 %v8291
    %v9023 = vunpack.c.l.b16 %v8292
    %v9024 = vunpack.c.l.b16 %v8293
    %v9025 = vunpack.c.h.b16 %v8293
    %v9026 = vunpack.c.l.b16 %v8294
    %v9027 = vunpack.c.l.b16 %v8295
    %v9028 = vunpack.c.h.b16 %v8295
    %v9029 = vunpack.c.l.b16 %v8296
    %v9030 = vunpack.c.l.b16 %v8297
    %v9031 = vunpack.c.h.b16 %v8297
    %v9032 = vunpack.c.l.b16 %v8298
    %v9033 = vunpack.c.l.b16 %v8299
    %v9034 = vunpack.c.h.b16 %v8299
    %v9035 = vunpack.c.l.b16 %v8300
    %v9036 = vunpack.c.l.b16 %v8301
    %v9037 = vunpack.c.h.b16 %v8301
    %v9038 = vunpack.c.l.b16 %v8302
    %v9039 = vunpack.c.l.b16 %v8303
    %v9040 = vunpack.c.h.b16 %v8303
    %v9041 = vunpack.c.l.b16 %v8304
    %v9042 = vpack.c.b16 %v8613, %v8610
    %v9043 = vpack.c.b16 %v8614, %v8611
    %v9044 = vpack.c.b16 %v8615, %v8612
    %v9045 = vpack.c.b16 %v8619, %v8616
    %v9046 = vpack.c.b16 %v8620, %v8617
    %v9047 = vpack.c.b16 %v8621, %v8618
    %v9048 = vpack.c.b16 %v8625, %v8622
    %v9049 = vpack.c.b16 %v8626, %v8623
    %v9050 = vpack.c.b16 %v8627, %v8624
    %v9051 = vpack.c.b16 %v8631, %v8628
    %v9052 = vpack.c.b16 %v8632, %v8629
    %v9053 = vpack.c.b16 %v8633, %v8630
    %v9054 = vpack.c.b16 %v8637, %v8634
    %v9055 = vpack.c.b16 %v8638, %v8635
    %v9056 = vpack.c.b16 %v8639, %v8636
    %v9057 = vpack.c.b16 %v8643, %v8640
    %v9058 = vpack.c.b16 %v8644, %v8641
    %v9059 = vpack.c.b16 %v8645, %v8642
    %v9060 = vpack.c.b16 %v8649, %v8646
    %v9061 = vpack.c.b16 %v8650, %v8647
    %v9062 = vpack.c.b16 %v8651, %v8648
    %v9063 = vpack.c.b16 %v8655, %v8652
    %v9064 = vpack.c.b16 %v8656, %v8653
    %v9065 = vpack.c.b16 %v8657, %v8654
    %v9066 = vpack.c.b16 %v8661, %v8658
    %v9067 = vpack.c.b16 %v8662, %v8659
    %v9068 = vpack.c.b16 %v8663, %v8660
    %v9069 = vpack.c.b16 %v8667, %v8664
    %v9070 = vpack.c.b16 %v8668, %v8665
    %v9071 = vpack.c.b16 %v8669, %v8666
    %v9072 = vpack.c.b16 %v8673, %v8670
    %v9073 = vpack.c.b16 %v8674, %v8671
    %v9074 = vpack.c.b16 %v8675, %v8672
    %v9075 = vpack.c.b16 %v8679, %v8676
    %v9076 = vpack.c.b16 %v8680, %v8677
    %v9077 = vpack.c.b16 %v8681, %v8678
    %v9078 = vpack.c.b16 %v8685, %v8682
    %v9079 = vpack.c.b16 %v8686, %v8683
    %v9080 = vpack.c.b16 %v8687, %v8684
    %v9081 = vpack.c.b16 %v8691, %v8688
    %v9082 = vpack.c.b16 %v8692, %v8689
    %v9083 = vpack.c.b16 %v8693, %v8690
    %v9084 = vpack.c.b16 %v8697, %v8694
    %v9085 = vpack.c.b16 %v8698, %v8695
    %v9086 = vpack.c.b16 %v8699, %v8696
    %v9087 = vpack.c.b16 %v8703, %v8700
    %v9088 = vpack.c.b16 %v8704, %v8701
    %v9089 = vpack.c.b16 %v8705, %v8702
    %v9090 = vpack.c.b16 %v8709, %v8706
    %v9091 = vpack.c.b16 %v8710, %v8707
    %v9092 = vpack.c.b16 %v8711, %v8708
    %v9093 = vpack.c.b16 %v8715, %v8712
    %v9094 = vpack.c.b16 %v8716, %v8713
    %v9095 = vpack.c.b16 %v8717, %v8714
    %v9096 = vpack.c.b16 %v8721, %v8718
    %v9097 = vpack.c.b16 %v8722, %v8719
    %v9098 = vpack.c.b16 %v8723, %v8720
    %v9099 = vpack.c.b16 %v8727, %v8724
    %v9100 = vpack.c.b16 %v8728, %v8725
    %v9101 = vpack.c.b16 %v8729, %v8726
    %v9102 = vpack.c.b16 %v8733, %v8730
    %v9103 = vpack.c.b16 %v8734, %v8731
    %v9104 = vpack.c.b16 %v8735, %v8732
    %v9105 = vpack.c.b16 %v8739, %v8736
    %v9106 = vpack.c.b16 %v8740, %v8737
    %v9107 = vpack.c.b16 %v8741, %v8738
    %v9108 = vpack.c.b16 %v8745, %v8742
    %v9109 = vpack.c.b16 %v8746, %v8743
    %v9110 = vpack.c.b16 %v8747, %v8744
    %v9111 = vpack.c.b16 %v8751, %v8748
    %v9112 = vpack.c.b16 %v8752, %v8749
    %v9113 = vpack.c.b16 %v8753, %v8750
    %v9114 = vpack.c.b16 %v8757, %v8754
    %v9115 = vpack.c.b16 %v8758, %v8755
    %v9116 = vpack.c.b16 %v8759, %v8756
    %v9117 = vpack.c.b16 %v8763, %v8760
    %v9118 = vpack.c.b16 %v8764, %v8761
    %v9119 = vpack.c.b16 %v8765, %v8762
    %v9120 = vpack.c.b16 %v8769, %v8766
    %v9121 = vpack.c.b16 %v8770, %v8767
    %v9122 = vpack.c.b16 %v8771, %v8768
    %v9123 = vpack.c.b16 %v8775, %v8772
    %v9124 = vpack.c.b16 %v8776, %v8773
    %v9125 = vpack.c.b16 %v8777, %v8774
    %v9126 = vpack.c.b16 %v8781, %v8778
    %v9127 = vpack.c.b16 %v8782, %v8779
    %v9128 = vpack.c.b16 %v8783, %v8780
    %v9129 = vpack.c.b16 %v8787, %v8784
    %v9130 = vpack.c.b16 %v8788, %v8785
    %v9131 = vpack.c.b16 %v8789, %v8786
    %v9132 = vpack.c.b16 %v8793, %v8790
    %v9133 = vpack.c.b16 %v8794, %v8791
    %v9134 = vpack.c.b16 %v8795, %v8792
    %v9135 = vpack.c.b16 %v8799, %v8796
    %v9136 = vpack.c.b16 %v8800, %v8797
    %v9137 = vpack.c.b16 %v8801, %v8798
    %v9138 = vpack.c.b16 %v8805, %v8802
    %v9139 = vpack.c.b16 %v8806, %v8803
    %v9140 = vpack.c.b16 %v8807, %v8804
    %v9141 = vpack.c.b16 %v8811, %v8808
    %v9142 = vpack.c.b16 %v8812, %v8809
    %v9143 = vpack.c.b16 %v8813, %v8810
    %v9144 = vpack.c.b16 %v8817, %v8814
    %v9145 = vpack.c.b16 %v8818, %v8815
    %v9146 = vpack.c.b16 %v8819, %v8816
    %v9147 = vpack.c.b16 %v8823, %v8820
    %v9148 = vpack.c.b16 %v8824, %v8821
    %v9149 = vpack.c.b16 %v8825, %v8822
    %v9150 = vpack.c.b16 %v8829, %v8826
    %v9151 = vpack.c.b16 %v8830, %v8827
    %v9152 = vpack.c.b16 %v8831, %v8828
    %v9153 = vpack.c.b16 %v8835, %v8832
    %v9154 = vpack.c.b16 %v8836, %v8833
    %v9155 = vpack.c.b16 %v8837, %v8834
    %v9156 = vpack.c.b16 %v8841, %v8838
    %v9157 = vpack.c.b16 %v8842, %v8839
    %v9158 = vpack.c.b16 %v8843, %v8840
    %v9159 = vpack.c.b16 %v8847, %v8844
    %v9160 = vpack.c.b16 %v8848, %v8845
    %v9161 = vpack.c.b16 %v8849, %v8846
    %v9162 = vpack.c.b16 %v8853, %v8850
    %v9163 = vpack.c.b16 %v8854, %v8851
    %v9164 = vpack.c.b16 %v8855, %v8852
    %v9165 = vpack.c.b16 %v8859, %v8856
    %v9166 = vpack.c.b16 %v8860, %v8857
    %v9167 = vpack.c.b16 %v8861, %v8858
    %v9168 = vpack.c.b16 %v8865, %v8862
    %v9169 = vpack.c.b16 %v8866, %v8863
    %v9170 = vpack.c.b16 %v8867, %v8864
    %v9171 = vpack.c.b16 %v8871, %v8868
    %v9172 = vpack.c.b16 %v8872, %v8869
    %v9173 = vpack.c.b16 %v8873, %v8870
    %v9174 = vpack.c.b16 %v8877, %v8874
    %v9175 = vpack.c.b16 %v8878, %v8875
    %v9176 = vpack.c.b16 %v8879, %v8876
    %v9177 = vpack.c.b16 %v8883, %v8880
    %v9178 = vpack.c.b16 %v8884, %v8881
    %v9179 = vpack.c.b16 %v8885, %v8882
    %v9180 = vpack.c.b16 %v8889, %v8886
    %v9181 = vpack.c.b16 %v8890, %v8887
    %v9182 = vpack.c.b16 %v8891, %v8888
    %v9183 = vpack.c.b16 %v8895, %v8892
    %v9184 = vpack.c.b16 %v8896, %v8893
    %v9185 = vpack.c.b16 %v8897, %v8894
    %v9186 = vpack.c.b16 %v8901, %v8898
    %v9187 = vpack.c.b16 %v8902, %v8899
    %v9188 = vpack.c.b16 %v8903, %v8900
    %v9189 = vpack.c.b16 %v8907, %v8904
    %v9190 = vpack.c.b16 %v8908, %v8905
    %v9191 = vpack.c.b16 %v8909, %v8906
    %v9192 = vpack.c.b16 %v8913, %v8910
    %v9193 = vpack.c.b16 %v8914, %v8911
    %v9194 = vpack.c.b16 %v8915, %v8912
    %v9195 = vpack.c.b16 %v8919, %v8916
    %v9196 = vpack.c.b16 %v8920, %v8917
    %v9197 = vpack.c.b16 %v8921, %v8918
    %v9198 = vpack.c.b16 %v8925, %v8922
    %v9199 = vpack.c.b16 %v8926, %v8923
    %v9200 = vpack.c.b16 %v8927, %v8924
    %v9201 = vpack.c.b16 %v8931, %v8928
    %v9202 = vpack.c.b16 %v8932, %v8929
    %v9203 = vpack.c.b16 %v8933, %v8930
    %v9204 = vpack.c.b16 %v8937, %v8934
    %v9205 = vpack.c.b16 %v8938, %v8935
    %v9206 = vpack.c.b16 %v8939, %v8936
    %v9207 = vpack.c.b16 %v8943, %v8940
    %v9208 = vpack.c.b16 %v8944, %v8941
    %v9209 = vpack.c.b16 %v8945, %v8942
    %v9210 = vpack.c.b16 %v8949, %v8946
    %v9211 = vpack.c.b16 %v8950, %v8947
    %v9212 = vpack.c.b16 %v8951, %v8948
    %v9213 = vpack.c.b16 %v8955, %v8952
    %v9214 = vpack.c.b16 %v8956, %v8953
    %v9215 = vpack.c.b16 %v8957, %v8954
    %v9216 = vpack.c.b16 %v8961, %v8958
    %v9217 = vpack.c.b16 %v8962, %v8959
    %v9218 = vpack.c.b16 %v8963, %v8960
    %v9219 = vpack.c.b16 %v8967, %v8964
    %v9220 = vpack.c.b16 %v8968, %v8965
    %v9221 = vpack.c.b16 %v8969, %v8966
    %v9222 = vpack.c.b16 %v8973, %v8970
    %v9223 = vpack.c.b16 %v8974, %v8971
    %v9224 = vpack.c.b16 %v8975, %v8972
    %v9225 = vpack.c.b16 %v8979, %v8976
    %v9226 = vpack.c.b16 %v8980, %v8977
    %v9227 = vpack.c.b16 %v8981, %v8978
    %v9228 = vpack.c.b16 %v8985, %v8982
    %v9229 = vpack.c.b16 %v8986, %v8983
    %v9230 = vpack.c.b16 %v8987, %v8984
    %v9231 = vpack.c.b16 %v8991, %v8988
    %v9232 = vpack.c.b16 %v8992, %v8989
    %v9233 = vpack.c.b16 %v8993, %v8990
    %v9234 = vpack.c.b16 %v8997, %v8994
    %v9235 = vpack.c.b16 %v8998, %v8995
    %v9236 = vpack.c.b16 %v8999, %v8996
    %v9237 = vpack.c.b16 %v9003, %v9000
    %v9238 = vpack.c.b16 %v9004, %v9001
    %v9239 = vpack.c.b16 %v9005, %v9002
    %v9240 = vpack.c.b16 %v9009, %v9006
    %v9241 = vpack.c.b16 %v9010, %v9007
    %v9242 = vpack.c.b16 %v9011, %v9008
    %v9243 = vpack.c.b16 %v9015, %v9012
    %v9244 = vpack.c.b16 %v9016, %v9013
    %v9245 = vpack.c.b16 %v9017, %v9014
    %v9246 = vpack.c.b16 %v9021, %v9018
    %v9247 = vpack.c.b16 %v9022, %v9019
    %v9248 = vpack.c.b16 %v9023, %v9020
    %v9249 = vpack.c.b16 %v9027, %v9024
    %v9250 = vpack.c.b16 %v9028, %v9025
    %v9251 = vpack.c.b16 %v9029, %v9026
    %v9252 = vpack.c.b16 %v9033, %v9030
    %v9253 = vpack.c.b16 %v9034, %v9031
    %v9254 = vpack.c.b16 %v9035, %v9032
    %v9255 = vpack.c.b16 %v9039, %v9036
    %v9256 = vpack.c.b16 %v9040, %v9037
    %v9257 = vpack.c.b16 %v9041, %v9038
    %9474 = vmatprep.subr.bf16.mxu0 %v9043
    %9475 = vmatpush1.bf16.msra.mxu0 %v9042
    %9476 = vmatprep.subr.bf16.mxu0 %v9046
    %9477 = vmatpush1.bf16.msra.mxu0 %v9045
    %9478 = vmatprep.subr.bf16.mxu0 %v9049
    %9479 = vmatpush1.bf16.msra.mxu0 %v9048
    %9480 = vmatprep.subr.bf16.mxu0 %v9052
    %9481 = vmatpush1.bf16.msra.mxu0 %v9051
    %9482 = vmatprep.subr.bf16.mxu0 %v9055
    %9483 = vmatpush1.bf16.msra.mxu0 %v9054
    %9484 = vmatprep.subr.bf16.mxu0 %v9058
    %9485 = vmatpush1.bf16.msra.mxu0 %v9057
    %9486 = vmatprep.subr.bf16.mxu0 %v9061
    %9487 = vmatpush1.bf16.msra.mxu0 %v9060
    %9488 = vmatprep.subr.bf16.mxu0 %v9064
    %9489 = vmatpush1.bf16.msra.mxu0 %v9063
    %9490 = vmatprep.subr.bf16.mxu0 %v9067
    %9491 = vmatpush1.bf16.msra.mxu0 %v9066
    %9492 = vmatprep.subr.bf16.mxu0 %v9070
    %9493 = vmatpush1.bf16.msra.mxu0 %v9069
    %9494 = vmatprep.subr.bf16.mxu0 %v9073
    %9495 = vmatpush1.bf16.msra.mxu0 %v9072
    %9496 = vmatprep.subr.bf16.mxu0 %v9076
    %9497 = vmatpush1.bf16.msra.mxu0 %v9075
    %9498 = vmatprep.subr.bf16.mxu0 %v9079
    %9499 = vmatpush1.bf16.msra.mxu0 %v9078
    %9500 = vmatprep.subr.bf16.mxu0 %v9082
    %9501 = vmatpush1.bf16.msra.mxu0 %v9081
    %9502 = vmatprep.subr.bf16.mxu0 %v9085
    %9503 = vmatpush1.bf16.msra.mxu0 %v9084
    %9504 = vmatprep.subr.bf16.mxu0 %v9088
    %9505 = vmatpush1.bf16.msra.mxu0 %v9087
    %9506 = vmatprep.mubr.bf16.mxu0 %v8009
    %9507 = vmatmul.mubr.bf16.gmra.mrb[0].mxu0 %v8008
    %v9508 = vpop.f32.mrb[0].mxu0
    %v9509 = vadd.f32 %v8310, %v9508
    %v9510 = vpop.f32.mrb[0].mxu0
    %v9511 = vadd.f32 %v8314, %v9510
    %v9512 = vpop.f32.mrb[0].mxu0
    %v9513 = vadd.f32 %v8310, %v9512
    %v9514 = vpop.f32.mrb[0].mxu0
    %v9515 = vadd.f32 %v8314, %v9514
    %9516 = vdwg.mxu0
    %9517 = vmatprep.subr.bf16.mxu0 %v9091
    %9518 = vmatpush1.bf16.msra.mxu0 %v9090
    %9519 = vmatprep.subr.bf16.mxu0 %v9094
    %9520 = vmatpush1.bf16.msra.mxu0 %v9093
    %9521 = vmatprep.subr.bf16.mxu0 %v9097
    %9522 = vmatpush1.bf16.msra.mxu0 %v9096
    %9523 = vmatprep.subr.bf16.mxu0 %v9100
    %9524 = vmatpush1.bf16.msra.mxu0 %v9099
    %9525 = vmatprep.subr.bf16.mxu0 %v9103
    %9526 = vmatpush1.bf16.msra.mxu0 %v9102
    %9527 = vmatprep.subr.bf16.mxu0 %v9106
    %9528 = vmatpush1.bf16.msra.mxu0 %v9105
    %9529 = vmatprep.subr.bf16.mxu0 %v9109
    %9530 = vmatpush1.bf16.msra.mxu0 %v9108
    %9531 = vmatprep.subr.bf16.mxu0 %v9112
    %9532 = vmatpush1.bf16.msra.mxu0 %v9111
    %9533 = vmatprep.subr.bf16.mxu0 %v9115
    %9534 = vmatpush1.bf16.msra.mxu0 %v9114
    %9535 = vmatprep.subr.bf16.mxu0 %v9118
    %9536 = vmatpush1.bf16.msra.mxu0 %v9117
    %9537 = vmatprep.subr.bf16.mxu0 %v9121
    %9538 = vmatpush1.bf16.msra.mxu0 %v9120
    %9539 = vmatprep.subr.bf16.mxu0 %v9124
    %9540 = vmatpush1.bf16.msra.mxu0 %v9123
    %9541 = vmatprep.subr.bf16.mxu0 %v9127
    %9542 = vmatpush1.bf16.msra.mxu0 %v9126
    %9543 = vmatprep.subr.bf16.mxu0 %v9130
    %9544 = vmatpush1.bf16.msra.mxu0 %v9129
    %9545 = vmatprep.subr.bf16.mxu0 %v9133
    %9546 = vmatpush1.bf16.msra.mxu0 %v9132
    %9547 = vmatprep.subr.bf16.mxu0 %v9136
    %9548 = vmatpush1.bf16.msra.mxu0 %v9135
    %9549 = vmatprep.mubr.bf16.mxu0 %v8011
    %9550 = vmatmul.mubr.bf16.gmra.mrb[0].mxu0 %v8010
    %v9551 = vpop.f32.mrb[0].mxu0
    %v9552 = vadd.f32 %v9509, %v9551
    %v9553 = vpop.f32.mrb[0].mxu0
    %v9554 = vadd.f32 %v9511, %v9553
    %v9555 = vpop.f32.mrb[0].mxu0
    %v9556 = vadd.f32 %v9513, %v9555
    %v9557 = vpop.f32.mrb[0].mxu0
    %v9558 = vadd.f32 %v9515, %v9557
    %9559 = vdwg.mxu0
    %9560 = vmatprep.subr.bf16.mxu0 %v9139
    %9561 = vmatpush1.bf16.msra.mxu0 %v9138
    %9562 = vmatprep.subr.bf16.mxu0 %v9142
    %9563 = vmatpush1.bf16.msra.mxu0 %v9141
    %9564 = vmatprep.subr.bf16.mxu0 %v9145
    %9565 = vmatpush1.bf16.msra.mxu0 %v9144
    %9566 = vmatprep.subr.bf16.mxu0 %v9148
    %9567 = vmatpush1.bf16.msra.mxu0 %v9147
    %9568 = vmatprep.subr.bf16.mxu0 %v9151
    %9569 = vmatpush1.bf16.msra.mxu0 %v9150
    %9570 = vmatprep.subr.bf16.mxu0 %v9154
    %9571 = vmatpush1.bf16.msra.mxu0 %v9153
    %9572 = vmatprep.subr.bf16.mxu0 %v9157
    %9573 = vmatpush1.bf16.msra.mxu0 %v9156
    %9574 = vmatprep.subr.bf16.mxu0 %v9160
    %9575 = vmatpush1.bf16.msra.mxu0 %v9159
    %9576 = vmatprep.subr.bf16.mxu0 %v9163
    %9577 = vmatpush1.bf16.msra.mxu0 %v9162
    %9578 = vmatprep.subr.bf16.mxu0 %v9166
    %9579 = vmatpush1.bf16.msra.mxu0 %v9165
    %9580 = vmatprep.subr.bf16.mxu0 %v9169
    %9581 = vmatpush1.bf16.msra.mxu0 %v9168
    %9582 = vmatprep.subr.bf16.mxu0 %v9172
    %9583 = vmatpush1.bf16.msra.mxu0 %v9171
    %9584 = vmatprep.subr.bf16.mxu0 %v9175
    %9585 = vmatpush1.bf16.msra.mxu0 %v9174
    %9586 = vmatprep.subr.bf16.mxu0 %v9178
    %9587 = vmatpush1.bf16.msra.mxu0 %v9177
    %9588 = vmatprep.subr.bf16.mxu0 %v9181
    %9589 = vmatpush1.bf16.msra.mxu0 %v9180
    %9590 = vmatprep.subr.bf16.mxu0 %v9184
    %9591 = vmatpush1.bf16.msra.mxu0 %v9183
    %9592 = vmatprep.mubr.bf16.mxu0 %v8013
    %9593 = vmatmul.mubr.bf16.gmra.mrb[0].mxu0 %v8012
    %v9594 = vpop.f32.mrb[0].mxu0
    %v9595 = vadd.f32 %v9552, %v9594
    %v9596 = vpop.f32.mrb[0].mxu0
    %v9597 = vadd.f32 %v9554, %v9596
    %v9598 = vpop.f32.mrb[0].mxu0
    %v9599 = vadd.f32 %v9556, %v9598
    %v9600 = vpop.f32.mrb[0].mxu0
    %v9601 = vadd.f32 %v9558, %v9600
    %9602 = vdwg.mxu0
    %9603 = vmatprep.subr.bf16.mxu0 %v9187
    %9604 = vmatpush1.bf16.msra.mxu0 %v9186
    %9605 = vmatprep.subr.bf16.mxu0 %v9190
    %9606 = vmatpush1.bf16.msra.mxu0 %v9189
    %9607 = vmatprep.subr.bf16.mxu0 %v9193
    %9608 = vmatpush1.bf16.msra.mxu0 %v9192
    %9609 = vmatprep.subr.bf16.mxu0 %v9196
    %9610 = vmatpush1.bf16.msra.mxu0 %v9195
    %9611 = vmatprep.subr.bf16.mxu0 %v9199
    %9612 = vmatpush1.bf16.msra.mxu0 %v9198
    %9613 = vmatprep.subr.bf16.mxu0 %v9202
    %9614 = vmatpush1.bf16.msra.mxu0 %v9201
    %9615 = vmatprep.subr.bf16.mxu0 %v9205
    %9616 = vmatpush1.bf16.msra.mxu0 %v9204
    %9617 = vmatprep.subr.bf16.mxu0 %v9208
    %9618 = vmatpush1.bf16.msra.mxu0 %v9207
    %9619 = vmatprep.subr.bf16.mxu0 %v9211
    %9620 = vmatpush1.bf16.msra.mxu0 %v9210
    %9621 = vmatprep.subr.bf16.mxu0 %v9214
    %9622 = vmatpush1.bf16.msra.mxu0 %v9213
    %9623 = vmatprep.subr.bf16.mxu0 %v9217
    %9624 = vmatpush1.bf16.msra.mxu0 %v9216
    %9625 = vmatprep.subr.bf16.mxu0 %v9220
    %9626 = vmatpush1.bf16.msra.mxu0 %v9219
    %9627 = vmatprep.subr.bf16.mxu0 %v9223
    %9628 = vmatpush1.bf16.msra.mxu0 %v9222
    %9629 = vmatprep.subr.bf16.mxu0 %v9226
    %9630 = vmatpush1.bf16.msra.mxu0 %v9225
    %9631 = vmatprep.subr.bf16.mxu0 %v9229
    %9632 = vmatpush1.bf16.msra.mxu0 %v9228
    %9633 = vmatprep.subr.bf16.mxu0 %v9232
    %9634 = vmatpush1.bf16.msra.mxu0 %v9231
    %9635 = vmatprep.mubr.bf16.mxu0 %v8015
    %9636 = vmatmul.mubr.bf16.gmra.mrb[0].mxu0 %v8014
    %v9637 = vpop.f32.mrb[0].mxu0
    %v9638 = vadd.f32 %v9595, %v9637
    %v9639 = vpop.f32.mrb[0].mxu0
    %v9640 = vadd.f32 %v9597, %v9639
    %v9641 = vpop.f32.mrb[0].mxu0
    %v9642 = vadd.f32 %v9599, %v9641
    %v9643 = vpop.f32.mrb[0].mxu0
    %v9644 = vadd.f32 %v9601, %v9643
    %9645 = vdwg.mxu0
    %9646 = vmatprep.subr.bf16.mxu0 %v9235
    %9647 = vmatpush1.bf16.msra.mxu0 %v9234
    %9648 = vmatprep.subr.bf16.mxu0 %v9238
    %9649 = vmatpush1.bf16.msra.mxu0 %v9237
    %9650 = vmatprep.subr.bf16.mxu0 %v9241
    %9651 = vmatpush1.bf16.msra.mxu0 %v9240
    %9652 = vmatprep.subr.bf16.mxu0 %v9244
    %9653 = vmatpush1.bf16.msra.mxu0 %v9243
    %9654 = vmatprep.subr.bf16.mxu0 %v9247
    %9655 = vmatpush1.bf16.msra.mxu0 %v9246
    %9656 = vmatprep.subr.bf16.mxu0 %v9250
    %9657 = vmatpush1.bf16.msra.mxu0 %v9249
    %9658 = vmatprep.subr.bf16.mxu0 %v9253
    %9659 = vmatpush1.bf16.msra.mxu0 %v9252
    %9660 = vmatprep.subr.bf16.mxu0 %v9256
    %9661 = vmatpush1.bf16.msra.mxu0 %v9255
    %9662 = vmatprep.subr.bf16.mxu0 0
    %9663 = vmatpush1.bf16.msra.mxu0 0
    %9664 = vmatprep.subr.bf16.mxu0 0
    %9665 = vmatpush1.bf16.msra.mxu0 0
    %9666 = vmatprep.subr.bf16.mxu0 0
    %9667 = vmatpush1.bf16.msra.mxu0 0
    %9668 = vmatprep.subr.bf16.mxu0 0
    %9669 = vmatpush1.bf16.msra.mxu0 0
    %9670 = vmatprep.subr.bf16.mxu0 0
    %9671 = vmatpush1.bf16.msra.mxu0 0
    %9672 = vmatprep.subr.bf16.mxu0 0
    %9673 = vmatpush1.bf16.msra.mxu0 0
    %9674 = vmatprep.subr.bf16.mxu0 0
    %9675 = vmatpush1.bf16.msra.mxu0 0
    %9676 = vmatprep.subr.bf16.mxu0 0
    %9677 = vmatpush1.bf16.msra.mxu0 0
    %9678 = vmatprep.mubr.bf16.mxu0 0
    %9679 = vmatmul.mubr.bf16.gmra.mrb[0].mxu0 %v8016
    %v9680 = vpop.f32.mrb[0].mxu0
    %v9681 = vadd.f32 %v9638, %v9680
    %v9682 = vpop.f32.mrb[0].mxu0
    %v9683 = vadd.f32 %v9640, %v9682
    %v9684 = vpop.f32.mrb[0].mxu0
    %v9685 = vadd.f32 %v9642, %v9684
    %v9686 = vpop.f32.mrb[0].mxu0
    %v9687 = vadd.f32 %v9644, %v9686
    %9688 = vdwg.mxu0
    %9689 = vmatprep.subr.bf16.mxu0 0
    %9690 = vmatpush1.bf16.msra.mxu0 %v9044
    %9691 = vmatprep.subr.bf16.mxu0 0
    %9692 = vmatpush1.bf16.msra.mxu0 %v9047
    %9693 = vmatprep.subr.bf16.mxu0 0
    %9694 = vmatpush1.bf16.msra.mxu0 %v9050
    %9695 = vmatprep.subr.bf16.mxu0 0
    %9696 = vmatpush1.bf16.msra.mxu0 %v9053
    %9697 = vmatprep.subr.bf16.mxu0 0
    %9698 = vmatpush1.bf16.msra.mxu0 %v9056
    %9699 = vmatprep.subr.bf16.mxu0 0
    %9700 = vmatpush1.bf16.msra.mxu0 %v9059
    %9701 = vmatprep.subr.bf16.mxu0 0
    %9702 = vmatpush1.bf16.msra.mxu0 %v9062
    %9703 = vmatprep.subr.bf16.mxu0 0
    %9704 = vmatpush1.bf16.msra.mxu0 %v9065
    %9705 = vmatprep.subr.bf16.mxu0 0
    %9706 = vmatpush1.bf16.msra.mxu0 %v9068
    %9707 = vmatprep.subr.bf16.mxu0 0
    %9708 = vmatpush1.bf16.msra.mxu0 %v9071
    %9709 = vmatprep.subr.bf16.mxu0 0
    %9710 = vmatpush1.bf16.msra.mxu0 %v9074
    %9711 = vmatprep.subr.bf16.mxu0 0
    %9712 = vmatpush1.bf16.msra.mxu0 %v9077
    %9713 = vmatprep.subr.bf16.mxu0 0
    %9714 = vmatpush1.bf16.msra.mxu0 %v9080
    %9715 = vmatprep.subr.bf16.mxu0 0
    %9716 = vmatpush1.bf16.msra.mxu0 %v9083
    %9717 = vmatprep.subr.bf16.mxu0 0
    %9718 = vmatpush1.bf16.msra.mxu0 %v9086
    %9719 = vmatprep.subr.bf16.mxu0 0
    %9720 = vmatpush1.bf16.msra.mxu0 %v9089
    %9721 = vmatprep.mubr.bf16.mxu0 %v8009
    %9722 = vmatmul.mubr.bf16.gmra.mrb[0].mxu0 %v8008
    %v9723 = vpop.f32.mrb[0].mxu0
    %v9724 = vadd.f32 %v8318, %v9723
    %v9725 = vpop.f32.mrb[0].mxu0
    %v9726 = vpop.f32.mrb[0].mxu0
    %v9727 = vadd.f32 %v8318, %v9726
    %v9728 = vpop.f32.mrb[0].mxu0
    %9729 = vdwg.mxu0
    %9730 = vmatprep.subr.bf16.mxu0 0
    %9731 = vmatpush1.bf16.msra.mxu0 %v9092
    %9732 = vmatprep.subr.bf16.mxu0 0
    %9733 = vmatpush1.bf16.msra.mxu0 %v9095
    %9734 = vmatprep.subr.bf16.mxu0 0
    %9735 = vmatpush1.bf16.msra.mxu0 %v9098
    %9736 = vmatprep.subr.bf16.mxu0 0
    %9737 = vmatpush1.bf16.msra.mxu0 %v9101
    %9738 = vmatprep.subr.bf16.mxu0 0
    %9739 = vmatpush1.bf16.msra.mxu0 %v9104
    %9740 = vmatprep.subr.bf16.mxu0 0
    %9741 = vmatpush1.bf16.msra.mxu0 %v9107
    %9742 = vmatprep.subr.bf16.mxu0 0
    %9743 = vmatpush1.bf16.msra.mxu0 %v9110
    %9744 = vmatprep.subr.bf16.mxu0 0
    %9745 = vmatpush1.bf16.msra.mxu0 %v9113
    %9746 = vmatprep.subr.bf16.mxu0 0
    %9747 = vmatpush1.bf16.msra.mxu0 %v9116
    %9748 = vmatprep.subr.bf16.mxu0 0
    %9749 = vmatpush1.bf16.msra.mxu0 %v9119
    %9750 = vmatprep.subr.bf16.mxu0 0
    %9751 = vmatpush1.bf16.msra.mxu0 %v9122
    %9752 = vmatprep.subr.bf16.mxu0 0
    %9753 = vmatpush1.bf16.msra.mxu0 %v9125
    %9754 = vmatprep.subr.bf16.mxu0 0
    %9755 = vmatpush1.bf16.msra.mxu0 %v9128
    %9756 = vmatprep.subr.bf16.mxu0 0
    %9757 = vmatpush1.bf16.msra.mxu0 %v9131
    %9758 = vmatprep.subr.bf16.mxu0 0
    %9759 = vmatpush1.bf16.msra.mxu0 %v9134
    %9760 = vmatprep.subr.bf16.mxu0 0
    %9761 = vmatpush1.bf16.msra.mxu0 %v9137
    %9762 = vmatprep.mubr.bf16.mxu0 %v8011
    %9763 = vmatmul.mubr.bf16.gmra.mrb[0].mxu0 %v8010
    %v9764 = vpop.f32.mrb[0].mxu0
    %v9765 = vadd.f32 %v9724, %v9764
    %v9766 = vpop.f32.mrb[0].mxu0
    %v9767 = vpop.f32.mrb[0].mxu0
    %v9768 = vadd.f32 %v9727, %v9767
    %v9769 = vpop.f32.mrb[0].mxu0
    %9770 = vdwg.mxu0
    %9771 = vmatprep.subr.bf16.mxu0 0
    %9772 = vmatpush1.bf16.msra.mxu0 %v9140
    %9773 = vmatprep.subr.bf16.mxu0 0
    %9774 = vmatpush1.bf16.msra.mxu0 %v9143
    %9775 = vmatprep.subr.bf16.mxu0 0
    %9776 = vmatpush1.bf16.msra.mxu0 %v9146
    %9777 = vmatprep.subr.bf16.mxu0 0
    %9778 = vmatpush1.bf16.msra.mxu0 %v9149
    %9779 = vmatprep.subr.bf16.mxu0 0
    %9780 = vmatpush1.bf16.msra.mxu0 %v9152
    %9781 = vmatprep.subr.bf16.mxu0 0
    %9782 = vmatpush1.bf16.msra.mxu0 %v9155
    %9783 = vmatprep.subr.bf16.mxu0 0
    %9784 = vmatpush1.bf16.msra.mxu0 %v9158
    %9785 = vmatprep.subr.bf16.mxu0 0
    %9786 = vmatpush1.bf16.msra.mxu0 %v9161
    %9787 = vmatprep.subr.bf16.mxu0 0
    %9788 = vmatpush1.bf16.msra.mxu0 %v9164
    %9789 = vmatprep.subr.bf16.mxu0 0
    %9790 = vmatpush1.bf16.msra.mxu0 %v9167
    %9791 = vmatprep.subr.bf16.mxu0 0
    %9792 = vmatpush1.bf16.msra.mxu0 %v9170
    %9793 = vmatprep.subr.bf16.mxu0 0
    %9794 = vmatpush1.bf16.msra.mxu0 %v9173
    %9795 = vmatprep.subr.bf16.mxu0 0
    %9796 = vmatpush1.bf16.msra.mxu0 %v9176
    %9797 = vmatprep.subr.bf16.mxu0 0
    %9798 = vmatpush1.bf16.msra.mxu0 %v9179
    %9799 = vmatprep.subr.bf16.mxu0 0
    %9800 = vmatpush1.bf16.msra.mxu0 %v9182
    %9801 = vmatprep.subr.bf16.mxu0 0
    %9802 = vmatpush1.bf16.msra.mxu0 %v9185
    %9803 = vmatprep.mubr.bf16.mxu0 %v8013
    %9804 = vmatmul.mubr.bf16.gmra.mrb[0].mxu0 %v8012
    %v9805 = vpop.f32.mrb[0].mxu0
    %v9806 = vadd.f32 %v9765, %v9805
    %v9807 = vpop.f32.mrb[0].mxu0
    %v9808 = vpop.f32.mrb[0].mxu0
    %v9809 = vadd.f32 %v9768, %v9808
    %v9810 = vpop.f32.mrb[0].mxu0
    %9811 = vdwg.mxu0
    %9812 = vmatprep.subr.bf16.mxu0 0
    %9813 = vmatpush1.bf16.msra.mxu0 %v9188
    %9814 = vmatprep.subr.bf16.mxu0 0
    %9815 = vmatpush1.bf16.msra.mxu0 %v9191
    %9816 = vmatprep.subr.bf16.mxu0 0
    %9817 = vmatpush1.bf16.msra.mxu0 %v9194
    %9818 = vmatprep.subr.bf16.mxu0 0
    %9819 = vmatpush1.bf16.msra.mxu0 %v9197
    %9820 = vmatprep.subr.bf16.mxu0 0
    %9821 = vmatpush1.bf16.msra.mxu0 %v9200
    %9822 = vmatprep.subr.bf16.mxu0 0
    %9823 = vmatpush1.bf16.msra.mxu0 %v9203
    %9824 = vmatprep.subr.bf16.mxu0 0
    %9825 = vmatpush1.bf16.msra.mxu0 %v9206
    %9826 = vmatprep.subr.bf16.mxu0 0
    %9827 = vmatpush1.bf16.msra.mxu0 %v9209
    %9828 = vmatprep.subr.bf16.mxu0 0
    %9829 = vmatpush1.bf16.msra.mxu0 %v9212
    %9830 = vmatprep.subr.bf16.mxu0 0
    %9831 = vmatpush1.bf16.msra.mxu0 %v9215
    %9832 = vmatprep.subr.bf16.mxu0 0
    %9833 = vmatpush1.bf16.msra.mxu0 %v9218
    %9834 = vmatprep.subr.bf16.mxu0 0
    %9835 = vmatpush1.bf16.msra.mxu0 %v9221
    %9836 = vmatprep.subr.bf16.mxu0 0
    %9837 = vmatpush1.bf16.msra.mxu0 %v9224
    %9838 = vmatprep.subr.bf16.mxu0 0
    %9839 = vmatpush1.bf16.msra.mxu0 %v9227
    %9840 = vmatprep.subr.bf16.mxu0 0
    %9841 = vmatpush1.bf16.msra.mxu0 %v9230
    %9842 = vmatprep.subr.bf16.mxu0 0
    %9843 = vmatpush1.bf16.msra.mxu0 %v9233
    %9844 = vmatprep.mubr.bf16.mxu0 %v8015
    %9845 = vmatmul.mubr.bf16.gmra.mrb[0].mxu0 %v8014
    %v9846 = vpop.f32.mrb[0].mxu0
    %v9847 = vadd.f32 %v9806, %v9846
    %v9848 = vpop.f32.mrb[0].mxu0
    %v9849 = vpop.f32.mrb[0].mxu0
    %v9850 = vadd.f32 %v9809, %v9849
    %v9851 = vpop.f32.mrb[0].mxu0
    %9852 = vdwg.mxu0
    %9853 = vmatprep.subr.bf16.mxu0 0
    %9854 = vmatpush1.bf16.msra.mxu0 %v9236
    %9855 = vmatprep.subr.bf16.mxu0 0
    %9856 = vmatpush1.bf16.msra.mxu0 %v9239
    %9857 = vmatprep.subr.bf16.mxu0 0
    %9858 = vmatpush1.bf16.msra.mxu0 %v9242
    %9859 = vmatprep.subr.bf16.mxu0 0
    %9860 = vmatpush1.bf16.msra.mxu0 %v9245
    %9861 = vmatprep.subr.bf16.mxu0 0
    %9862 = vmatpush1.bf16.msra.mxu0 %v9248
    %9863 = vmatprep.subr.bf16.mxu0 0
    %9864 = vmatpush1.bf16.msra.mxu0 %v9251
    %9865 = vmatprep.subr.bf16.mxu0 0
    %9866 = vmatpush1.bf16.msra.mxu0 %v9254
    %9867 = vmatprep.subr.bf16.mxu0 0
    %9868 = vmatpush1.bf16.msra.mxu0 %v9257
    %9869 = vmatprep.subr.bf16.mxu0 0
    %9870 = vmatpush1.bf16.msra.mxu0 0
    %9871 = vmatprep.subr.bf16.mxu0 0
    %9872 = vmatpush1.bf16.msra.mxu0 0
    %9873 = vmatprep.subr.bf16.mxu0 0
    %9874 = vmatpush1.bf16.msra.mxu0 0
    %9875 = vmatprep.subr.bf16.mxu0 0
    %9876 = vmatpush1.bf16.msra.mxu0 0
    %9877 = vmatprep.subr.bf16.mxu0 0
    %9878 = vmatpush1.bf16.msra.mxu0 0
    %9879 = vmatprep.subr.bf16.mxu0 0
    %9880 = vmatpush1.bf16.msra.mxu0 0
    %9881 = vmatprep.subr.bf16.mxu0 0
    %9882 = vmatpush1.bf16.msra.mxu0 0
    %9883 = vmatprep.subr.bf16.mxu0 0
    %9884 = vmatpush1.bf16.msra.mxu0 0
    %9885 = vmatprep.mubr.bf16.mxu0 0
    %9886 = vmatmul.mubr.bf16.gmra.mrb[0].mxu0 %v8016
    %v9887 = vpop.f32.mrb[0].mxu0
    %v9888 = vadd.f32 %v9847, %v9887
    %v9889 = vpop.f32.mrb[0].mxu0
    %v9890 = vpop.f32.mrb[0].mxu0
    %v9891 = vadd.f32 %v9850, %v9890
    %v9892 = vpop.f32.mrb[0].mxu0
    %9893 = vdwg.mxu0
    %v9894 = vmax.f32 %v9681, 0.0
    %v9895 = vmax.f32 %v9683, 0.0
    %v9896 = vmax.f32 %v9888, 0.0
    %v9897 = vmax.f32 %v9685, 0.0
    %v9898 = vmax.f32 %v9687, 0.0
    %v9899 = vmax.f32 %v9891, 0.0
    %v9900 = vpack.c.bf16 %v9897, %v9894
    %v9901 = vpack.c.bf16 %v9898, %v9895
    %v9902 = vpack.c.bf16 %v9899, %v9896
    %v9903 = vld [vmem:[%s51] sm:$0xf]
    %v9904 = vld [vmem:[%s51 + $0x4] sm:$0xf]
    %v9905 = vld [vmem:[%s51 + $0x8] sm:$0xf]
    %v9906 = vld [vmem:[%s51 + $0xc] sm:$0xf]
    %v9907 = vld [vmem:[%s51 + $0x10] sm:$0xf]
    %v9908 = vld [vmem:[%s51 + $0x14] sm:$0xf]
    %v9909 = vld [vmem:[%s51 + $0x18] sm:$0xf]
    %v9910 = vld [vmem:[%s51 + $0x1c] sm:$0xf]
    %v9911 = vld [vmem:[%s51 + $0x20] sm:$0xf]
    %v9921 = vunpack.c.l.b16 %v9903
    %v9922 = vunpack.c.l.b16 %v9904
    %v9923 = vunpack.c.l.b16 %v9905
    %v9924 = vunpack.c.l.b16 %v9906
    %v9925 = vunpack.c.l.b16 %v9907
    %v9926 = vunpack.c.l.b16 %v9908
    %v9927 = vunpack.c.l.b16 %v9909
    %v9928 = vunpack.c.l.b16 %v9910
    %v9929 = vunpack.c.l.b16 %v9911
    %v9930 = vpack.c.b16 %v9922, %v9921
    %v9931 = vpack.c.b16 %v9924, %v9923
    %v9932 = vpack.c.b16 %v9926, %v9925
    %v9933 = vpack.c.b16 %v9928, %v9927
    %v9934 = vpack.c.b16 %v9929, %v9929
    %v9936 = vsel %vm4073, %v9930, 0
    %v9939 = vsel %vm4073, %v9931, 0
    %v9942 = vsel %vm4073, %v9932, 0
    %v9945 = vsel %vm4073, %v9933, 0
    %v9948 = vsel %vm4073, %v9934, 0
    %9950 = vmatprep.subr.bf16.mxu0 %v9901
    %9951 = vmatpush1.bf16.msra.mxu0 %v9900
    %9952 = vmatprep.subr.bf16.mxu0 0
    %9953 = vmatpush1.bf16.msra.mxu0 0
    %9954 = vmatprep.subr.bf16.mxu0 0
    %9955 = vmatpush1.bf16.msra.mxu0 0
    %9956 = vmatprep.subr.bf16.mxu0 0
    %9957 = vmatpush1.bf16.msra.mxu0 0
    %9958 = vmatprep.subr.bf16.mxu0 0
    %9959 = vmatpush1.bf16.msra.mxu0 0
    %9960 = vmatprep.subr.bf16.mxu0 0
    %9961 = vmatpush1.bf16.msra.mxu0 0
    %9962 = vmatprep.subr.bf16.mxu0 0
    %9963 = vmatpush1.bf16.msra.mxu0 0
    %9964 = vmatprep.subr.bf16.mxu0 0
    %9965 = vmatpush1.bf16.msra.mxu0 0
    %9966 = vmatprep.subr.bf16.mxu0 0
    %9967 = vmatpush1.bf16.msra.mxu0 0
    %9968 = vmatprep.subr.bf16.mxu0 0
    %9969 = vmatpush1.bf16.msra.mxu0 0
    %9970 = vmatprep.subr.bf16.mxu0 0
    %9971 = vmatpush1.bf16.msra.mxu0 0
    %9972 = vmatprep.subr.bf16.mxu0 0
    %9973 = vmatpush1.bf16.msra.mxu0 0
    %9974 = vmatprep.subr.bf16.mxu0 0
    %9975 = vmatpush1.bf16.msra.mxu0 0
    %9976 = vmatprep.subr.bf16.mxu0 0
    %9977 = vmatpush1.bf16.msra.mxu0 0
    %9978 = vmatprep.subr.bf16.mxu0 0
    %9979 = vmatpush1.bf16.msra.mxu0 0
    %9980 = vmatprep.subr.bf16.mxu0 0
    %9981 = vmatpush1.bf16.msra.mxu0 0
    %9982 = vmatprep.mubr.bf16.mxu0 0
    %9983 = vmatmul.mubr.bf16.gmra.mrb[0].mxu0 %v9936
    %v9984 = vpop.f32.mrb[0].mxu0
    %v9985 = vadd.f32 0.0, %v9984
    %v9986 = vpop.f32.mrb[0].mxu0
    %v9987 = vadd.f32 0.0, %v9986
    %v9988 = vpop.f32.mrb[0].mxu0
    %v9989 = vadd.f32 0.0, %v9988
    %v9990 = vpop.f32.mrb[0].mxu0
    %v9991 = vadd.f32 0.0, %v9990
    %9992 = vmatprep.mubr.bf16.mxu0 0
    %9993 = vmatmul.mubr.bf16.gmra.mrb[0].mxu0 %v9939
    %v9994 = vpop.f32.mrb[0].mxu0
    %v9995 = vadd.f32 0.0, %v9994
    %v9996 = vpop.f32.mrb[0].mxu0
    %v9997 = vadd.f32 0.0, %v9996
    %v9998 = vpop.f32.mrb[0].mxu0
    %v9999 = vadd.f32 0.0, %v9998
    %v10000 = vpop.f32.mrb[0].mxu0
    %v10001 = vadd.f32 0.0, %v10000
    %10002 = vmatprep.mubr.bf16.mxu0 0
    %10003 = vmatmul.mubr.bf16.gmra.mrb[0].mxu0 %v9942
    %v10004 = vpop.f32.mrb[0].mxu0
    %v10005 = vadd.f32 0.0, %v10004
    %v10006 = vpop.f32.mrb[0].mxu0
    %v10007 = vadd.f32 0.0, %v10006
    %v10008 = vpop.f32.mrb[0].mxu0
    %v10009 = vadd.f32 0.0, %v10008
    %v10010 = vpop.f32.mrb[0].mxu0
    %v10011 = vadd.f32 0.0, %v10010
    %10012 = vmatprep.mubr.bf16.mxu0 0
    %10013 = vmatmul.mubr.bf16.gmra.mrb[0].mxu0 %v9945
    %v10014 = vpop.f32.mrb[0].mxu0
    %v10015 = vadd.f32 0.0, %v10014
    %v10016 = vpop.f32.mrb[0].mxu0
    %v10017 = vadd.f32 0.0, %v10016
    %v10018 = vpop.f32.mrb[0].mxu0
    %v10019 = vadd.f32 0.0, %v10018
    %v10020 = vpop.f32.mrb[0].mxu0
    %v10021 = vadd.f32 0.0, %v10020
    %10022 = vmatprep.mubr.bf16.mxu0 0
    %10023 = vmatmul.mubr.bf16.gmra.mrb[0].mxu0 %v9948
    %v10024 = vpop.f32.mrb[0].mxu0
    %v10025 = vadd.f32 0.0, %v10024
    %v10026 = vpop.f32.mrb[0].mxu0
    %v10027 = vadd.f32 0.0, %v10026
    %v10028 = vpop.f32.mrb[0].mxu0
    %v10029 = vpop.f32.mrb[0].mxu0
    %10030 = vdwg.mxu0
    %10031 = vmatprep.subr.bf16.mxu0 0
    %10032 = vmatpush1.bf16.msra.mxu0 %v9902
    %10033 = vmatprep.subr.bf16.mxu0 0
    %10034 = vmatpush1.bf16.msra.mxu0 0
    %10035 = vmatprep.subr.bf16.mxu0 0
    %10036 = vmatpush1.bf16.msra.mxu0 0
    %10037 = vmatprep.subr.bf16.mxu0 0
    %10038 = vmatpush1.bf16.msra.mxu0 0
    %10039 = vmatprep.subr.bf16.mxu0 0
    %10040 = vmatpush1.bf16.msra.mxu0 0
    %10041 = vmatprep.subr.bf16.mxu0 0
    %10042 = vmatpush1.bf16.msra.mxu0 0
    %10043 = vmatprep.subr.bf16.mxu0 0
    %10044 = vmatpush1.bf16.msra.mxu0 0
    %10045 = vmatprep.subr.bf16.mxu0 0
    %10046 = vmatpush1.bf16.msra.mxu0 0
    %10047 = vmatprep.subr.bf16.mxu0 0
    %10048 = vmatpush1.bf16.msra.mxu0 0
    %10049 = vmatprep.subr.bf16.mxu0 0
    %10050 = vmatpush1.bf16.msra.mxu0 0
    %10051 = vmatprep.subr.bf16.mxu0 0
    %10052 = vmatpush1.bf16.msra.mxu0 0
    %10053 = vmatprep.subr.bf16.mxu0 0
    %10054 = vmatpush1.bf16.msra.mxu0 0
    %10055 = vmatprep.subr.bf16.mxu0 0
    %10056 = vmatpush1.bf16.msra.mxu0 0
    %10057 = vmatprep.subr.bf16.mxu0 0
    %10058 = vmatpush1.bf16.msra.mxu0 0
    %10059 = vmatprep.subr.bf16.mxu0 0
    %10060 = vmatpush1.bf16.msra.mxu0 0
    %10061 = vmatprep.subr.bf16.mxu0 0
    %10062 = vmatpush1.bf16.msra.mxu0 0
    %10063 = vmatprep.mubr.bf16.mxu0 0
    %10064 = vmatmul.mubr.bf16.gmra.mrb[0].mxu0 %v9936
    %v10065 = vpop.f32.mrb[0].mxu0
    %v10066 = vadd.f32 0.0, %v10065
    %v10067 = vpop.f32.mrb[0].mxu0
    %v10068 = vpop.f32.mrb[0].mxu0
    %v10069 = vadd.f32 0.0, %v10068
    %v10070 = vpop.f32.mrb[0].mxu0
    %10071 = vmatprep.mubr.bf16.mxu0 0
    %10072 = vmatmul.mubr.bf16.gmra.mrb[0].mxu0 %v9939
    %v10073 = vpop.f32.mrb[0].mxu0
    %v10074 = vadd.f32 0.0, %v10073
    %v10075 = vpop.f32.mrb[0].mxu0
    %v10076 = vpop.f32.mrb[0].mxu0
    %v10077 = vadd.f32 0.0, %v10076
    %v10078 = vpop.f32.mrb[0].mxu0
    %10079 = vmatprep.mubr.bf16.mxu0 0
    %10080 = vmatmul.mubr.bf16.gmra.mrb[0].mxu0 %v9942
    %v10081 = vpop.f32.mrb[0].mxu0
    %v10082 = vadd.f32 0.0, %v10081
    %v10083 = vpop.f32.mrb[0].mxu0
    %v10084 = vpop.f32.mrb[0].mxu0
    %v10085 = vadd.f32 0.0, %v10084
    %v10086 = vpop.f32.mrb[0].mxu0
    %10087 = vmatprep.mubr.bf16.mxu0 0
    %10088 = vmatmul.mubr.bf16.gmra.mrb[0].mxu0 %v9945
    %v10089 = vpop.f32.mrb[0].mxu0
    %v10090 = vadd.f32 0.0, %v10089
    %v10091 = vpop.f32.mrb[0].mxu0
    %v10092 = vpop.f32.mrb[0].mxu0
    %v10093 = vadd.f32 0.0, %v10092
    %v10094 = vpop.f32.mrb[0].mxu0
    %10095 = vmatprep.mubr.bf16.mxu0 0
    %10096 = vmatmul.mubr.bf16.gmra.mrb[0].mxu0 %v9948
    %v10097 = vpop.f32.mrb[0].mxu0
    %v10098 = vadd.f32 0.0, %v10097
    %v10099 = vpop.f32.mrb[0].mxu0
    %v10100 = vpop.f32.mrb[0].mxu0
    %v10101 = vpop.f32.mrb[0].mxu0
    %10102 = vdwg.mxu0
    %v10103 = vpack.c.bf16 %v9989, %v9985
    %v10104 = vpack.c.bf16 %v9991, %v9987
    %v10105 = vpack.c.bf16 %v10069, %v10066
    %v10106 = vpack.c.bf16 %v10005, %v9999
    %v10107 = vpack.c.bf16 %v10007, %v10001
    %v10108 = vpack.c.bf16 %v10082, %v10077
    %v10109 = vpack.c.bf16 %v10019, %v10015
    %v10110 = vpack.c.bf16 %v10021, %v10017
    %v10111 = vpack.c.bf16 %v10093, %v10090
    %v10112 = vpack.c.bf16 %v9995, %v9995
    %v10113 = vpack.c.bf16 %v9997, %v9997
    %v10114 = vpack.c.bf16 %v10074, %v10074
    %v10115 = vpack.c.bf16 %v10009, %v10009
    %v10116 = vpack.c.bf16 %v10011, %v10011
    %v10117 = vpack.c.bf16 %v10085, %v10085
    %v10118 = vpack.c.bf16 %v10025, %v10025
    %v10119 = vpack.c.bf16 %v10027, %v10027
    %v10120 = vpack.c.bf16 %v10098, %v10098
    %v10121 = vld [vmem:[#allocation13] sm:$0xff]
    %v10122 = vld [vmem:[#allocation13 + $0x8] sm:$0xf]
    %v10123 = vld [vmem:[#allocation13 + $0xc] sm:$0xff]
    %v10124 = vld [vmem:[#allocation13 + $0x14] sm:$0xf]
    %v10125 = vld [vmem:[#allocation13 + $0x18] sm:$0xff]
    %v10126 = vld [vmem:[#allocation13 + $0x20] sm:$0xf]
    %v10127 = vld [vmem:[#allocation13 + $0x24] sm:$0xff]
    %v10128 = vld [vmem:[#allocation13 + $0x2c] sm:$0xf]
    %v10129 = vld [vmem:[#allocation13 + $0x30] sm:$0xff]
    %v10130 = vld [vmem:[#allocation13 + $0x38] sm:$0xf]
    %v10131 = vld [vmem:[#allocation13 + $0x3c] sm:$0xff]
    %v10132 = vld [vmem:[#allocation13 + $0x44] sm:$0xf]
    %v10133 = vld [vmem:[#allocation13 + $0x48] sm:$0xff]
    %v10134 = vld [vmem:[#allocation13 + $0x50] sm:$0xf]
    %v10135 = vld [vmem:[#allocation13 + $0x54] sm:$0xff]
    %v10136 = vld [vmem:[#allocation13 + $0x5c] sm:$0xf]
    %v10137 = vld [vmem:[#allocation13 + $0x60] sm:$0xff]
    %v10138 = vld [vmem:[#allocation13 + $0x68] sm:$0xf]
    %v10139 = vld [vmem:[#allocation13 + $0x6c] sm:$0xff]
    %v10140 = vld [vmem:[#allocation13 + $0x74] sm:$0xf]
    %v10141 = vld [vmem:[#allocation13 + $0x78] sm:$0xff]
    %v10142 = vld [vmem:[#allocation13 + $0x80] sm:$0xf]
    %v10143 = vld [vmem:[#allocation13 + $0x84] sm:$0xff]
    %v10144 = vld [vmem:[#allocation13 + $0x8c] sm:$0xf]
    %v10145 = vld [vmem:[#allocation13 + $0x90] sm:$0xff]
    %v10146 = vld [vmem:[#allocation13 + $0x98] sm:$0xf]
    %v10147 = vld [vmem:[#allocation13 + $0x9c] sm:$0xff]
    %v10148 = vld [vmem:[#allocation13 + $0xa4] sm:$0xf]
    %v10149 = vld [vmem:[#allocation13 + $0xa8] sm:$0xff]
    %v10150 = vld [vmem:[#allocation13 + $0xb0] sm:$0xf]
    %v10151 = vld [vmem:[#allocation13 + $0xb4] sm:$0xff]
    %v10152 = vld [vmem:[#allocation13 + $0xbc] sm:$0xf]
    %v10153 = vld [vmem:[#allocation13 + $0xc0] sm:$0xff]
    %v10154 = vld [vmem:[#allocation13 + $0xc8] sm:$0xf]
    %v10155 = vld [vmem:[#allocation13 + $0xcc] sm:$0xff]
    %v10156 = vld [vmem:[#allocation13 + $0xd4] sm:$0xf]
    %v10157 = vld [vmem:[#allocation13 + $0xd8] sm:$0xff]
    %v10158 = vld [vmem:[#allocation13 + $0xe0] sm:$0xf]
    %v10159 = vld [vmem:[#allocation13 + $0xe4] sm:$0xff]
    %v10160 = vld [vmem:[#allocation13 + $0xec] sm:$0xf]
    %v10161 = vld [vmem:[#allocation13 + $0xf0] sm:$0xff]
    %v10162 = vld [vmem:[#allocation13 + $0xf8] sm:$0xf]
    %v10163 = vld [vmem:[#allocation13 + $0xfc] sm:$0xff]
    %v10164 = vld [vmem:[#allocation13 + $0x104] sm:$0xf]
    %v10165 = vld [vmem:[#allocation13 + $0x108] sm:$0xff]
    %v10166 = vld [vmem:[#allocation13 + $0x110] sm:$0xf]
    %v10167 = vld [vmem:[#allocation13 + $0x114] sm:$0xff]
    %v10168 = vld [vmem:[#allocation13 + $0x11c] sm:$0xf]
    %v10169 = vld [vmem:[#allocation13 + $0x120] sm:$0xff]
    %v10170 = vld [vmem:[#allocation13 + $0x128] sm:$0xf]
    %v10171 = vld [vmem:[#allocation13 + $0x12c] sm:$0xff]
    %v10172 = vld [vmem:[#allocation13 + $0x134] sm:$0xf]
    %v10173 = vld [vmem:[#allocation13 + $0x138] sm:$0xff]
    %v10174 = vld [vmem:[#allocation13 + $0x140] sm:$0xf]
    %v10175 = vld [vmem:[#allocation13 + $0x144] sm:$0xff]
    %v10176 = vld [vmem:[#allocation13 + $0x14c] sm:$0xf]
    %v10177 = vld [vmem:[#allocation13 + $0x150] sm:$0xff]
    %v10178 = vld [vmem:[#allocation13 + $0x158] sm:$0xf]
    %v10179 = vld [vmem:[#allocation13 + $0x15c] sm:$0xff]
    %v10180 = vld [vmem:[#allocation13 + $0x164] sm:$0xf]
    %v10181 = vld [vmem:[#allocation13 + $0x168] sm:$0xff]
    %v10182 = vld [vmem:[#allocation13 + $0x170] sm:$0xf]
    %v10183 = vld [vmem:[#allocation13 + $0x174] sm:$0xff]
    %v10184 = vld [vmem:[#allocation13 + $0x17c] sm:$0xf]
    %v10185 = vld [vmem:[#allocation13 + $0x180] sm:$0xff]
    %v10186 = vld [vmem:[#allocation13 + $0x188] sm:$0xf]
    %v10187 = vld [vmem:[#allocation13 + $0x18c] sm:$0xff]
    %v10188 = vld [vmem:[#allocation13 + $0x194] sm:$0xf]
    %v10189 = vld [vmem:[#allocation13 + $0x198] sm:$0xff]
    %v10190 = vld [vmem:[#allocation13 + $0x1a0] sm:$0xf]
    %v10191 = vld [vmem:[#allocation13 + $0x1a4] sm:$0xff]
    %v10192 = vld [vmem:[#allocation13 + $0x1ac] sm:$0xf]
    %v10193 = vld [vmem:[#allocation13 + $0x1b0] sm:$0xff]
    %v10194 = vld [vmem:[#allocation13 + $0x1b8] sm:$0xf]
    %v10195 = vld [vmem:[#allocation13 + $0x1bc] sm:$0xff]
    %v10196 = vld [vmem:[#allocation13 + $0x1c4] sm:$0xf]
    %v10197 = vld [vmem:[#allocation13 + $0x1c8] sm:$0xff]
    %v10198 = vld [vmem:[#allocation13 + $0x1d0] sm:$0xf]
    %v10199 = vld [vmem:[#allocation13 + $0x1d4] sm:$0xff]
    %v10200 = vld [vmem:[#allocation13 + $0x1dc] sm:$0xf]
    %v10201 = vld [vmem:[#allocation13 + $0x1e0] sm:$0xff]
    %v10202 = vld [vmem:[#allocation13 + $0x1e8] sm:$0xf]
    %v10203 = vld [vmem:[#allocation13 + $0x1ec] sm:$0xff]
    %v10204 = vld [vmem:[#allocation13 + $0x1f4] sm:$0xf]
    %v10205 = vld [vmem:[#allocation13 + $0x1f8] sm:$0xff]
    %v10206 = vld [vmem:[#allocation13 + $0x200] sm:$0xf]
    %v10207 = vld [vmem:[#allocation13 + $0x204] sm:$0xff]
    %v10208 = vld [vmem:[#allocation13 + $0x20c] sm:$0xf]
    %v10209 = vld [vmem:[#allocation13 + $0x210] sm:$0xff]
    %v10210 = vld [vmem:[#allocation13 + $0x218] sm:$0xf]
    %v10211 = vld [vmem:[#allocation13 + $0x21c] sm:$0xff]
    %v10212 = vld [vmem:[#allocation13 + $0x224] sm:$0xf]
    %v10213 = vld [vmem:[#allocation13 + $0x228] sm:$0xff]
    %v10214 = vld [vmem:[#allocation13 + $0x230] sm:$0xf]
    %v10215 = vld [vmem:[#allocation13 + $0x234] sm:$0xff]
    %v10216 = vld [vmem:[#allocation13 + $0x23c] sm:$0xf]
    %v10217 = vld [vmem:[#allocation13 + $0x240] sm:$0xff]
    %v10218 = vld [vmem:[#allocation13 + $0x248] sm:$0xf]
    %v10219 = vld [vmem:[#allocation13 + $0x24c] sm:$0xff]
    %v10220 = vld [vmem:[#allocation13 + $0x254] sm:$0xf]
    %v10221 = vld [vmem:[#allocation13 + $0x258] sm:$0xff]
    %v10222 = vld [vmem:[#allocation13 + $0x260] sm:$0xf]
    %v10223 = vld [vmem:[#allocation13 + $0x264] sm:$0xff]
    %v10224 = vld [vmem:[#allocation13 + $0x26c] sm:$0xf]
    %v10225 = vld [vmem:[#allocation13 + $0x270] sm:$0xff]
    %v10226 = vld [vmem:[#allocation13 + $0x278] sm:$0xf]
    %v10227 = vld [vmem:[#allocation13 + $0x27c] sm:$0xff]
    %v10228 = vld [vmem:[#allocation13 + $0x284] sm:$0xf]
    %v10229 = vld [vmem:[#allocation13 + $0x288] sm:$0xff]
    %v10230 = vld [vmem:[#allocation13 + $0x290] sm:$0xf]
    %v10231 = vld [vmem:[#allocation13 + $0x294] sm:$0xff]
    %v10232 = vld [vmem:[#allocation13 + $0x29c] sm:$0xf]
    %v10233 = vld [vmem:[#allocation13 + $0x2a0] sm:$0xff]
    %v10234 = vld [vmem:[#allocation13 + $0x2a8] sm:$0xf]
    %v10235 = vld [vmem:[#allocation13 + $0x2ac] sm:$0xff]
    %v10236 = vld [vmem:[#allocation13 + $0x2b4] sm:$0xf]
    %v10237 = vld [vmem:[#allocation13 + $0x2b8] sm:$0xff]
    %v10238 = vld [vmem:[#allocation13 + $0x2c0] sm:$0xf]
    %v10239 = vld [vmem:[#allocation13 + $0x2c4] sm:$0xff]
    %v10240 = vld [vmem:[#allocation13 + $0x2cc] sm:$0xf]
    %v10241 = vld [vmem:[#allocation13 + $0x2d0] sm:$0xff]
    %v10242 = vld [vmem:[#allocation13 + $0x2d8] sm:$0xf]
    %v10243 = vld [vmem:[#allocation13 + $0x2dc] sm:$0xff]
    %v10244 = vld [vmem:[#allocation13 + $0x2e4] sm:$0xf]
    %v10245 = vld [vmem:[#allocation13 + $0x2e8] sm:$0xff]
    %v10246 = vld [vmem:[#allocation13 + $0x2f0] sm:$0xf]
    %v10247 = vld [vmem:[#allocation13 + $0x2f4] sm:$0xff]
    %v10248 = vld [vmem:[#allocation13 + $0x2fc] sm:$0xf]
    %v10249 = vld [vmem:[#allocation13 + $0x300] sm:$0xff]
    %v10250 = vld [vmem:[#allocation13 + $0x308] sm:$0xf]
    %v10251 = vld [vmem:[#allocation13 + $0x30c] sm:$0xff]
    %v10252 = vld [vmem:[#allocation13 + $0x314] sm:$0xf]
    %v10253 = vld [vmem:[#allocation13 + $0x318] sm:$0xff]
    %v10254 = vld [vmem:[#allocation13 + $0x320] sm:$0xf]
    %v10255 = vld [vmem:[#allocation13 + $0x324] sm:$0xff]
    %v10256 = vld [vmem:[#allocation13 + $0x32c] sm:$0xf]
    %v10257 = vld [vmem:[#allocation13 + $0x330] sm:$0xff]
    %v10258 = vld [vmem:[#allocation13 + $0x338] sm:$0xf]
    %v10259 = vld [vmem:[#allocation13 + $0x33c] sm:$0xff]
    %v10260 = vld [vmem:[#allocation13 + $0x344] sm:$0xf]
    %v10261 = vld [vmem:[#allocation13 + $0x348] sm:$0xff]
    %v10262 = vld [vmem:[#allocation13 + $0x350] sm:$0xf]
    %v10263 = vld [vmem:[#allocation13 + $0x354] sm:$0xff]
    %v10264 = vld [vmem:[#allocation13 + $0x35c] sm:$0xf]
    %v10265 = vld [vmem:[#allocation13 + $0x360] sm:$0xff]
    %v10266 = vld [vmem:[#allocation13 + $0x368] sm:$0xf]
    %v10267 = vld [vmem:[#allocation13 + $0x36c] sm:$0xff]
    %v10268 = vld [vmem:[#allocation13 + $0x374] sm:$0xf]
    %v10269 = vld [vmem:[#allocation13 + $0x378] sm:$0xff]
    %v10270 = vld [vmem:[#allocation13 + $0x380] sm:$0xf]
    %v10271 = vld [vmem:[#allocation13 + $0x384] sm:$0xff]
    %v10272 = vld [vmem:[#allocation13 + $0x38c] sm:$0xf]
    %v10273 = vld [vmem:[#allocation13 + $0x390] sm:$0xff]
    %v10274 = vld [vmem:[#allocation13 + $0x398] sm:$0xf]
    %v10275 = vld [vmem:[#allocation13 + $0x39c] sm:$0xff]
    %v10276 = vld [vmem:[#allocation13 + $0x3a4] sm:$0xf]
    %v10277 = vld [vmem:[#allocation13 + $0x3a8] sm:$0xff]
    %v10278 = vld [vmem:[#allocation13 + $0x3b0] sm:$0xf]
    %v10279 = vld [vmem:[#allocation13 + $0x3b4] sm:$0xff]
    %v10280 = vld [vmem:[#allocation13 + $0x3bc] sm:$0xf]
    %v10281 = vld [vmem:[#allocation13 + $0x3c0] sm:$0xff]
    %v10282 = vld [vmem:[#allocation13 + $0x3c8] sm:$0xf]
    %v10283 = vld [vmem:[#allocation13 + $0x3cc] sm:$0xff]
    %v10284 = vld [vmem:[#allocation13 + $0x3d4] sm:$0xf]
    %v10285 = vld [vmem:[#allocation13 + $0x3d8] sm:$0xff]
    %v10286 = vld [vmem:[#allocation13 + $0x3e0] sm:$0xf]
    %v10287 = vld [vmem:[#allocation13 + $0x3e4] sm:$0xff]
    %v10288 = vld [vmem:[#allocation13 + $0x3ec] sm:$0xf]
    %v10289 = vld [vmem:[#allocation13 + $0x3f0] sm:$0xff]
    %v10290 = vld [vmem:[#allocation13 + $0x3f8] sm:$0xf]
    %v10291 = vld [vmem:[#allocation13 + $0x3fc] sm:$0xff]
    %v10292 = vld [vmem:[#allocation13 + $0x404] sm:$0xf]
    %v10293 = vld [vmem:[#allocation13 + $0x408] sm:$0xff]
    %v10294 = vld [vmem:[#allocation13 + $0x410] sm:$0xf]
    %v10295 = vld [vmem:[#allocation13 + $0x414] sm:$0xff]
    %v10296 = vld [vmem:[#allocation13 + $0x41c] sm:$0xf]
    %v10297 = vld [vmem:[#allocation13 + $0x420] sm:$0xff]
    %v10298 = vld [vmem:[#allocation13 + $0x428] sm:$0xf]
    %v10299 = vld [vmem:[#allocation13 + $0x42c] sm:$0xff]
    %v10300 = vld [vmem:[#allocation13 + $0x434] sm:$0xf]
    %v10301 = vld [vmem:[#allocation13 + $0x438] sm:$0xff]
    %v10302 = vld [vmem:[#allocation13 + $0x440] sm:$0xf]
    %v10303 = vld [vmem:[#allocation13 + $0x444] sm:$0xff]
    %v10304 = vld [vmem:[#allocation13 + $0x44c] sm:$0xf]
    %v10305 = vld [vmem:[#allocation13 + $0x450] sm:$0xff]
    %v10306 = vld [vmem:[#allocation13 + $0x458] sm:$0xf]
    %v10307 = vld [vmem:[#allocation13 + $0x45c] sm:$0xff]
    %v10308 = vld [vmem:[#allocation13 + $0x464] sm:$0xf]
    %v10309 = vld [vmem:[#allocation13 + $0x468] sm:$0xff]
    %v10310 = vld [vmem:[#allocation13 + $0x470] sm:$0xf]
    %v10311 = vld [vmem:[#allocation13 + $0x474] sm:$0xff]
    %v10312 = vld [vmem:[#allocation13 + $0x47c] sm:$0xf]
    %v10313 = vld [vmem:[#allocation13 + $0x480] sm:$0xff]
    %v10314 = vld [vmem:[#allocation13 + $0x488] sm:$0xf]
    %v10315 = vld [vmem:[#allocation13 + $0x48c] sm:$0xff]
    %v10316 = vld [vmem:[#allocation13 + $0x494] sm:$0xf]
    %v10317 = vld [vmem:[#allocation13 + $0x498] sm:$0xff]
    %v10318 = vld [vmem:[#allocation13 + $0x4a0] sm:$0xf]
    %v10319 = vld [vmem:[#allocation13 + $0x4a4] sm:$0xff]
    %v10320 = vld [vmem:[#allocation13 + $0x4ac] sm:$0xf]
    %v10321 = vld [vmem:[#allocation13 + $0x4b0] sm:$0xff]
    %v10322 = vld [vmem:[#allocation13 + $0x4b8] sm:$0xf]
    %v10323 = vld [vmem:[#allocation13 + $0x4bc] sm:$0xff]
    %v10324 = vld [vmem:[#allocation13 + $0x4c4] sm:$0xf]
    %v10325 = vld [vmem:[#allocation13 + $0x4c8] sm:$0xff]
    %v10326 = vld [vmem:[#allocation13 + $0x4d0] sm:$0xf]
    %v10327 = vld [vmem:[#allocation13 + $0x4d4] sm:$0xff]
    %v10328 = vld [vmem:[#allocation13 + $0x4dc] sm:$0xf]
    %v10329 = vld [vmem:[#allocation13 + $0x4e0] sm:$0xff]
    %v10330 = vld [vmem:[#allocation13 + $0x4e8] sm:$0xf]
    %v10331 = vld [vmem:[#allocation13 + $0x4ec] sm:$0xff]
    %v10332 = vld [vmem:[#allocation13 + $0x4f4] sm:$0xf]
    %v10333 = vld [vmem:[#allocation13 + $0x4f8] sm:$0xff]
    %v10334 = vld [vmem:[#allocation13 + $0x500] sm:$0xf]
    %v10335 = vld [vmem:[#allocation13 + $0x504] sm:$0xff]
    %v10336 = vld [vmem:[#allocation13 + $0x50c] sm:$0xf]
    %v10337 = vld [vmem:[#allocation13 + $0x510] sm:$0xff]
    %v10338 = vld [vmem:[#allocation13 + $0x518] sm:$0xf]
    %v10339 = vld [vmem:[#allocation13 + $0x51c] sm:$0xff]
    %v10340 = vld [vmem:[#allocation13 + $0x524] sm:$0xf]
    %v10341 = vld [vmem:[#allocation13 + $0x528] sm:$0xff]
    %v10342 = vld [vmem:[#allocation13 + $0x530] sm:$0xf]
    %v10343 = vld [vmem:[#allocation13 + $0x534] sm:$0xff]
    %v10344 = vld [vmem:[#allocation13 + $0x53c] sm:$0xf]
    %v10345 = vld [vmem:[#allocation13 + $0x540] sm:$0xff]
    %v10346 = vld [vmem:[#allocation13 + $0x548] sm:$0xf]
    %v10347 = vld [vmem:[#allocation13 + $0x54c] sm:$0xff]
    %v10348 = vld [vmem:[#allocation13 + $0x554] sm:$0xf]
    %v10349 = vld [vmem:[#allocation13 + $0x558] sm:$0xff]
    %v10350 = vld [vmem:[#allocation13 + $0x560] sm:$0xf]
    %v10351 = vld [vmem:[#allocation13 + $0x564] sm:$0xff]
    %v10352 = vld [vmem:[#allocation13 + $0x56c] sm:$0xf]
    %v10353 = vld [vmem:[#allocation13 + $0x570] sm:$0xff]
    %v10354 = vld [vmem:[#allocation13 + $0x578] sm:$0xf]
    %v10355 = vld [vmem:[#allocation13 + $0x57c] sm:$0xff]
    %v10356 = vld [vmem:[#allocation13 + $0x584] sm:$0xf]
    %v10357 = vld [vmem:[#allocation13 + $0x588] sm:$0xff]
    %v10358 = vld [vmem:[#allocation13 + $0x590] sm:$0xf]
    %v10359 = vld [vmem:[#allocation13 + $0x594] sm:$0xff]
    %v10360 = vld [vmem:[#allocation13 + $0x59c] sm:$0xf]
    %v10361 = vld [vmem:[#allocation13 + $0x5a0] sm:$0xff]
    %v10362 = vld [vmem:[#allocation13 + $0x5a8] sm:$0xf]
    %v10363 = vld [vmem:[#allocation13 + $0x5ac] sm:$0xff]
    %v10364 = vld [vmem:[#allocation13 + $0x5b4] sm:$0xf]
    %v10365 = vld [vmem:[#allocation13 + $0x5b8] sm:$0xff]
    %v10366 = vld [vmem:[#allocation13 + $0x5c0] sm:$0xf]
    %v10367 = vld [vmem:[#allocation13 + $0x5c4] sm:$0xff]
    %v10368 = vld [vmem:[#allocation13 + $0x5cc] sm:$0xf]
    %v10369 = vld [vmem:[#allocation13 + $0x5d0] sm:$0xff]
    %v10370 = vld [vmem:[#allocation13 + $0x5d8] sm:$0xf]
    %v10371 = vld [vmem:[#allocation13 + $0x5dc] sm:$0xff]
    %v10372 = vld [vmem:[#allocation13 + $0x5e4] sm:$0xf]
    %v10373 = vld [vmem:[#allocation13 + $0x5e8] sm:$0xff]
    %v10374 = vld [vmem:[#allocation13 + $0x5f0] sm:$0xf]
    %v10375 = vld [vmem:[#allocation13 + $0x5f4] sm:$0xff]
    %v10376 = vld [vmem:[#allocation13 + $0x5fc] sm:$0xf]
    %v10377 = vld [vmem:[#allocation13 + $0x600] sm:$0xff]
    %v10378 = vld [vmem:[#allocation13 + $0x608] sm:$0xf]
    %v10379 = vld [vmem:[#allocation13 + $0x60c] sm:$0xff]
    %v10380 = vld [vmem:[#allocation13 + $0x614] sm:$0xf]
    %v10381 = vld [vmem:[#allocation13 + $0x618] sm:$0xff]
    %v10382 = vld [vmem:[#allocation13 + $0x620] sm:$0xf]
    %v10383 = vld [vmem:[#allocation13 + $0x624] sm:$0xff]
    %v10384 = vld [vmem:[#allocation13 + $0x62c] sm:$0xf]
    %v10385 = vld [vmem:[#allocation13 + $0x630] sm:$0xff]
    %v10386 = vld [vmem:[#allocation13 + $0x638] sm:$0xf]
    %v10387 = vld [vmem:[#allocation13 + $0x63c] sm:$0xff]
    %v10388 = vld [vmem:[#allocation13 + $0x644] sm:$0xf]
    %v10389 = vld [vmem:[#allocation13 + $0x648] sm:$0xff]
    %v10390 = vld [vmem:[#allocation13 + $0x650] sm:$0xf]
    %v10391 = vld [vmem:[#allocation13 + $0x654] sm:$0xff]
    %v10392 = vld [vmem:[#allocation13 + $0x65c] sm:$0xf]
    %v10393 = vld [vmem:[#allocation13 + $0x660] sm:$0xff]
    %v10394 = vld [vmem:[#allocation13 + $0x668] sm:$0xf]
    %v10395 = vld [vmem:[#allocation13 + $0x66c] sm:$0xff]
    %v10396 = vld [vmem:[#allocation13 + $0x674] sm:$0xf]
    %v10397 = vld [vmem:[#allocation13 + $0x678] sm:$0xff]
    %v10398 = vld [vmem:[#allocation13 + $0x680] sm:$0xf]
    %v10399 = vld [vmem:[#allocation13 + $0x684] sm:$0xff]
    %v10400 = vld [vmem:[#allocation13 + $0x68c] sm:$0xf]
    %v10401 = vld [vmem:[#allocation13 + $0x690] sm:$0xff]
    %v10402 = vld [vmem:[#allocation13 + $0x698] sm:$0xf]
    %v10403 = vld [vmem:[#allocation13 + $0x69c] sm:$0xff]
    %v10404 = vld [vmem:[#allocation13 + $0x6a4] sm:$0xf]
    %v10405 = vld [vmem:[#allocation13 + $0x6a8] sm:$0xff]
    %v10406 = vld [vmem:[#allocation13 + $0x6b0] sm:$0xf]
    %v10407 = vld [vmem:[#allocation13 + $0x6b4] sm:$0xff]
    %v10408 = vld [vmem:[#allocation13 + $0x6bc] sm:$0xf]
    %v10409 = vld [vmem:[%s55] sm:$0x7]
    %v10411 = vlaneseq
    %v10412 = vshrl.u32 %v10411, 7
    %v10413 = vsub.s32 0, %v10412
    %v10414 = vrot.slane %v10409, %v10413
    %v10415 = vlaneseq
    %v10416 = vshrl.u32 %v10415, 7
    %v10417 = vsub.s32 1, %v10416
    %v10418 = vrot.slane %v10409, %v10417
    %v10419 = vlaneseq
    %v10420 = vshrl.u32 %v10419, 7
    %v10421 = vsub.s32 2, %v10420
    %v10422 = vrot.slane %v10409, %v10421
    %v10714 = vunpack.c.l.b16 %v10121
    %v10715 = vunpack.c.h.b16 %v10121
    %v10716 = vunpack.c.l.b16 %v10122
    %v10717 = vunpack.c.l.b16 %v10123
    %v10718 = vunpack.c.h.b16 %v10123
    %v10719 = vunpack.c.l.b16 %v10124
    %v10720 = vunpack.c.l.b16 %v10125
    %v10721 = vunpack.c.h.b16 %v10125
    %v10722 = vunpack.c.l.b16 %v10126
    %v10723 = vunpack.c.l.b16 %v10127
    %v10724 = vunpack.c.h.b16 %v10127
    %v10725 = vunpack.c.l.b16 %v10128
    %v10726 = vunpack.c.l.b16 %v10129
    %v10727 = vunpack.c.h.b16 %v10129
    %v10728 = vunpack.c.l.b16 %v10130
    %v10729 = vunpack.c.l.b16 %v10131
    %v10730 = vunpack.c.h.b16 %v10131
    %v10731 = vunpack.c.l.b16 %v10132
    %v10732 = vunpack.c.l.b16 %v10133
    %v10733 = vunpack.c.h.b16 %v10133
    %v10734 = vunpack.c.l.b16 %v10134
    %v10735 = vunpack.c.l.b16 %v10135
    %v10736 = vunpack.c.h.b16 %v10135
    %v10737 = vunpack.c.l.b16 %v10136
    %v10738 = vunpack.c.l.b16 %v10137
    %v10739 = vunpack.c.h.b16 %v10137
    %v10740 = vunpack.c.l.b16 %v10138
    %v10741 = vunpack.c.l.b16 %v10139
    %v10742 = vunpack.c.h.b16 %v10139
    %v10743 = vunpack.c.l.b16 %v10140
    %v10744 = vunpack.c.l.b16 %v10141
    %v10745 = vunpack.c.h.b16 %v10141
    %v10746 = vunpack.c.l.b16 %v10142
    %v10747 = vunpack.c.l.b16 %v10143
    %v10748 = vunpack.c.h.b16 %v10143
    %v10749 = vunpack.c.l.b16 %v10144
    %v10750 = vunpack.c.l.b16 %v10145
    %v10751 = vunpack.c.h.b16 %v10145
    %v10752 = vunpack.c.l.b16 %v10146
    %v10753 = vunpack.c.l.b16 %v10147
    %v10754 = vunpack.c.h.b16 %v10147
    %v10755 = vunpack.c.l.b16 %v10148
    %v10756 = vunpack.c.l.b16 %v10149
    %v10757 = vunpack.c.h.b16 %v10149
    %v10758 = vunpack.c.l.b16 %v10150
    %v10759 = vunpack.c.l.b16 %v10151
    %v10760 = vunpack.c.h.b16 %v10151
    %v10761 = vunpack.c.l.b16 %v10152
    %v10762 = vunpack.c.l.b16 %v10153
    %v10763 = vunpack.c.h.b16 %v10153
    %v10764 = vunpack.c.l.b16 %v10154
    %v10765 = vunpack.c.l.b16 %v10155
    %v10766 = vunpack.c.h.b16 %v10155
    %v10767 = vunpack.c.l.b16 %v10156
    %v10768 = vunpack.c.l.b16 %v10157
    %v10769 = vunpack.c.h.b16 %v10157
    %v10770 = vunpack.c.l.b16 %v10158
    %v10771 = vunpack.c.l.b16 %v10159
    %v10772 = vunpack.c.h.b16 %v10159
    %v10773 = vunpack.c.l.b16 %v10160
    %v10774 = vunpack.c.l.b16 %v10161
    %v10775 = vunpack.c.h.b16 %v10161
    %v10776 = vunpack.c.l.b16 %v10162
    %v10777 = vunpack.c.l.b16 %v10163
    %v10778 = vunpack.c.h.b16 %v10163
    %v10779 = vunpack.c.l.b16 %v10164
    %v10780 = vunpack.c.l.b16 %v10165
    %v10781 = vunpack.c.h.b16 %v10165
    %v10782 = vunpack.c.l.b16 %v10166
    %v10783 = vunpack.c.l.b16 %v10167
    %v10784 = vunpack.c.h.b16 %v10167
    %v10785 = vunpack.c.l.b16 %v10168
    %v10786 = vunpack.c.l.b16 %v10169
    %v10787 = vunpack.c.h.b16 %v10169
    %v10788 = vunpack.c.l.b16 %v10170
    %v10789 = vunpack.c.l.b16 %v10171
    %v10790 = vunpack.c.h.b16 %v10171
    %v10791 = vunpack.c.l.b16 %v10172
    %v10792 = vunpack.c.l.b16 %v10173
    %v10793 = vunpack.c.h.b16 %v10173
    %v10794 = vunpack.c.l.b16 %v10174
    %v10795 = vunpack.c.l.b16 %v10175
    %v10796 = vunpack.c.h.b16 %v10175
    %v10797 = vunpack.c.l.b16 %v10176
    %v10798 = vunpack.c.l.b16 %v10177
    %v10799 = vunpack.c.h.b16 %v10177
    %v10800 = vunpack.c.l.b16 %v10178
    %v10801 = vunpack.c.l.b16 %v10179
    %v10802 = vunpack.c.h.b16 %v10179
    %v10803 = vunpack.c.l.b16 %v10180
    %v10804 = vunpack.c.l.b16 %v10181
    %v10805 = vunpack.c.h.b16 %v10181
    %v10806 = vunpack.c.l.b16 %v10182
    %v10807 = vunpack.c.l.b16 %v10183
    %v10808 = vunpack.c.h.b16 %v10183
    %v10809 = vunpack.c.l.b16 %v10184
    %v10810 = vunpack.c.l.b16 %v10185
    %v10811 = vunpack.c.h.b16 %v10185
    %v10812 = vunpack.c.l.b16 %v10186
    %v10813 = vunpack.c.l.b16 %v10187
    %v10814 = vunpack.c.h.b16 %v10187
    %v10815 = vunpack.c.l.b16 %v10188
    %v10816 = vunpack.c.l.b16 %v10189
    %v10817 = vunpack.c.h.b16 %v10189
    %v10818 = vunpack.c.l.b16 %v10190
    %v10819 = vunpack.c.l.b16 %v10191
    %v10820 = vunpack.c.h.b16 %v10191
    %v10821 = vunpack.c.l.b16 %v10192
    %v10822 = vunpack.c.l.b16 %v10193
    %v10823 = vunpack.c.h.b16 %v10193
    %v10824 = vunpack.c.l.b16 %v10194
    %v10825 = vunpack.c.l.b16 %v10195
    %v10826 = vunpack.c.h.b16 %v10195
    %v10827 = vunpack.c.l.b16 %v10196
    %v10828 = vunpack.c.l.b16 %v10197
    %v10829 = vunpack.c.h.b16 %v10197
    %v10830 = vunpack.c.l.b16 %v10198
    %v10831 = vunpack.c.l.b16 %v10199
    %v10832 = vunpack.c.h.b16 %v10199
    %v10833 = vunpack.c.l.b16 %v10200
    %v10834 = vunpack.c.l.b16 %v10201
    %v10835 = vunpack.c.h.b16 %v10201
    %v10836 = vunpack.c.l.b16 %v10202
    %v10837 = vunpack.c.l.b16 %v10203
    %v10838 = vunpack.c.h.b16 %v10203
    %v10839 = vunpack.c.l.b16 %v10204
    %v10840 = vunpack.c.l.b16 %v10205
    %v10841 = vunpack.c.h.b16 %v10205
    %v10842 = vunpack.c.l.b16 %v10206
    %v10843 = vunpack.c.l.b16 %v10207
    %v10844 = vunpack.c.h.b16 %v10207
    %v10845 = vunpack.c.l.b16 %v10208
    %v10846 = vunpack.c.l.b16 %v10209
    %v10847 = vunpack.c.h.b16 %v10209
    %v10848 = vunpack.c.l.b16 %v10210
    %v10849 = vunpack.c.l.b16 %v10211
    %v10850 = vunpack.c.h.b16 %v10211
    %v10851 = vunpack.c.l.b16 %v10212
    %v10852 = vunpack.c.l.b16 %v10213
    %v10853 = vunpack.c.h.b16 %v10213
    %v10854 = vunpack.c.l.b16 %v10214
    %v10855 = vunpack.c.l.b16 %v10215
    %v10856 = vunpack.c.h.b16 %v10215
    %v10857 = vunpack.c.l.b16 %v10216
    %v10858 = vunpack.c.l.b16 %v10217
    %v10859 = vunpack.c.h.b16 %v10217
    %v10860 = vunpack.c.l.b16 %v10218
    %v10861 = vunpack.c.l.b16 %v10219
    %v10862 = vunpack.c.h.b16 %v10219
    %v10863 = vunpack.c.l.b16 %v10220
    %v10864 = vunpack.c.l.b16 %v10221
    %v10865 = vunpack.c.h.b16 %v10221
    %v10866 = vunpack.c.l.b16 %v10222
    %v10867 = vunpack.c.l.b16 %v10223
    %v10868 = vunpack.c.h.b16 %v10223
    %v10869 = vunpack.c.l.b16 %v10224
    %v10870 = vunpack.c.l.b16 %v10225
    %v10871 = vunpack.c.h.b16 %v10225
    %v10872 = vunpack.c.l.b16 %v10226
    %v10873 = vunpack.c.l.b16 %v10227
    %v10874 = vunpack.c.h.b16 %v10227
    %v10875 = vunpack.c.l.b16 %v10228
    %v10876 = vunpack.c.l.b16 %v10229
    %v10877 = vunpack.c.h.b16 %v10229
    %v10878 = vunpack.c.l.b16 %v10230
    %v10879 = vunpack.c.l.b16 %v10231
    %v10880 = vunpack.c.h.b16 %v10231
    %v10881 = vunpack.c.l.b16 %v10232
    %v10882 = vunpack.c.l.b16 %v10233
    %v10883 = vunpack.c.h.b16 %v10233
    %v10884 = vunpack.c.l.b16 %v10234
    %v10885 = vunpack.c.l.b16 %v10235
    %v10886 = vunpack.c.h.b16 %v10235
    %v10887 = vunpack.c.l.b16 %v10236
    %v10888 = vunpack.c.l.b16 %v10237
    %v10889 = vunpack.c.h.b16 %v10237
    %v10890 = vunpack.c.l.b16 %v10238
    %v10891 = vunpack.c.l.b16 %v10239
    %v10892 = vunpack.c.h.b16 %v10239
    %v10893 = vunpack.c.l.b16 %v10240
    %v10894 = vunpack.c.l.b16 %v10241
    %v10895 = vunpack.c.h.b16 %v10241
    %v10896 = vunpack.c.l.b16 %v10242
    %v10897 = vunpack.c.l.b16 %v10243
    %v10898 = vunpack.c.h.b16 %v10243
    %v10899 = vunpack.c.l.b16 %v10244
    %v10900 = vunpack.c.l.b16 %v10245
    %v10901 = vunpack.c.h.b16 %v10245
    %v10902 = vunpack.c.l.b16 %v10246
    %v10903 = vunpack.c.l.b16 %v10247
    %v10904 = vunpack.c.h.b16 %v10247
    %v10905 = vunpack.c.l.b16 %v10248
    %v10906 = vunpack.c.l.b16 %v10249
    %v10907 = vunpack.c.h.b16 %v10249
    %v10908 = vunpack.c.l.b16 %v10250
    %v10909 = vunpack.c.l.b16 %v10251
    %v10910 = vunpack.c.h.b16 %v10251
    %v10911 = vunpack.c.l.b16 %v10252
    %v10912 = vunpack.c.l.b16 %v10253
    %v10913 = vunpack.c.h.b16 %v10253
    %v10914 = vunpack.c.l.b16 %v10254
    %v10915 = vunpack.c.l.b16 %v10255
    %v10916 = vunpack.c.h.b16 %v10255
    %v10917 = vunpack.c.l.b16 %v10256
    %v10918 = vunpack.c.l.b16 %v10257
    %v10919 = vunpack.c.h.b16 %v10257
    %v10920 = vunpack.c.l.b16 %v10258
    %v10921 = vunpack.c.l.b16 %v10259
    %v10922 = vunpack.c.h.b16 %v10259
    %v10923 = vunpack.c.l.b16 %v10260
    %v10924 = vunpack.c.l.b16 %v10261
    %v10925 = vunpack.c.h.b16 %v10261
    %v10926 = vunpack.c.l.b16 %v10262
    %v10927 = vunpack.c.l.b16 %v10263
    %v10928 = vunpack.c.h.b16 %v10263
    %v10929 = vunpack.c.l.b16 %v10264
    %v10930 = vunpack.c.l.b16 %v10265
    %v10931 = vunpack.c.h.b16 %v10265
    %v10932 = vunpack.c.l.b16 %v10266
    %v10933 = vunpack.c.l.b16 %v10267
    %v10934 = vunpack.c.h.b16 %v10267
    %v10935 = vunpack.c.l.b16 %v10268
    %v10936 = vunpack.c.l.b16 %v10269
    %v10937 = vunpack.c.h.b16 %v10269
    %v10938 = vunpack.c.l.b16 %v10270
    %v10939 = vunpack.c.l.b16 %v10271
    %v10940 = vunpack.c.h.b16 %v10271
    %v10941 = vunpack.c.l.b16 %v10272
    %v10942 = vunpack.c.l.b16 %v10273
    %v10943 = vunpack.c.h.b16 %v10273
    %v10944 = vunpack.c.l.b16 %v10274
    %v10945 = vunpack.c.l.b16 %v10275
    %v10946 = vunpack.c.h.b16 %v10275
    %v10947 = vunpack.c.l.b16 %v10276
    %v10948 = vunpack.c.l.b16 %v10277
    %v10949 = vunpack.c.h.b16 %v10277
    %v10950 = vunpack.c.l.b16 %v10278
    %v10951 = vunpack.c.l.b16 %v10279
    %v10952 = vunpack.c.h.b16 %v10279
    %v10953 = vunpack.c.l.b16 %v10280
    %v10954 = vunpack.c.l.b16 %v10281
    %v10955 = vunpack.c.h.b16 %v10281
    %v10956 = vunpack.c.l.b16 %v10282
    %v10957 = vunpack.c.l.b16 %v10283
    %v10958 = vunpack.c.h.b16 %v10283
    %v10959 = vunpack.c.l.b16 %v10284
    %v10960 = vunpack.c.l.b16 %v10285
    %v10961 = vunpack.c.h.b16 %v10285
    %v10962 = vunpack.c.l.b16 %v10286
    %v10963 = vunpack.c.l.b16 %v10287
    %v10964 = vunpack.c.h.b16 %v10287
    %v10965 = vunpack.c.l.b16 %v10288
    %v10966 = vunpack.c.l.b16 %v10289
    %v10967 = vunpack.c.h.b16 %v10289
    %v10968 = vunpack.c.l.b16 %v10290
    %v10969 = vunpack.c.l.b16 %v10291
    %v10970 = vunpack.c.h.b16 %v10291
    %v10971 = vunpack.c.l.b16 %v10292
    %v10972 = vunpack.c.l.b16 %v10293
    %v10973 = vunpack.c.h.b16 %v10293
    %v10974 = vunpack.c.l.b16 %v10294
    %v10975 = vunpack.c.l.b16 %v10295
    %v10976 = vunpack.c.h.b16 %v10295
    %v10977 = vunpack.c.l.b16 %v10296
    %v10978 = vunpack.c.l.b16 %v10297
    %v10979 = vunpack.c.h.b16 %v10297
    %v10980 = vunpack.c.l.b16 %v10298
    %v10981 = vunpack.c.l.b16 %v10299
    %v10982 = vunpack.c.h.b16 %v10299
    %v10983 = vunpack.c.l.b16 %v10300
    %v10984 = vunpack.c.l.b16 %v10301
    %v10985 = vunpack.c.h.b16 %v10301
    %v10986 = vunpack.c.l.b16 %v10302
    %v10987 = vunpack.c.l.b16 %v10303
    %v10988 = vunpack.c.h.b16 %v10303
    %v10989 = vunpack.c.l.b16 %v10304
    %v10990 = vunpack.c.l.b16 %v10305
    %v10991 = vunpack.c.h.b16 %v10305
    %v10992 = vunpack.c.l.b16 %v10306
    %v10993 = vunpack.c.l.b16 %v10307
    %v10994 = vunpack.c.h.b16 %v10307
    %v10995 = vunpack.c.l.b16 %v10308
    %v10996 = vunpack.c.l.b16 %v10309
    %v10997 = vunpack.c.h.b16 %v10309
    %v10998 = vunpack.c.l.b16 %v10310
    %v10999 = vunpack.c.l.b16 %v10311
    %v11000 = vunpack.c.h.b16 %v10311
    %v11001 = vunpack.c.l.b16 %v10312
    %v11002 = vunpack.c.l.b16 %v10313
    %v11003 = vunpack.c.h.b16 %v10313
    %v11004 = vunpack.c.l.b16 %v10314
    %v11005 = vunpack.c.l.b16 %v10315
    %v11006 = vunpack.c.h.b16 %v10315
    %v11007 = vunpack.c.l.b16 %v10316
    %v11008 = vunpack.c.l.b16 %v10317
    %v11009 = vunpack.c.h.b16 %v10317
    %v11010 = vunpack.c.l.b16 %v10318
    %v11011 = vunpack.c.l.b16 %v10319
    %v11012 = vunpack.c.h.b16 %v10319
    %v11013 = vunpack.c.l.b16 %v10320
    %v11014 = vunpack.c.l.b16 %v10321
    %v11015 = vunpack.c.h.b16 %v10321
    %v11016 = vunpack.c.l.b16 %v10322
    %v11017 = vunpack.c.l.b16 %v10323
    %v11018 = vunpack.c.h.b16 %v10323
    %v11019 = vunpack.c.l.b16 %v10324
    %v11020 = vunpack.c.l.b16 %v10325
    %v11021 = vunpack.c.h.b16 %v10325
    %v11022 = vunpack.c.l.b16 %v10326
    %v11023 = vunpack.c.l.b16 %v10327
    %v11024 = vunpack.c.h.b16 %v10327
    %v11025 = vunpack.c.l.b16 %v10328
    %v11026 = vunpack.c.l.b16 %v10329
    %v11027 = vunpack.c.h.b16 %v10329
    %v11028 = vunpack.c.l.b16 %v10330
    %v11029 = vunpack.c.l.b16 %v10331
    %v11030 = vunpack.c.h.b16 %v10331
    %v11031 = vunpack.c.l.b16 %v10332
    %v11032 = vunpack.c.l.b16 %v10333
    %v11033 = vunpack.c.h.b16 %v10333
    %v11034 = vunpack.c.l.b16 %v10334
    %v11035 = vunpack.c.l.b16 %v10335
    %v11036 = vunpack.c.h.b16 %v10335
    %v11037 = vunpack.c.l.b16 %v10336
    %v11038 = vunpack.c.l.b16 %v10337
    %v11039 = vunpack.c.h.b16 %v10337
    %v11040 = vunpack.c.l.b16 %v10338
    %v11041 = vunpack.c.l.b16 %v10339
    %v11042 = vunpack.c.h.b16 %v10339
    %v11043 = vunpack.c.l.b16 %v10340
    %v11044 = vunpack.c.l.b16 %v10341
    %v11045 = vunpack.c.h.b16 %v10341
    %v11046 = vunpack.c.l.b16 %v10342
    %v11047 = vunpack.c.l.b16 %v10343
    %v11048 = vunpack.c.h.b16 %v10343
    %v11049 = vunpack.c.l.b16 %v10344
    %v11050 = vunpack.c.l.b16 %v10345
    %v11051 = vunpack.c.h.b16 %v10345
    %v11052 = vunpack.c.l.b16 %v10346
    %v11053 = vunpack.c.l.b16 %v10347
    %v11054 = vunpack.c.h.b16 %v10347
    %v11055 = vunpack.c.l.b16 %v10348
    %v11056 = vunpack.c.l.b16 %v10349
    %v11057 = vunpack.c.h.b16 %v10349
    %v11058 = vunpack.c.l.b16 %v10350
    %v11059 = vunpack.c.l.b16 %v10351
    %v11060 = vunpack.c.h.b16 %v10351
    %v11061 = vunpack.c.l.b16 %v10352
    %v11062 = vunpack.c.l.b16 %v10353
    %v11063 = vunpack.c.h.b16 %v10353
    %v11064 = vunpack.c.l.b16 %v10354
    %v11065 = vunpack.c.l.b16 %v10355
    %v11066 = vunpack.c.h.b16 %v10355
    %v11067 = vunpack.c.l.b16 %v10356
    %v11068 = vunpack.c.l.b16 %v10357
    %v11069 = vunpack.c.h.b16 %v10357
    %v11070 = vunpack.c.l.b16 %v10358
    %v11071 = vunpack.c.l.b16 %v10359
    %v11072 = vunpack.c.h.b16 %v10359
    %v11073 = vunpack.c.l.b16 %v10360
    %v11074 = vunpack.c.l.b16 %v10361
    %v11075 = vunpack.c.h.b16 %v10361
    %v11076 = vunpack.c.l.b16 %v10362
    %v11077 = vunpack.c.l.b16 %v10363
    %v11078 = vunpack.c.h.b16 %v10363
    %v11079 = vunpack.c.l.b16 %v10364
    %v11080 = vunpack.c.l.b16 %v10365
    %v11081 = vunpack.c.h.b16 %v10365
    %v11082 = vunpack.c.l.b16 %v10366
    %v11083 = vunpack.c.l.b16 %v10367
    %v11084 = vunpack.c.h.b16 %v10367
    %v11085 = vunpack.c.l.b16 %v10368
    %v11086 = vunpack.c.l.b16 %v10369
    %v11087 = vunpack.c.h.b16 %v10369
    %v11088 = vunpack.c.l.b16 %v10370
    %v11089 = vunpack.c.l.b16 %v10371
    %v11090 = vunpack.c.h.b16 %v10371
    %v11091 = vunpack.c.l.b16 %v10372
    %v11092 = vunpack.c.l.b16 %v10373
    %v11093 = vunpack.c.h.b16 %v10373
    %v11094 = vunpack.c.l.b16 %v10374
    %v11095 = vunpack.c.l.b16 %v10375
    %v11096 = vunpack.c.h.b16 %v10375
    %v11097 = vunpack.c.l.b16 %v10376
    %v11098 = vunpack.c.l.b16 %v10377
    %v11099 = vunpack.c.h.b16 %v10377
    %v11100 = vunpack.c.l.b16 %v10378
    %v11101 = vunpack.c.l.b16 %v10379
    %v11102 = vunpack.c.h.b16 %v10379
    %v11103 = vunpack.c.l.b16 %v10380
    %v11104 = vunpack.c.l.b16 %v10381
    %v11105 = vunpack.c.h.b16 %v10381
    %v11106 = vunpack.c.l.b16 %v10382
    %v11107 = vunpack.c.l.b16 %v10383
    %v11108 = vunpack.c.h.b16 %v10383
    %v11109 = vunpack.c.l.b16 %v10384
    %v11110 = vunpack.c.l.b16 %v10385
    %v11111 = vunpack.c.h.b16 %v10385
    %v11112 = vunpack.c.l.b16 %v10386
    %v11113 = vunpack.c.l.b16 %v10387
    %v11114 = vunpack.c.h.b16 %v10387
    %v11115 = vunpack.c.l.b16 %v10388
    %v11116 = vunpack.c.l.b16 %v10389
    %v11117 = vunpack.c.h.b16 %v10389
    %v11118 = vunpack.c.l.b16 %v10390
    %v11119 = vunpack.c.l.b16 %v10391
    %v11120 = vunpack.c.h.b16 %v10391
    %v11121 = vunpack.c.l.b16 %v10392
    %v11122 = vunpack.c.l.b16 %v10393
    %v11123 = vunpack.c.h.b16 %v10393
    %v11124 = vunpack.c.l.b16 %v10394
    %v11125 = vunpack.c.l.b16 %v10395
    %v11126 = vunpack.c.h.b16 %v10395
    %v11127 = vunpack.c.l.b16 %v10396
    %v11128 = vunpack.c.l.b16 %v10397
    %v11129 = vunpack.c.h.b16 %v10397
    %v11130 = vunpack.c.l.b16 %v10398
    %v11131 = vunpack.c.l.b16 %v10399
    %v11132 = vunpack.c.h.b16 %v10399
    %v11133 = vunpack.c.l.b16 %v10400
    %v11134 = vunpack.c.l.b16 %v10401
    %v11135 = vunpack.c.h.b16 %v10401
    %v11136 = vunpack.c.l.b16 %v10402
    %v11137 = vunpack.c.l.b16 %v10403
    %v11138 = vunpack.c.h.b16 %v10403
    %v11139 = vunpack.c.l.b16 %v10404
    %v11140 = vunpack.c.l.b16 %v10405
    %v11141 = vunpack.c.h.b16 %v10405
    %v11142 = vunpack.c.l.b16 %v10406
    %v11143 = vunpack.c.l.b16 %v10407
    %v11144 = vunpack.c.h.b16 %v10407
    %v11145 = vunpack.c.l.b16 %v10408
    %v11146 = vpack.c.b16 %v10717, %v10714
    %v11147 = vpack.c.b16 %v10718, %v10715
    %v11148 = vpack.c.b16 %v10719, %v10716
    %v11149 = vpack.c.b16 %v10723, %v10720
    %v11150 = vpack.c.b16 %v10724, %v10721
    %v11151 = vpack.c.b16 %v10725, %v10722
    %v11152 = vpack.c.b16 %v10729, %v10726
    %v11153 = vpack.c.b16 %v10730, %v10727
    %v11154 = vpack.c.b16 %v10731, %v10728
    %v11155 = vpack.c.b16 %v10735, %v10732
    %v11156 = vpack.c.b16 %v10736, %v10733
    %v11157 = vpack.c.b16 %v10737, %v10734
    %v11158 = vpack.c.b16 %v10741, %v10738
    %v11159 = vpack.c.b16 %v10742, %v10739
    %v11160 = vpack.c.b16 %v10743, %v10740
    %v11161 = vpack.c.b16 %v10747, %v10744
    %v11162 = vpack.c.b16 %v10748, %v10745
    %v11163 = vpack.c.b16 %v10749, %v10746
    %v11164 = vpack.c.b16 %v10753, %v10750
    %v11165 = vpack.c.b16 %v10754, %v10751
    %v11166 = vpack.c.b16 %v10755, %v10752
    %v11167 = vpack.c.b16 %v10759, %v10756
    %v11168 = vpack.c.b16 %v10760, %v10757
    %v11169 = vpack.c.b16 %v10761, %v10758
    %v11170 = vpack.c.b16 %v10765, %v10762
    %v11171 = vpack.c.b16 %v10766, %v10763
    %v11172 = vpack.c.b16 %v10767, %v10764
    %v11173 = vpack.c.b16 %v10771, %v10768
    %v11174 = vpack.c.b16 %v10772, %v10769
    %v11175 = vpack.c.b16 %v10773, %v10770
    %v11176 = vpack.c.b16 %v10777, %v10774
    %v11177 = vpack.c.b16 %v10778, %v10775
    %v11178 = vpack.c.b16 %v10779, %v10776
    %v11179 = vpack.c.b16 %v10783, %v10780
    %v11180 = vpack.c.b16 %v10784, %v10781
    %v11181 = vpack.c.b16 %v10785, %v10782
    %v11182 = vpack.c.b16 %v10789, %v10786
    %v11183 = vpack.c.b16 %v10790, %v10787
    %v11184 = vpack.c.b16 %v10791, %v10788
    %v11185 = vpack.c.b16 %v10795, %v10792
    %v11186 = vpack.c.b16 %v10796, %v10793
    %v11187 = vpack.c.b16 %v10797, %v10794
    %v11188 = vpack.c.b16 %v10801, %v10798
    %v11189 = vpack.c.b16 %v10802, %v10799
    %v11190 = vpack.c.b16 %v10803, %v10800
    %v11191 = vpack.c.b16 %v10807, %v10804
    %v11192 = vpack.c.b16 %v10808, %v10805
    %v11193 = vpack.c.b16 %v10809, %v10806
    %v11194 = vpack.c.b16 %v10813, %v10810
    %v11195 = vpack.c.b16 %v10814, %v10811
    %v11196 = vpack.c.b16 %v10815, %v10812
    %v11197 = vpack.c.b16 %v10819, %v10816
    %v11198 = vpack.c.b16 %v10820, %v10817
    %v11199 = vpack.c.b16 %v10821, %v10818
    %v11200 = vpack.c.b16 %v10825, %v10822
    %v11201 = vpack.c.b16 %v10826, %v10823
    %v11202 = vpack.c.b16 %v10827, %v10824
    %v11203 = vpack.c.b16 %v10831, %v10828
    %v11204 = vpack.c.b16 %v10832, %v10829
    %v11205 = vpack.c.b16 %v10833, %v10830
    %v11206 = vpack.c.b16 %v10837, %v10834
    %v11207 = vpack.c.b16 %v10838, %v10835
    %v11208 = vpack.c.b16 %v10839, %v10836
    %v11209 = vpack.c.b16 %v10843, %v10840
    %v11210 = vpack.c.b16 %v10844, %v10841
    %v11211 = vpack.c.b16 %v10845, %v10842
    %v11212 = vpack.c.b16 %v10849, %v10846
    %v11213 = vpack.c.b16 %v10850, %v10847
    %v11214 = vpack.c.b16 %v10851, %v10848
    %v11215 = vpack.c.b16 %v10855, %v10852
    %v11216 = vpack.c.b16 %v10856, %v10853
    %v11217 = vpack.c.b16 %v10857, %v10854
    %v11218 = vpack.c.b16 %v10861, %v10858
    %v11219 = vpack.c.b16 %v10862, %v10859
    %v11220 = vpack.c.b16 %v10863, %v10860
    %v11221 = vpack.c.b16 %v10867, %v10864
    %v11222 = vpack.c.b16 %v10868, %v10865
    %v11223 = vpack.c.b16 %v10869, %v10866
    %v11224 = vpack.c.b16 %v10873, %v10870
    %v11225 = vpack.c.b16 %v10874, %v10871
    %v11226 = vpack.c.b16 %v10875, %v10872
    %v11227 = vpack.c.b16 %v10879, %v10876
    %v11228 = vpack.c.b16 %v10880, %v10877
    %v11229 = vpack.c.b16 %v10881, %v10878
    %v11230 = vpack.c.b16 %v10885, %v10882
    %v11231 = vpack.c.b16 %v10886, %v10883
    %v11232 = vpack.c.b16 %v10887, %v10884
    %v11233 = vpack.c.b16 %v10891, %v10888
    %v11234 = vpack.c.b16 %v10892, %v10889
    %v11235 = vpack.c.b16 %v10893, %v10890
    %v11236 = vpack.c.b16 %v10897, %v10894
    %v11237 = vpack.c.b16 %v10898, %v10895
    %v11238 = vpack.c.b16 %v10899, %v10896
    %v11239 = vpack.c.b16 %v10903, %v10900
    %v11240 = vpack.c.b16 %v10904, %v10901
    %v11241 = vpack.c.b16 %v10905, %v10902
    %v11242 = vpack.c.b16 %v10909, %v10906
    %v11243 = vpack.c.b16 %v10910, %v10907
    %v11244 = vpack.c.b16 %v10911, %v10908
    %v11245 = vpack.c.b16 %v10915, %v10912
    %v11246 = vpack.c.b16 %v10916, %v10913
    %v11247 = vpack.c.b16 %v10917, %v10914
    %v11248 = vpack.c.b16 %v10921, %v10918
    %v11249 = vpack.c.b16 %v10922, %v10919
    %v11250 = vpack.c.b16 %v10923, %v10920
    %v11251 = vpack.c.b16 %v10927, %v10924
    %v11252 = vpack.c.b16 %v10928, %v10925
    %v11253 = vpack.c.b16 %v10929, %v10926
    %v11254 = vpack.c.b16 %v10933, %v10930
    %v11255 = vpack.c.b16 %v10934, %v10931
    %v11256 = vpack.c.b16 %v10935, %v10932
    %v11257 = vpack.c.b16 %v10939, %v10936
    %v11258 = vpack.c.b16 %v10940, %v10937
    %v11259 = vpack.c.b16 %v10941, %v10938
    %v11260 = vpack.c.b16 %v10945, %v10942
    %v11261 = vpack.c.b16 %v10946, %v10943
    %v11262 = vpack.c.b16 %v10947, %v10944
    %v11263 = vpack.c.b16 %v10951, %v10948
    %v11264 = vpack.c.b16 %v10952, %v10949
    %v11265 = vpack.c.b16 %v10953, %v10950
    %v11266 = vpack.c.b16 %v10957, %v10954
    %v11267 = vpack.c.b16 %v10958, %v10955
    %v11268 = vpack.c.b16 %v10959, %v10956
    %v11269 = vpack.c.b16 %v10963, %v10960
    %v11270 = vpack.c.b16 %v10964, %v10961
    %v11271 = vpack.c.b16 %v10965, %v10962
    %v11272 = vpack.c.b16 %v10969, %v10966
    %v11273 = vpack.c.b16 %v10970, %v10967
    %v11274 = vpack.c.b16 %v10971, %v10968
    %v11275 = vpack.c.b16 %v10975, %v10972
    %v11276 = vpack.c.b16 %v10976, %v10973
    %v11277 = vpack.c.b16 %v10977, %v10974
    %v11278 = vpack.c.b16 %v10981, %v10978
    %v11279 = vpack.c.b16 %v10982, %v10979
    %v11280 = vpack.c.b16 %v10983, %v10980
    %v11281 = vpack.c.b16 %v10987, %v10984
    %v11282 = vpack.c.b16 %v10988, %v10985
    %v11283 = vpack.c.b16 %v10989, %v10986
    %v11284 = vpack.c.b16 %v10993, %v10990
    %v11285 = vpack.c.b16 %v10994, %v10991
    %v11286 = vpack.c.b16 %v10995, %v10992
    %v11287 = vpack.c.b16 %v10999, %v10996
    %v11288 = vpack.c.b16 %v11000, %v10997
    %v11289 = vpack.c.b16 %v11001, %v10998
    %v11290 = vpack.c.b16 %v11005, %v11002
    %v11291 = vpack.c.b16 %v11006, %v11003
    %v11292 = vpack.c.b16 %v11007, %v11004
    %v11293 = vpack.c.b16 %v11011, %v11008
    %v11294 = vpack.c.b16 %v11012, %v11009
    %v11295 = vpack.c.b16 %v11013, %v11010
    %v11296 = vpack.c.b16 %v11017, %v11014
    %v11297 = vpack.c.b16 %v11018, %v11015
    %v11298 = vpack.c.b16 %v11019, %v11016
    %v11299 = vpack.c.b16 %v11023, %v11020
    %v11300 = vpack.c.b16 %v11024, %v11021
    %v11301 = vpack.c.b16 %v11025, %v11022
    %v11302 = vpack.c.b16 %v11029, %v11026
    %v11303 = vpack.c.b16 %v11030, %v11027
    %v11304 = vpack.c.b16 %v11031, %v11028
    %v11305 = vpack.c.b16 %v11035, %v11032
    %v11306 = vpack.c.b16 %v11036, %v11033
    %v11307 = vpack.c.b16 %v11037, %v11034
    %v11308 = vpack.c.b16 %v11041, %v11038
    %v11309 = vpack.c.b16 %v11042, %v11039
    %v11310 = vpack.c.b16 %v11043, %v11040
    %v11311 = vpack.c.b16 %v11047, %v11044
    %v11312 = vpack.c.b16 %v11048, %v11045
    %v11313 = vpack.c.b16 %v11049, %v11046
    %v11314 = vpack.c.b16 %v11053, %v11050
    %v11315 = vpack.c.b16 %v11054, %v11051
    %v11316 = vpack.c.b16 %v11055, %v11052
    %v11317 = vpack.c.b16 %v11059, %v11056
    %v11318 = vpack.c.b16 %v11060, %v11057
    %v11319 = vpack.c.b16 %v11061, %v11058
    %v11320 = vpack.c.b16 %v11065, %v11062
    %v11321 = vpack.c.b16 %v11066, %v11063
    %v11322 = vpack.c.b16 %v11067, %v11064
    %v11323 = vpack.c.b16 %v11071, %v11068
    %v11324 = vpack.c.b16 %v11072, %v11069
    %v11325 = vpack.c.b16 %v11073, %v11070
    %v11326 = vpack.c.b16 %v11077, %v11074
    %v11327 = vpack.c.b16 %v11078, %v11075
    %v11328 = vpack.c.b16 %v11079, %v11076
    %v11329 = vpack.c.b16 %v11083, %v11080
    %v11330 = vpack.c.b16 %v11084, %v11081
    %v11331 = vpack.c.b16 %v11085, %v11082
    %v11332 = vpack.c.b16 %v11089, %v11086
    %v11333 = vpack.c.b16 %v11090, %v11087
    %v11334 = vpack.c.b16 %v11091, %v11088
    %v11335 = vpack.c.b16 %v11095, %v11092
    %v11336 = vpack.c.b16 %v11096, %v11093
    %v11337 = vpack.c.b16 %v11097, %v11094
    %v11338 = vpack.c.b16 %v11101, %v11098
    %v11339 = vpack.c.b16 %v11102, %v11099
    %v11340 = vpack.c.b16 %v11103, %v11100
    %v11341 = vpack.c.b16 %v11107, %v11104
    %v11342 = vpack.c.b16 %v11108, %v11105
    %v11343 = vpack.c.b16 %v11109, %v11106
    %v11344 = vpack.c.b16 %v11113, %v11110
    %v11345 = vpack.c.b16 %v11114, %v11111
    %v11346 = vpack.c.b16 %v11115, %v11112
    %v11347 = vpack.c.b16 %v11119, %v11116
    %v11348 = vpack.c.b16 %v11120, %v11117
    %v11349 = vpack.c.b16 %v11121, %v11118
    %v11350 = vpack.c.b16 %v11125, %v11122
    %v11351 = vpack.c.b16 %v11126, %v11123
    %v11352 = vpack.c.b16 %v11127, %v11124
    %v11353 = vpack.c.b16 %v11131, %v11128
    %v11354 = vpack.c.b16 %v11132, %v11129
    %v11355 = vpack.c.b16 %v11133, %v11130
    %v11356 = vpack.c.b16 %v11137, %v11134
    %v11357 = vpack.c.b16 %v11138, %v11135
    %v11358 = vpack.c.b16 %v11139, %v11136
    %v11359 = vpack.c.b16 %v11143, %v11140
    %v11360 = vpack.c.b16 %v11144, %v11141
    %v11361 = vpack.c.b16 %v11145, %v11142
    %11578 = vmatprep.subr.bf16.mxu0 %v11147
    %11579 = vmatpush1.bf16.msra.mxu0 %v11146
    %11580 = vmatprep.subr.bf16.mxu0 %v11150
    %11581 = vmatpush1.bf16.msra.mxu0 %v11149
    %11582 = vmatprep.subr.bf16.mxu0 %v11153
    %11583 = vmatpush1.bf16.msra.mxu0 %v11152
    %11584 = vmatprep.subr.bf16.mxu0 %v11156
    %11585 = vmatpush1.bf16.msra.mxu0 %v11155
    %11586 = vmatprep.subr.bf16.mxu0 %v11159
    %11587 = vmatpush1.bf16.msra.mxu0 %v11158
    %11588 = vmatprep.subr.bf16.mxu0 %v11162
    %11589 = vmatpush1.bf16.msra.mxu0 %v11161
    %11590 = vmatprep.subr.bf16.mxu0 %v11165
    %11591 = vmatpush1.bf16.msra.mxu0 %v11164
    %11592 = vmatprep.subr.bf16.mxu0 %v11168
    %11593 = vmatpush1.bf16.msra.mxu0 %v11167
    %11594 = vmatprep.subr.bf16.mxu0 %v11171
    %11595 = vmatpush1.bf16.msra.mxu0 %v11170
    %11596 = vmatprep.subr.bf16.mxu0 %v11174
    %11597 = vmatpush1.bf16.msra.mxu0 %v11173
    %11598 = vmatprep.subr.bf16.mxu0 %v11177
    %11599 = vmatpush1.bf16.msra.mxu0 %v11176
    %11600 = vmatprep.subr.bf16.mxu0 %v11180
    %11601 = vmatpush1.bf16.msra.mxu0 %v11179
    %11602 = vmatprep.subr.bf16.mxu0 %v11183
    %11603 = vmatpush1.bf16.msra.mxu0 %v11182
    %11604 = vmatprep.subr.bf16.mxu0 %v11186
    %11605 = vmatpush1.bf16.msra.mxu0 %v11185
    %11606 = vmatprep.subr.bf16.mxu0 %v11189
    %11607 = vmatpush1.bf16.msra.mxu0 %v11188
    %11608 = vmatprep.subr.bf16.mxu0 %v11192
    %11609 = vmatpush1.bf16.msra.mxu0 %v11191
    %11610 = vmatprep.mubr.bf16.mxu0 %v10104
    %11611 = vmatmul.mubr.bf16.gmra.mrb[0].mxu0 %v10103
    %v11612 = vpop.f32.mrb[0].mxu0
    %v11613 = vadd.f32 %v10414, %v11612
    %v11614 = vpop.f32.mrb[0].mxu0
    %v11615 = vadd.f32 %v10418, %v11614
    %v11616 = vpop.f32.mrb[0].mxu0
    %v11617 = vadd.f32 %v10414, %v11616
    %v11618 = vpop.f32.mrb[0].mxu0
    %v11619 = vadd.f32 %v10418, %v11618
    %11620 = vmatprep.mubr.bf16.mxu0 %v10113
    %11621 = vmatmul.mubr.bf16.gmra.mrb[0].mxu0 %v10112
    %v11622 = vpop.f32.mrb[0].mxu0
    %v11623 = vadd.f32 %v10414, %v11622
    %v11624 = vpop.f32.mrb[0].mxu0
    %v11625 = vadd.f32 %v10418, %v11624
    %v11626 = vpop.f32.mrb[0].mxu0
    %v11627 = vpop.f32.mrb[0].mxu0
    %11628 = vdwg.mxu0
    %11629 = vmatprep.subr.bf16.mxu0 %v11195
    %11630 = vmatpush1.bf16.msra.mxu0 %v11194
    %11631 = vmatprep.subr.bf16.mxu0 %v11198
    %11632 = vmatpush1.bf16.msra.mxu0 %v11197
    %11633 = vmatprep.subr.bf16.mxu0 %v11201
    %11634 = vmatpush1.bf16.msra.mxu0 %v11200
    %11635 = vmatprep.subr.bf16.mxu0 %v11204
    %11636 = vmatpush1.bf16.msra.mxu0 %v11203
    %11637 = vmatprep.subr.bf16.mxu0 %v11207
    %11638 = vmatpush1.bf16.msra.mxu0 %v11206
    %11639 = vmatprep.subr.bf16.mxu0 %v11210
    %11640 = vmatpush1.bf16.msra.mxu0 %v11209
    %11641 = vmatprep.subr.bf16.mxu0 %v11213
    %11642 = vmatpush1.bf16.msra.mxu0 %v11212
    %11643 = vmatprep.subr.bf16.mxu0 %v11216
    %11644 = vmatpush1.bf16.msra.mxu0 %v11215
    %11645 = vmatprep.subr.bf16.mxu0 %v11219
    %11646 = vmatpush1.bf16.msra.mxu0 %v11218
    %11647 = vmatprep.subr.bf16.mxu0 %v11222
    %11648 = vmatpush1.bf16.msra.mxu0 %v11221
    %11649 = vmatprep.subr.bf16.mxu0 %v11225
    %11650 = vmatpush1.bf16.msra.mxu0 %v11224
    %11651 = vmatprep.subr.bf16.mxu0 %v11228
    %11652 = vmatpush1.bf16.msra.mxu0 %v11227
    %11653 = vmatprep.subr.bf16.mxu0 %v11231
    %11654 = vmatpush1.bf16.msra.mxu0 %v11230
    %11655 = vmatprep.subr.bf16.mxu0 %v11234
    %11656 = vmatpush1.bf16.msra.mxu0 %v11233
    %11657 = vmatprep.subr.bf16.mxu0 %v11237
    %11658 = vmatpush1.bf16.msra.mxu0 %v11236
    %11659 = vmatprep.subr.bf16.mxu0 %v11240
    %11660 = vmatpush1.bf16.msra.mxu0 %v11239
    %11661 = vmatprep.mubr.bf16.mxu0 %v10106
    %11662 = vmatmul.mubr.bf16.gmra.mrb[0].mxu0 %v10105
    %v11663 = vpop.f32.mrb[0].mxu0
    %v11664 = vadd.f32 %v11613, %v11663
    %v11665 = vpop.f32.mrb[0].mxu0
    %v11666 = vadd.f32 %v11615, %v11665
    %v11667 = vpop.f32.mrb[0].mxu0
    %v11668 = vadd.f32 %v11617, %v11667
    %v11669 = vpop.f32.mrb[0].mxu0
    %v11670 = vadd.f32 %v11619, %v11669
    %11671 = vmatprep.mubr.bf16.mxu0 %v10115
    %11672 = vmatmul.mubr.bf16.gmra.mrb[0].mxu0 %v10114
    %v11673 = vpop.f32.mrb[0].mxu0
    %v11674 = vadd.f32 %v11623, %v11673
    %v11675 = vpop.f32.mrb[0].mxu0
    %v11676 = vadd.f32 %v11625, %v11675
    %v11677 = vpop.f32.mrb[0].mxu0
    %v11678 = vpop.f32.mrb[0].mxu0
    %11679 = vdwg.mxu0
    %11680 = vmatprep.subr.bf16.mxu0 %v11243
    %11681 = vmatpush1.bf16.msra.mxu0 %v11242
    %11682 = vmatprep.subr.bf16.mxu0 %v11246
    %11683 = vmatpush1.bf16.msra.mxu0 %v11245
    %11684 = vmatprep.subr.bf16.mxu0 %v11249
    %11685 = vmatpush1.bf16.msra.mxu0 %v11248
    %11686 = vmatprep.subr.bf16.mxu0 %v11252
    %11687 = vmatpush1.bf16.msra.mxu0 %v11251
    %11688 = vmatprep.subr.bf16.mxu0 %v11255
    %11689 = vmatpush1.bf16.msra.mxu0 %v11254
    %11690 = vmatprep.subr.bf16.mxu0 %v11258
    %11691 = vmatpush1.bf16.msra.mxu0 %v11257
    %11692 = vmatprep.subr.bf16.mxu0 %v11261
    %11693 = vmatpush1.bf16.msra.mxu0 %v11260
    %11694 = vmatprep.subr.bf16.mxu0 %v11264
    %11695 = vmatpush1.bf16.msra.mxu0 %v11263
    %11696 = vmatprep.subr.bf16.mxu0 %v11267
    %11697 = vmatpush1.bf16.msra.mxu0 %v11266
    %11698 = vmatprep.subr.bf16.mxu0 %v11270
    %11699 = vmatpush1.bf16.msra.mxu0 %v11269
    %11700 = vmatprep.subr.bf16.mxu0 %v11273
    %11701 = vmatpush1.bf16.msra.mxu0 %v11272
    %11702 = vmatprep.subr.bf16.mxu0 %v11276
    %11703 = vmatpush1.bf16.msra.mxu0 %v11275
    %11704 = vmatprep.subr.bf16.mxu0 %v11279
    %11705 = vmatpush1.bf16.msra.mxu0 %v11278
    %11706 = vmatprep.subr.bf16.mxu0 %v11282
    %11707 = vmatpush1.bf16.msra.mxu0 %v11281
    %11708 = vmatprep.subr.bf16.mxu0 %v11285
    %11709 = vmatpush1.bf16.msra.mxu0 %v11284
    %11710 = vmatprep.subr.bf16.mxu0 %v11288
    %11711 = vmatpush1.bf16.msra.mxu0 %v11287
    %11712 = vmatprep.mubr.bf16.mxu0 %v10108
    %11713 = vmatmul.mubr.bf16.gmra.mrb[0].mxu0 %v10107
    %v11714 = vpop.f32.mrb[0].mxu0
    %v11715 = vadd.f32 %v11664, %v11714
    %v11716 = vpop.f32.mrb[0].mxu0
    %v11717 = vadd.f32 %v11666, %v11716
    %v11718 = vpop.f32.mrb[0].mxu0
    %v11719 = vadd.f32 %v11668, %v11718
    %v11720 = vpop.f32.mrb[0].mxu0
    %v11721 = vadd.f32 %v11670, %v11720
    %11722 = vmatprep.mubr.bf16.mxu0 %v10117
    %11723 = vmatmul.mubr.bf16.gmra.mrb[0].mxu0 %v10116
    %v11724 = vpop.f32.mrb[0].mxu0
    %v11725 = vadd.f32 %v11674, %v11724
    %v11726 = vpop.f32.mrb[0].mxu0
    %v11727 = vadd.f32 %v11676, %v11726
    %v11728 = vpop.f32.mrb[0].mxu0
    %v11729 = vpop.f32.mrb[0].mxu0
    %11730 = vdwg.mxu0
    %11731 = vmatprep.subr.bf16.mxu0 %v11291
    %11732 = vmatpush1.bf16.msra.mxu0 %v11290
    %11733 = vmatprep.subr.bf16.mxu0 %v11294
    %11734 = vmatpush1.bf16.msra.mxu0 %v11293
    %11735 = vmatprep.subr.bf16.mxu0 %v11297
    %11736 = vmatpush1.bf16.msra.mxu0 %v11296
    %11737 = vmatprep.subr.bf16.mxu0 %v11300
    %11738 = vmatpush1.bf16.msra.mxu0 %v11299
    %11739 = vmatprep.subr.bf16.mxu0 %v11303
    %11740 = vmatpush1.bf16.msra.mxu0 %v11302
    %11741 = vmatprep.subr.bf16.mxu0 %v11306
    %11742 = vmatpush1.bf16.msra.mxu0 %v11305
    %11743 = vmatprep.subr.bf16.mxu0 %v11309
    %11744 = vmatpush1.bf16.msra.mxu0 %v11308
    %11745 = vmatprep.subr.bf16.mxu0 %v11312
    %11746 = vmatpush1.bf16.msra.mxu0 %v11311
    %11747 = vmatprep.subr.bf16.mxu0 %v11315
    %11748 = vmatpush1.bf16.msra.mxu0 %v11314
    %11749 = vmatprep.subr.bf16.mxu0 %v11318
    %11750 = vmatpush1.bf16.msra.mxu0 %v11317
    %11751 = vmatprep.subr.bf16.mxu0 %v11321
    %11752 = vmatpush1.bf16.msra.mxu0 %v11320
    %11753 = vmatprep.subr.bf16.mxu0 %v11324
    %11754 = vmatpush1.bf16.msra.mxu0 %v11323
    %11755 = vmatprep.subr.bf16.mxu0 %v11327
    %11756 = vmatpush1.bf16.msra.mxu0 %v11326
    %11757 = vmatprep.subr.bf16.mxu0 %v11330
    %11758 = vmatpush1.bf16.msra.mxu0 %v11329
    %11759 = vmatprep.subr.bf16.mxu0 %v11333
    %11760 = vmatpush1.bf16.msra.mxu0 %v11332
    %11761 = vmatprep.subr.bf16.mxu0 %v11336
    %11762 = vmatpush1.bf16.msra.mxu0 %v11335
    %11763 = vmatprep.mubr.bf16.mxu0 %v10110
    %11764 = vmatmul.mubr.bf16.gmra.mrb[0].mxu0 %v10109
    %v11765 = vpop.f32.mrb[0].mxu0
    %v11766 = vadd.f32 %v11715, %v11765
    %v11767 = vpop.f32.mrb[0].mxu0
    %v11768 = vadd.f32 %v11717, %v11767
    %v11769 = vpop.f32.mrb[0].mxu0
    %v11770 = vadd.f32 %v11719, %v11769
    %v11771 = vpop.f32.mrb[0].mxu0
    %v11772 = vadd.f32 %v11721, %v11771
    %11773 = vmatprep.mubr.bf16.mxu0 %v10119
    %11774 = vmatmul.mubr.bf16.gmra.mrb[0].mxu0 %v10118
    %v11775 = vpop.f32.mrb[0].mxu0
    %v11776 = vadd.f32 %v11725, %v11775
    %v11777 = vpop.f32.mrb[0].mxu0
    %v11778 = vadd.f32 %v11727, %v11777
    %v11779 = vpop.f32.mrb[0].mxu0
    %v11780 = vpop.f32.mrb[0].mxu0
    %11781 = vdwg.mxu0
    %11782 = vmatprep.subr.bf16.mxu0 %v11339
    %11783 = vmatpush1.bf16.msra.mxu0 %v11338
    %11784 = vmatprep.subr.bf16.mxu0 %v11342
    %11785 = vmatpush1.bf16.msra.mxu0 %v11341
    %11786 = vmatprep.subr.bf16.mxu0 %v11345
    %11787 = vmatpush1.bf16.msra.mxu0 %v11344
    %11788 = vmatprep.subr.bf16.mxu0 %v11348
    %11789 = vmatpush1.bf16.msra.mxu0 %v11347
    %11790 = vmatprep.subr.bf16.mxu0 %v11351
    %11791 = vmatpush1.bf16.msra.mxu0 %v11350
    %11792 = vmatprep.subr.bf16.mxu0 %v11354
    %11793 = vmatpush1.bf16.msra.mxu0 %v11353
    %11794 = vmatprep.subr.bf16.mxu0 %v11357
    %11795 = vmatpush1.bf16.msra.mxu0 %v11356
    %11796 = vmatprep.subr.bf16.mxu0 %v11360
    %11797 = vmatpush1.bf16.msra.mxu0 %v11359
    %11798 = vmatprep.subr.bf16.mxu0 0
    %11799 = vmatpush1.bf16.msra.mxu0 0
    %11800 = vmatprep.subr.bf16.mxu0 0
    %11801 = vmatpush1.bf16.msra.mxu0 0
    %11802 = vmatprep.subr.bf16.mxu0 0
    %11803 = vmatpush1.bf16.msra.mxu0 0
    %11804 = vmatprep.subr.bf16.mxu0 0
    %11805 = vmatpush1.bf16.msra.mxu0 0
    %11806 = vmatprep.subr.bf16.mxu0 0
    %11807 = vmatpush1.bf16.msra.mxu0 0
    %11808 = vmatprep.subr.bf16.mxu0 0
    %11809 = vmatpush1.bf16.msra.mxu0 0
    %11810 = vmatprep.subr.bf16.mxu0 0
    %11811 = vmatpush1.bf16.msra.mxu0 0
    %11812 = vmatprep.subr.bf16.mxu0 0
    %11813 = vmatpush1.bf16.msra.mxu0 0
    %11814 = vmatprep.mubr.bf16.mxu0 0
    %11815 = vmatmul.mubr.bf16.gmra.mrb[0].mxu0 %v10111
    %v11816 = vpop.f32.mrb[0].mxu0
    %v11817 = vadd.f32 %v11766, %v11816
    %v11818 = vpop.f32.mrb[0].mxu0
    %v11819 = vadd.f32 %v11768, %v11818
    %v11820 = vpop.f32.mrb[0].mxu0
    %v11821 = vadd.f32 %v11770, %v11820
    %v11822 = vpop.f32.mrb[0].mxu0
    %v11823 = vadd.f32 %v11772, %v11822
    %11824 = vmatprep.mubr.bf16.mxu0 0
    %11825 = vmatmul.mubr.bf16.gmra.mrb[0].mxu0 %v10120
    %v11826 = vpop.f32.mrb[0].mxu0
    %v11827 = vadd.f32 %v11776, %v11826
    %v11828 = vpop.f32.mrb[0].mxu0
    %v11829 = vadd.f32 %v11778, %v11828
    %v11830 = vpop.f32.mrb[0].mxu0
    %v11831 = vpop.f32.mrb[0].mxu0
    %11832 = vdwg.mxu0
    %11833 = vmatprep.subr.bf16.mxu0 0
    %11834 = vmatpush1.bf16.msra.mxu0 %v11148
    %11835 = vmatprep.subr.bf16.mxu0 0
    %11836 = vmatpush1.bf16.msra.mxu0 %v11151
    %11837 = vmatprep.subr.bf16.mxu0 0
    %11838 = vmatpush1.bf16.msra.mxu0 %v11154
    %11839 = vmatprep.subr.bf16.mxu0 0
    %11840 = vmatpush1.bf16.msra.mxu0 %v11157
    %11841 = vmatprep.subr.bf16.mxu0 0
    %11842 = vmatpush1.bf16.msra.mxu0 %v11160
    %11843 = vmatprep.subr.bf16.mxu0 0
    %11844 = vmatpush1.bf16.msra.mxu0 %v11163
    %11845 = vmatprep.subr.bf16.mxu0 0
    %11846 = vmatpush1.bf16.msra.mxu0 %v11166
    %11847 = vmatprep.subr.bf16.mxu0 0
    %11848 = vmatpush1.bf16.msra.mxu0 %v11169
    %11849 = vmatprep.subr.bf16.mxu0 0
    %11850 = vmatpush1.bf16.msra.mxu0 %v11172
    %11851 = vmatprep.subr.bf16.mxu0 0
    %11852 = vmatpush1.bf16.msra.mxu0 %v11175
    %11853 = vmatprep.subr.bf16.mxu0 0
    %11854 = vmatpush1.bf16.msra.mxu0 %v11178
    %11855 = vmatprep.subr.bf16.mxu0 0
    %11856 = vmatpush1.bf16.msra.mxu0 %v11181
    %11857 = vmatprep.subr.bf16.mxu0 0
    %11858 = vmatpush1.bf16.msra.mxu0 %v11184
    %11859 = vmatprep.subr.bf16.mxu0 0
    %11860 = vmatpush1.bf16.msra.mxu0 %v11187
    %11861 = vmatprep.subr.bf16.mxu0 0
    %11862 = vmatpush1.bf16.msra.mxu0 %v11190
    %11863 = vmatprep.subr.bf16.mxu0 0
    %11864 = vmatpush1.bf16.msra.mxu0 %v11193
    %11865 = vmatprep.mubr.bf16.mxu0 %v10104
    %11866 = vmatmul.mubr.bf16.gmra.mrb[0].mxu0 %v10103
    %v11867 = vpop.f32.mrb[0].mxu0
    %v11868 = vadd.f32 %v10422, %v11867
    %v11869 = vpop.f32.mrb[0].mxu0
    %v11870 = vpop.f32.mrb[0].mxu0
    %v11871 = vadd.f32 %v10422, %v11870
    %v11872 = vpop.f32.mrb[0].mxu0
    %11873 = vmatprep.mubr.bf16.mxu0 %v10113
    %11874 = vmatmul.mubr.bf16.gmra.mrb[0].mxu0 %v10112
    %v11875 = vpop.f32.mrb[0].mxu0
    %v11876 = vadd.f32 %v10422, %v11875
    %v11877 = vpop.f32.mrb[0].mxu0
    %v11878 = vpop.f32.mrb[0].mxu0
    %v11879 = vpop.f32.mrb[0].mxu0
    %11880 = vdwg.mxu0
    %11881 = vmatprep.subr.bf16.mxu0 0
    %11882 = vmatpush1.bf16.msra.mxu0 %v11196
    %11883 = vmatprep.subr.bf16.mxu0 0
    %11884 = vmatpush1.bf16.msra.mxu0 %v11199
    %11885 = vmatprep.subr.bf16.mxu0 0
    %11886 = vmatpush1.bf16.msra.mxu0 %v11202
    %11887 = vmatprep.subr.bf16.mxu0 0
    %11888 = vmatpush1.bf16.msra.mxu0 %v11205
    %11889 = vmatprep.subr.bf16.mxu0 0
    %11890 = vmatpush1.bf16.msra.mxu0 %v11208
    %11891 = vmatprep.subr.bf16.mxu0 0
    %11892 = vmatpush1.bf16.msra.mxu0 %v11211
    %11893 = vmatprep.subr.bf16.mxu0 0
    %11894 = vmatpush1.bf16.msra.mxu0 %v11214
    %11895 = vmatprep.subr.bf16.mxu0 0
    %11896 = vmatpush1.bf16.msra.mxu0 %v11217
    %11897 = vmatprep.subr.bf16.mxu0 0
    %11898 = vmatpush1.bf16.msra.mxu0 %v11220
    %11899 = vmatprep.subr.bf16.mxu0 0
    %11900 = vmatpush1.bf16.msra.mxu0 %v11223
    %11901 = vmatprep.subr.bf16.mxu0 0
    %11902 = vmatpush1.bf16.msra.mxu0 %v11226
    %11903 = vmatprep.subr.bf16.mxu0 0
    %11904 = vmatpush1.bf16.msra.mxu0 %v11229
    %11905 = vmatprep.subr.bf16.mxu0 0
    %11906 = vmatpush1.bf16.msra.mxu0 %v11232
    %11907 = vmatprep.subr.bf16.mxu0 0
    %11908 = vmatpush1.bf16.msra.mxu0 %v11235
    %11909 = vmatprep.subr.bf16.mxu0 0
    %11910 = vmatpush1.bf16.msra.mxu0 %v11238
    %11911 = vmatprep.subr.bf16.mxu0 0
    %11912 = vmatpush1.bf16.msra.mxu0 %v11241
    %11913 = vmatprep.mubr.bf16.mxu0 %v10106
    %11914 = vmatmul.mubr.bf16.gmra.mrb[0].mxu0 %v10105
    %v11915 = vpop.f32.mrb[0].mxu0
    %v11916 = vadd.f32 %v11868, %v11915
    %v11917 = vpop.f32.mrb[0].mxu0
    %v11918 = vpop.f32.mrb[0].mxu0
    %v11919 = vadd.f32 %v11871, %v11918
    %v11920 = vpop.f32.mrb[0].mxu0
    %11921 = vmatprep.mubr.bf16.mxu0 %v10115
    %11922 = vmatmul.mubr.bf16.gmra.mrb[0].mxu0 %v10114
    %v11923 = vpop.f32.mrb[0].mxu0
    %v11924 = vadd.f32 %v11876, %v11923
    %v11925 = vpop.f32.mrb[0].mxu0
    %v11926 = vpop.f32.mrb[0].mxu0
    %v11927 = vpop.f32.mrb[0].mxu0
    %11928 = vdwg.mxu0
    %11929 = vmatprep.subr.bf16.mxu0 0
    %11930 = vmatpush1.bf16.msra.mxu0 %v11244
    %11931 = vmatprep.subr.bf16.mxu0 0
    %11932 = vmatpush1.bf16.msra.mxu0 %v11247
    %11933 = vmatprep.subr.bf16.mxu0 0
    %11934 = vmatpush1.bf16.msra.mxu0 %v11250
    %11935 = vmatprep.subr.bf16.mxu0 0
    %11936 = vmatpush1.bf16.msra.mxu0 %v11253
    %11937 = vmatprep.subr.bf16.mxu0 0
    %11938 = vmatpush1.bf16.msra.mxu0 %v11256
    %11939 = vmatprep.subr.bf16.mxu0 0
    %11940 = vmatpush1.bf16.msra.mxu0 %v11259
    %11941 = vmatprep.subr.bf16.mxu0 0
    %11942 = vmatpush1.bf16.msra.mxu0 %v11262
    %11943 = vmatprep.subr.bf16.mxu0 0
    %11944 = vmatpush1.bf16.msra.mxu0 %v11265
    %11945 = vmatprep.subr.bf16.mxu0 0
    %11946 = vmatpush1.bf16.msra.mxu0 %v11268
    %11947 = vmatprep.subr.bf16.mxu0 0
    %11948 = vmatpush1.bf16.msra.mxu0 %v11271
    %11949 = vmatprep.subr.bf16.mxu0 0
    %11950 = vmatpush1.bf16.msra.mxu0 %v11274
    %11951 = vmatprep.subr.bf16.mxu0 0
    %11952 = vmatpush1.bf16.msra.mxu0 %v11277
    %11953 = vmatprep.subr.bf16.mxu0 0
    %11954 = vmatpush1.bf16.msra.mxu0 %v11280
    %11955 = vmatprep.subr.bf16.mxu0 0
    %11956 = vmatpush1.bf16.msra.mxu0 %v11283
    %11957 = vmatprep.subr.bf16.mxu0 0
    %11958 = vmatpush1.bf16.msra.mxu0 %v11286
    %11959 = vmatprep.subr.bf16.mxu0 0
    %11960 = vmatpush1.bf16.msra.mxu0 %v11289
    %11961 = vmatprep.mubr.bf16.mxu0 %v10108
    %11962 = vmatmul.mubr.bf16.gmra.mrb[0].mxu0 %v10107
    %v11963 = vpop.f32.mrb[0].mxu0
    %v11964 = vadd.f32 %v11916, %v11963
    %v11965 = vpop.f32.mrb[0].mxu0
    %v11966 = vpop.f32.mrb[0].mxu0
    %v11967 = vadd.f32 %v11919, %v11966
    %v11968 = vpop.f32.mrb[0].mxu0
    %11969 = vmatprep.mubr.bf16.mxu0 %v10117
    %11970 = vmatmul.mubr.bf16.gmra.mrb[0].mxu0 %v10116
    %v11971 = vpop.f32.mrb[0].mxu0
    %v11972 = vadd.f32 %v11924, %v11971
    %v11973 = vpop.f32.mrb[0].mxu0
    %v11974 = vpop.f32.mrb[0].mxu0
    %v11975 = vpop.f32.mrb[0].mxu0
    %11976 = vdwg.mxu0
    %11977 = vmatprep.subr.bf16.mxu0 0
    %11978 = vmatpush1.bf16.msra.mxu0 %v11292
    %11979 = vmatprep.subr.bf16.mxu0 0
    %11980 = vmatpush1.bf16.msra.mxu0 %v11295
    %11981 = vmatprep.subr.bf16.mxu0 0
    %11982 = vmatpush1.bf16.msra.mxu0 %v11298
    %11983 = vmatprep.subr.bf16.mxu0 0
    %11984 = vmatpush1.bf16.msra.mxu0 %v11301
    %11985 = vmatprep.subr.bf16.mxu0 0
    %11986 = vmatpush1.bf16.msra.mxu0 %v11304
    %11987 = vmatprep.subr.bf16.mxu0 0
    %11988 = vmatpush1.bf16.msra.mxu0 %v11307
    %11989 = vmatprep.subr.bf16.mxu0 0
    %11990 = vmatpush1.bf16.msra.mxu0 %v11310
    %11991 = vmatprep.subr.bf16.mxu0 0
    %11992 = vmatpush1.bf16.msra.mxu0 %v11313
    %11993 = vmatprep.subr.bf16.mxu0 0
    %11994 = vmatpush1.bf16.msra.mxu0 %v11316
    %11995 = vmatprep.subr.bf16.mxu0 0
    %11996 = vmatpush1.bf16.msra.mxu0 %v11319
    %11997 = vmatprep.subr.bf16.mxu0 0
    %11998 = vmatpush1.bf16.msra.mxu0 %v11322
    %11999 = vmatprep.subr.bf16.mxu0 0
    %12000 = vmatpush1.bf16.msra.mxu0 %v11325
    %12001 = vmatprep.subr.bf16.mxu0 0
    %12002 = vmatpush1.bf16.msra.mxu0 %v11328
    %12003 = vmatprep.subr.bf16.mxu0 0
    %12004 = vmatpush1.bf16.msra.mxu0 %v11331
    %12005 = vmatprep.subr.bf16.mxu0 0
    %12006 = vmatpush1.bf16.msra.mxu0 %v11334
    %12007 = vmatprep.subr.bf16.mxu0 0
    %12008 = vmatpush1.bf16.msra.mxu0 %v11337
    %12009 = vmatprep.mubr.bf16.mxu0 %v10110
    %12010 = vmatmul.mubr.bf16.gmra.mrb[0].mxu0 %v10109
    %v12011 = vpop.f32.mrb[0].mxu0
    %v12012 = vadd.f32 %v11964, %v12011
    %v12013 = vpop.f32.mrb[0].mxu0
    %v12014 = vpop.f32.mrb[0].mxu0
    %v12015 = vadd.f32 %v11967, %v12014
    %v12016 = vpop.f32.mrb[0].mxu0
    %12017 = vmatprep.mubr.bf16.mxu0 %v10119
    %12018 = vmatmul.mubr.bf16.gmra.mrb[0].mxu0 %v10118
    %v12019 = vpop.f32.mrb[0].mxu0
    %v12020 = vadd.f32 %v11972, %v12019
    %v12021 = vpop.f32.mrb[0].mxu0
    %v12022 = vpop.f32.mrb[0].mxu0
    %v12023 = vpop.f32.mrb[0].mxu0
    %12024 = vdwg.mxu0
    %12025 = vmatprep.subr.bf16.mxu0 0
    %12026 = vmatpush1.bf16.msra.mxu0 %v11340
    %12027 = vmatprep.subr.bf16.mxu0 0
    %12028 = vmatpush1.bf16.msra.mxu0 %v11343
    %12029 = vmatprep.subr.bf16.mxu0 0
    %12030 = vmatpush1.bf16.msra.mxu0 %v11346
    %12031 = vmatprep.subr.bf16.mxu0 0
    %12032 = vmatpush1.bf16.msra.mxu0 %v11349
    %12033 = vmatprep.subr.bf16.mxu0 0
    %12034 = vmatpush1.bf16.msra.mxu0 %v11352
    %12035 = vmatprep.subr.bf16.mxu0 0
    %12036 = vmatpush1.bf16.msra.mxu0 %v11355
    %12037 = vmatprep.subr.bf16.mxu0 0
    %12038 = vmatpush1.bf16.msra.mxu0 %v11358
    %12039 = vmatprep.subr.bf16.mxu0 0
    %12040 = vmatpush1.bf16.msra.mxu0 %v11361
    %12041 = vmatprep.subr.bf16.mxu0 0
    %12042 = vmatpush1.bf16.msra.mxu0 0
    %12043 = vmatprep.subr.bf16.mxu0 0
    %12044 = vmatpush1.bf16.msra.mxu0 0
    %12045 = vmatprep.subr.bf16.mxu0 0
    %12046 = vmatpush1.bf16.msra.mxu0 0
    %12047 = vmatprep.subr.bf16.mxu0 0
    %12048 = vmatpush1.bf16.msra.mxu0 0
    %12049 = vmatprep.subr.bf16.mxu0 0
    %12050 = vmatpush1.bf16.msra.mxu0 0
    %12051 = vmatprep.subr.bf16.mxu0 0
    %12052 = vmatpush1.bf16.msra.mxu0 0
    %12053 = vmatprep.subr.bf16.mxu0 0
    %12054 = vmatpush1.bf16.msra.mxu0 0
    %12055 = vmatprep.subr.bf16.mxu0 0
    %12056 = vmatpush1.bf16.msra.mxu0 0
    %12057 = vmatprep.mubr.bf16.mxu0 0
    %12058 = vmatmul.mubr.bf16.gmra.mrb[0].mxu0 %v10111
    %v12059 = vpop.f32.mrb[0].mxu0
    %v12060 = vadd.f32 %v12012, %v12059
    %v12061 = vpop.f32.mrb[0].mxu0
    %v12062 = vpop.f32.mrb[0].mxu0
    %v12063 = vadd.f32 %v12015, %v12062
    %v12064 = vpop.f32.mrb[0].mxu0
    %12065 = vmatprep.mubr.bf16.mxu0 0
    %12066 = vmatmul.mubr.bf16.gmra.mrb[0].mxu0 %v10120
    %v12067 = vpop.f32.mrb[0].mxu0
    %v12068 = vadd.f32 %v12020, %v12067
    %v12069 = vpop.f32.mrb[0].mxu0
    %v12070 = vpop.f32.mrb[0].mxu0
    %v12071 = vpop.f32.mrb[0].mxu0
    %12072 = vdwg.mxu0
    %v12073 = vmax.f32 %v11817, 0.0
    %v12074 = vmax.f32 %v11819, 0.0
    %v12075 = vmax.f32 %v12060, 0.0
    %v12076 = vmax.f32 %v11821, 0.0
    %v12077 = vmax.f32 %v11823, 0.0
    %v12078 = vmax.f32 %v12063, 0.0
    %v12079 = vmax.f32 %v11827, 0.0
    %v12080 = vmax.f32 %v11829, 0.0
    %v12081 = vmax.f32 %v12068, 0.0
    %v12082 = vpack.c.bf16 %v12076, %v12073
    %v12083 = vpack.c.bf16 %v12077, %v12074
    %v12084 = vpack.c.bf16 %v12078, %v12075
    %v12085 = vpack.c.bf16 %v12079, %v12079
    %v12086 = vpack.c.bf16 %v12080, %v12080
    %v12087 = vpack.c.bf16 %v12081, %v12081
    %v12088 = vld [vmem:[%s57] sm:$0xf]
    %v12089 = vld [vmem:[%s57 + $0x4] sm:$0xf]
    %v12090 = vld [vmem:[%s57 + $0x8] sm:$0xf]
    %v12091 = vld [vmem:[%s57 + $0xc] sm:$0xf]
    %v12092 = vld [vmem:[%s57 + $0x10] sm:$0xf]
    %v12093 = vld [vmem:[%s57 + $0x14] sm:$0xf]
    %v12094 = vld [vmem:[%s57 + $0x18] sm:$0xf]
    %v12095 = vld [vmem:[%s57 + $0x1c] sm:$0xf]
    %v12096 = vld [vmem:[%s57 + $0x20] sm:$0xf]
    %v12097 = vld [vmem:[%s57 + $0x24] sm:$0xf]
    %v12098 = vld [vmem:[%s57 + $0x28] sm:$0xf]
    %v12099 = vld [vmem:[%s57 + $0x2c] sm:$0xf]
    %v12100 = vld [vmem:[%s57 + $0x30] sm:$0xf]
    %v12101 = vld [vmem:[%s57 + $0x34] sm:$0xf]
    %v12102 = vld [vmem:[%s57 + $0x38] sm:$0xf]
    %v12103 = vld [vmem:[%s57 + $0x3c] sm:$0xf]
    %v12104 = vld [vmem:[%s57 + $0x40] sm:$0xf]
    %v12105 = vld [vmem:[%s57 + $0x44] sm:$0xf]
    %v12124 = vunpack.c.l.b16 %v12088
    %v12125 = vunpack.c.l.b16 %v12089
    %v12126 = vunpack.c.l.b16 %v12090
    %v12127 = vunpack.c.l.b16 %v12091
    %v12128 = vunpack.c.l.b16 %v12092
    %v12129 = vunpack.c.l.b16 %v12093
    %v12130 = vunpack.c.l.b16 %v12094
    %v12131 = vunpack.c.l.b16 %v12095
    %v12132 = vunpack.c.l.b16 %v12096
    %v12133 = vunpack.c.l.b16 %v12097
    %v12134 = vunpack.c.l.b16 %v12098
    %v12135 = vunpack.c.l.b16 %v12099
    %v12136 = vunpack.c.l.b16 %v12100
    %v12137 = vunpack.c.l.b16 %v12101
    %v12138 = vunpack.c.l.b16 %v12102
    %v12139 = vunpack.c.l.b16 %v12103
    %v12140 = vunpack.c.l.b16 %v12104
    %v12141 = vunpack.c.l.b16 %v12105
    %v12142 = vpack.c.b16 %v12125, %v12124
    %v12143 = vpack.c.b16 %v12127, %v12126
    %v12144 = vpack.c.b16 %v12129, %v12128
    %v12145 = vpack.c.b16 %v12131, %v12130
    %v12146 = vpack.c.b16 %v12133, %v12132
    %v12147 = vpack.c.b16 %v12135, %v12134
    %v12148 = vpack.c.b16 %v12137, %v12136
    %v12149 = vpack.c.b16 %v12139, %v12138
    %v12150 = vpack.c.b16 %v12141, %v12140
    %v12152 = vsel %vm1818, %v12142, 0
    %v12155 = vsel %vm1818, %v12143, 0
    %v12158 = vsel %vm1818, %v12144, 0
    %v12161 = vsel %vm1818, %v12145, 0
    %v12164 = vsel %vm1818, %v12146, 0
    %v12167 = vsel %vm1818, %v12147, 0
    %v12170 = vsel %vm1818, %v12148, 0
    %v12173 = vsel %vm1818, %v12149, 0
    %v12176 = vsel %vm1818, %v12150, 0
    %v12179 = vsel %vm1828, %v12085, 0
    %v12182 = vsel %vm1828, %v12086, 0
    %v12185 = vsel %vm1828, %v12087, 0
    %12187 = vmatprep.subr.bf16.mxu0 %v12083
    %12188 = vmatpush1.bf16.msra.mxu0 %v12082
    %12189 = vmatprep.subr.bf16.mxu0 %v12182
    %12190 = vmatpush1.bf16.msra.mxu0 %v12179
    %12191 = vmatprep.subr.bf16.mxu0 0
    %12192 = vmatpush1.bf16.msra.mxu0 0
    %12193 = vmatprep.subr.bf16.mxu0 0
    %12194 = vmatpush1.bf16.msra.mxu0 0
    %12195 = vmatprep.subr.bf16.mxu0 0
    %12196 = vmatpush1.bf16.msra.mxu0 0
    %12197 = vmatprep.subr.bf16.mxu0 0
    %12198 = vmatpush1.bf16.msra.mxu0 0
    %12199 = vmatprep.subr.bf16.mxu0 0
    %12200 = vmatpush1.bf16.msra.mxu0 0
    %12201 = vmatprep.subr.bf16.mxu0 0
    %12202 = vmatpush1.bf16.msra.mxu0 0
    %12203 = vmatprep.subr.bf16.mxu0 0
    %12204 = vmatpush1.bf16.msra.mxu0 0
    %12205 = vmatprep.subr.bf16.mxu0 0
    %12206 = vmatpush1.bf16.msra.mxu0 0
    %12207 = vmatprep.subr.bf16.mxu0 0
    %12208 = vmatpush1.bf16.msra.mxu0 0
    %12209 = vmatprep.subr.bf16.mxu0 0
    %12210 = vmatpush1.bf16.msra.mxu0 0
    %12211 = vmatprep.subr.bf16.mxu0 0
    %12212 = vmatpush1.bf16.msra.mxu0 0
    %12213 = vmatprep.subr.bf16.mxu0 0
    %12214 = vmatpush1.bf16.msra.mxu0 0
    %12215 = vmatprep.subr.bf16.mxu0 0
    %12216 = vmatpush1.bf16.msra.mxu0 0
    %12217 = vmatprep.subr.bf16.mxu0 0
    %12218 = vmatpush1.bf16.msra.mxu0 0
    %12219 = vmatprep.mubr.bf16.mxu0 0
    %12220 = vmatmul.mubr.bf16.gmra.mrb[0].mxu0 %v12152
    %v12221 = vpop.f32.mrb[0].mxu0
    %v12222 = vadd.f32 0.0, %v12221
    %v12223 = vpop.f32.mrb[0].mxu0
    %v12224 = vadd.f32 0.0, %v12223
    %v12225 = vpop.f32.mrb[0].mxu0
    %v12226 = vadd.f32 0.0, %v12225
    %v12227 = vpop.f32.mrb[0].mxu0
    %v12228 = vadd.f32 0.0, %v12227
    %12229 = vmatprep.mubr.bf16.mxu0 0
    %12230 = vmatmul.mubr.bf16.gmra.mrb[0].mxu0 %v12155
    %v12231 = vpop.f32.mrb[0].mxu0
    %v12232 = vadd.f32 0.0, %v12231
    %v12233 = vpop.f32.mrb[0].mxu0
    %v12234 = vadd.f32 0.0, %v12233
    %v12235 = vpop.f32.mrb[0].mxu0
    %v12236 = vadd.f32 0.0, %v12235
    %v12237 = vpop.f32.mrb[0].mxu0
    %v12238 = vadd.f32 0.0, %v12237
    %12239 = vmatprep.mubr.bf16.mxu0 0
    %12240 = vmatmul.mubr.bf16.gmra.mrb[0].mxu0 %v12158
    %v12241 = vpop.f32.mrb[0].mxu0
    %v12242 = vadd.f32 0.0, %v12241
    %v12243 = vpop.f32.mrb[0].mxu0
    %v12244 = vadd.f32 0.0, %v12243
    %v12245 = vpop.f32.mrb[0].mxu0
    %v12246 = vadd.f32 0.0, %v12245
    %v12247 = vpop.f32.mrb[0].mxu0
    %v12248 = vadd.f32 0.0, %v12247
    %12249 = vmatprep.mubr.bf16.mxu0 0
    %12250 = vmatmul.mubr.bf16.gmra.mrb[0].mxu0 %v12161
    %v12251 = vpop.f32.mrb[0].mxu0
    %v12252 = vadd.f32 0.0, %v12251
    %v12253 = vpop.f32.mrb[0].mxu0
    %v12254 = vadd.f32 0.0, %v12253
    %v12255 = vpop.f32.mrb[0].mxu0
    %v12256 = vadd.f32 0.0, %v12255
    %v12257 = vpop.f32.mrb[0].mxu0
    %v12258 = vadd.f32 0.0, %v12257
    %12259 = vmatprep.mubr.bf16.mxu0 0
    %12260 = vmatmul.mubr.bf16.gmra.mrb[0].mxu0 %v12164
    %v12261 = vpop.f32.mrb[0].mxu0
    %v12262 = vadd.f32 0.0, %v12261
    %v12263 = vpop.f32.mrb[0].mxu0
    %v12264 = vadd.f32 0.0, %v12263
    %v12265 = vpop.f32.mrb[0].mxu0
    %v12266 = vadd.f32 0.0, %v12265
    %v12267 = vpop.f32.mrb[0].mxu0
    %v12268 = vadd.f32 0.0, %v12267
    %12269 = vmatprep.mubr.bf16.mxu0 0
    %12270 = vmatmul.mubr.bf16.gmra.mrb[0].mxu0 %v12167
    %v12271 = vpop.f32.mrb[0].mxu0
    %v12272 = vadd.f32 0.0, %v12271
    %v12273 = vpop.f32.mrb[0].mxu0
    %v12274 = vadd.f32 0.0, %v12273
    %v12275 = vpop.f32.mrb[0].mxu0
    %v12276 = vadd.f32 0.0, %v12275
    %v12277 = vpop.f32.mrb[0].mxu0
    %v12278 = vadd.f32 0.0, %v12277
    %12279 = vmatprep.mubr.bf16.mxu0 0
    %12280 = vmatmul.mubr.bf16.gmra.mrb[0].mxu0 %v12170
    %v12281 = vpop.f32.mrb[0].mxu0
    %v12282 = vadd.f32 0.0, %v12281
    %v12283 = vpop.f32.mrb[0].mxu0
    %v12284 = vadd.f32 0.0, %v12283
    %v12285 = vpop.f32.mrb[0].mxu0
    %v12286 = vadd.f32 0.0, %v12285
    %v12287 = vpop.f32.mrb[0].mxu0
    %v12288 = vadd.f32 0.0, %v12287
    %12289 = vmatprep.mubr.bf16.mxu0 0
    %12290 = vmatmul.mubr.bf16.gmra.mrb[0].mxu0 %v12173
    %v12291 = vpop.f32.mrb[0].mxu0
    %v12292 = vadd.f32 0.0, %v12291
    %v12293 = vpop.f32.mrb[0].mxu0
    %v12294 = vadd.f32 0.0, %v12293
    %v12295 = vpop.f32.mrb[0].mxu0
    %v12296 = vadd.f32 0.0, %v12295
    %v12297 = vpop.f32.mrb[0].mxu0
    %v12298 = vadd.f32 0.0, %v12297
    %12299 = vmatprep.mubr.bf16.mxu0 0
    %12300 = vmatmul.mubr.bf16.gmra.mrb[0].mxu0 %v12176
    %v12301 = vpop.f32.mrb[0].mxu0
    %v12302 = vadd.f32 0.0, %v12301
    %v12303 = vpop.f32.mrb[0].mxu0
    %v12304 = vadd.f32 0.0, %v12303
    %v12305 = vpop.f32.mrb[0].mxu0
    %v12306 = vadd.f32 0.0, %v12305
    %v12307 = vpop.f32.mrb[0].mxu0
    %v12308 = vadd.f32 0.0, %v12307
    %12309 = vdwg.mxu0
    %12310 = vmatprep.subr.bf16.mxu0 0
    %12311 = vmatpush1.bf16.msra.mxu0 %v12084
    %12312 = vmatprep.subr.bf16.mxu0 0
    %12313 = vmatpush1.bf16.msra.mxu0 %v12185
    %12314 = vmatprep.subr.bf16.mxu0 0
    %12315 = vmatpush1.bf16.msra.mxu0 0
    %12316 = vmatprep.subr.bf16.mxu0 0
    %12317 = vmatpush1.bf16.msra.mxu0 0
    %12318 = vmatprep.subr.bf16.mxu0 0
    %12319 = vmatpush1.bf16.msra.mxu0 0
    %12320 = vmatprep.subr.bf16.mxu0 0
    %12321 = vmatpush1.bf16.msra.mxu0 0
    %12322 = vmatprep.subr.bf16.mxu0 0
    %12323 = vmatpush1.bf16.msra.mxu0 0
    %12324 = vmatprep.subr.bf16.mxu0 0
    %12325 = vmatpush1.bf16.msra.mxu0 0
    %12326 = vmatprep.subr.bf16.mxu0 0
    %12327 = vmatpush1.bf16.msra.mxu0 0
    %12328 = vmatprep.subr.bf16.mxu0 0
    %12329 = vmatpush1.bf16.msra.mxu0 0
    %12330 = vmatprep.subr.bf16.mxu0 0
    %12331 = vmatpush1.bf16.msra.mxu0 0
    %12332 = vmatprep.subr.bf16.mxu0 0
    %12333 = vmatpush1.bf16.msra.mxu0 0
    %12334 = vmatprep.subr.bf16.mxu0 0
    %12335 = vmatpush1.bf16.msra.mxu0 0
    %12336 = vmatprep.subr.bf16.mxu0 0
    %12337 = vmatpush1.bf16.msra.mxu0 0
    %12338 = vmatprep.subr.bf16.mxu0 0
    %12339 = vmatpush1.bf16.msra.mxu0 0
    %12340 = vmatprep.subr.bf16.mxu0 0
    %12341 = vmatpush1.bf16.msra.mxu0 0
    %12342 = vmatprep.mubr.bf16.mxu0 0
    %12343 = vmatmul.mubr.bf16.gmra.mrb[0].mxu0 %v12152
    %v12344 = vpop.f32.mrb[0].mxu0
    %v12345 = vadd.f32 0.0, %v12344
    %v12346 = vpop.f32.mrb[0].mxu0
    %v12347 = vpop.f32.mrb[0].mxu0
    %v12348 = vadd.f32 0.0, %v12347
    %v12349 = vpop.f32.mrb[0].mxu0
    %12350 = vmatprep.mubr.bf16.mxu0 0
    %12351 = vmatmul.mubr.bf16.gmra.mrb[0].mxu0 %v12155
    %v12352 = vpop.f32.mrb[0].mxu0
    %v12353 = vadd.f32 0.0, %v12352
    %v12354 = vpop.f32.mrb[0].mxu0
    %v12355 = vpop.f32.mrb[0].mxu0
    %v12356 = vadd.f32 0.0, %v12355
    %v12357 = vpop.f32.mrb[0].mxu0
    %12358 = vmatprep.mubr.bf16.mxu0 0
    %12359 = vmatmul.mubr.bf16.gmra.mrb[0].mxu0 %v12158
    %v12360 = vpop.f32.mrb[0].mxu0
    %v12361 = vadd.f32 0.0, %v12360
    %v12362 = vpop.f32.mrb[0].mxu0
    %v12363 = vpop.f32.mrb[0].mxu0
    %v12364 = vadd.f32 0.0, %v12363
    %v12365 = vpop.f32.mrb[0].mxu0
    %12366 = vmatprep.mubr.bf16.mxu0 0
    %12367 = vmatmul.mubr.bf16.gmra.mrb[0].mxu0 %v12161
    %v12368 = vpop.f32.mrb[0].mxu0
    %v12369 = vadd.f32 0.0, %v12368
    %v12370 = vpop.f32.mrb[0].mxu0
    %v12371 = vpop.f32.mrb[0].mxu0
    %v12372 = vadd.f32 0.0, %v12371
    %v12373 = vpop.f32.mrb[0].mxu0
    %12374 = vmatprep.mubr.bf16.mxu0 0
    %12375 = vmatmul.mubr.bf16.gmra.mrb[0].mxu0 %v12164
    %v12376 = vpop.f32.mrb[0].mxu0
    %v12377 = vadd.f32 0.0, %v12376
    %v12378 = vpop.f32.mrb[0].mxu0
    %v12379 = vpop.f32.mrb[0].mxu0
    %v12380 = vadd.f32 0.0, %v12379
    %v12381 = vpop.f32.mrb[0].mxu0
    %12382 = vmatprep.mubr.bf16.mxu0 0
    %12383 = vmatmul.mubr.bf16.gmra.mrb[0].mxu0 %v12167
    %v12384 = vpop.f32.mrb[0].mxu0
    %v12385 = vadd.f32 0.0, %v12384
    %v12386 = vpop.f32.mrb[0].mxu0
    %v12387 = vpop.f32.mrb[0].mxu0
    %v12388 = vadd.f32 0.0, %v12387
    %v12389 = vpop.f32.mrb[0].mxu0
    %12390 = vmatprep.mubr.bf16.mxu0 0
    %12391 = vmatmul.mubr.bf16.gmra.mrb[0].mxu0 %v12170
    %v12392 = vpop.f32.mrb[0].mxu0
    %v12393 = vadd.f32 0.0, %v12392
    %v12394 = vpop.f32.mrb[0].mxu0
    %v12395 = vpop.f32.mrb[0].mxu0
    %v12396 = vadd.f32 0.0, %v12395
    %v12397 = vpop.f32.mrb[0].mxu0
    %12398 = vmatprep.mubr.bf16.mxu0 0
    %12399 = vmatmul.mubr.bf16.gmra.mrb[0].mxu0 %v12173
    %v12400 = vpop.f32.mrb[0].mxu0
    %v12401 = vadd.f32 0.0, %v12400
    %v12402 = vpop.f32.mrb[0].mxu0
    %v12403 = vpop.f32.mrb[0].mxu0
    %v12404 = vadd.f32 0.0, %v12403
    %v12405 = vpop.f32.mrb[0].mxu0
    %12406 = vmatprep.mubr.bf16.mxu0 0
    %12407 = vmatmul.mubr.bf16.gmra.mrb[0].mxu0 %v12176
    %v12408 = vpop.f32.mrb[0].mxu0
    %v12409 = vadd.f32 0.0, %v12408
    %v12410 = vpop.f32.mrb[0].mxu0
    %v12411 = vpop.f32.mrb[0].mxu0
    %v12412 = vadd.f32 0.0, %v12411
    %v12413 = vpop.f32.mrb[0].mxu0
    %12414 = vdwg.mxu0
    %v12415 = vpack.c.bf16 %v12226, %v12222
    %v12416 = vpack.c.bf16 %v12228, %v12224
    %v12417 = vpack.c.bf16 %v12348, %v12345
    %v12418 = vpack.c.bf16 %v12256, %v12252
    %v12419 = vpack.c.bf16 %v12258, %v12254
    %v12420 = vpack.c.bf16 %v12372, %v12369
    %v12421 = vpack.c.bf16 %v12286, %v12282
    %v12422 = vpack.c.bf16 %v12288, %v12284
    %v12423 = vpack.c.bf16 %v12396, %v12393
    %v12424 = vpack.c.bf16 %v12236, %v12232
    %v12425 = vpack.c.bf16 %v12238, %v12234
    %v12426 = vpack.c.bf16 %v12356, %v12353
    %v12427 = vpack.c.bf16 %v12266, %v12262
    %v12428 = vpack.c.bf16 %v12268, %v12264
    %v12429 = vpack.c.bf16 %v12380, %v12377
    %v12430 = vpack.c.bf16 %v12296, %v12292
    %v12431 = vpack.c.bf16 %v12298, %v12294
    %v12432 = vpack.c.bf16 %v12404, %v12401
    %v12433 = vpack.c.bf16 %v12246, %v12242
    %v12434 = vpack.c.bf16 %v12248, %v12244
    %v12435 = vpack.c.bf16 %v12364, %v12361
    %v12436 = vpack.c.bf16 %v12276, %v12272
    %v12437 = vpack.c.bf16 %v12278, %v12274
    %v12438 = vpack.c.bf16 %v12388, %v12385
    %v12439 = vpack.c.bf16 %v12306, %v12302
    %v12440 = vpack.c.bf16 %v12308, %v12304
    %v12441 = vpack.c.bf16 %v12412, %v12409
    %v12442 = vld [vmem:[#allocation14] sm:$0xf]
    %v12443 = vld [vmem:[#allocation14 + $0x4] sm:$0xf]
    %v12444 = vld [vmem:[#allocation14 + $0x8] sm:$0xf]
    %v12445 = vld [vmem:[#allocation14 + $0xc] sm:$0xf]
    %v12446 = vld [vmem:[#allocation14 + $0x10] sm:$0xf]
    %v12447 = vld [vmem:[#allocation14 + $0x14] sm:$0xf]
    %v12448 = vld [vmem:[#allocation14 + $0x18] sm:$0xf]
    %v12449 = vld [vmem:[#allocation14 + $0x1c] sm:$0xf]
    %v12450 = vld [vmem:[#allocation14 + $0x20] sm:$0xf]
    %v12451 = vld [vmem:[#allocation14 + $0x24] sm:$0xf]
    %v12452 = vld [vmem:[#allocation14 + $0x28] sm:$0xf]
    %v12453 = vld [vmem:[#allocation14 + $0x2c] sm:$0xf]
    %v12454 = vld [vmem:[#allocation14 + $0x30] sm:$0xf]
    %v12455 = vld [vmem:[#allocation14 + $0x34] sm:$0xf]
    %v12456 = vld [vmem:[#allocation14 + $0x38] sm:$0xf]
    %v12457 = vld [vmem:[#allocation14 + $0x3c] sm:$0xf]
    %v12458 = vld [vmem:[#allocation14 + $0x40] sm:$0xf]
    %v12459 = vld [vmem:[#allocation14 + $0x44] sm:$0xf]
    %v12460 = vld [vmem:[#allocation14 + $0x48] sm:$0xf]
    %v12461 = vld [vmem:[#allocation14 + $0x4c] sm:$0xf]
    %v12462 = vld [vmem:[#allocation14 + $0x50] sm:$0xf]
    %v12463 = vld [vmem:[#allocation14 + $0x54] sm:$0xf]
    %v12464 = vld [vmem:[#allocation14 + $0x58] sm:$0xf]
    %v12465 = vld [vmem:[#allocation14 + $0x5c] sm:$0xf]
    %v12466 = vld [vmem:[#allocation14 + $0x60] sm:$0xf]
    %v12467 = vld [vmem:[#allocation14 + $0x64] sm:$0xf]
    %v12468 = vld [vmem:[#allocation14 + $0x68] sm:$0xf]
    %v12469 = vld [vmem:[#allocation14 + $0x6c] sm:$0xf]
    %v12470 = vld [vmem:[#allocation14 + $0x70] sm:$0xf]
    %v12471 = vld [vmem:[#allocation14 + $0x74] sm:$0xf]
    %v12472 = vld [vmem:[#allocation14 + $0x78] sm:$0xf]
    %v12473 = vld [vmem:[#allocation14 + $0x7c] sm:$0xf]
    %v12474 = vld [vmem:[#allocation14 + $0x80] sm:$0xf]
    %v12475 = vld [vmem:[#allocation14 + $0x84] sm:$0xf]
    %v12476 = vld [vmem:[#allocation14 + $0x88] sm:$0xf]
    %v12477 = vld [vmem:[#allocation14 + $0x8c] sm:$0xf]
    %v12478 = vld [vmem:[#allocation14 + $0x90] sm:$0xf]
    %v12479 = vld [vmem:[#allocation14 + $0x94] sm:$0xf]
    %v12480 = vld [vmem:[#allocation14 + $0x98] sm:$0xf]
    %v12481 = vld [vmem:[#allocation14 + $0x9c] sm:$0xf]
    %v12482 = vld [vmem:[#allocation14 + $0xa0] sm:$0xf]
    %v12483 = vld [vmem:[#allocation14 + $0xa4] sm:$0xf]
    %v12484 = vld [vmem:[#allocation14 + $0xa8] sm:$0xf]
    %v12485 = vld [vmem:[#allocation14 + $0xac] sm:$0xf]
    %v12486 = vld [vmem:[#allocation14 + $0xb0] sm:$0xf]
    %v12487 = vld [vmem:[#allocation14 + $0xb4] sm:$0xf]
    %v12488 = vld [vmem:[#allocation14 + $0xb8] sm:$0xf]
    %v12489 = vld [vmem:[#allocation14 + $0xbc] sm:$0xf]
    %v12490 = vld [vmem:[#allocation14 + $0xc0] sm:$0xf]
    %v12491 = vld [vmem:[#allocation14 + $0xc4] sm:$0xf]
    %v12492 = vld [vmem:[#allocation14 + $0xc8] sm:$0xf]
    %v12493 = vld [vmem:[#allocation14 + $0xcc] sm:$0xf]
    %v12494 = vld [vmem:[#allocation14 + $0xd0] sm:$0xf]
    %v12495 = vld [vmem:[#allocation14 + $0xd4] sm:$0xf]
    %v12496 = vld [vmem:[#allocation14 + $0xd8] sm:$0xf]
    %v12497 = vld [vmem:[#allocation14 + $0xdc] sm:$0xf]
    %v12498 = vld [vmem:[#allocation14 + $0xe0] sm:$0xf]
    %v12499 = vld [vmem:[#allocation14 + $0xe4] sm:$0xf]
    %v12500 = vld [vmem:[#allocation14 + $0xe8] sm:$0xf]
    %v12501 = vld [vmem:[#allocation14 + $0xec] sm:$0xf]
    %v12502 = vld [vmem:[#allocation14 + $0xf0] sm:$0xf]
    %v12503 = vld [vmem:[#allocation14 + $0xf4] sm:$0xf]
    %v12504 = vld [vmem:[#allocation14 + $0xf8] sm:$0xf]
    %v12505 = vld [vmem:[#allocation14 + $0xfc] sm:$0xf]
    %v12506 = vld [vmem:[#allocation14 + $0x100] sm:$0xf]
    %v12507 = vld [vmem:[#allocation14 + $0x104] sm:$0xf]
    %v12508 = vld [vmem:[#allocation14 + $0x108] sm:$0xf]
    %v12509 = vld [vmem:[#allocation14 + $0x10c] sm:$0xf]
    %v12510 = vld [vmem:[#allocation14 + $0x110] sm:$0xf]
    %v12511 = vld [vmem:[#allocation14 + $0x114] sm:$0xf]
    %v12512 = vld [vmem:[#allocation14 + $0x118] sm:$0xf]
    %v12513 = vld [vmem:[#allocation14 + $0x11c] sm:$0xf]
    %v12514 = vld [vmem:[#allocation14 + $0x120] sm:$0xf]
    %v12515 = vld [vmem:[#allocation14 + $0x124] sm:$0xf]
    %v12516 = vld [vmem:[#allocation14 + $0x128] sm:$0xf]
    %v12517 = vld [vmem:[#allocation14 + $0x12c] sm:$0xf]
    %v12518 = vld [vmem:[#allocation14 + $0x130] sm:$0xf]
    %v12519 = vld [vmem:[#allocation14 + $0x134] sm:$0xf]
    %v12520 = vld [vmem:[#allocation14 + $0x138] sm:$0xf]
    %v12521 = vld [vmem:[#allocation14 + $0x13c] sm:$0xf]
    %v12522 = vld [vmem:[#allocation14 + $0x140] sm:$0xf]
    %v12523 = vld [vmem:[#allocation14 + $0x144] sm:$0xf]
    %v12524 = vld [vmem:[#allocation14 + $0x148] sm:$0xf]
    %v12525 = vld [vmem:[#allocation14 + $0x14c] sm:$0xf]
    %v12526 = vld [vmem:[#allocation14 + $0x150] sm:$0xf]
    %v12527 = vld [vmem:[#allocation14 + $0x154] sm:$0xf]
    %v12528 = vld [vmem:[#allocation14 + $0x158] sm:$0xf]
    %v12529 = vld [vmem:[#allocation14 + $0x15c] sm:$0xf]
    %v12530 = vld [vmem:[#allocation14 + $0x160] sm:$0xf]
    %v12531 = vld [vmem:[#allocation14 + $0x164] sm:$0xf]
    %v12532 = vld [vmem:[#allocation14 + $0x168] sm:$0xf]
    %v12533 = vld [vmem:[#allocation14 + $0x16c] sm:$0xf]
    %v12534 = vld [vmem:[#allocation14 + $0x170] sm:$0xf]
    %v12535 = vld [vmem:[#allocation14 + $0x174] sm:$0xf]
    %v12536 = vld [vmem:[#allocation14 + $0x178] sm:$0xf]
    %v12537 = vld [vmem:[#allocation14 + $0x17c] sm:$0xf]
    %v12538 = vld [vmem:[#allocation14 + $0x180] sm:$0xf]
    %v12539 = vld [vmem:[#allocation14 + $0x184] sm:$0xf]
    %v12540 = vld [vmem:[#allocation14 + $0x188] sm:$0xf]
    %v12541 = vld [vmem:[#allocation14 + $0x18c] sm:$0xf]
    %v12542 = vld [vmem:[#allocation14 + $0x190] sm:$0xf]
    %v12543 = vld [vmem:[#allocation14 + $0x194] sm:$0xf]
    %v12544 = vld [vmem:[#allocation14 + $0x198] sm:$0xf]
    %v12545 = vld [vmem:[#allocation14 + $0x19c] sm:$0xf]
    %v12546 = vld [vmem:[#allocation14 + $0x1a0] sm:$0xf]
    %v12547 = vld [vmem:[#allocation14 + $0x1a4] sm:$0xf]
    %v12548 = vld [vmem:[#allocation14 + $0x1a8] sm:$0xf]
    %v12549 = vld [vmem:[#allocation14 + $0x1ac] sm:$0xf]
    %v12550 = vld [vmem:[#allocation14 + $0x1b0] sm:$0xf]
    %v12551 = vld [vmem:[#allocation14 + $0x1b4] sm:$0xf]
    %v12552 = vld [vmem:[#allocation14 + $0x1b8] sm:$0xf]
    %v12553 = vld [vmem:[#allocation14 + $0x1bc] sm:$0xf]
    %v12554 = vld [vmem:[#allocation14 + $0x1c0] sm:$0xf]
    %v12555 = vld [vmem:[#allocation14 + $0x1c4] sm:$0xf]
    %v12556 = vld [vmem:[#allocation14 + $0x1c8] sm:$0xf]
    %v12557 = vld [vmem:[#allocation14 + $0x1cc] sm:$0xf]
    %v12558 = vld [vmem:[#allocation14 + $0x1d0] sm:$0xf]
    %v12559 = vld [vmem:[#allocation14 + $0x1d4] sm:$0xf]
    %v12560 = vld [vmem:[#allocation14 + $0x1d8] sm:$0xf]
    %v12561 = vld [vmem:[#allocation14 + $0x1dc] sm:$0xf]
    %v12562 = vld [vmem:[#allocation14 + $0x1e0] sm:$0xf]
    %v12563 = vld [vmem:[#allocation14 + $0x1e4] sm:$0xf]
    %v12564 = vld [vmem:[#allocation14 + $0x1e8] sm:$0xf]
    %v12565 = vld [vmem:[#allocation14 + $0x1ec] sm:$0xf]
    %v12566 = vld [vmem:[#allocation14 + $0x1f0] sm:$0xf]
    %v12567 = vld [vmem:[#allocation14 + $0x1f4] sm:$0xf]
    %v12568 = vld [vmem:[#allocation14 + $0x1f8] sm:$0xf]
    %v12569 = vld [vmem:[#allocation14 + $0x1fc] sm:$0xf]
    %v12570 = vld [vmem:[#allocation14 + $0x200] sm:$0xf]
    %v12571 = vld [vmem:[#allocation14 + $0x204] sm:$0xf]
    %v12572 = vld [vmem:[#allocation14 + $0x208] sm:$0xf]
    %v12573 = vld [vmem:[#allocation14 + $0x20c] sm:$0xf]
    %v12574 = vld [vmem:[#allocation14 + $0x210] sm:$0xf]
    %v12575 = vld [vmem:[#allocation14 + $0x214] sm:$0xf]
    %v12576 = vld [vmem:[#allocation14 + $0x218] sm:$0xf]
    %v12577 = vld [vmem:[#allocation14 + $0x21c] sm:$0xf]
    %v12578 = vld [vmem:[#allocation14 + $0x220] sm:$0xf]
    %v12579 = vld [vmem:[#allocation14 + $0x224] sm:$0xf]
    %v12580 = vld [vmem:[#allocation14 + $0x228] sm:$0xf]
    %v12581 = vld [vmem:[#allocation14 + $0x22c] sm:$0xf]
    %v12582 = vld [vmem:[#allocation14 + $0x230] sm:$0xf]
    %v12583 = vld [vmem:[#allocation14 + $0x234] sm:$0xf]
    %v12584 = vld [vmem:[#allocation14 + $0x238] sm:$0xf]
    %v12585 = vld [vmem:[#allocation14 + $0x23c] sm:$0xf]
    %v12586 = vld [vmem:[%s61] sm:$0x1]
    %v12588 = vlaneseq
    %v12589 = vshrl.u32 %v12588, 7
    %v12590 = vsub.s32 0, %v12589
    %v12591 = vrot.slane %v12586, %v12590
    %v12737 = vunpack.c.l.b16 %v12442
    %v12738 = vunpack.c.l.b16 %v12443
    %v12739 = vunpack.c.l.b16 %v12444
    %v12740 = vunpack.c.l.b16 %v12445
    %v12741 = vunpack.c.l.b16 %v12446
    %v12742 = vunpack.c.l.b16 %v12447
    %v12743 = vunpack.c.l.b16 %v12448
    %v12744 = vunpack.c.l.b16 %v12449
    %v12745 = vunpack.c.l.b16 %v12450
    %v12746 = vunpack.c.l.b16 %v12451
    %v12747 = vunpack.c.l.b16 %v12452
    %v12748 = vunpack.c.l.b16 %v12453
    %v12749 = vunpack.c.l.b16 %v12454
    %v12750 = vunpack.c.l.b16 %v12455
    %v12751 = vunpack.c.l.b16 %v12456
    %v12752 = vunpack.c.l.b16 %v12457
    %v12753 = vunpack.c.l.b16 %v12458
    %v12754 = vunpack.c.l.b16 %v12459
    %v12755 = vunpack.c.l.b16 %v12460
    %v12756 = vunpack.c.l.b16 %v12461
    %v12757 = vunpack.c.l.b16 %v12462
    %v12758 = vunpack.c.l.b16 %v12463
    %v12759 = vunpack.c.l.b16 %v12464
    %v12760 = vunpack.c.l.b16 %v12465
    %v12761 = vunpack.c.l.b16 %v12466
    %v12762 = vunpack.c.l.b16 %v12467
    %v12763 = vunpack.c.l.b16 %v12468
    %v12764 = vunpack.c.l.b16 %v12469
    %v12765 = vunpack.c.l.b16 %v12470
    %v12766 = vunpack.c.l.b16 %v12471
    %v12767 = vunpack.c.l.b16 %v12472
    %v12768 = vunpack.c.l.b16 %v12473
    %v12769 = vunpack.c.l.b16 %v12474
    %v12770 = vunpack.c.l.b16 %v12475
    %v12771 = vunpack.c.l.b16 %v12476
    %v12772 = vunpack.c.l.b16 %v12477
    %v12773 = vunpack.c.l.b16 %v12478
    %v12774 = vunpack.c.l.b16 %v12479
    %v12775 = vunpack.c.l.b16 %v12480
    %v12776 = vunpack.c.l.b16 %v12481
    %v12777 = vunpack.c.l.b16 %v12482
    %v12778 = vunpack.c.l.b16 %v12483
    %v12779 = vunpack.c.l.b16 %v12484
    %v12780 = vunpack.c.l.b16 %v12485
    %v12781 = vunpack.c.l.b16 %v12486
    %v12782 = vunpack.c.l.b16 %v12487
    %v12783 = vunpack.c.l.b16 %v12488
    %v12784 = vunpack.c.l.b16 %v12489
    %v12785 = vunpack.c.l.b16 %v12490
    %v12786 = vunpack.c.l.b16 %v12491
    %v12787 = vunpack.c.l.b16 %v12492
    %v12788 = vunpack.c.l.b16 %v12493
    %v12789 = vunpack.c.l.b16 %v12494
    %v12790 = vunpack.c.l.b16 %v12495
    %v12791 = vunpack.c.l.b16 %v12496
    %v12792 = vunpack.c.l.b16 %v12497
    %v12793 = vunpack.c.l.b16 %v12498
    %v12794 = vunpack.c.l.b16 %v12499
    %v12795 = vunpack.c.l.b16 %v12500
    %v12796 = vunpack.c.l.b16 %v12501
    %v12797 = vunpack.c.l.b16 %v12502
    %v12798 = vunpack.c.l.b16 %v12503
    %v12799 = vunpack.c.l.b16 %v12504
    %v12800 = vunpack.c.l.b16 %v12505
    %v12801 = vunpack.c.l.b16 %v12506
    %v12802 = vunpack.c.l.b16 %v12507
    %v12803 = vunpack.c.l.b16 %v12508
    %v12804 = vunpack.c.l.b16 %v12509
    %v12805 = vunpack.c.l.b16 %v12510
    %v12806 = vunpack.c.l.b16 %v12511
    %v12807 = vunpack.c.l.b16 %v12512
    %v12808 = vunpack.c.l.b16 %v12513
    %v12809 = vunpack.c.l.b16 %v12514
    %v12810 = vunpack.c.l.b16 %v12515
    %v12811 = vunpack.c.l.b16 %v12516
    %v12812 = vunpack.c.l.b16 %v12517
    %v12813 = vunpack.c.l.b16 %v12518
    %v12814 = vunpack.c.l.b16 %v12519
    %v12815 = vunpack.c.l.b16 %v12520
    %v12816 = vunpack.c.l.b16 %v12521
    %v12817 = vunpack.c.l.b16 %v12522
    %v12818 = vunpack.c.l.b16 %v12523
    %v12819 = vunpack.c.l.b16 %v12524
    %v12820 = vunpack.c.l.b16 %v12525
    %v12821 = vunpack.c.l.b16 %v12526
    %v12822 = vunpack.c.l.b16 %v12527
    %v12823 = vunpack.c.l.b16 %v12528
    %v12824 = vunpack.c.l.b16 %v12529
    %v12825 = vunpack.c.l.b16 %v12530
    %v12826 = vunpack.c.l.b16 %v12531
    %v12827 = vunpack.c.l.b16 %v12532
    %v12828 = vunpack.c.l.b16 %v12533
    %v12829 = vunpack.c.l.b16 %v12534
    %v12830 = vunpack.c.l.b16 %v12535
    %v12831 = vunpack.c.l.b16 %v12536
    %v12832 = vunpack.c.l.b16 %v12537
    %v12833 = vunpack.c.l.b16 %v12538
    %v12834 = vunpack.c.l.b16 %v12539
    %v12835 = vunpack.c.l.b16 %v12540
    %v12836 = vunpack.c.l.b16 %v12541
    %v12837 = vunpack.c.l.b16 %v12542
    %v12838 = vunpack.c.l.b16 %v12543
    %v12839 = vunpack.c.l.b16 %v12544
    %v12840 = vunpack.c.l.b16 %v12545
    %v12841 = vunpack.c.l.b16 %v12546
    %v12842 = vunpack.c.l.b16 %v12547
    %v12843 = vunpack.c.l.b16 %v12548
    %v12844 = vunpack.c.l.b16 %v12549
    %v12845 = vunpack.c.l.b16 %v12550
    %v12846 = vunpack.c.l.b16 %v12551
    %v12847 = vunpack.c.l.b16 %v12552
    %v12848 = vunpack.c.l.b16 %v12553
    %v12849 = vunpack.c.l.b16 %v12554
    %v12850 = vunpack.c.l.b16 %v12555
    %v12851 = vunpack.c.l.b16 %v12556
    %v12852 = vunpack.c.l.b16 %v12557
    %v12853 = vunpack.c.l.b16 %v12558
    %v12854 = vunpack.c.l.b16 %v12559
    %v12855 = vunpack.c.l.b16 %v12560
    %v12856 = vunpack.c.l.b16 %v12561
    %v12857 = vunpack.c.l.b16 %v12562
    %v12858 = vunpack.c.l.b16 %v12563
    %v12859 = vunpack.c.l.b16 %v12564
    %v12860 = vunpack.c.l.b16 %v12565
    %v12861 = vunpack.c.l.b16 %v12566
    %v12862 = vunpack.c.l.b16 %v12567
    %v12863 = vunpack.c.l.b16 %v12568
    %v12864 = vunpack.c.l.b16 %v12569
    %v12865 = vunpack.c.l.b16 %v12570
    %v12866 = vunpack.c.l.b16 %v12571
    %v12867 = vunpack.c.l.b16 %v12572
    %v12868 = vunpack.c.l.b16 %v12573
    %v12869 = vunpack.c.l.b16 %v12574
    %v12870 = vunpack.c.l.b16 %v12575
    %v12871 = vunpack.c.l.b16 %v12576
    %v12872 = vunpack.c.l.b16 %v12577
    %v12873 = vunpack.c.l.b16 %v12578
    %v12874 = vunpack.c.l.b16 %v12579
    %v12875 = vunpack.c.l.b16 %v12580
    %v12876 = vunpack.c.l.b16 %v12581
    %v12877 = vunpack.c.l.b16 %v12582
    %v12878 = vunpack.c.l.b16 %v12583
    %v12879 = vunpack.c.l.b16 %v12584
    %v12880 = vunpack.c.l.b16 %v12585
    %v12881 = vpack.c.b16 %v12738, %v12737
    %v12882 = vpack.c.b16 %v12740, %v12739
    %v12883 = vpack.c.b16 %v12742, %v12741
    %v12884 = vpack.c.b16 %v12744, %v12743
    %v12885 = vpack.c.b16 %v12746, %v12745
    %v12886 = vpack.c.b16 %v12748, %v12747
    %v12887 = vpack.c.b16 %v12750, %v12749
    %v12888 = vpack.c.b16 %v12752, %v12751
    %v12889 = vpack.c.b16 %v12754, %v12753
    %v12890 = vpack.c.b16 %v12756, %v12755
    %v12891 = vpack.c.b16 %v12758, %v12757
    %v12892 = vpack.c.b16 %v12760, %v12759
    %v12893 = vpack.c.b16 %v12762, %v12761
    %v12894 = vpack.c.b16 %v12764, %v12763
    %v12895 = vpack.c.b16 %v12766, %v12765
    %v12896 = vpack.c.b16 %v12768, %v12767
    %v12897 = vpack.c.b16 %v12770, %v12769
    %v12898 = vpack.c.b16 %v12772, %v12771
    %v12899 = vpack.c.b16 %v12774, %v12773
    %v12900 = vpack.c.b16 %v12776, %v12775
    %v12901 = vpack.c.b16 %v12778, %v12777
    %v12902 = vpack.c.b16 %v12780, %v12779
    %v12903 = vpack.c.b16 %v12782, %v12781
    %v12904 = vpack.c.b16 %v12784, %v12783
    %v12905 = vpack.c.b16 %v12786, %v12785
    %v12906 = vpack.c.b16 %v12788, %v12787
    %v12907 = vpack.c.b16 %v12790, %v12789
    %v12908 = vpack.c.b16 %v12792, %v12791
    %v12909 = vpack.c.b16 %v12794, %v12793
    %v12910 = vpack.c.b16 %v12796, %v12795
    %v12911 = vpack.c.b16 %v12798, %v12797
    %v12912 = vpack.c.b16 %v12800, %v12799
    %v12913 = vpack.c.b16 %v12802, %v12801
    %v12914 = vpack.c.b16 %v12804, %v12803
    %v12915 = vpack.c.b16 %v12806, %v12805
    %v12916 = vpack.c.b16 %v12808, %v12807
    %v12917 = vpack.c.b16 %v12810, %v12809
    %v12918 = vpack.c.b16 %v12812, %v12811
    %v12919 = vpack.c.b16 %v12814, %v12813
    %v12920 = vpack.c.b16 %v12816, %v12815
    %v12921 = vpack.c.b16 %v12818, %v12817
    %v12922 = vpack.c.b16 %v12820, %v12819
    %v12923 = vpack.c.b16 %v12822, %v12821
    %v12924 = vpack.c.b16 %v12824, %v12823
    %v12925 = vpack.c.b16 %v12826, %v12825
    %v12926 = vpack.c.b16 %v12828, %v12827
    %v12927 = vpack.c.b16 %v12830, %v12829
    %v12928 = vpack.c.b16 %v12832, %v12831
    %v12929 = vpack.c.b16 %v12834, %v12833
    %v12930 = vpack.c.b16 %v12836, %v12835
    %v12931 = vpack.c.b16 %v12838, %v12837
    %v12932 = vpack.c.b16 %v12840, %v12839
    %v12933 = vpack.c.b16 %v12842, %v12841
    %v12934 = vpack.c.b16 %v12844, %v12843
    %v12935 = vpack.c.b16 %v12846, %v12845
    %v12936 = vpack.c.b16 %v12848, %v12847
    %v12937 = vpack.c.b16 %v12850, %v12849
    %v12938 = vpack.c.b16 %v12852, %v12851
    %v12939 = vpack.c.b16 %v12854, %v12853
    %v12940 = vpack.c.b16 %v12856, %v12855
    %v12941 = vpack.c.b16 %v12858, %v12857
    %v12942 = vpack.c.b16 %v12860, %v12859
    %v12943 = vpack.c.b16 %v12862, %v12861
    %v12944 = vpack.c.b16 %v12864, %v12863
    %v12945 = vpack.c.b16 %v12866, %v12865
    %v12946 = vpack.c.b16 %v12868, %v12867
    %v12947 = vpack.c.b16 %v12870, %v12869
    %v12948 = vpack.c.b16 %v12872, %v12871
    %v12949 = vpack.c.b16 %v12874, %v12873
    %v12950 = vpack.c.b16 %v12876, %v12875
    %v12951 = vpack.c.b16 %v12878, %v12877
    %v12952 = vpack.c.b16 %v12880, %v12879
    %13025 = vmatprep.subr.bf16.mxu0 0
    %13026 = vmatpush1.bf16.msra.mxu0 %v12881
    %13027 = vmatprep.subr.bf16.mxu0 0
    %13028 = vmatpush1.bf16.msra.mxu0 %v12882
    %13029 = vmatprep.subr.bf16.mxu0 0
    %13030 = vmatpush1.bf16.msra.mxu0 %v12883
    %13031 = vmatprep.subr.bf16.mxu0 0
    %13032 = vmatpush1.bf16.msra.mxu0 %v12884
    %13033 = vmatprep.subr.bf16.mxu0 0
    %13034 = vmatpush1.bf16.msra.mxu0 %v12885
    %13035 = vmatprep.subr.bf16.mxu0 0
    %13036 = vmatpush1.bf16.msra.mxu0 %v12886
    %13037 = vmatprep.subr.bf16.mxu0 0
    %13038 = vmatpush1.bf16.msra.mxu0 %v12887
    %13039 = vmatprep.subr.bf16.mxu0 0
    %13040 = vmatpush1.bf16.msra.mxu0 %v12888
    %13041 = vmatprep.subr.bf16.mxu0 0
    %13042 = vmatpush1.bf16.msra.mxu0 %v12889
    %13043 = vmatprep.subr.bf16.mxu0 0
    %13044 = vmatpush1.bf16.msra.mxu0 %v12890
    %13045 = vmatprep.subr.bf16.mxu0 0
    %13046 = vmatpush1.bf16.msra.mxu0 %v12891
    %13047 = vmatprep.subr.bf16.mxu0 0
    %13048 = vmatpush1.bf16.msra.mxu0 %v12892
    %13049 = vmatprep.subr.bf16.mxu0 0
    %13050 = vmatpush1.bf16.msra.mxu0 %v12893
    %13051 = vmatprep.subr.bf16.mxu0 0
    %13052 = vmatpush1.bf16.msra.mxu0 %v12894
    %13053 = vmatprep.subr.bf16.mxu0 0
    %13054 = vmatpush1.bf16.msra.mxu0 %v12895
    %13055 = vmatprep.subr.bf16.mxu0 0
    %13056 = vmatpush1.bf16.msra.mxu0 %v12896
    %13057 = vmatprep.mubr.bf16.mxu0 %v12416
    %13058 = vmatmul.mubr.bf16.gmra.mrb[0].mxu0 %v12415
    %v13059 = vpop.f32.mrb[0].mxu0
    %v13060 = vadd.f32 %v12591, %v13059
    %v13061 = vpop.f32.mrb[0].mxu0
    %v13062 = vpop.f32.mrb[0].mxu0
    %v13063 = vadd.f32 %v12591, %v13062
    %v13064 = vpop.f32.mrb[0].mxu0
    %13065 = vmatprep.mubr.bf16.mxu0 %v12425
    %13066 = vmatmul.mubr.bf16.gmra.mrb[0].mxu0 %v12424
    %v13067 = vpop.f32.mrb[0].mxu0
    %v13068 = vadd.f32 %v12591, %v13067
    %v13069 = vpop.f32.mrb[0].mxu0
    %v13070 = vpop.f32.mrb[0].mxu0
    %v13071 = vadd.f32 %v12591, %v13070
    %v13072 = vpop.f32.mrb[0].mxu0
    %13073 = vmatprep.mubr.bf16.mxu0 %v12434
    %13074 = vmatmul.mubr.bf16.gmra.mrb[0].mxu0 %v12433
    %v13075 = vpop.f32.mrb[0].mxu0
    %v13076 = vadd.f32 %v12591, %v13075
    %v13077 = vpop.f32.mrb[0].mxu0
    %v13078 = vpop.f32.mrb[0].mxu0
    %v13079 = vadd.f32 %v12591, %v13078
    %v13080 = vpop.f32.mrb[0].mxu0
    %13081 = vdwg.mxu0
    %13082 = vmatprep.subr.bf16.mxu0 0
    %13083 = vmatpush1.bf16.msra.mxu0 %v12897
    %13084 = vmatprep.subr.bf16.mxu0 0
    %13085 = vmatpush1.bf16.msra.mxu0 %v12898
    %13086 = vmatprep.subr.bf16.mxu0 0
    %13087 = vmatpush1.bf16.msra.mxu0 %v12899
    %13088 = vmatprep.subr.bf16.mxu0 0
    %13089 = vmatpush1.bf16.msra.mxu0 %v12900
    %13090 = vmatprep.subr.bf16.mxu0 0
    %13091 = vmatpush1.bf16.msra.mxu0 %v12901
    %13092 = vmatprep.subr.bf16.mxu0 0
    %13093 = vmatpush1.bf16.msra.mxu0 %v12902
    %13094 = vmatprep.subr.bf16.mxu0 0
    %13095 = vmatpush1.bf16.msra.mxu0 %v12903
    %13096 = vmatprep.subr.bf16.mxu0 0
    %13097 = vmatpush1.bf16.msra.mxu0 %v12904
    %13098 = vmatprep.subr.bf16.mxu0 0
    %13099 = vmatpush1.bf16.msra.mxu0 %v12905
    %13100 = vmatprep.subr.bf16.mxu0 0
    %13101 = vmatpush1.bf16.msra.mxu0 %v12906
    %13102 = vmatprep.subr.bf16.mxu0 0
    %13103 = vmatpush1.bf16.msra.mxu0 %v12907
    %13104 = vmatprep.subr.bf16.mxu0 0
    %13105 = vmatpush1.bf16.msra.mxu0 %v12908
    %13106 = vmatprep.subr.bf16.mxu0 0
    %13107 = vmatpush1.bf16.msra.mxu0 %v12909
    %13108 = vmatprep.subr.bf16.mxu0 0
    %13109 = vmatpush1.bf16.msra.mxu0 %v12910
    %13110 = vmatprep.subr.bf16.mxu0 0
    %13111 = vmatpush1.bf16.msra.mxu0 %v12911
    %13112 = vmatprep.subr.bf16.mxu0 0
    %13113 = vmatpush1.bf16.msra.mxu0 %v12912
    %13114 = vmatprep.mubr.bf16.mxu0 %v12418
    %13115 = vmatmul.mubr.bf16.gmra.mrb[0].mxu0 %v12417
    %v13116 = vpop.f32.mrb[0].mxu0
    %v13117 = vadd.f32 %v13060, %v13116
    %v13118 = vpop.f32.mrb[0].mxu0
    %v13119 = vpop.f32.mrb[0].mxu0
    %v13120 = vadd.f32 %v13063, %v13119
    %v13121 = vpop.f32.mrb[0].mxu0
    %13122 = vmatprep.mubr.bf16.mxu0 %v12427
    %13123 = vmatmul.mubr.bf16.gmra.mrb[0].mxu0 %v12426
    %v13124 = vpop.f32.mrb[0].mxu0
    %v13125 = vadd.f32 %v13068, %v13124
    %v13126 = vpop.f32.mrb[0].mxu0
    %v13127 = vpop.f32.mrb[0].mxu0
    %v13128 = vadd.f32 %v13071, %v13127
    %v13129 = vpop.f32.mrb[0].mxu0
    %13130 = vmatprep.mubr.bf16.mxu0 %v12436
    %13131 = vmatmul.mubr.bf16.gmra.mrb[0].mxu0 %v12435
    %v13132 = vpop.f32.mrb[0].mxu0
    %v13133 = vadd.f32 %v13076, %v13132
    %v13134 = vpop.f32.mrb[0].mxu0
    %v13135 = vpop.f32.mrb[0].mxu0
    %v13136 = vadd.f32 %v13079, %v13135
    %v13137 = vpop.f32.mrb[0].mxu0
    %13138 = vdwg.mxu0
    %13139 = vmatprep.subr.bf16.mxu0 0
    %13140 = vmatpush1.bf16.msra.mxu0 %v12913
    %13141 = vmatprep.subr.bf16.mxu0 0
    %13142 = vmatpush1.bf16.msra.mxu0 %v12914
    %13143 = vmatprep.subr.bf16.mxu0 0
    %13144 = vmatpush1.bf16.msra.mxu0 %v12915
    %13145 = vmatprep.subr.bf16.mxu0 0
    %13146 = vmatpush1.bf16.msra.mxu0 %v12916
    %13147 = vmatprep.subr.bf16.mxu0 0
    %13148 = vmatpush1.bf16.msra.mxu0 %v12917
    %13149 = vmatprep.subr.bf16.mxu0 0
    %13150 = vmatpush1.bf16.msra.mxu0 %v12918
    %13151 = vmatprep.subr.bf16.mxu0 0
    %13152 = vmatpush1.bf16.msra.mxu0 %v12919
    %13153 = vmatprep.subr.bf16.mxu0 0
    %13154 = vmatpush1.bf16.msra.mxu0 %v12920
    %13155 = vmatprep.subr.bf16.mxu0 0
    %13156 = vmatpush1.bf16.msra.mxu0 %v12921
    %13157 = vmatprep.subr.bf16.mxu0 0
    %13158 = vmatpush1.bf16.msra.mxu0 %v12922
    %13159 = vmatprep.subr.bf16.mxu0 0
    %13160 = vmatpush1.bf16.msra.mxu0 %v12923
    %13161 = vmatprep.subr.bf16.mxu0 0
    %13162 = vmatpush1.bf16.msra.mxu0 %v12924
    %13163 = vmatprep.subr.bf16.mxu0 0
    %13164 = vmatpush1.bf16.msra.mxu0 %v12925
    %13165 = vmatprep.subr.bf16.mxu0 0
    %13166 = vmatpush1.bf16.msra.mxu0 %v12926
    %13167 = vmatprep.subr.bf16.mxu0 0
    %13168 = vmatpush1.bf16.msra.mxu0 %v12927
    %13169 = vmatprep.subr.bf16.mxu0 0
    %13170 = vmatpush1.bf16.msra.mxu0 %v12928
    %13171 = vmatprep.mubr.bf16.mxu0 %v12420
    %13172 = vmatmul.mubr.bf16.gmra.mrb[0].mxu0 %v12419
    %v13173 = vpop.f32.mrb[0].mxu0
    %v13174 = vadd.f32 %v13117, %v13173
    %v13175 = vpop.f32.mrb[0].mxu0
    %v13176 = vpop.f32.mrb[0].mxu0
    %v13177 = vadd.f32 %v13120, %v13176
    %v13178 = vpop.f32.mrb[0].mxu0
    %13179 = vmatprep.mubr.bf16.mxu0 %v12429
    %13180 = vmatmul.mubr.bf16.gmra.mrb[0].mxu0 %v12428
    %v13181 = vpop.f32.mrb[0].mxu0
    %v13182 = vadd.f32 %v13125, %v13181
    %v13183 = vpop.f32.mrb[0].mxu0
    %v13184 = vpop.f32.mrb[0].mxu0
    %v13185 = vadd.f32 %v13128, %v13184
    %v13186 = vpop.f32.mrb[0].mxu0
    %13187 = vmatprep.mubr.bf16.mxu0 %v12438
    %13188 = vmatmul.mubr.bf16.gmra.mrb[0].mxu0 %v12437
    %v13189 = vpop.f32.mrb[0].mxu0
    %v13190 = vadd.f32 %v13133, %v13189
    %v13191 = vpop.f32.mrb[0].mxu0
    %v13192 = vpop.f32.mrb[0].mxu0
    %v13193 = vadd.f32 %v13136, %v13192
    %v13194 = vpop.f32.mrb[0].mxu0
    %13195 = vdwg.mxu0
    %13196 = vmatprep.subr.bf16.mxu0 0
    %13197 = vmatpush1.bf16.msra.mxu0 %v12929
    %13198 = vmatprep.subr.bf16.mxu0 0
    %13199 = vmatpush1.bf16.msra.mxu0 %v12930
    %13200 = vmatprep.subr.bf16.mxu0 0
    %13201 = vmatpush1.bf16.msra.mxu0 %v12931
    %13202 = vmatprep.subr.bf16.mxu0 0
    %13203 = vmatpush1.bf16.msra.mxu0 %v12932
    %13204 = vmatprep.subr.bf16.mxu0 0
    %13205 = vmatpush1.bf16.msra.mxu0 %v12933
    %13206 = vmatprep.subr.bf16.mxu0 0
    %13207 = vmatpush1.bf16.msra.mxu0 %v12934
    %13208 = vmatprep.subr.bf16.mxu0 0
    %13209 = vmatpush1.bf16.msra.mxu0 %v12935
    %13210 = vmatprep.subr.bf16.mxu0 0
    %13211 = vmatpush1.bf16.msra.mxu0 %v12936
    %13212 = vmatprep.subr.bf16.mxu0 0
    %13213 = vmatpush1.bf16.msra.mxu0 %v12937
    %13214 = vmatprep.subr.bf16.mxu0 0
    %13215 = vmatpush1.bf16.msra.mxu0 %v12938
    %13216 = vmatprep.subr.bf16.mxu0 0
    %13217 = vmatpush1.bf16.msra.mxu0 %v12939
    %13218 = vmatprep.subr.bf16.mxu0 0
    %13219 = vmatpush1.bf16.msra.mxu0 %v12940
    %13220 = vmatprep.subr.bf16.mxu0 0
    %13221 = vmatpush1.bf16.msra.mxu0 %v12941
    %13222 = vmatprep.subr.bf16.mxu0 0
    %13223 = vmatpush1.bf16.msra.mxu0 %v12942
    %13224 = vmatprep.subr.bf16.mxu0 0
    %13225 = vmatpush1.bf16.msra.mxu0 %v12943
    %13226 = vmatprep.subr.bf16.mxu0 0
    %13227 = vmatpush1.bf16.msra.mxu0 %v12944
    %13228 = vmatprep.mubr.bf16.mxu0 %v12422
    %13229 = vmatmul.mubr.bf16.gmra.mrb[0].mxu0 %v12421
    %v13230 = vpop.f32.mrb[0].mxu0
    %v13231 = vadd.f32 %v13174, %v13230
    %v13232 = vpop.f32.mrb[0].mxu0
    %v13233 = vpop.f32.mrb[0].mxu0
    %v13234 = vadd.f32 %v13177, %v13233
    %v13235 = vpop.f32.mrb[0].mxu0
    %13236 = vmatprep.mubr.bf16.mxu0 %v12431
    %13237 = vmatmul.mubr.bf16.gmra.mrb[0].mxu0 %v12430
    %v13238 = vpop.f32.mrb[0].mxu0
    %v13239 = vadd.f32 %v13182, %v13238
    %v13240 = vpop.f32.mrb[0].mxu0
    %v13241 = vpop.f32.mrb[0].mxu0
    %v13242 = vadd.f32 %v13185, %v13241
    %v13243 = vpop.f32.mrb[0].mxu0
    %13244 = vmatprep.mubr.bf16.mxu0 %v12440
    %13245 = vmatmul.mubr.bf16.gmra.mrb[0].mxu0 %v12439
    %v13246 = vpop.f32.mrb[0].mxu0
    %v13247 = vadd.f32 %v13190, %v13246
    %v13248 = vpop.f32.mrb[0].mxu0
    %v13249 = vpop.f32.mrb[0].mxu0
    %v13250 = vadd.f32 %v13193, %v13249
    %v13251 = vpop.f32.mrb[0].mxu0
    %13252 = vdwg.mxu0
    %13253 = vmatprep.subr.bf16.mxu0 0
    %13254 = vmatpush1.bf16.msra.mxu0 %v12945
    %13255 = vmatprep.subr.bf16.mxu0 0
    %13256 = vmatpush1.bf16.msra.mxu0 %v12946
    %13257 = vmatprep.subr.bf16.mxu0 0
    %13258 = vmatpush1.bf16.msra.mxu0 %v12947
    %13259 = vmatprep.subr.bf16.mxu0 0
    %13260 = vmatpush1.bf16.msra.mxu0 %v12948
    %13261 = vmatprep.subr.bf16.mxu0 0
    %13262 = vmatpush1.bf16.msra.mxu0 %v12949
    %13263 = vmatprep.subr.bf16.mxu0 0
    %13264 = vmatpush1.bf16.msra.mxu0 %v12950
    %13265 = vmatprep.subr.bf16.mxu0 0
    %13266 = vmatpush1.bf16.msra.mxu0 %v12951
    %13267 = vmatprep.subr.bf16.mxu0 0
    %13268 = vmatpush1.bf16.msra.mxu0 %v12952
    %13269 = vmatprep.subr.bf16.mxu0 0
    %13270 = vmatpush1.bf16.msra.mxu0 0
    %13271 = vmatprep.subr.bf16.mxu0 0
    %13272 = vmatpush1.bf16.msra.mxu0 0
    %13273 = vmatprep.subr.bf16.mxu0 0
    %13274 = vmatpush1.bf16.msra.mxu0 0
    %13275 = vmatprep.subr.bf16.mxu0 0
    %13276 = vmatpush1.bf16.msra.mxu0 0
    %13277 = vmatprep.subr.bf16.mxu0 0
    %13278 = vmatpush1.bf16.msra.mxu0 0
    %13279 = vmatprep.subr.bf16.mxu0 0
    %13280 = vmatpush1.bf16.msra.mxu0 0
    %13281 = vmatprep.subr.bf16.mxu0 0
    %13282 = vmatpush1.bf16.msra.mxu0 0
    %13283 = vmatprep.subr.bf16.mxu0 0
    %13284 = vmatpush1.bf16.msra.mxu0 0
    %13285 = vmatprep.mubr.bf16.mxu0 0
    %13286 = vmatmul.mubr.bf16.gmra.mrb[0].mxu0 %v12423
    %v13287 = vpop.f32.mrb[0].mxu0
    %v13288 = vadd.f32 %v13231, %v13287
    %v13289 = vpop.f32.mrb[0].mxu0
    %v13290 = vpop.f32.mrb[0].mxu0
    %v13291 = vadd.f32 %v13234, %v13290
    %v13292 = vpop.f32.mrb[0].mxu0
    %13293 = vmatprep.mubr.bf16.mxu0 0
    %13294 = vmatmul.mubr.bf16.gmra.mrb[0].mxu0 %v12432
    %v13295 = vpop.f32.mrb[0].mxu0
    %v13296 = vadd.f32 %v13239, %v13295
    %v13297 = vpop.f32.mrb[0].mxu0
    %v13298 = vpop.f32.mrb[0].mxu0
    %v13299 = vadd.f32 %v13242, %v13298
    %v13300 = vpop.f32.mrb[0].mxu0
    %13301 = vmatprep.mubr.bf16.mxu0 0
    %13302 = vmatmul.mubr.bf16.gmra.mrb[0].mxu0 %v12441
    %v13303 = vpop.f32.mrb[0].mxu0
    %v13304 = vadd.f32 %v13247, %v13303
    %v13305 = vpop.f32.mrb[0].mxu0
    %v13306 = vpop.f32.mrb[0].mxu0
    %v13307 = vadd.f32 %v13250, %v13306
    %v13308 = vpop.f32.mrb[0].mxu0
    %13309 = vdwg.mxu0
    %v13310 = vmul.f32 %v13288, 0.5
    %v13311 = vmul.f32 %v13291, 0.5
    %v13312 = vmul.f32 %v13296, 0.5
    %v13313 = vmul.f32 %v13299, 0.5
    %v13314 = vmul.f32 %v13304, 0.5
    %v13315 = vmul.f32 %v13307, 0.5
    %v13316 = vtanh.pop %v13310
    %v13317 = vtanh.pop %v13311
    %v13318 = vtanh.pop %v13312
    %v13319 = vtanh.pop %v13313
    %v13320 = vtanh.pop %v13314
    %v13321 = vtanh.pop %v13315
    %v13322 = vadd.f32 %v13316, 1.0
    %v13323 = vadd.f32 %v13317, 1.0
    %v13324 = vadd.f32 %v13318, 1.0
    %v13325 = vadd.f32 %v13319, 1.0
    %v13326 = vadd.f32 %v13320, 1.0
    %v13327 = vadd.f32 %v13321, 1.0
    %v13328 = vmul.f32 %v13322, 0.5
    %v13329 = vmul.f32 %v13323, 0.5
    %v13330 = vmul.f32 %v13324, 0.5
    %v13331 = vmul.f32 %v13325, 0.5
    %v13332 = vmul.f32 %v13326, 0.5
    %v13333 = vmul.f32 %v13327, 0.5
    %13334 = vst [vmem:[#allocation16] sm:$0xff] %v13328
    %13335 = vst [vmem:[#allocation16 + $0x8] sm:$0xff] %v13329
    %13336 = vst [vmem:[#allocation16 + $0x10] sm:$0xff] %v13330
    %13337 = vst [vmem:[#allocation16 + $0x18] sm:$0xff] %v13331
    %13338 = vst [vmem:[#allocation16 + $0x20] sm:$0xff] %v13332
    %13339 = vst [vmem:[#allocation16 + $0x28] sm:$0xff] %v13333
    // Predicated region
    $region158: #{forward.1} parent=1 // pred_check
      _
    $region159: #{forward.1} parent=1 // pred_check_branch
      %13341 = sbr.rel (0) target = $region161
    $region160: #{forward.1} parent=1 // pred_region
      %s13343 = ssub.s32 768, 768
      %13344 = vsyncadd [#allocation4], %s13343
      %s13345 = sshll.u32 [#allocation16], 4
      %s13346 = int_to_ptr.vmem [resolvable:$true] %s13345
      %13351 = dma.vmem_to_hbm [thread:$0]  %s13346, 768, %s63, [#allocation4], 128, 128, 8
    $region161: #{forward.1} parent=1 // pred_fallthru
      _
    // Predicated region
    $region162: #{forward.1} parent=1 // pred_check
      _
    $region163: #{forward.1} parent=1 // pred_check_branch
      %13353 = sbr.rel (0) target = $region165
    $region164: #{forward.1} parent=1 // pred_region
      %13354 = dma.done [#allocation4], 768
    $region165: #{forward.1} parent=1 // pred_fallthru
      _
    %13355 = vsyncpa [#allocation3], 1
    %13356 = vsyncpa [#allocation6], 1
    %13357 = vsyncpa [#allocation9], 1
    %13358 = vsyncpa [#allocation12], 1
    %13359 = vsyncpa [#allocation15], 1
    %13360 = vsyncpa [#allocation4], 1

</llo_original>
